<compile_context>
chip_gen: v7x
topology: tpu7x:2x2x1
jax: 0.10.0
libtpu: 0.0.40
codegen_flags: <defaults>
</compile_context>

<pallas_src>
import jax
import jax.numpy as jnp
from jax.experimental import pallas as pl
from jax.experimental.pallas import tpu as pltpu

LAYER_DIMS = [4, 512, 256, 128, 64, 32, 1]


def _round_up(n, m):
    return ((n + m - 1) // m) * m


def _mlp_kernel(x_ref, w1_ref, w2_ref, w3_ref, w45_ref, w6_ref, bcat_ref, b6_ref, o_ref):
    # TODO(synk): Dropout(p=0.3) layers are identity here (inference/eval semantics).
    act = w1_ref.dtype  # bf16: MXU inputs and elementwise bias/ReLU; accumulation stays f32.

    def dense_relu(h, w, b):
        acc = jnp.dot(h, w, preferred_element_type=jnp.float32)
        return jnp.maximum(acc.astype(act) + b, 0)

    h = x_ref[...]                                                   # (tm, 4) bf16
    h = dense_relu(h, w1_ref[...], bcat_ref[:, 0:512])               # (tm, 512)
    h = dense_relu(h, w2_ref[...], bcat_ref[:, 512:768])             # (tm, 256)
    h = dense_relu(h, w3_ref[...], bcat_ref[:, 768:896])             # (tm, 128)
    h = dense_relu(h, w45_ref[:, 0:128], bcat_ref[:, 896:1024])      # (tm, 128), 64 real lanes
    h = dense_relu(h, w45_ref[:, 128:256], bcat_ref[:, 1024:1152])   # (tm, 128), 32 real lanes
    # Final layer: f32 bias add, width-1 output (no lane padding of the result).
    y = jnp.dot(h, w6_ref[...], preferred_element_type=jnp.float32) + b6_ref[...]
    o_ref[...] = y


def prepare_params(params, matmul_dtype=jnp.bfloat16):
    """Pad / cast / pack the 6 (W, b) pairs once. W_i is (in, out), b_i is (out,)."""
    (w1, b1), (w2, b2), (w3, b3), (w4, b4), (w5, b5), (w6, b6) = params
    cast = lambda a: a.astype(matmul_dtype)

    w1p = cast(w1)                                                       # (4, 512)
    w2p = cast(w2)                                                       # (512, 256)
    w3p = cast(w3)                                                       # (256, 128)
    # Hidden dims 64/32 are zero-padded to 128 lanes; zero padding stays exactly 0 through ReLU.
    w4p = jnp.zeros((128, 128), matmul_dtype).at[:, :64].set(cast(w4))   # (128, 64) -> (128, 128)
    w5p = jnp.zeros((128, 128), matmul_dtype).at[:64, :32].set(cast(w5)) # (64, 32)  -> (128, 128)
    w45 = jnp.concatenate([w4p, w5p], axis=1)                            # (128, 256)
    w6p = jnp.zeros((128, 1), matmul_dtype).at[:32, :].set(cast(w6))     # (32, 1)   -> (128, 1)

    # Biases b1..b5 packed lane-aligned: [512 | 256 | 128 | 128 (64 real) | 128 (32 real)].
    bcat = jnp.zeros((1, 1152), matmul_dtype)
    bcat = bcat.at[0, 0:512].set(cast(b1))
    bcat = bcat.at[0, 512:768].set(cast(b2))
    bcat = bcat.at[0, 768:896].set(cast(b3))
    bcat = bcat.at[0, 896:960].set(cast(b4))
    bcat = bcat.at[0, 1024:1056].set(cast(b5))
    b6p = b6.astype(jnp.float32).reshape(1, 1)

    return (w1p, w2p, w3p, w45, w6p, bcat, b6p)


@jax.jit
def sdr_predictor_pallas(x, prepared):
    """x: (N, 4) float32; prepared: output of prepare_params(). Returns (N, 1) float32."""
    w1p, w2p, w3p, w45, w6p, bcat, b6p = prepared
    N, F = x.shape
    assert F == LAYER_DIMS[0]

    # Batch tile: aim for exactly 2 grid steps (v7x has 2 TensorCores; amortizes per-step
    # overhead on single-TC chips), capped at 1536 rows to stay well inside scoped VMEM.
    tm = min(1536, _round_up(max(-(-N // 2), 8), 8))
    n_pad = _round_up(N, tm)
    grid = (n_pad // tm,)

    xb = x.astype(w1p.dtype)
    if n_pad != N:
        xb = jnp.pad(xb, ((0, n_pad - N), (0, 0)))  # cheap (n_pad, 4) batch pad only

    out = pl.pallas_call(
        _mlp_kernel,
        out_shape=jax.ShapeDtypeStruct((n_pad, 1), jnp.float32),
        grid_spec=pltpu.PrefetchScalarGridSpec(
            num_scalar_prefetch=0,
            grid=grid,
            in_specs=[
                pl.BlockSpec((tm, F), lambda i: (i, 0)),      # x: the only batch-streamed input
                pl.BlockSpec(w1p.shape, lambda i: (0, 0)),    # grid-invariant weights / biases
                pl.BlockSpec(w2p.shape, lambda i: (0, 0)),
                pl.BlockSpec(w3p.shape, lambda i: (0, 0)),
                pl.BlockSpec(w45.shape, lambda i: (0, 0)),
                pl.BlockSpec(w6p.shape, lambda i: (0, 0)),
                pl.BlockSpec(bcat.shape, lambda i: (0, 0)),
                pl.BlockSpec(b6p.shape, lambda i: (0, 0)),
            ],
            out_specs=pl.BlockSpec((tm, 1), lambda i: (i, 0)),
        ),
        compiler_params=pltpu.CompilerParams(
            dimension_semantics=("parallel",),
            vmem_limit_bytes=32 * 1024 * 1024,
        ),
    )(xb, w1p, w2p, w3p, w45, w6p, bcat, b6p)

    return out[:N]


def init_params(key):
    """Deterministic init mimicking PyTorch Linear default (Kaiming-uniform-ish)."""
    params = []
    for idx in range(len(LAYER_DIMS) - 1):
        fan_in, fan_out = LAYER_DIMS[idx], LAYER_DIMS[idx + 1]
        key, kw, kb = jax.random.split(key, 3)
        bound = 1.0 / jnp.sqrt(fan_in)
        w = jax.random.uniform(kw, (fan_in, fan_out), jnp.float32, -bound, bound)
        b = jax.random.uniform(kb, (fan_out,), jnp.float32, -bound, bound)
        params.append((w, b))
    return params


def sdr_predictor_ref(x, params):
    """Pure-JAX reference with the same math as the kernel (bf16 matmul/elementwise, f32 acc)."""
    h = x.astype(jnp.bfloat16)
    n = len(params)
    for li, (w, b) in enumerate(params):
        acc = jnp.dot(h, w.astype(jnp.bfloat16), preferred_element_type=jnp.float32)
        if li < n - 1:
            h = jnp.maximum(acc.astype(jnp.bfloat16) + b.astype(jnp.bfloat16), 0)
        else:
            h = acc + b.astype(jnp.float32)
    return h


if __name__ == "__main__":
    key = jax.random.PRNGKey(0)
    kx, kp = jax.random.split(key)

    N = 2581  # same row count as the original script (x = x[:2581]); not a multiple of the tile
    x = jax.random.normal(kx, (N, 4), jnp.float32)
    params = init_params(kp)
    prepared = prepare_params(params)

    out = jax.block_until_ready(sdr_predictor_pallas(x, prepared))
    assert out.shape == (N, 1)
    assert out.dtype == jnp.float32

    ref = sdr_predictor_ref(x, params)
    assert jnp.allclose(out, ref, atol=5e-3, rtol=5e-3), "mismatch vs pure-JAX reference"

    print("KERNEL_OK")
</pallas_src>

<mosaic_0001>
module attributes {stable_mosaic.version = 11 : i64} {
  func.func @_mlp_kernel(%arg0: i32, %arg1: memref<1296x4xbf16, #tpu.memory_space<vmem>>, %arg2: memref<4x512xbf16, #tpu.memory_space<vmem>>, %arg3: memref<512x256xbf16, #tpu.memory_space<vmem>>, %arg4: memref<256x128xbf16, #tpu.memory_space<vmem>>, %arg5: memref<128x256xbf16, #tpu.memory_space<vmem>>, %arg6: memref<128x1xbf16, #tpu.memory_space<vmem>>, %arg7: memref<1x1152xbf16, #tpu.memory_space<vmem>>, %arg8: memref<1x1xf32, #tpu.memory_space<vmem>>, %arg9: memref<1296x1xf32, #tpu.memory_space<vmem>>) attributes {dimension_semantics = [#tpu.dimension_semantics<parallel>], iteration_bounds = array<i64: 2>, scalar_prefetch = 0 : i64, scratch_operands = 0 : i64, tpu.core_type = #tpu.core_type<tc>, window_params = [{transform_indices = @transform_0, window_bounds = array<i64: 1296, 4>}, {pipeline_mode = #tpu.pipeline_mode<synchronous>, transform_indices = @transform_1, window_bounds = array<i64: 4, 512>}, {pipeline_mode = #tpu.pipeline_mode<synchronous>, transform_indices = @transform_2, window_bounds = array<i64: 512, 256>}, {pipeline_mode = #tpu.pipeline_mode<synchronous>, transform_indices = @transform_3, window_bounds = array<i64: 256, 128>}, {pipeline_mode = #tpu.pipeline_mode<synchronous>, transform_indices = @transform_4, window_bounds = array<i64: 128, 256>}, {pipeline_mode = #tpu.pipeline_mode<synchronous>, transform_indices = @transform_5, window_bounds = array<i64: 128, 1>}, {pipeline_mode = #tpu.pipeline_mode<synchronous>, transform_indices = @transform_6, window_bounds = array<i64: 1, 1152>}, {pipeline_mode = #tpu.pipeline_mode<synchronous>, transform_indices = @transform_7, window_bounds = array<i64: 1, 1>}, {transform_indices = @transform_8, window_bounds = array<i64: 1296, 1>}]} {
    %c0 = arith.constant 0 : index
    %c0_0 = arith.constant 0 : index
    %0 = vector.load %arg1[%c0, %c0_0] : memref<1296x4xbf16, #tpu.memory_space<vmem>>, vector<1296x4xbf16>
    %c0_1 = arith.constant 0 : index
    %c0_2 = arith.constant 0 : index
    %1 = vector.load %arg2[%c0_1, %c0_2] : memref<4x512xbf16, #tpu.memory_space<vmem>>, vector<4x512xbf16>
    %c0_3 = arith.constant 0 : index
    %c0_4 = arith.constant 0 : index
    %2 = vector.load %arg7[%c0_3, %c0_4] : memref<1x1152xbf16, #tpu.memory_space<vmem>>, vector<1x512xbf16>
    %cst = arith.constant dense<0.000000e+00> : vector<1296x512xf32>
    %3 = tpu.matmul %0, %1, %cst {dimension_numbers = #tpu.dot_dimension_numbers<[1], [0], [0], [1], [0, 0, 1, 1], [], []>} : vector<1296x4xbf16>, vector<4x512xbf16>, vector<1296x512xf32> -> vector<1296x512xf32>
    %4 = arith.truncf %3 : vector<1296x512xf32> to vector<1296x512xbf16>
    %5 = vector.broadcast %2 : vector<1x512xbf16> to vector<1296x512xbf16>
    %6 = arith.addf %4, %5 : vector<1296x512xbf16>
    %cst_5 = arith.constant 0.000000e+00 : bf16
    %7 = vector.broadcast %cst_5 : bf16 to vector<1296x512xbf16>
    %8 = arith.maximumf %6, %7 : vector<1296x512xbf16>
    %c0_6 = arith.constant 0 : index
    %c0_7 = arith.constant 0 : index
    %9 = vector.load %arg3[%c0_6, %c0_7] : memref<512x256xbf16, #tpu.memory_space<vmem>>, vector<512x256xbf16>
    %c0_8 = arith.constant 0 : index
    %c512 = arith.constant 512 : index
    %10 = vector.load %arg7[%c0_8, %c512] : memref<1x1152xbf16, #tpu.memory_space<vmem>>, vector<1x256xbf16>
    %cst_9 = arith.constant dense<0.000000e+00> : vector<1296x256xf32>
    %11 = tpu.matmul %8, %9, %cst_9 {dimension_numbers = #tpu.dot_dimension_numbers<[1], [0], [0], [1], [0, 0, 1, 1], [], []>} : vector<1296x512xbf16>, vector<512x256xbf16>, vector<1296x256xf32> -> vector<1296x256xf32>
    %12 = arith.truncf %11 : vector<1296x256xf32> to vector<1296x256xbf16>
    %13 = vector.broadcast %10 : vector<1x256xbf16> to vector<1296x256xbf16>
    %14 = arith.addf %12, %13 : vector<1296x256xbf16>
    %cst_10 = arith.constant 0.000000e+00 : bf16
    %15 = vector.broadcast %cst_10 : bf16 to vector<1296x256xbf16>
    %16 = arith.maximumf %14, %15 : vector<1296x256xbf16>
    %c0_11 = arith.constant 0 : index
    %c0_12 = arith.constant 0 : index
    %17 = vector.load %arg4[%c0_11, %c0_12] : memref<256x128xbf16, #tpu.memory_space<vmem>>, vector<256x128xbf16>
    %c0_13 = arith.constant 0 : index
    %c768 = arith.constant 768 : index
    %18 = vector.load %arg7[%c0_13, %c768] : memref<1x1152xbf16, #tpu.memory_space<vmem>>, vector<1x128xbf16>
    %cst_14 = arith.constant dense<0.000000e+00> : vector<1296x128xf32>
    %19 = tpu.matmul %16, %17, %cst_14 {dimension_numbers = #tpu.dot_dimension_numbers<[1], [0], [0], [1], [0, 0, 1, 1], [], []>} : vector<1296x256xbf16>, vector<256x128xbf16>, vector<1296x128xf32> -> vector<1296x128xf32>
    %20 = arith.truncf %19 : vector<1296x128xf32> to vector<1296x128xbf16>
    %21 = vector.broadcast %18 : vector<1x128xbf16> to vector<1296x128xbf16>
    %22 = arith.addf %20, %21 : vector<1296x128xbf16>
    %cst_15 = arith.constant 0.000000e+00 : bf16
    %23 = vector.broadcast %cst_15 : bf16 to vector<1296x128xbf16>
    %24 = arith.maximumf %22, %23 : vector<1296x128xbf16>
    %c0_16 = arith.constant 0 : index
    %c0_17 = arith.constant 0 : index
    %25 = vector.load %arg5[%c0_16, %c0_17] : memref<128x256xbf16, #tpu.memory_space<vmem>>, vector<128x128xbf16>
    %c0_18 = arith.constant 0 : index
    %c896 = arith.constant 896 : index
    %26 = vector.load %arg7[%c0_18, %c896] : memref<1x1152xbf16, #tpu.memory_space<vmem>>, vector<1x128xbf16>
    %cst_19 = arith.constant dense<0.000000e+00> : vector<1296x128xf32>
    %27 = tpu.matmul %24, %25, %cst_19 {dimension_numbers = #tpu.dot_dimension_numbers<[1], [0], [0], [1], [0, 0, 1, 1], [], []>} : vector<1296x128xbf16>, vector<128x128xbf16>, vector<1296x128xf32> -> vector<1296x128xf32>
    %28 = arith.truncf %27 : vector<1296x128xf32> to vector<1296x128xbf16>
    %29 = vector.broadcast %26 : vector<1x128xbf16> to vector<1296x128xbf16>
    %30 = arith.addf %28, %29 : vector<1296x128xbf16>
    %cst_20 = arith.constant 0.000000e+00 : bf16
    %31 = vector.broadcast %cst_20 : bf16 to vector<1296x128xbf16>
    %32 = arith.maximumf %30, %31 : vector<1296x128xbf16>
    %c0_21 = arith.constant 0 : index
    %c128 = arith.constant 128 : index
    %33 = vector.load %arg5[%c0_21, %c128] : memref<128x256xbf16, #tpu.memory_space<vmem>>, vector<128x128xbf16>
    %c0_22 = arith.constant 0 : index
    %c1024 = arith.constant 1024 : index
    %34 = vector.load %arg7[%c0_22, %c1024] : memref<1x1152xbf16, #tpu.memory_space<vmem>>, vector<1x128xbf16>
    %cst_23 = arith.constant dense<0.000000e+00> : vector<1296x128xf32>
    %35 = tpu.matmul %32, %33, %cst_23 {dimension_numbers = #tpu.dot_dimension_numbers<[1], [0], [0], [1], [0, 0, 1, 1], [], []>} : vector<1296x128xbf16>, vector<128x128xbf16>, vector<1296x128xf32> -> vector<1296x128xf32>
    %36 = arith.truncf %35 : vector<1296x128xf32> to vector<1296x128xbf16>
    %37 = vector.broadcast %34 : vector<1x128xbf16> to vector<1296x128xbf16>
    %38 = arith.addf %36, %37 : vector<1296x128xbf16>
    %cst_24 = arith.constant 0.000000e+00 : bf16
    %39 = vector.broadcast %cst_24 : bf16 to vector<1296x128xbf16>
    %40 = arith.maximumf %38, %39 : vector<1296x128xbf16>
    %c0_25 = arith.constant 0 : index
    %c0_26 = arith.constant 0 : index
    %41 = vector.load %arg6[%c0_25, %c0_26] : memref<128x1xbf16, #tpu.memory_space<vmem>>, vector<128x1xbf16>
    %cst_27 = arith.constant dense<0.000000e+00> : vector<1296x1xf32>
    %42 = tpu.matmul %40, %41, %cst_27 {dimension_numbers = #tpu.dot_dimension_numbers<[1], [0], [0], [1], [0, 0, 1, 1], [], []>} : vector<1296x128xbf16>, vector<128x1xbf16>, vector<1296x1xf32> -> vector<1296x1xf32>
    %c0_28 = arith.constant 0 : index
    %c0_29 = arith.constant 0 : index
    %43 = vector.load %arg8[%c0_28, %c0_29] : memref<1x1xf32, #tpu.memory_space<vmem>>, vector<1x1xf32>
    %44 = vector.broadcast %43 : vector<1x1xf32> to vector<1296x1xf32>
    %45 = arith.addf %42, %44 : vector<1296x1xf32>
    %c0_30 = arith.constant 0 : index
    %c0_31 = arith.constant 0 : index
    %46 = vector.load %arg9[%c0_30, %c0_31] : memref<1296x1xf32, #tpu.memory_space<vmem>>, vector<1296x1xf32>
    tpu.vector_store %arg9[%c0_30, %c0_31], %45 {strides = array<i32>} : memref<1296x1xf32, #tpu.memory_space<vmem>>, vector<1296x1xf32>,
    return
  }
  func.func @transform_0(%arg0: i32) -> (i32, i32) {
    %c0_i32 = arith.constant 0 : i32
    %c0_i32_0 = arith.constant 0 : i32
    return %arg0, %c0_i32 : i32, i32
  }
  func.func @transform_1(%arg0: i32) -> (i32, i32) {
    %c0_i32 = arith.constant 0 : i32
    %c0_i32_0 = arith.constant 0 : i32
    %c0_i32_1 = arith.constant 0 : i32
    return %c0_i32, %c0_i32_0 : i32, i32
  }
  func.func @transform_2(%arg0: i32) -> (i32, i32) {
    %c0_i32 = arith.constant 0 : i32
    %c0_i32_0 = arith.constant 0 : i32
    %c0_i32_1 = arith.constant 0 : i32
    return %c0_i32, %c0_i32_0 : i32, i32
  }
  func.func @transform_3(%arg0: i32) -> (i32, i32) {
    %c0_i32 = arith.constant 0 : i32
    %c0_i32_0 = arith.constant 0 : i32
    %c0_i32_1 = arith.constant 0 : i32
    return %c0_i32, %c0_i32_0 : i32, i32
  }
  func.func @transform_4(%arg0: i32) -> (i32, i32) {
    %c0_i32 = arith.constant 0 : i32
    %c0_i32_0 = arith.constant 0 : i32
    %c0_i32_1 = arith.constant 0 : i32
    return %c0_i32, %c0_i32_0 : i32, i32
  }
  func.func @transform_5(%arg0: i32) -> (i32, i32) {
    %c0_i32 = arith.constant 0 : i32
    %c0_i32_0 = arith.constant 0 : i32
    %c0_i32_1 = arith.constant 0 : i32
    return %c0_i32, %c0_i32_0 : i32, i32
  }
  func.func @transform_6(%arg0: i32) -> (i32, i32) {
    %c0_i32 = arith.constant 0 : i32
    %c0_i32_0 = arith.constant 0 : i32
    %c0_i32_1 = arith.constant 0 : i32
    return %c0_i32, %c0_i32_0 : i32, i32
  }
  func.func @transform_7(%arg0: i32) -> (i32, i32) {
    %c0_i32 = arith.constant 0 : i32
    %c0_i32_0 = arith.constant 0 : i32
    %c0_i32_1 = arith.constant 0 : i32
    return %c0_i32, %c0_i32_0 : i32, i32
  }
  func.func @transform_8(%arg0: i32) -> (i32, i32) {
    %c0_i32 = arith.constant 0 : i32
    %c0_i32_0 = arith.constant 0 : i32
    return %arg0, %c0_i32 : i32, i32
  }
}

</mosaic_0001>

<llo_original>
// kernel: sdr_predictor_pallas.1
$region0: #{sdr_predictor_pallas.1}
  #allocation0 [shape = 'u32[]', space=smem, size = 0x4, offset = 0x4, fixed_abs, tag = 'smem constant byte address 0x4 - core index']
  #allocation1 [shape = 'u32[144,128]{1,0:T(1,128)}', space=vmem, size = 0x12000, scoped, tag = 'internal scratch']
  #allocation2 [shape = 'f32[1,1]{1,0:T(1,128)S(1)}', space=vmem, size = 0x200, scoped, tag = 'scoped memory for sdr_predictor_pallas.1']
  %s0 = inlined_call_operand.vmem [shape: bf16[2592,4], index: 0, kind: input, shape index: {}]
  %s1 = inlined_call_operand.vmem [shape: bf16[4,512], index: 1, kind: input, shape index: {}]
  %s2 = inlined_call_operand.vmem [shape: bf16[512,256], index: 2, kind: input, shape index: {}]
  %s3 = inlined_call_operand.vmem [shape: bf16[256,128], index: 3, kind: input, shape index: {}]
  %s4 = inlined_call_operand.vmem [shape: bf16[128,256], index: 4, kind: input, shape index: {}]
  %s5 = inlined_call_operand.vmem [shape: bf16[128,1], index: 5, kind: input, shape index: {}]
  %s6 = inlined_call_operand.vmem [shape: bf16[1,1152], index: 6, kind: input, shape index: {}]
  %s7 = inlined_call_operand.<no memory space> [shape: f32[1,1], index: 7, kind: input, shape index: {}]
  %s8 = inlined_call_operand.vmem [shape: f32[2592,1], index: 8, kind: output, shape index: {}]
  %s9 = sld [smem:[#allocation0]]
  $region65: #{sdr_predictor_pallas.1} parent=0
    _
  %s11 = ssub.s32 1, %s9
  %s12 = scalar_select 0, %s11, %s9
  %v13 = vstv %s7
  %14 = vst [vmem:[#allocation2] sm:$0x1] %v13
  loop: start=0, step=1, limit=4
  $region2: #{sdr_predictor_pallas.1} parent=0 // loop_pre_header
    _
  $region3: #{sdr_predictor_pallas.1} parent=0 // loop_header
    %s16 = sphi 0, %s20
    %p17 = scmp.ge.s32.totalorder %s16, 4
    %s26 = sphi 0, %s28
    %s29 = sphi 0, %s26
    %s30 = sphi 0, %s29
    %s46 = sphi 0, %s30
    %s50 = sphi 0, %s50
    %s52 = sphi 0, %s50
    %s53 = sphi 0, %s52
    %s67 = sphi 0, %s53
    %s71 = sphi 0, %s71
    %s73 = sphi 0, %s71
    %s74 = sphi 0, %s73
    %s88 = sphi 0, %s74
    %s92 = sphi 0, %s92
    %s94 = sphi 0, %s92
    %s95 = sphi 0, %s94
    %s109 = sphi 0, %s95
    %s113 = sphi 0, %s113
    %s115 = sphi 0, %s113
    %s116 = sphi 0, %s115
    %s130 = sphi 0, %s116
    %s134 = sphi 0, %s134
    %s136 = sphi 0, %s134
    %s137 = sphi 0, %s136
    %s151 = sphi 0, %s137
    %s155 = sphi 0, %s155
    %s157 = sphi 0, %s155
    %s158 = sphi 0, %s157
    %s172 = sphi 0, %s158
    %s176 = sphi 0, %s176
    %s178 = sphi 0, %s176
    %s179 = sphi 0, %s178
    %s193 = sphi 0, %s179
    %s199 = sphi 0, %s201
    %s202 = sphi 0, %s199
    %s203 = sphi 0, %s202
    %s219 = sphi 0, %s203
  $region4: #{sdr_predictor_pallas.1} parent=0 // loop_header_branch
    %19 = sbr.rel (%p17) target = $region8
  $region5: #{sdr_predictor_pallas.1} parent=0 // loop_body
    %s21 = ssub.s32 %s16, 1
    %s22 = ssub.s32 %s16, 2
    %s23 = sadd.s32 %s16, 1
    %s24 = ssub.s32 %s16, %s23
    %p25 = scmp.eq.s32.totalorder %s24, 0
    %s27 = sadd.s32 %s26, 1
    %s28 = scalar_select %p25, %s26, %s27
    %p31 = pneg %p25
    %p32 = scmp.eq.s32.totalorder %s16, 1
    %p33 = por %p31, %p32
    %p34 = scmp.ne.s32.totalorder %s26, %s29
    %p35 = scmp.eq.s32.totalorder %s16, 0
    %p36 = por %p34, %p35
    %p37 = scmp.ne.s32.totalorder %s26, %s29
    %p38 = scmp.eq.s32.totalorder %s21, 1
    %p39 = por %p37, %p38
    %p40 = scmp.ne.s32.totalorder %s29, %s30
    %p41 = scmp.eq.s32.totalorder %s21, 0
    %p42 = por %p40, %p41
    %p43 = scmp.ne.s32.totalorder %s29, %s30
    %p44 = scmp.eq.s32.totalorder %s22, 1
    %p45 = por %p43, %p44
    %p47 = scmp.ne.s32.totalorder %s30, %s46
    %p48 = scmp.eq.s32.totalorder %s22, 0
    %p49 = por %p47, %p48
    %s51 = sadd.s32 %s50, 1
    %p54 = scmp.eq.s32.totalorder %s16, 1
    %p55 = scmp.ne.s32.totalorder %s50, %s52
    %p56 = scmp.eq.s32.totalorder %s16, 0
    %p57 = por %p55, %p56
    %p58 = scmp.ne.s32.totalorder %s50, %s52
    %p59 = scmp.eq.s32.totalorder %s21, 1
    %p60 = por %p58, %p59
    %p61 = scmp.ne.s32.totalorder %s52, %s53
    %p62 = scmp.eq.s32.totalorder %s21, 0
    %p63 = por %p61, %p62
    %p64 = scmp.ne.s32.totalorder %s52, %s53
    %p65 = scmp.eq.s32.totalorder %s22, 1
    %p66 = por %p64, %p65
    %p68 = scmp.ne.s32.totalorder %s53, %s67
    %p69 = scmp.eq.s32.totalorder %s22, 0
    %p70 = por %p68, %p69
    %s72 = sadd.s32 %s71, 1
    %p75 = scmp.eq.s32.totalorder %s16, 1
    %p76 = scmp.ne.s32.totalorder %s71, %s73
    %p77 = scmp.eq.s32.totalorder %s16, 0
    %p78 = por %p76, %p77
    %p79 = scmp.ne.s32.totalorder %s71, %s73
    %p80 = scmp.eq.s32.totalorder %s21, 1
    %p81 = por %p79, %p80
    %p82 = scmp.ne.s32.totalorder %s73, %s74
    %p83 = scmp.eq.s32.totalorder %s21, 0
    %p84 = por %p82, %p83
    %p85 = scmp.ne.s32.totalorder %s73, %s74
    %p86 = scmp.eq.s32.totalorder %s22, 1
    %p87 = por %p85, %p86
    %p89 = scmp.ne.s32.totalorder %s74, %s88
    %p90 = scmp.eq.s32.totalorder %s22, 0
    %p91 = por %p89, %p90
    %s93 = sadd.s32 %s92, 1
    %p96 = scmp.eq.s32.totalorder %s16, 1
    %p97 = scmp.ne.s32.totalorder %s92, %s94
    %p98 = scmp.eq.s32.totalorder %s16, 0
    %p99 = por %p97, %p98
    %p100 = scmp.ne.s32.totalorder %s92, %s94
    %p101 = scmp.eq.s32.totalorder %s21, 1
    %p102 = por %p100, %p101
    %p103 = scmp.ne.s32.totalorder %s94, %s95
    %p104 = scmp.eq.s32.totalorder %s21, 0
    %p105 = por %p103, %p104
    %p106 = scmp.ne.s32.totalorder %s94, %s95
    %p107 = scmp.eq.s32.totalorder %s22, 1
    %p108 = por %p106, %p107
    %p110 = scmp.ne.s32.totalorder %s95, %s109
    %p111 = scmp.eq.s32.totalorder %s22, 0
    %p112 = por %p110, %p111
    %s114 = sadd.s32 %s113, 1
    %p117 = scmp.eq.s32.totalorder %s16, 1
    %p118 = scmp.ne.s32.totalorder %s113, %s115
    %p119 = scmp.eq.s32.totalorder %s16, 0
    %p120 = por %p118, %p119
    %p121 = scmp.ne.s32.totalorder %s113, %s115
    %p122 = scmp.eq.s32.totalorder %s21, 1
    %p123 = por %p121, %p122
    %p124 = scmp.ne.s32.totalorder %s115, %s116
    %p125 = scmp.eq.s32.totalorder %s21, 0
    %p126 = por %p124, %p125
    %p127 = scmp.ne.s32.totalorder %s115, %s116
    %p128 = scmp.eq.s32.totalorder %s22, 1
    %p129 = por %p127, %p128
    %p131 = scmp.ne.s32.totalorder %s116, %s130
    %p132 = scmp.eq.s32.totalorder %s22, 0
    %p133 = por %p131, %p132
    %s135 = sadd.s32 %s134, 1
    %p138 = scmp.eq.s32.totalorder %s16, 1
    %p139 = scmp.ne.s32.totalorder %s134, %s136
    %p140 = scmp.eq.s32.totalorder %s16, 0
    %p141 = por %p139, %p140
    %p142 = scmp.ne.s32.totalorder %s134, %s136
    %p143 = scmp.eq.s32.totalorder %s21, 1
    %p144 = por %p142, %p143
    %p145 = scmp.ne.s32.totalorder %s136, %s137
    %p146 = scmp.eq.s32.totalorder %s21, 0
    %p147 = por %p145, %p146
    %p148 = scmp.ne.s32.totalorder %s136, %s137
    %p149 = scmp.eq.s32.totalorder %s22, 1
    %p150 = por %p148, %p149
    %p152 = scmp.ne.s32.totalorder %s137, %s151
    %p153 = scmp.eq.s32.totalorder %s22, 0
    %p154 = por %p152, %p153
    %s156 = sadd.s32 %s155, 1
    %p159 = scmp.eq.s32.totalorder %s16, 1
    %p160 = scmp.ne.s32.totalorder %s155, %s157
    %p161 = scmp.eq.s32.totalorder %s16, 0
    %p162 = por %p160, %p161
    %p163 = scmp.ne.s32.totalorder %s155, %s157
    %p164 = scmp.eq.s32.totalorder %s21, 1
    %p165 = por %p163, %p164
    %p166 = scmp.ne.s32.totalorder %s157, %s158
    %p167 = scmp.eq.s32.totalorder %s21, 0
    %p168 = por %p166, %p167
    %p169 = scmp.ne.s32.totalorder %s157, %s158
    %p170 = scmp.eq.s32.totalorder %s22, 1
    %p171 = por %p169, %p170
    %p173 = scmp.ne.s32.totalorder %s158, %s172
    %p174 = scmp.eq.s32.totalorder %s22, 0
    %p175 = por %p173, %p174
    %s177 = sadd.s32 %s176, 1
    %p180 = scmp.eq.s32.totalorder %s16, 1
    %p181 = scmp.ne.s32.totalorder %s176, %s178
    %p182 = scmp.eq.s32.totalorder %s16, 0
    %p183 = por %p181, %p182
    %p184 = scmp.ne.s32.totalorder %s176, %s178
    %p185 = scmp.eq.s32.totalorder %s21, 1
    %p186 = por %p184, %p185
    %p187 = scmp.ne.s32.totalorder %s178, %s179
    %p188 = scmp.eq.s32.totalorder %s21, 0
    %p189 = por %p187, %p188
    %p190 = scmp.ne.s32.totalorder %s178, %s179
    %p191 = scmp.eq.s32.totalorder %s22, 1
    %p192 = por %p190, %p191
    %p194 = scmp.ne.s32.totalorder %s179, %s193
    %p195 = scmp.eq.s32.totalorder %s22, 0
    %p196 = por %p194, %p195
    %s197 = ssub.s32 %s16, %s23
    %p198 = scmp.eq.s32.totalorder %s197, 0
    %s200 = sadd.s32 %s199, 1
    %s201 = scalar_select %p198, %s199, %s200
    %p204 = pneg %p198
    %p205 = scmp.eq.s32.totalorder %s16, 1
    %p206 = por %p204, %p205
    %p207 = scmp.ne.s32.totalorder %s199, %s202
    %p208 = scmp.eq.s32.totalorder %s16, 0
    %p209 = por %p207, %p208
    %p210 = scmp.ne.s32.totalorder %s199, %s202
    %p211 = scmp.eq.s32.totalorder %s21, 1
    %p212 = por %p210, %p211
    %p213 = scmp.ne.s32.totalorder %s202, %s203
    %p214 = scmp.eq.s32.totalorder %s21, 0
    %p215 = por %p213, %p214
    %p216 = scmp.ne.s32.totalorder %s202, %s203
    %p217 = scmp.eq.s32.totalorder %s22, 1
    %p218 = por %p216, %p217
    %p220 = scmp.ne.s32.totalorder %s203, %s219
    %p221 = scmp.eq.s32.totalorder %s22, 0
    %p222 = por %p220, %p221
    %p223 = scmp.le.s32.totalorder 1, %s16
    %p224 = scmp.lt.s32.totalorder %s16, 3
    %p225 = pnand %p223, %p224
    %p226 = pneg %p225
    // Predicated region
    $region9: #{sdr_predictor_pallas.1} parent=5 // pred_check
      _
    $region10: #{sdr_predictor_pallas.1} parent=5 // pred_check_branch
      %228 = sbr.rel (%p225) target = $region12
    $region11: #{sdr_predictor_pallas.1} parent=5 // pred_region
      %s229 = ssub.s32 %s16, 1
      // Predicated region
      $region13: #{sdr_predictor_pallas.1} parent=11 // pred_check
        %p230 = pneg %p63
      $region14: #{sdr_predictor_pallas.1} parent=11 // pred_check_branch
        %232 = sbr.rel (%p230) target = $region16
      $region15: #{sdr_predictor_pallas.1} parent=11 // pred_region
        _
      $region16: #{sdr_predictor_pallas.1} parent=11 // pred_fallthru
        _
      // Predicated region
      $region17: #{sdr_predictor_pallas.1} parent=11 // pred_check
        %p233 = pneg %p84
      $region18: #{sdr_predictor_pallas.1} parent=11 // pred_check_branch
        %235 = sbr.rel (%p233) target = $region20
      $region19: #{sdr_predictor_pallas.1} parent=11 // pred_region
        _
      $region20: #{sdr_predictor_pallas.1} parent=11 // pred_fallthru
        _
      // Predicated region
      $region21: #{sdr_predictor_pallas.1} parent=11 // pred_check
        %p236 = pneg %p105
      $region22: #{sdr_predictor_pallas.1} parent=11 // pred_check_branch
        %238 = sbr.rel (%p236) target = $region24
      $region23: #{sdr_predictor_pallas.1} parent=11 // pred_region
        _
      $region24: #{sdr_predictor_pallas.1} parent=11 // pred_fallthru
        _
      // Predicated region
      $region25: #{sdr_predictor_pallas.1} parent=11 // pred_check
        %p239 = pneg %p126
      $region26: #{sdr_predictor_pallas.1} parent=11 // pred_check_branch
        %241 = sbr.rel (%p239) target = $region28
      $region27: #{sdr_predictor_pallas.1} parent=11 // pred_region
        _
      $region28: #{sdr_predictor_pallas.1} parent=11 // pred_fallthru
        _
      // Predicated region
      $region29: #{sdr_predictor_pallas.1} parent=11 // pred_check
        %p242 = pneg %p147
      $region30: #{sdr_predictor_pallas.1} parent=11 // pred_check_branch
        %244 = sbr.rel (%p242) target = $region32
      $region31: #{sdr_predictor_pallas.1} parent=11 // pred_region
        _
      $region32: #{sdr_predictor_pallas.1} parent=11 // pred_fallthru
        _
      // Predicated region
      $region33: #{sdr_predictor_pallas.1} parent=11 // pred_check
        %p245 = pneg %p168
      $region34: #{sdr_predictor_pallas.1} parent=11 // pred_check_branch
        %247 = sbr.rel (%p245) target = $region36
      $region35: #{sdr_predictor_pallas.1} parent=11 // pred_region
        _
      $region36: #{sdr_predictor_pallas.1} parent=11 // pred_fallthru
        _
      // Predicated region
      $region37: #{sdr_predictor_pallas.1} parent=11 // pred_check
        %p248 = pneg %p189
      $region38: #{sdr_predictor_pallas.1} parent=11 // pred_check_branch
        %250 = sbr.rel (%p248) target = $region40
      $region39: #{sdr_predictor_pallas.1} parent=11 // pred_region
        _
      $region40: #{sdr_predictor_pallas.1} parent=11 // pred_fallthru
        _
    $region12: #{sdr_predictor_pallas.1} parent=5 // pred_fallthru
      _
    %p251 = scmp.lt.s32.totalorder %s16, 2
    // Predicated region
    $region41: #{sdr_predictor_pallas.1} parent=5 // pred_check
      %p252 = pneg %p251
    $region42: #{sdr_predictor_pallas.1} parent=5 // pred_check_branch
      %254 = sbr.rel (%p252) target = $region44
    $region43: #{sdr_predictor_pallas.1} parent=5 // pred_region
      // Predicated region
      $region45: #{sdr_predictor_pallas.1} parent=43 // pred_check
        %p255 = pneg %p36
      $region46: #{sdr_predictor_pallas.1} parent=43 // pred_check_branch
        %257 = sbr.rel (%p255) target = $region48
      $region47: #{sdr_predictor_pallas.1} parent=43 // pred_region
        %s258 = smul.u32 162, %s16
        %p259 = scmp.lt.s32.totalorder %s258, 323
        %s260 = scalar_select %p259, %s258, 323
        %s261 = smul.addr %s260, 4
        %s262 = scalar_lea.vmem %s0, %s261
        %s263 = smul.u32 162, %s16
      $region48: #{sdr_predictor_pallas.1} parent=43 // pred_fallthru
        _
    $region44: #{sdr_predictor_pallas.1} parent=5 // pred_fallthru
      _
    %p264 = scmp.le.s32.totalorder 1, %s16
    %p265 = scmp.lt.s32.totalorder %s16, 3
    %p266 = pnand %p264, %p265
    %p267 = pneg %p266
    // Predicated region
    $region49: #{sdr_predictor_pallas.1} parent=5 // pred_check
      _
    $region50: #{sdr_predictor_pallas.1} parent=5 // pred_check_branch
      %269 = sbr.rel (%p266) target = $region52
    $region51: #{sdr_predictor_pallas.1} parent=5 // pred_region
      %s270 = ssub.s32 %s16, 1
      %s271 = smul.u32 162, %s21
      %p272 = scmp.lt.s32.totalorder %s271, 323
      %s273 = scalar_select %p272, %s271, 323
      %s274 = smul.addr %s273, 4
      %s275 = scalar_lea.vmem %s0, %s274
      %p276 = pneg %p42
      %p277 = pneg %p39
      %p278 = pneg %p63
      %p279 = pneg %p60
      %p280 = pneg %p84
      %p281 = pneg %p81
      %p282 = pneg %p105
      %p283 = pneg %p102
      %p284 = pneg %p126
      %p285 = pneg %p123
      %p286 = pneg %p147
      %p287 = pneg %p144
      %p288 = pneg %p168
      %p289 = pneg %p165
      %p290 = pneg %p189
      %p291 = pneg %p186
      %p292 = pneg %p215
      %p293 = pneg %p212
      %s294 = smul.u32 162, %s21
      %p295 = scmp.lt.s32.totalorder %s294, 323
      %s296 = scalar_select %p295, %s294, 323
      %s297 = smul.addr %s296, 8
      %s298 = scalar_lea.vmem %s8, %s297
      %s299 = smul.u32 162, %s21
      %p300 = scmp.lt.s32.totalorder %s299, 323
      %s301 = scalar_select %p300, %s299, 323
      %s302 = smul.addr %s301, 4
      %s303 = scalar_lea.vmem %s0, %s302
      %s304 = smul.u32 162, %s21
      %s305 = smul.u32 162, %s21
      %p306 = scmp.lt.s32.totalorder %s305, 323
      %s307 = scalar_select %p306, %s305, 323
      %s308 = smul.addr %s307, 8
      %s309 = scalar_lea.vmem %s8, %s308
      %s310 = smul.u32 162, %s21
      %v312 = vld [vmem:[%s303] sm:$0xf]
      %v313 = vld [vmem:[%s303 + $0x4] sm:$0xf]
      %v314 = vld [vmem:[%s303 + $0x8] sm:$0xf]
      %v315 = vld [vmem:[%s303 + $0xc] sm:$0xf]
      %v316 = vld [vmem:[%s303 + $0x10] sm:$0xf]
      %v317 = vld [vmem:[%s303 + $0x14] sm:$0xf]
      %v318 = vld [vmem:[%s303 + $0x18] sm:$0xf]
      %v319 = vld [vmem:[%s303 + $0x1c] sm:$0xf]
      %v320 = vld [vmem:[%s303 + $0x20] sm:$0xf]
      %v321 = vld [vmem:[%s303 + $0x24] sm:$0xf]
      %v322 = vld [vmem:[%s303 + $0x28] sm:$0xf]
      %v323 = vld [vmem:[%s303 + $0x2c] sm:$0xf]
      %v324 = vld [vmem:[%s303 + $0x30] sm:$0xf]
      %v325 = vld [vmem:[%s303 + $0x34] sm:$0xf]
      %v326 = vld [vmem:[%s303 + $0x38] sm:$0xf]
      %v327 = vld [vmem:[%s303 + $0x3c] sm:$0xf]
      %v328 = vld [vmem:[%s303 + $0x40] sm:$0xf]
      %v329 = vld [vmem:[%s303 + $0x44] sm:$0xf]
      %v330 = vld [vmem:[%s303 + $0x48] sm:$0xf]
      %v331 = vld [vmem:[%s303 + $0x4c] sm:$0xf]
      %v332 = vld [vmem:[%s303 + $0x50] sm:$0xf]
      %v333 = vld [vmem:[%s303 + $0x54] sm:$0xf]
      %v334 = vld [vmem:[%s303 + $0x58] sm:$0xf]
      %v335 = vld [vmem:[%s303 + $0x5c] sm:$0xf]
      %v336 = vld [vmem:[%s303 + $0x60] sm:$0xf]
      %v337 = vld [vmem:[%s303 + $0x64] sm:$0xf]
      %v338 = vld [vmem:[%s303 + $0x68] sm:$0xf]
      %v339 = vld [vmem:[%s303 + $0x6c] sm:$0xf]
      %v340 = vld [vmem:[%s303 + $0x70] sm:$0xf]
      %v341 = vld [vmem:[%s303 + $0x74] sm:$0xf]
      %v342 = vld [vmem:[%s303 + $0x78] sm:$0xf]
      %v343 = vld [vmem:[%s303 + $0x7c] sm:$0xf]
      %v344 = vld [vmem:[%s303 + $0x80] sm:$0xf]
      %v345 = vld [vmem:[%s303 + $0x84] sm:$0xf]
      %v346 = vld [vmem:[%s303 + $0x88] sm:$0xf]
      %v347 = vld [vmem:[%s303 + $0x8c] sm:$0xf]
      %v348 = vld [vmem:[%s303 + $0x90] sm:$0xf]
      %v349 = vld [vmem:[%s303 + $0x94] sm:$0xf]
      %v350 = vld [vmem:[%s303 + $0x98] sm:$0xf]
      %v351 = vld [vmem:[%s303 + $0x9c] sm:$0xf]
      %v352 = vld [vmem:[%s303 + $0xa0] sm:$0xf]
      %v353 = vld [vmem:[%s303 + $0xa4] sm:$0xf]
      %v354 = vld [vmem:[%s303 + $0xa8] sm:$0xf]
      %v355 = vld [vmem:[%s303 + $0xac] sm:$0xf]
      %v356 = vld [vmem:[%s303 + $0xb0] sm:$0xf]
      %v357 = vld [vmem:[%s303 + $0xb4] sm:$0xf]
      %v358 = vld [vmem:[%s303 + $0xb8] sm:$0xf]
      %v359 = vld [vmem:[%s303 + $0xbc] sm:$0xf]
      %v360 = vld [vmem:[%s303 + $0xc0] sm:$0xf]
      %v361 = vld [vmem:[%s303 + $0xc4] sm:$0xf]
      %v362 = vld [vmem:[%s303 + $0xc8] sm:$0xf]
      %v363 = vld [vmem:[%s303 + $0xcc] sm:$0xf]
      %v364 = vld [vmem:[%s303 + $0xd0] sm:$0xf]
      %v365 = vld [vmem:[%s303 + $0xd4] sm:$0xf]
      %v366 = vld [vmem:[%s303 + $0xd8] sm:$0xf]
      %v367 = vld [vmem:[%s303 + $0xdc] sm:$0xf]
      %v368 = vld [vmem:[%s303 + $0xe0] sm:$0xf]
      %v369 = vld [vmem:[%s303 + $0xe4] sm:$0xf]
      %v370 = vld [vmem:[%s303 + $0xe8] sm:$0xf]
      %v371 = vld [vmem:[%s303 + $0xec] sm:$0xf]
      %v372 = vld [vmem:[%s303 + $0xf0] sm:$0xf]
      %v373 = vld [vmem:[%s303 + $0xf4] sm:$0xf]
      %v374 = vld [vmem:[%s303 + $0xf8] sm:$0xf]
      %v375 = vld [vmem:[%s303 + $0xfc] sm:$0xf]
      %v376 = vld [vmem:[%s303 + $0x100] sm:$0xf]
      %v377 = vld [vmem:[%s303 + $0x104] sm:$0xf]
      %v378 = vld [vmem:[%s303 + $0x108] sm:$0xf]
      %v379 = vld [vmem:[%s303 + $0x10c] sm:$0xf]
      %v380 = vld [vmem:[%s303 + $0x110] sm:$0xf]
      %v381 = vld [vmem:[%s303 + $0x114] sm:$0xf]
      %v382 = vld [vmem:[%s303 + $0x118] sm:$0xf]
      %v383 = vld [vmem:[%s303 + $0x11c] sm:$0xf]
      %v384 = vld [vmem:[%s303 + $0x120] sm:$0xf]
      %v385 = vld [vmem:[%s303 + $0x124] sm:$0xf]
      %v386 = vld [vmem:[%s303 + $0x128] sm:$0xf]
      %v387 = vld [vmem:[%s303 + $0x12c] sm:$0xf]
      %v388 = vld [vmem:[%s303 + $0x130] sm:$0xf]
      %v389 = vld [vmem:[%s303 + $0x134] sm:$0xf]
      %v390 = vld [vmem:[%s303 + $0x138] sm:$0xf]
      %v391 = vld [vmem:[%s303 + $0x13c] sm:$0xf]
      %v392 = vld [vmem:[%s303 + $0x140] sm:$0xf]
      %v393 = vld [vmem:[%s303 + $0x144] sm:$0xf]
      %v394 = vld [vmem:[%s303 + $0x148] sm:$0xf]
      %v395 = vld [vmem:[%s303 + $0x14c] sm:$0xf]
      %v396 = vld [vmem:[%s303 + $0x150] sm:$0xf]
      %v397 = vld [vmem:[%s303 + $0x154] sm:$0xf]
      %v398 = vld [vmem:[%s303 + $0x158] sm:$0xf]
      %v399 = vld [vmem:[%s303 + $0x15c] sm:$0xf]
      %v400 = vld [vmem:[%s303 + $0x160] sm:$0xf]
      %v401 = vld [vmem:[%s303 + $0x164] sm:$0xf]
      %v402 = vld [vmem:[%s303 + $0x168] sm:$0xf]
      %v403 = vld [vmem:[%s303 + $0x16c] sm:$0xf]
      %v404 = vld [vmem:[%s303 + $0x170] sm:$0xf]
      %v405 = vld [vmem:[%s303 + $0x174] sm:$0xf]
      %v406 = vld [vmem:[%s303 + $0x178] sm:$0xf]
      %v407 = vld [vmem:[%s303 + $0x17c] sm:$0xf]
      %v408 = vld [vmem:[%s303 + $0x180] sm:$0xf]
      %v409 = vld [vmem:[%s303 + $0x184] sm:$0xf]
      %v410 = vld [vmem:[%s303 + $0x188] sm:$0xf]
      %v411 = vld [vmem:[%s303 + $0x18c] sm:$0xf]
      %v412 = vld [vmem:[%s303 + $0x190] sm:$0xf]
      %v413 = vld [vmem:[%s303 + $0x194] sm:$0xf]
      %v414 = vld [vmem:[%s303 + $0x198] sm:$0xf]
      %v415 = vld [vmem:[%s303 + $0x19c] sm:$0xf]
      %v416 = vld [vmem:[%s303 + $0x1a0] sm:$0xf]
      %v417 = vld [vmem:[%s303 + $0x1a4] sm:$0xf]
      %v418 = vld [vmem:[%s303 + $0x1a8] sm:$0xf]
      %v419 = vld [vmem:[%s303 + $0x1ac] sm:$0xf]
      %v420 = vld [vmem:[%s303 + $0x1b0] sm:$0xf]
      %v421 = vld [vmem:[%s303 + $0x1b4] sm:$0xf]
      %v422 = vld [vmem:[%s303 + $0x1b8] sm:$0xf]
      %v423 = vld [vmem:[%s303 + $0x1bc] sm:$0xf]
      %v424 = vld [vmem:[%s303 + $0x1c0] sm:$0xf]
      %v425 = vld [vmem:[%s303 + $0x1c4] sm:$0xf]
      %v426 = vld [vmem:[%s303 + $0x1c8] sm:$0xf]
      %v427 = vld [vmem:[%s303 + $0x1cc] sm:$0xf]
      %v428 = vld [vmem:[%s303 + $0x1d0] sm:$0xf]
      %v429 = vld [vmem:[%s303 + $0x1d4] sm:$0xf]
      %v430 = vld [vmem:[%s303 + $0x1d8] sm:$0xf]
      %v431 = vld [vmem:[%s303 + $0x1dc] sm:$0xf]
      %v432 = vld [vmem:[%s303 + $0x1e0] sm:$0xf]
      %v433 = vld [vmem:[%s303 + $0x1e4] sm:$0xf]
      %v434 = vld [vmem:[%s303 + $0x1e8] sm:$0xf]
      %v435 = vld [vmem:[%s303 + $0x1ec] sm:$0xf]
      %v436 = vld [vmem:[%s303 + $0x1f0] sm:$0xf]
      %v437 = vld [vmem:[%s303 + $0x1f4] sm:$0xf]
      %v438 = vld [vmem:[%s303 + $0x1f8] sm:$0xf]
      %v439 = vld [vmem:[%s303 + $0x1fc] sm:$0xf]
      %v440 = vld [vmem:[%s303 + $0x200] sm:$0xf]
      %v441 = vld [vmem:[%s303 + $0x204] sm:$0xf]
      %v442 = vld [vmem:[%s303 + $0x208] sm:$0xf]
      %v443 = vld [vmem:[%s303 + $0x20c] sm:$0xf]
      %v444 = vld [vmem:[%s303 + $0x210] sm:$0xf]
      %v445 = vld [vmem:[%s303 + $0x214] sm:$0xf]
      %v446 = vld [vmem:[%s303 + $0x218] sm:$0xf]
      %v447 = vld [vmem:[%s303 + $0x21c] sm:$0xf]
      %v448 = vld [vmem:[%s303 + $0x220] sm:$0xf]
      %v449 = vld [vmem:[%s303 + $0x224] sm:$0xf]
      %v450 = vld [vmem:[%s303 + $0x228] sm:$0xf]
      %v451 = vld [vmem:[%s303 + $0x22c] sm:$0xf]
      %v452 = vld [vmem:[%s303 + $0x230] sm:$0xf]
      %v453 = vld [vmem:[%s303 + $0x234] sm:$0xf]
      %v454 = vld [vmem:[%s303 + $0x238] sm:$0xf]
      %v455 = vld [vmem:[%s303 + $0x23c] sm:$0xf]
      %v456 = vld [vmem:[%s303 + $0x240] sm:$0xf]
      %v457 = vld [vmem:[%s303 + $0x244] sm:$0xf]
      %v458 = vld [vmem:[%s303 + $0x248] sm:$0xf]
      %v459 = vld [vmem:[%s303 + $0x24c] sm:$0xf]
      %v460 = vld [vmem:[%s303 + $0x250] sm:$0xf]
      %v461 = vld [vmem:[%s303 + $0x254] sm:$0xf]
      %v462 = vld [vmem:[%s303 + $0x258] sm:$0xf]
      %v463 = vld [vmem:[%s303 + $0x25c] sm:$0xf]
      %v464 = vld [vmem:[%s303 + $0x260] sm:$0xf]
      %v465 = vld [vmem:[%s303 + $0x264] sm:$0xf]
      %v466 = vld [vmem:[%s303 + $0x268] sm:$0xf]
      %v467 = vld [vmem:[%s303 + $0x26c] sm:$0xf]
      %v468 = vld [vmem:[%s303 + $0x270] sm:$0xf]
      %v469 = vld [vmem:[%s303 + $0x274] sm:$0xf]
      %v470 = vld [vmem:[%s303 + $0x278] sm:$0xf]
      %v471 = vld [vmem:[%s303 + $0x27c] sm:$0xf]
      %v472 = vld [vmem:[%s303 + $0x280] sm:$0xf]
      %v473 = vld [vmem:[%s303 + $0x284] sm:$0xf]
      %v474 = vld [vmem:[%s1] sm:$0xff]
      %v475 = vld [vmem:[%s6] sm:$0xf]
      %v638 = vunpack.c.l.b16 %v312
      %v639 = vunpack.c.l.b16 %v313
      %v640 = vunpack.c.l.b16 %v314
      %v641 = vunpack.c.l.b16 %v315
      %v642 = vunpack.c.l.b16 %v316
      %v643 = vunpack.c.l.b16 %v317
      %v644 = vunpack.c.l.b16 %v318
      %v645 = vunpack.c.l.b16 %v319
      %v646 = vunpack.c.l.b16 %v320
      %v647 = vunpack.c.l.b16 %v321
      %v648 = vunpack.c.l.b16 %v322
      %v649 = vunpack.c.l.b16 %v323
      %v650 = vunpack.c.l.b16 %v324
      %v651 = vunpack.c.l.b16 %v325
      %v652 = vunpack.c.l.b16 %v326
      %v653 = vunpack.c.l.b16 %v327
      %v654 = vunpack.c.l.b16 %v328
      %v655 = vunpack.c.l.b16 %v329
      %v656 = vunpack.c.l.b16 %v330
      %v657 = vunpack.c.l.b16 %v331
      %v658 = vunpack.c.l.b16 %v332
      %v659 = vunpack.c.l.b16 %v333
      %v660 = vunpack.c.l.b16 %v334
      %v661 = vunpack.c.l.b16 %v335
      %v662 = vunpack.c.l.b16 %v336
      %v663 = vunpack.c.l.b16 %v337
      %v664 = vunpack.c.l.b16 %v338
      %v665 = vunpack.c.l.b16 %v339
      %v666 = vunpack.c.l.b16 %v340
      %v667 = vunpack.c.l.b16 %v341
      %v668 = vunpack.c.l.b16 %v342
      %v669 = vunpack.c.l.b16 %v343
      %v670 = vunpack.c.l.b16 %v344
      %v671 = vunpack.c.l.b16 %v345
      %v672 = vunpack.c.l.b16 %v346
      %v673 = vunpack.c.l.b16 %v347
      %v674 = vunpack.c.l.b16 %v348
      %v675 = vunpack.c.l.b16 %v349
      %v676 = vunpack.c.l.b16 %v350
      %v677 = vunpack.c.l.b16 %v351
      %v678 = vunpack.c.l.b16 %v352
      %v679 = vunpack.c.l.b16 %v353
      %v680 = vunpack.c.l.b16 %v354
      %v681 = vunpack.c.l.b16 %v355
      %v682 = vunpack.c.l.b16 %v356
      %v683 = vunpack.c.l.b16 %v357
      %v684 = vunpack.c.l.b16 %v358
      %v685 = vunpack.c.l.b16 %v359
      %v686 = vunpack.c.l.b16 %v360
      %v687 = vunpack.c.l.b16 %v361
      %v688 = vunpack.c.l.b16 %v362
      %v689 = vunpack.c.l.b16 %v363
      %v690 = vunpack.c.l.b16 %v364
      %v691 = vunpack.c.l.b16 %v365
      %v692 = vunpack.c.l.b16 %v366
      %v693 = vunpack.c.l.b16 %v367
      %v694 = vunpack.c.l.b16 %v368
      %v695 = vunpack.c.l.b16 %v369
      %v696 = vunpack.c.l.b16 %v370
      %v697 = vunpack.c.l.b16 %v371
      %v698 = vunpack.c.l.b16 %v372
      %v699 = vunpack.c.l.b16 %v373
      %v700 = vunpack.c.l.b16 %v374
      %v701 = vunpack.c.l.b16 %v375
      %v702 = vunpack.c.l.b16 %v376
      %v703 = vunpack.c.l.b16 %v377
      %v704 = vunpack.c.l.b16 %v378
      %v705 = vunpack.c.l.b16 %v379
      %v706 = vunpack.c.l.b16 %v380
      %v707 = vunpack.c.l.b16 %v381
      %v708 = vunpack.c.l.b16 %v382
      %v709 = vunpack.c.l.b16 %v383
      %v710 = vunpack.c.l.b16 %v384
      %v711 = vunpack.c.l.b16 %v385
      %v712 = vunpack.c.l.b16 %v386
      %v713 = vunpack.c.l.b16 %v387
      %v714 = vunpack.c.l.b16 %v388
      %v715 = vunpack.c.l.b16 %v389
      %v716 = vunpack.c.l.b16 %v390
      %v717 = vunpack.c.l.b16 %v391
      %v718 = vunpack.c.l.b16 %v392
      %v719 = vunpack.c.l.b16 %v393
      %v720 = vunpack.c.l.b16 %v394
      %v721 = vunpack.c.l.b16 %v395
      %v722 = vunpack.c.l.b16 %v396
      %v723 = vunpack.c.l.b16 %v397
      %v724 = vunpack.c.l.b16 %v398
      %v725 = vunpack.c.l.b16 %v399
      %v726 = vunpack.c.l.b16 %v400
      %v727 = vunpack.c.l.b16 %v401
      %v728 = vunpack.c.l.b16 %v402
      %v729 = vunpack.c.l.b16 %v403
      %v730 = vunpack.c.l.b16 %v404
      %v731 = vunpack.c.l.b16 %v405
      %v732 = vunpack.c.l.b16 %v406
      %v733 = vunpack.c.l.b16 %v407
      %v734 = vunpack.c.l.b16 %v408
      %v735 = vunpack.c.l.b16 %v409
      %v736 = vunpack.c.l.b16 %v410
      %v737 = vunpack.c.l.b16 %v411
      %v738 = vunpack.c.l.b16 %v412
      %v739 = vunpack.c.l.b16 %v413
      %v740 = vunpack.c.l.b16 %v414
      %v741 = vunpack.c.l.b16 %v415
      %v742 = vunpack.c.l.b16 %v416
      %v743 = vunpack.c.l.b16 %v417
      %v744 = vunpack.c.l.b16 %v418
      %v745 = vunpack.c.l.b16 %v419
      %v746 = vunpack.c.l.b16 %v420
      %v747 = vunpack.c.l.b16 %v421
      %v748 = vunpack.c.l.b16 %v422
      %v749 = vunpack.c.l.b16 %v423
      %v750 = vunpack.c.l.b16 %v424
      %v751 = vunpack.c.l.b16 %v425
      %v752 = vunpack.c.l.b16 %v426
      %v753 = vunpack.c.l.b16 %v427
      %v754 = vunpack.c.l.b16 %v428
      %v755 = vunpack.c.l.b16 %v429
      %v756 = vunpack.c.l.b16 %v430
      %v757 = vunpack.c.l.b16 %v431
      %v758 = vunpack.c.l.b16 %v432
      %v759 = vunpack.c.l.b16 %v433
      %v760 = vunpack.c.l.b16 %v434
      %v761 = vunpack.c.l.b16 %v435
      %v762 = vunpack.c.l.b16 %v436
      %v763 = vunpack.c.l.b16 %v437
      %v764 = vunpack.c.l.b16 %v438
      %v765 = vunpack.c.l.b16 %v439
      %v766 = vunpack.c.l.b16 %v440
      %v767 = vunpack.c.l.b16 %v441
      %v768 = vunpack.c.l.b16 %v442
      %v769 = vunpack.c.l.b16 %v443
      %v770 = vunpack.c.l.b16 %v444
      %v771 = vunpack.c.l.b16 %v445
      %v772 = vunpack.c.l.b16 %v446
      %v773 = vunpack.c.l.b16 %v447
      %v774 = vunpack.c.l.b16 %v448
      %v775 = vunpack.c.l.b16 %v449
      %v776 = vunpack.c.l.b16 %v450
      %v777 = vunpack.c.l.b16 %v451
      %v778 = vunpack.c.l.b16 %v452
      %v779 = vunpack.c.l.b16 %v453
      %v780 = vunpack.c.l.b16 %v454
      %v781 = vunpack.c.l.b16 %v455
      %v782 = vunpack.c.l.b16 %v456
      %v783 = vunpack.c.l.b16 %v457
      %v784 = vunpack.c.l.b16 %v458
      %v785 = vunpack.c.l.b16 %v459
      %v786 = vunpack.c.l.b16 %v460
      %v787 = vunpack.c.l.b16 %v461
      %v788 = vunpack.c.l.b16 %v462
      %v789 = vunpack.c.l.b16 %v463
      %v790 = vunpack.c.l.b16 %v464
      %v791 = vunpack.c.l.b16 %v465
      %v792 = vunpack.c.l.b16 %v466
      %v793 = vunpack.c.l.b16 %v467
      %v794 = vunpack.c.l.b16 %v468
      %v795 = vunpack.c.l.b16 %v469
      %v796 = vunpack.c.l.b16 %v470
      %v797 = vunpack.c.l.b16 %v471
      %v798 = vunpack.c.l.b16 %v472
      %v799 = vunpack.c.l.b16 %v473
      %v800 = vpack.c.b16 %v639, %v638
      %v801 = vpack.c.b16 %v641, %v640
      %v802 = vpack.c.b16 %v643, %v642
      %v803 = vpack.c.b16 %v645, %v644
      %v804 = vpack.c.b16 %v647, %v646
      %v805 = vpack.c.b16 %v649, %v648
      %v806 = vpack.c.b16 %v651, %v650
      %v807 = vpack.c.b16 %v653, %v652
      %v808 = vpack.c.b16 %v655, %v654
      %v809 = vpack.c.b16 %v657, %v656
      %v810 = vpack.c.b16 %v659, %v658
      %v811 = vpack.c.b16 %v661, %v660
      %v812 = vpack.c.b16 %v663, %v662
      %v813 = vpack.c.b16 %v665, %v664
      %v814 = vpack.c.b16 %v667, %v666
      %v815 = vpack.c.b16 %v669, %v668
      %v816 = vpack.c.b16 %v671, %v670
      %v817 = vpack.c.b16 %v673, %v672
      %v818 = vpack.c.b16 %v675, %v674
      %v819 = vpack.c.b16 %v677, %v676
      %v820 = vpack.c.b16 %v679, %v678
      %v821 = vpack.c.b16 %v681, %v680
      %v822 = vpack.c.b16 %v683, %v682
      %v823 = vpack.c.b16 %v685, %v684
      %v824 = vpack.c.b16 %v687, %v686
      %v825 = vpack.c.b16 %v689, %v688
      %v826 = vpack.c.b16 %v691, %v690
      %v827 = vpack.c.b16 %v693, %v692
      %v828 = vpack.c.b16 %v695, %v694
      %v829 = vpack.c.b16 %v697, %v696
      %v830 = vpack.c.b16 %v699, %v698
      %v831 = vpack.c.b16 %v701, %v700
      %v832 = vpack.c.b16 %v703, %v702
      %v833 = vpack.c.b16 %v705, %v704
      %v834 = vpack.c.b16 %v707, %v706
      %v835 = vpack.c.b16 %v709, %v708
      %v836 = vpack.c.b16 %v711, %v710
      %v837 = vpack.c.b16 %v713, %v712
      %v838 = vpack.c.b16 %v715, %v714
      %v839 = vpack.c.b16 %v717, %v716
      %v840 = vpack.c.b16 %v719, %v718
      %v841 = vpack.c.b16 %v721, %v720
      %v842 = vpack.c.b16 %v723, %v722
      %v843 = vpack.c.b16 %v725, %v724
      %v844 = vpack.c.b16 %v727, %v726
      %v845 = vpack.c.b16 %v729, %v728
      %v846 = vpack.c.b16 %v731, %v730
      %v847 = vpack.c.b16 %v733, %v732
      %v848 = vpack.c.b16 %v735, %v734
      %v849 = vpack.c.b16 %v737, %v736
      %v850 = vpack.c.b16 %v739, %v738
      %v851 = vpack.c.b16 %v741, %v740
      %v852 = vpack.c.b16 %v743, %v742
      %v853 = vpack.c.b16 %v745, %v744
      %v854 = vpack.c.b16 %v747, %v746
      %v855 = vpack.c.b16 %v749, %v748
      %v856 = vpack.c.b16 %v751, %v750
      %v857 = vpack.c.b16 %v753, %v752
      %v858 = vpack.c.b16 %v755, %v754
      %v859 = vpack.c.b16 %v757, %v756
      %v860 = vpack.c.b16 %v759, %v758
      %v861 = vpack.c.b16 %v761, %v760
      %v862 = vpack.c.b16 %v763, %v762
      %v863 = vpack.c.b16 %v765, %v764
      %v864 = vpack.c.b16 %v767, %v766
      %v865 = vpack.c.b16 %v769, %v768
      %v866 = vpack.c.b16 %v771, %v770
      %v867 = vpack.c.b16 %v773, %v772
      %v868 = vpack.c.b16 %v775, %v774
      %v869 = vpack.c.b16 %v777, %v776
      %v870 = vpack.c.b16 %v779, %v778
      %v871 = vpack.c.b16 %v781, %v780
      %v872 = vpack.c.b16 %v783, %v782
      %v873 = vpack.c.b16 %v785, %v784
      %v874 = vpack.c.b16 %v787, %v786
      %v875 = vpack.c.b16 %v789, %v788
      %v876 = vpack.c.b16 %v791, %v790
      %v877 = vpack.c.b16 %v793, %v792
      %v878 = vpack.c.b16 %v795, %v794
      %v879 = vpack.c.b16 %v797, %v796
      %v880 = vpack.c.b16 %v799, %v798
      %v882 = vcombine.high %v474, %v474
      %v884 = vunpack.c.l.s4 1983009808
      %v885 = vunpack.c.0.s8 %v884
      %v886 = vlaneseq
      %v887 = vshrl.u32 %v886, 7
      %v888 = vsub.s32 %v885, %v887
      %v889 = vrot.slane %v474, %v888
      %v891 = vunpack.c.l.s4 1983009808
      %v892 = vunpack.c.0.s8 %v891
      %v893 = vlaneseq
      %v894 = vshrl.u32 %v893, 7
      %v895 = vsub.s32 %v892, %v894
      %v896 = vrot.slane %v882, %v895
      %v897 = vcombine.high %v889, %v889
      %v898 = vcombine.high %v896, %v896
      %vm899 = vcmask 31744
      %v901 = vsel %vm899, %v800, 0
      %v904 = vsel %vm899, %v801, 0
      %v907 = vsel %vm899, %v802, 0
      %v910 = vsel %vm899, %v803, 0
      %v913 = vsel %vm899, %v804, 0
      %v916 = vsel %vm899, %v805, 0
      %v919 = vsel %vm899, %v806, 0
      %v922 = vsel %vm899, %v807, 0
      %v925 = vsel %vm899, %v808, 0
      %v928 = vsel %vm899, %v809, 0
      %v931 = vsel %vm899, %v810, 0
      %v934 = vsel %vm899, %v811, 0
      %v937 = vsel %vm899, %v812, 0
      %v940 = vsel %vm899, %v813, 0
      %v943 = vsel %vm899, %v814, 0
      %v946 = vsel %vm899, %v815, 0
      %v949 = vsel %vm899, %v816, 0
      %v952 = vsel %vm899, %v817, 0
      %v955 = vsel %vm899, %v818, 0
      %v958 = vsel %vm899, %v819, 0
      %v961 = vsel %vm899, %v820, 0
      %v964 = vsel %vm899, %v821, 0
      %v967 = vsel %vm899, %v822, 0
      %v970 = vsel %vm899, %v823, 0
      %v973 = vsel %vm899, %v824, 0
      %v976 = vsel %vm899, %v825, 0
      %v979 = vsel %vm899, %v826, 0
      %v982 = vsel %vm899, %v827, 0
      %v985 = vsel %vm899, %v828, 0
      %v988 = vsel %vm899, %v829, 0
      %v991 = vsel %vm899, %v830, 0
      %v994 = vsel %vm899, %v831, 0
      %v997 = vsel %vm899, %v832, 0
      %v1000 = vsel %vm899, %v833, 0
      %v1003 = vsel %vm899, %v834, 0
      %v1006 = vsel %vm899, %v835, 0
      %v1009 = vsel %vm899, %v836, 0
      %v1012 = vsel %vm899, %v837, 0
      %v1015 = vsel %vm899, %v838, 0
      %v1018 = vsel %vm899, %v839, 0
      %v1021 = vsel %vm899, %v840, 0
      %v1024 = vsel %vm899, %v841, 0
      %v1027 = vsel %vm899, %v842, 0
      %v1030 = vsel %vm899, %v843, 0
      %v1033 = vsel %vm899, %v844, 0
      %v1036 = vsel %vm899, %v845, 0
      %v1039 = vsel %vm899, %v846, 0
      %v1042 = vsel %vm899, %v847, 0
      %v1045 = vsel %vm899, %v848, 0
      %v1048 = vsel %vm899, %v849, 0
      %v1051 = vsel %vm899, %v850, 0
      %v1054 = vsel %vm899, %v851, 0
      %v1057 = vsel %vm899, %v852, 0
      %v1060 = vsel %vm899, %v853, 0
      %v1063 = vsel %vm899, %v854, 0
      %v1066 = vsel %vm899, %v855, 0
      %v1069 = vsel %vm899, %v856, 0
      %v1072 = vsel %vm899, %v857, 0
      %v1075 = vsel %vm899, %v858, 0
      %v1078 = vsel %vm899, %v859, 0
      %v1081 = vsel %vm899, %v860, 0
      %v1084 = vsel %vm899, %v861, 0
      %v1087 = vsel %vm899, %v862, 0
      %v1090 = vsel %vm899, %v863, 0
      %v1093 = vsel %vm899, %v864, 0
      %v1096 = vsel %vm899, %v865, 0
      %v1099 = vsel %vm899, %v866, 0
      %v1102 = vsel %vm899, %v867, 0
      %v1105 = vsel %vm899, %v868, 0
      %v1108 = vsel %vm899, %v869, 0
      %v1111 = vsel %vm899, %v870, 0
      %v1114 = vsel %vm899, %v871, 0
      %v1117 = vsel %vm899, %v872, 0
      %v1120 = vsel %vm899, %v873, 0
      %v1123 = vsel %vm899, %v874, 0
      %v1126 = vsel %vm899, %v875, 0
      %v1129 = vsel %vm899, %v876, 0
      %v1132 = vsel %vm899, %v877, 0
      %v1135 = vsel %vm899, %v878, 0
      %v1138 = vsel %vm899, %v879, 0
      %v1141 = vsel %vm899, %v880, 0
      %vm1143 = vcmask 1041408
      %v1145 = vsel %vm1143, %v889, 0
      %v1148 = vsel %vm1143, %v897, 0
      %v1151 = vsel %vm1143, %v896, 0
      %v1154 = vsel %vm1143, %v898, 0
      %1156 = vmatprep.subr.bf16.mxu0 %v1148
      %1157 = vmatpush1.bf16.msra.mxu0 %v1145
      %1158 = vmatprep.subr.bf16.mxu0 0
      %1159 = vmatpush1.bf16.msra.mxu0 0
      %1160 = vmatprep.subr.bf16.mxu0 0
      %1161 = vmatpush1.bf16.msra.mxu0 0
      %1162 = vmatprep.subr.bf16.mxu0 0
      %1163 = vmatpush1.bf16.msra.mxu0 0
      %1164 = vmatprep.subr.bf16.mxu0 0
      %1165 = vmatpush1.bf16.msra.mxu0 0
      %1166 = vmatprep.subr.bf16.mxu0 0
      %1167 = vmatpush1.bf16.msra.mxu0 0
      %1168 = vmatprep.subr.bf16.mxu0 0
      %1169 = vmatpush1.bf16.msra.mxu0 0
      %1170 = vmatprep.subr.bf16.mxu0 0
      %1171 = vmatpush1.bf16.msra.mxu0 0
      %1172 = vmatprep.subr.bf16.mxu0 0
      %1173 = vmatpush1.bf16.msra.mxu0 0
      %1174 = vmatprep.subr.bf16.mxu0 0
      %1175 = vmatpush1.bf16.msra.mxu0 0
      %1176 = vmatprep.subr.bf16.mxu0 0
      %1177 = vmatpush1.bf16.msra.mxu0 0
      %1178 = vmatprep.subr.bf16.mxu0 0
      %1179 = vmatpush1.bf16.msra.mxu0 0
      %1180 = vmatprep.subr.bf16.mxu0 0
      %1181 = vmatpush1.bf16.msra.mxu0 0
      %1182 = vmatprep.subr.bf16.mxu0 0
      %1183 = vmatpush1.bf16.msra.mxu0 0
      %1184 = vmatprep.subr.bf16.mxu0 0
      %1185 = vmatpush1.bf16.msra.mxu0 0
      %1186 = vmatprep.subr.bf16.mxu0 0
      %1187 = vmatpush1.bf16.msra.mxu0 0
      %1188 = vmatprep.mubr.bf16.mxu0 0
      %1189 = vmatmul.mubr.bf16.gmra.mrb[0].mxu0 %v901
      %v1190 = vpop.f32.mrb[0].mxu0
      %v1191 = vadd.f32 0.0, %v1190
      %v1192 = vpop.f32.mrb[0].mxu0
      %v1193 = vadd.f32 0.0, %v1192
      %v1194 = vpop.f32.mrb[0].mxu0
      %v1195 = vadd.f32 0.0, %v1194
      %v1196 = vpop.f32.mrb[0].mxu0
      %v1197 = vadd.f32 0.0, %v1196
      %1198 = vmatprep.mubr.bf16.mxu0 0
      %1199 = vmatmul.mubr.bf16.gmra.mrb[0].mxu0 %v904
      %v1200 = vpop.f32.mrb[0].mxu0
      %v1201 = vadd.f32 0.0, %v1200
      %v1202 = vpop.f32.mrb[0].mxu0
      %v1203 = vadd.f32 0.0, %v1202
      %v1204 = vpop.f32.mrb[0].mxu0
      %v1205 = vadd.f32 0.0, %v1204
      %v1206 = vpop.f32.mrb[0].mxu0
      %v1207 = vadd.f32 0.0, %v1206
      %1208 = vmatprep.mubr.bf16.mxu0 0
      %1209 = vmatmul.mubr.bf16.gmra.mrb[0].mxu0 %v907
      %v1210 = vpop.f32.mrb[0].mxu0
      %v1211 = vadd.f32 0.0, %v1210
      %v1212 = vpop.f32.mrb[0].mxu0
      %v1213 = vadd.f32 0.0, %v1212
      %v1214 = vpop.f32.mrb[0].mxu0
      %v1215 = vadd.f32 0.0, %v1214
      %v1216 = vpop.f32.mrb[0].mxu0
      %v1217 = vadd.f32 0.0, %v1216
      %1218 = vmatprep.mubr.bf16.mxu0 0
      %1219 = vmatmul.mubr.bf16.gmra.mrb[0].mxu0 %v910
      %v1220 = vpop.f32.mrb[0].mxu0
      %v1221 = vadd.f32 0.0, %v1220
      %v1222 = vpop.f32.mrb[0].mxu0
      %v1223 = vadd.f32 0.0, %v1222
      %v1224 = vpop.f32.mrb[0].mxu0
      %v1225 = vadd.f32 0.0, %v1224
      %v1226 = vpop.f32.mrb[0].mxu0
      %v1227 = vadd.f32 0.0, %v1226
      %1228 = vmatprep.mubr.bf16.mxu0 0
      %1229 = vmatmul.mubr.bf16.gmra.mrb[0].mxu0 %v913
      %v1230 = vpop.f32.mrb[0].mxu0
      %v1231 = vadd.f32 0.0, %v1230
      %v1232 = vpop.f32.mrb[0].mxu0
      %v1233 = vadd.f32 0.0, %v1232
      %v1234 = vpop.f32.mrb[0].mxu0
      %v1235 = vadd.f32 0.0, %v1234
      %v1236 = vpop.f32.mrb[0].mxu0
      %v1237 = vadd.f32 0.0, %v1236
      %1238 = vmatprep.mubr.bf16.mxu0 0
      %1239 = vmatmul.mubr.bf16.gmra.mrb[0].mxu0 %v916
      %v1240 = vpop.f32.mrb[0].mxu0
      %v1241 = vadd.f32 0.0, %v1240
      %v1242 = vpop.f32.mrb[0].mxu0
      %v1243 = vadd.f32 0.0, %v1242
      %v1244 = vpop.f32.mrb[0].mxu0
      %v1245 = vadd.f32 0.0, %v1244
      %v1246 = vpop.f32.mrb[0].mxu0
      %v1247 = vadd.f32 0.0, %v1246
      %1248 = vmatprep.mubr.bf16.mxu0 0
      %1249 = vmatmul.mubr.bf16.gmra.mrb[0].mxu0 %v919
      %v1250 = vpop.f32.mrb[0].mxu0
      %v1251 = vadd.f32 0.0, %v1250
      %v1252 = vpop.f32.mrb[0].mxu0
      %v1253 = vadd.f32 0.0, %v1252
      %v1254 = vpop.f32.mrb[0].mxu0
      %v1255 = vadd.f32 0.0, %v1254
      %v1256 = vpop.f32.mrb[0].mxu0
      %v1257 = vadd.f32 0.0, %v1256
      %1258 = vmatprep.mubr.bf16.mxu0 0
      %1259 = vmatmul.mubr.bf16.gmra.mrb[0].mxu0 %v922
      %v1260 = vpop.f32.mrb[0].mxu0
      %v1261 = vadd.f32 0.0, %v1260
      %v1262 = vpop.f32.mrb[0].mxu0
      %v1263 = vadd.f32 0.0, %v1262
      %v1264 = vpop.f32.mrb[0].mxu0
      %v1265 = vadd.f32 0.0, %v1264
      %v1266 = vpop.f32.mrb[0].mxu0
      %v1267 = vadd.f32 0.0, %v1266
      %1268 = vmatprep.mubr.bf16.mxu0 0
      %1269 = vmatmul.mubr.bf16.gmra.mrb[0].mxu0 %v925
      %v1270 = vpop.f32.mrb[0].mxu0
      %v1271 = vadd.f32 0.0, %v1270
      %v1272 = vpop.f32.mrb[0].mxu0
      %v1273 = vadd.f32 0.0, %v1272
      %v1274 = vpop.f32.mrb[0].mxu0
      %v1275 = vadd.f32 0.0, %v1274
      %v1276 = vpop.f32.mrb[0].mxu0
      %v1277 = vadd.f32 0.0, %v1276
      %1278 = vmatprep.mubr.bf16.mxu0 0
      %1279 = vmatmul.mubr.bf16.gmra.mrb[0].mxu0 %v928
      %v1280 = vpop.f32.mrb[0].mxu0
      %v1281 = vadd.f32 0.0, %v1280
      %v1282 = vpop.f32.mrb[0].mxu0
      %v1283 = vadd.f32 0.0, %v1282
      %v1284 = vpop.f32.mrb[0].mxu0
      %v1285 = vadd.f32 0.0, %v1284
      %v1286 = vpop.f32.mrb[0].mxu0
      %v1287 = vadd.f32 0.0, %v1286
      %1288 = vmatprep.mubr.bf16.mxu0 0
      %1289 = vmatmul.mubr.bf16.gmra.mrb[0].mxu0 %v931
      %v1290 = vpop.f32.mrb[0].mxu0
      %v1291 = vadd.f32 0.0, %v1290
      %v1292 = vpop.f32.mrb[0].mxu0
      %v1293 = vadd.f32 0.0, %v1292
      %v1294 = vpop.f32.mrb[0].mxu0
      %v1295 = vadd.f32 0.0, %v1294
      %v1296 = vpop.f32.mrb[0].mxu0
      %v1297 = vadd.f32 0.0, %v1296
      %1298 = vmatprep.mubr.bf16.mxu0 0
      %1299 = vmatmul.mubr.bf16.gmra.mrb[0].mxu0 %v934
      %v1300 = vpop.f32.mrb[0].mxu0
      %v1301 = vadd.f32 0.0, %v1300
      %v1302 = vpop.f32.mrb[0].mxu0
      %v1303 = vadd.f32 0.0, %v1302
      %v1304 = vpop.f32.mrb[0].mxu0
      %v1305 = vadd.f32 0.0, %v1304
      %v1306 = vpop.f32.mrb[0].mxu0
      %v1307 = vadd.f32 0.0, %v1306
      %1308 = vmatprep.mubr.bf16.mxu0 0
      %1309 = vmatmul.mubr.bf16.gmra.mrb[0].mxu0 %v937
      %v1310 = vpop.f32.mrb[0].mxu0
      %v1311 = vadd.f32 0.0, %v1310
      %v1312 = vpop.f32.mrb[0].mxu0
      %v1313 = vadd.f32 0.0, %v1312
      %v1314 = vpop.f32.mrb[0].mxu0
      %v1315 = vadd.f32 0.0, %v1314
      %v1316 = vpop.f32.mrb[0].mxu0
      %v1317 = vadd.f32 0.0, %v1316
      %1318 = vmatprep.mubr.bf16.mxu0 0
      %1319 = vmatmul.mubr.bf16.gmra.mrb[0].mxu0 %v940
      %v1320 = vpop.f32.mrb[0].mxu0
      %v1321 = vadd.f32 0.0, %v1320
      %v1322 = vpop.f32.mrb[0].mxu0
      %v1323 = vadd.f32 0.0, %v1322
      %v1324 = vpop.f32.mrb[0].mxu0
      %v1325 = vadd.f32 0.0, %v1324
      %v1326 = vpop.f32.mrb[0].mxu0
      %v1327 = vadd.f32 0.0, %v1326
      %1328 = vmatprep.mubr.bf16.mxu0 0
      %1329 = vmatmul.mubr.bf16.gmra.mrb[0].mxu0 %v943
      %v1330 = vpop.f32.mrb[0].mxu0
      %v1331 = vadd.f32 0.0, %v1330
      %v1332 = vpop.f32.mrb[0].mxu0
      %v1333 = vadd.f32 0.0, %v1332
      %v1334 = vpop.f32.mrb[0].mxu0
      %v1335 = vadd.f32 0.0, %v1334
      %v1336 = vpop.f32.mrb[0].mxu0
      %v1337 = vadd.f32 0.0, %v1336
      %1338 = vmatprep.mubr.bf16.mxu0 0
      %1339 = vmatmul.mubr.bf16.gmra.mrb[0].mxu0 %v946
      %v1340 = vpop.f32.mrb[0].mxu0
      %v1341 = vadd.f32 0.0, %v1340
      %v1342 = vpop.f32.mrb[0].mxu0
      %v1343 = vadd.f32 0.0, %v1342
      %v1344 = vpop.f32.mrb[0].mxu0
      %v1345 = vadd.f32 0.0, %v1344
      %v1346 = vpop.f32.mrb[0].mxu0
      %v1347 = vadd.f32 0.0, %v1346
      %1348 = vmatprep.mubr.bf16.mxu0 0
      %1349 = vmatmul.mubr.bf16.gmra.mrb[0].mxu0 %v949
      %v1350 = vpop.f32.mrb[0].mxu0
      %v1351 = vadd.f32 0.0, %v1350
      %v1352 = vpop.f32.mrb[0].mxu0
      %v1353 = vadd.f32 0.0, %v1352
      %v1354 = vpop.f32.mrb[0].mxu0
      %v1355 = vadd.f32 0.0, %v1354
      %v1356 = vpop.f32.mrb[0].mxu0
      %v1357 = vadd.f32 0.0, %v1356
      %1358 = vmatprep.mubr.bf16.mxu0 0
      %1359 = vmatmul.mubr.bf16.gmra.mrb[0].mxu0 %v952
      %v1360 = vpop.f32.mrb[0].mxu0
      %v1361 = vadd.f32 0.0, %v1360
      %v1362 = vpop.f32.mrb[0].mxu0
      %v1363 = vadd.f32 0.0, %v1362
      %v1364 = vpop.f32.mrb[0].mxu0
      %v1365 = vadd.f32 0.0, %v1364
      %v1366 = vpop.f32.mrb[0].mxu0
      %v1367 = vadd.f32 0.0, %v1366
      %1368 = vmatprep.mubr.bf16.mxu0 0
      %1369 = vmatmul.mubr.bf16.gmra.mrb[0].mxu0 %v955
      %v1370 = vpop.f32.mrb[0].mxu0
      %v1371 = vadd.f32 0.0, %v1370
      %v1372 = vpop.f32.mrb[0].mxu0
      %v1373 = vadd.f32 0.0, %v1372
      %v1374 = vpop.f32.mrb[0].mxu0
      %v1375 = vadd.f32 0.0, %v1374
      %v1376 = vpop.f32.mrb[0].mxu0
      %v1377 = vadd.f32 0.0, %v1376
      %1378 = vmatprep.mubr.bf16.mxu0 0
      %1379 = vmatmul.mubr.bf16.gmra.mrb[0].mxu0 %v958
      %v1380 = vpop.f32.mrb[0].mxu0
      %v1381 = vadd.f32 0.0, %v1380
      %v1382 = vpop.f32.mrb[0].mxu0
      %v1383 = vadd.f32 0.0, %v1382
      %v1384 = vpop.f32.mrb[0].mxu0
      %v1385 = vadd.f32 0.0, %v1384
      %v1386 = vpop.f32.mrb[0].mxu0
      %v1387 = vadd.f32 0.0, %v1386
      %1388 = vmatprep.mubr.bf16.mxu0 0
      %1389 = vmatmul.mubr.bf16.gmra.mrb[0].mxu0 %v961
      %v1390 = vpop.f32.mrb[0].mxu0
      %v1391 = vadd.f32 0.0, %v1390
      %v1392 = vpop.f32.mrb[0].mxu0
      %v1393 = vadd.f32 0.0, %v1392
      %v1394 = vpop.f32.mrb[0].mxu0
      %v1395 = vadd.f32 0.0, %v1394
      %v1396 = vpop.f32.mrb[0].mxu0
      %v1397 = vadd.f32 0.0, %v1396
      %1398 = vmatprep.mubr.bf16.mxu0 0
      %1399 = vmatmul.mubr.bf16.gmra.mrb[0].mxu0 %v964
      %v1400 = vpop.f32.mrb[0].mxu0
      %v1401 = vadd.f32 0.0, %v1400
      %v1402 = vpop.f32.mrb[0].mxu0
      %v1403 = vadd.f32 0.0, %v1402
      %v1404 = vpop.f32.mrb[0].mxu0
      %v1405 = vadd.f32 0.0, %v1404
      %v1406 = vpop.f32.mrb[0].mxu0
      %v1407 = vadd.f32 0.0, %v1406
      %1408 = vmatprep.mubr.bf16.mxu0 0
      %1409 = vmatmul.mubr.bf16.gmra.mrb[0].mxu0 %v967
      %v1410 = vpop.f32.mrb[0].mxu0
      %v1411 = vadd.f32 0.0, %v1410
      %v1412 = vpop.f32.mrb[0].mxu0
      %v1413 = vadd.f32 0.0, %v1412
      %v1414 = vpop.f32.mrb[0].mxu0
      %v1415 = vadd.f32 0.0, %v1414
      %v1416 = vpop.f32.mrb[0].mxu0
      %v1417 = vadd.f32 0.0, %v1416
      %1418 = vmatprep.mubr.bf16.mxu0 0
      %1419 = vmatmul.mubr.bf16.gmra.mrb[0].mxu0 %v970
      %v1420 = vpop.f32.mrb[0].mxu0
      %v1421 = vadd.f32 0.0, %v1420
      %v1422 = vpop.f32.mrb[0].mxu0
      %v1423 = vadd.f32 0.0, %v1422
      %v1424 = vpop.f32.mrb[0].mxu0
      %v1425 = vadd.f32 0.0, %v1424
      %v1426 = vpop.f32.mrb[0].mxu0
      %v1427 = vadd.f32 0.0, %v1426
      %1428 = vmatprep.mubr.bf16.mxu0 0
      %1429 = vmatmul.mubr.bf16.gmra.mrb[0].mxu0 %v973
      %v1430 = vpop.f32.mrb[0].mxu0
      %v1431 = vadd.f32 0.0, %v1430
      %v1432 = vpop.f32.mrb[0].mxu0
      %v1433 = vadd.f32 0.0, %v1432
      %v1434 = vpop.f32.mrb[0].mxu0
      %v1435 = vadd.f32 0.0, %v1434
      %v1436 = vpop.f32.mrb[0].mxu0
      %v1437 = vadd.f32 0.0, %v1436
      %1438 = vmatprep.mubr.bf16.mxu0 0
      %1439 = vmatmul.mubr.bf16.gmra.mrb[0].mxu0 %v976
      %v1440 = vpop.f32.mrb[0].mxu0
      %v1441 = vadd.f32 0.0, %v1440
      %v1442 = vpop.f32.mrb[0].mxu0
      %v1443 = vadd.f32 0.0, %v1442
      %v1444 = vpop.f32.mrb[0].mxu0
      %v1445 = vadd.f32 0.0, %v1444
      %v1446 = vpop.f32.mrb[0].mxu0
      %v1447 = vadd.f32 0.0, %v1446
      %1448 = vmatprep.mubr.bf16.mxu0 0
      %1449 = vmatmul.mubr.bf16.gmra.mrb[0].mxu0 %v979
      %v1450 = vpop.f32.mrb[0].mxu0
      %v1451 = vadd.f32 0.0, %v1450
      %v1452 = vpop.f32.mrb[0].mxu0
      %v1453 = vadd.f32 0.0, %v1452
      %v1454 = vpop.f32.mrb[0].mxu0
      %v1455 = vadd.f32 0.0, %v1454
      %v1456 = vpop.f32.mrb[0].mxu0
      %v1457 = vadd.f32 0.0, %v1456
      %1458 = vmatprep.mubr.bf16.mxu0 0
      %1459 = vmatmul.mubr.bf16.gmra.mrb[0].mxu0 %v982
      %v1460 = vpop.f32.mrb[0].mxu0
      %v1461 = vadd.f32 0.0, %v1460
      %v1462 = vpop.f32.mrb[0].mxu0
      %v1463 = vadd.f32 0.0, %v1462
      %v1464 = vpop.f32.mrb[0].mxu0
      %v1465 = vadd.f32 0.0, %v1464
      %v1466 = vpop.f32.mrb[0].mxu0
      %v1467 = vadd.f32 0.0, %v1466
      %1468 = vmatprep.mubr.bf16.mxu0 0
      %1469 = vmatmul.mubr.bf16.gmra.mrb[0].mxu0 %v985
      %v1470 = vpop.f32.mrb[0].mxu0
      %v1471 = vadd.f32 0.0, %v1470
      %v1472 = vpop.f32.mrb[0].mxu0
      %v1473 = vadd.f32 0.0, %v1472
      %v1474 = vpop.f32.mrb[0].mxu0
      %v1475 = vadd.f32 0.0, %v1474
      %v1476 = vpop.f32.mrb[0].mxu0
      %v1477 = vadd.f32 0.0, %v1476
      %1478 = vmatprep.mubr.bf16.mxu0 0
      %1479 = vmatmul.mubr.bf16.gmra.mrb[0].mxu0 %v988
      %v1480 = vpop.f32.mrb[0].mxu0
      %v1481 = vadd.f32 0.0, %v1480
      %v1482 = vpop.f32.mrb[0].mxu0
      %v1483 = vadd.f32 0.0, %v1482
      %v1484 = vpop.f32.mrb[0].mxu0
      %v1485 = vadd.f32 0.0, %v1484
      %v1486 = vpop.f32.mrb[0].mxu0
      %v1487 = vadd.f32 0.0, %v1486
      %1488 = vmatprep.mubr.bf16.mxu0 0
      %1489 = vmatmul.mubr.bf16.gmra.mrb[0].mxu0 %v991
      %v1490 = vpop.f32.mrb[0].mxu0
      %v1491 = vadd.f32 0.0, %v1490
      %v1492 = vpop.f32.mrb[0].mxu0
      %v1493 = vadd.f32 0.0, %v1492
      %v1494 = vpop.f32.mrb[0].mxu0
      %v1495 = vadd.f32 0.0, %v1494
      %v1496 = vpop.f32.mrb[0].mxu0
      %v1497 = vadd.f32 0.0, %v1496
      %1498 = vmatprep.mubr.bf16.mxu0 0
      %1499 = vmatmul.mubr.bf16.gmra.mrb[0].mxu0 %v994
      %v1500 = vpop.f32.mrb[0].mxu0
      %v1501 = vadd.f32 0.0, %v1500
      %v1502 = vpop.f32.mrb[0].mxu0
      %v1503 = vadd.f32 0.0, %v1502
      %v1504 = vpop.f32.mrb[0].mxu0
      %v1505 = vadd.f32 0.0, %v1504
      %v1506 = vpop.f32.mrb[0].mxu0
      %v1507 = vadd.f32 0.0, %v1506
      %1508 = vmatprep.mubr.bf16.mxu0 0
      %1509 = vmatmul.mubr.bf16.gmra.mrb[0].mxu0 %v997
      %v1510 = vpop.f32.mrb[0].mxu0
      %v1511 = vadd.f32 0.0, %v1510
      %v1512 = vpop.f32.mrb[0].mxu0
      %v1513 = vadd.f32 0.0, %v1512
      %v1514 = vpop.f32.mrb[0].mxu0
      %v1515 = vadd.f32 0.0, %v1514
      %v1516 = vpop.f32.mrb[0].mxu0
      %v1517 = vadd.f32 0.0, %v1516
      %1518 = vmatprep.mubr.bf16.mxu0 0
      %1519 = vmatmul.mubr.bf16.gmra.mrb[0].mxu0 %v1000
      %v1520 = vpop.f32.mrb[0].mxu0
      %v1521 = vadd.f32 0.0, %v1520
      %v1522 = vpop.f32.mrb[0].mxu0
      %v1523 = vadd.f32 0.0, %v1522
      %v1524 = vpop.f32.mrb[0].mxu0
      %v1525 = vadd.f32 0.0, %v1524
      %v1526 = vpop.f32.mrb[0].mxu0
      %v1527 = vadd.f32 0.0, %v1526
      %1528 = vmatprep.mubr.bf16.mxu0 0
      %1529 = vmatmul.mubr.bf16.gmra.mrb[0].mxu0 %v1003
      %v1530 = vpop.f32.mrb[0].mxu0
      %v1531 = vadd.f32 0.0, %v1530
      %v1532 = vpop.f32.mrb[0].mxu0
      %v1533 = vadd.f32 0.0, %v1532
      %v1534 = vpop.f32.mrb[0].mxu0
      %v1535 = vadd.f32 0.0, %v1534
      %v1536 = vpop.f32.mrb[0].mxu0
      %v1537 = vadd.f32 0.0, %v1536
      %1538 = vmatprep.mubr.bf16.mxu0 0
      %1539 = vmatmul.mubr.bf16.gmra.mrb[0].mxu0 %v1006
      %v1540 = vpop.f32.mrb[0].mxu0
      %v1541 = vadd.f32 0.0, %v1540
      %v1542 = vpop.f32.mrb[0].mxu0
      %v1543 = vadd.f32 0.0, %v1542
      %v1544 = vpop.f32.mrb[0].mxu0
      %v1545 = vadd.f32 0.0, %v1544
      %v1546 = vpop.f32.mrb[0].mxu0
      %v1547 = vadd.f32 0.0, %v1546
      %1548 = vmatprep.mubr.bf16.mxu0 0
      %1549 = vmatmul.mubr.bf16.gmra.mrb[0].mxu0 %v1009
      %v1550 = vpop.f32.mrb[0].mxu0
      %v1551 = vadd.f32 0.0, %v1550
      %v1552 = vpop.f32.mrb[0].mxu0
      %v1553 = vadd.f32 0.0, %v1552
      %v1554 = vpop.f32.mrb[0].mxu0
      %v1555 = vadd.f32 0.0, %v1554
      %v1556 = vpop.f32.mrb[0].mxu0
      %v1557 = vadd.f32 0.0, %v1556
      %1558 = vmatprep.mubr.bf16.mxu0 0
      %1559 = vmatmul.mubr.bf16.gmra.mrb[0].mxu0 %v1012
      %v1560 = vpop.f32.mrb[0].mxu0
      %v1561 = vadd.f32 0.0, %v1560
      %v1562 = vpop.f32.mrb[0].mxu0
      %v1563 = vadd.f32 0.0, %v1562
      %v1564 = vpop.f32.mrb[0].mxu0
      %v1565 = vadd.f32 0.0, %v1564
      %v1566 = vpop.f32.mrb[0].mxu0
      %v1567 = vadd.f32 0.0, %v1566
      %1568 = vmatprep.mubr.bf16.mxu0 0
      %1569 = vmatmul.mubr.bf16.gmra.mrb[0].mxu0 %v1015
      %v1570 = vpop.f32.mrb[0].mxu0
      %v1571 = vadd.f32 0.0, %v1570
      %v1572 = vpop.f32.mrb[0].mxu0
      %v1573 = vadd.f32 0.0, %v1572
      %v1574 = vpop.f32.mrb[0].mxu0
      %v1575 = vadd.f32 0.0, %v1574
      %v1576 = vpop.f32.mrb[0].mxu0
      %v1577 = vadd.f32 0.0, %v1576
      %1578 = vmatprep.mubr.bf16.mxu0 0
      %1579 = vmatmul.mubr.bf16.gmra.mrb[0].mxu0 %v1018
      %v1580 = vpop.f32.mrb[0].mxu0
      %v1581 = vadd.f32 0.0, %v1580
      %v1582 = vpop.f32.mrb[0].mxu0
      %v1583 = vadd.f32 0.0, %v1582
      %v1584 = vpop.f32.mrb[0].mxu0
      %v1585 = vadd.f32 0.0, %v1584
      %v1586 = vpop.f32.mrb[0].mxu0
      %v1587 = vadd.f32 0.0, %v1586
      %1588 = vmatprep.mubr.bf16.mxu0 0
      %1589 = vmatmul.mubr.bf16.gmra.mrb[0].mxu0 %v1021
      %v1590 = vpop.f32.mrb[0].mxu0
      %v1591 = vadd.f32 0.0, %v1590
      %v1592 = vpop.f32.mrb[0].mxu0
      %v1593 = vadd.f32 0.0, %v1592
      %v1594 = vpop.f32.mrb[0].mxu0
      %v1595 = vadd.f32 0.0, %v1594
      %v1596 = vpop.f32.mrb[0].mxu0
      %v1597 = vadd.f32 0.0, %v1596
      %1598 = vmatprep.mubr.bf16.mxu0 0
      %1599 = vmatmul.mubr.bf16.gmra.mrb[0].mxu0 %v1024
      %v1600 = vpop.f32.mrb[0].mxu0
      %v1601 = vadd.f32 0.0, %v1600
      %v1602 = vpop.f32.mrb[0].mxu0
      %v1603 = vadd.f32 0.0, %v1602
      %v1604 = vpop.f32.mrb[0].mxu0
      %v1605 = vadd.f32 0.0, %v1604
      %v1606 = vpop.f32.mrb[0].mxu0
      %v1607 = vadd.f32 0.0, %v1606
      %1608 = vmatprep.mubr.bf16.mxu0 0
      %1609 = vmatmul.mubr.bf16.gmra.mrb[0].mxu0 %v1027
      %v1610 = vpop.f32.mrb[0].mxu0
      %v1611 = vadd.f32 0.0, %v1610
      %v1612 = vpop.f32.mrb[0].mxu0
      %v1613 = vadd.f32 0.0, %v1612
      %v1614 = vpop.f32.mrb[0].mxu0
      %v1615 = vadd.f32 0.0, %v1614
      %v1616 = vpop.f32.mrb[0].mxu0
      %v1617 = vadd.f32 0.0, %v1616
      %1618 = vmatprep.mubr.bf16.mxu0 0
      %1619 = vmatmul.mubr.bf16.gmra.mrb[0].mxu0 %v1030
      %v1620 = vpop.f32.mrb[0].mxu0
      %v1621 = vadd.f32 0.0, %v1620
      %v1622 = vpop.f32.mrb[0].mxu0
      %v1623 = vadd.f32 0.0, %v1622
      %v1624 = vpop.f32.mrb[0].mxu0
      %v1625 = vadd.f32 0.0, %v1624
      %v1626 = vpop.f32.mrb[0].mxu0
      %v1627 = vadd.f32 0.0, %v1626
      %1628 = vmatprep.mubr.bf16.mxu0 0
      %1629 = vmatmul.mubr.bf16.gmra.mrb[0].mxu0 %v1033
      %v1630 = vpop.f32.mrb[0].mxu0
      %v1631 = vadd.f32 0.0, %v1630
      %v1632 = vpop.f32.mrb[0].mxu0
      %v1633 = vadd.f32 0.0, %v1632
      %v1634 = vpop.f32.mrb[0].mxu0
      %v1635 = vadd.f32 0.0, %v1634
      %v1636 = vpop.f32.mrb[0].mxu0
      %v1637 = vadd.f32 0.0, %v1636
      %1638 = vmatprep.mubr.bf16.mxu0 0
      %1639 = vmatmul.mubr.bf16.gmra.mrb[0].mxu0 %v1036
      %v1640 = vpop.f32.mrb[0].mxu0
      %v1641 = vadd.f32 0.0, %v1640
      %v1642 = vpop.f32.mrb[0].mxu0
      %v1643 = vadd.f32 0.0, %v1642
      %v1644 = vpop.f32.mrb[0].mxu0
      %v1645 = vadd.f32 0.0, %v1644
      %v1646 = vpop.f32.mrb[0].mxu0
      %v1647 = vadd.f32 0.0, %v1646
      %1648 = vmatprep.mubr.bf16.mxu0 0
      %1649 = vmatmul.mubr.bf16.gmra.mrb[0].mxu0 %v1039
      %v1650 = vpop.f32.mrb[0].mxu0
      %v1651 = vadd.f32 0.0, %v1650
      %v1652 = vpop.f32.mrb[0].mxu0
      %v1653 = vadd.f32 0.0, %v1652
      %v1654 = vpop.f32.mrb[0].mxu0
      %v1655 = vadd.f32 0.0, %v1654
      %v1656 = vpop.f32.mrb[0].mxu0
      %v1657 = vadd.f32 0.0, %v1656
      %1658 = vmatprep.mubr.bf16.mxu0 0
      %1659 = vmatmul.mubr.bf16.gmra.mrb[0].mxu0 %v1042
      %v1660 = vpop.f32.mrb[0].mxu0
      %v1661 = vadd.f32 0.0, %v1660
      %v1662 = vpop.f32.mrb[0].mxu0
      %v1663 = vadd.f32 0.0, %v1662
      %v1664 = vpop.f32.mrb[0].mxu0
      %v1665 = vadd.f32 0.0, %v1664
      %v1666 = vpop.f32.mrb[0].mxu0
      %v1667 = vadd.f32 0.0, %v1666
      %1668 = vmatprep.mubr.bf16.mxu0 0
      %1669 = vmatmul.mubr.bf16.gmra.mrb[0].mxu0 %v1045
      %v1670 = vpop.f32.mrb[0].mxu0
      %v1671 = vadd.f32 0.0, %v1670
      %v1672 = vpop.f32.mrb[0].mxu0
      %v1673 = vadd.f32 0.0, %v1672
      %v1674 = vpop.f32.mrb[0].mxu0
      %v1675 = vadd.f32 0.0, %v1674
      %v1676 = vpop.f32.mrb[0].mxu0
      %v1677 = vadd.f32 0.0, %v1676
      %1678 = vmatprep.mubr.bf16.mxu0 0
      %1679 = vmatmul.mubr.bf16.gmra.mrb[0].mxu0 %v1048
      %v1680 = vpop.f32.mrb[0].mxu0
      %v1681 = vadd.f32 0.0, %v1680
      %v1682 = vpop.f32.mrb[0].mxu0
      %v1683 = vadd.f32 0.0, %v1682
      %v1684 = vpop.f32.mrb[0].mxu0
      %v1685 = vadd.f32 0.0, %v1684
      %v1686 = vpop.f32.mrb[0].mxu0
      %v1687 = vadd.f32 0.0, %v1686
      %1688 = vmatprep.mubr.bf16.mxu0 0
      %1689 = vmatmul.mubr.bf16.gmra.mrb[0].mxu0 %v1051
      %v1690 = vpop.f32.mrb[0].mxu0
      %v1691 = vadd.f32 0.0, %v1690
      %v1692 = vpop.f32.mrb[0].mxu0
      %v1693 = vadd.f32 0.0, %v1692
      %v1694 = vpop.f32.mrb[0].mxu0
      %v1695 = vadd.f32 0.0, %v1694
      %v1696 = vpop.f32.mrb[0].mxu0
      %v1697 = vadd.f32 0.0, %v1696
      %1698 = vmatprep.mubr.bf16.mxu0 0
      %1699 = vmatmul.mubr.bf16.gmra.mrb[0].mxu0 %v1054
      %v1700 = vpop.f32.mrb[0].mxu0
      %v1701 = vadd.f32 0.0, %v1700
      %v1702 = vpop.f32.mrb[0].mxu0
      %v1703 = vadd.f32 0.0, %v1702
      %v1704 = vpop.f32.mrb[0].mxu0
      %v1705 = vadd.f32 0.0, %v1704
      %v1706 = vpop.f32.mrb[0].mxu0
      %v1707 = vadd.f32 0.0, %v1706
      %1708 = vmatprep.mubr.bf16.mxu0 0
      %1709 = vmatmul.mubr.bf16.gmra.mrb[0].mxu0 %v1057
      %v1710 = vpop.f32.mrb[0].mxu0
      %v1711 = vadd.f32 0.0, %v1710
      %v1712 = vpop.f32.mrb[0].mxu0
      %v1713 = vadd.f32 0.0, %v1712
      %v1714 = vpop.f32.mrb[0].mxu0
      %v1715 = vadd.f32 0.0, %v1714
      %v1716 = vpop.f32.mrb[0].mxu0
      %v1717 = vadd.f32 0.0, %v1716
      %1718 = vmatprep.mubr.bf16.mxu0 0
      %1719 = vmatmul.mubr.bf16.gmra.mrb[0].mxu0 %v1060
      %v1720 = vpop.f32.mrb[0].mxu0
      %v1721 = vadd.f32 0.0, %v1720
      %v1722 = vpop.f32.mrb[0].mxu0
      %v1723 = vadd.f32 0.0, %v1722
      %v1724 = vpop.f32.mrb[0].mxu0
      %v1725 = vadd.f32 0.0, %v1724
      %v1726 = vpop.f32.mrb[0].mxu0
      %v1727 = vadd.f32 0.0, %v1726
      %1728 = vmatprep.mubr.bf16.mxu0 0
      %1729 = vmatmul.mubr.bf16.gmra.mrb[0].mxu0 %v1063
      %v1730 = vpop.f32.mrb[0].mxu0
      %v1731 = vadd.f32 0.0, %v1730
      %v1732 = vpop.f32.mrb[0].mxu0
      %v1733 = vadd.f32 0.0, %v1732
      %v1734 = vpop.f32.mrb[0].mxu0
      %v1735 = vadd.f32 0.0, %v1734
      %v1736 = vpop.f32.mrb[0].mxu0
      %v1737 = vadd.f32 0.0, %v1736
      %1738 = vmatprep.mubr.bf16.mxu0 0
      %1739 = vmatmul.mubr.bf16.gmra.mrb[0].mxu0 %v1066
      %v1740 = vpop.f32.mrb[0].mxu0
      %v1741 = vadd.f32 0.0, %v1740
      %v1742 = vpop.f32.mrb[0].mxu0
      %v1743 = vadd.f32 0.0, %v1742
      %v1744 = vpop.f32.mrb[0].mxu0
      %v1745 = vadd.f32 0.0, %v1744
      %v1746 = vpop.f32.mrb[0].mxu0
      %v1747 = vadd.f32 0.0, %v1746
      %1748 = vmatprep.mubr.bf16.mxu0 0
      %1749 = vmatmul.mubr.bf16.gmra.mrb[0].mxu0 %v1069
      %v1750 = vpop.f32.mrb[0].mxu0
      %v1751 = vadd.f32 0.0, %v1750
      %v1752 = vpop.f32.mrb[0].mxu0
      %v1753 = vadd.f32 0.0, %v1752
      %v1754 = vpop.f32.mrb[0].mxu0
      %v1755 = vadd.f32 0.0, %v1754
      %v1756 = vpop.f32.mrb[0].mxu0
      %v1757 = vadd.f32 0.0, %v1756
      %1758 = vmatprep.mubr.bf16.mxu0 0
      %1759 = vmatmul.mubr.bf16.gmra.mrb[0].mxu0 %v1072
      %v1760 = vpop.f32.mrb[0].mxu0
      %v1761 = vadd.f32 0.0, %v1760
      %v1762 = vpop.f32.mrb[0].mxu0
      %v1763 = vadd.f32 0.0, %v1762
      %v1764 = vpop.f32.mrb[0].mxu0
      %v1765 = vadd.f32 0.0, %v1764
      %v1766 = vpop.f32.mrb[0].mxu0
      %v1767 = vadd.f32 0.0, %v1766
      %1768 = vmatprep.mubr.bf16.mxu0 0
      %1769 = vmatmul.mubr.bf16.gmra.mrb[0].mxu0 %v1075
      %v1770 = vpop.f32.mrb[0].mxu0
      %v1771 = vadd.f32 0.0, %v1770
      %v1772 = vpop.f32.mrb[0].mxu0
      %v1773 = vadd.f32 0.0, %v1772
      %v1774 = vpop.f32.mrb[0].mxu0
      %v1775 = vadd.f32 0.0, %v1774
      %v1776 = vpop.f32.mrb[0].mxu0
      %v1777 = vadd.f32 0.0, %v1776
      %1778 = vmatprep.mubr.bf16.mxu0 0
      %1779 = vmatmul.mubr.bf16.gmra.mrb[0].mxu0 %v1078
      %v1780 = vpop.f32.mrb[0].mxu0
      %v1781 = vadd.f32 0.0, %v1780
      %v1782 = vpop.f32.mrb[0].mxu0
      %v1783 = vadd.f32 0.0, %v1782
      %v1784 = vpop.f32.mrb[0].mxu0
      %v1785 = vadd.f32 0.0, %v1784
      %v1786 = vpop.f32.mrb[0].mxu0
      %v1787 = vadd.f32 0.0, %v1786
      %1788 = vmatprep.mubr.bf16.mxu0 0
      %1789 = vmatmul.mubr.bf16.gmra.mrb[0].mxu0 %v1081
      %v1790 = vpop.f32.mrb[0].mxu0
      %v1791 = vadd.f32 0.0, %v1790
      %v1792 = vpop.f32.mrb[0].mxu0
      %v1793 = vadd.f32 0.0, %v1792
      %v1794 = vpop.f32.mrb[0].mxu0
      %v1795 = vadd.f32 0.0, %v1794
      %v1796 = vpop.f32.mrb[0].mxu0
      %v1797 = vadd.f32 0.0, %v1796
      %1798 = vmatprep.mubr.bf16.mxu0 0
      %1799 = vmatmul.mubr.bf16.gmra.mrb[0].mxu0 %v1084
      %v1800 = vpop.f32.mrb[0].mxu0
      %v1801 = vadd.f32 0.0, %v1800
      %v1802 = vpop.f32.mrb[0].mxu0
      %v1803 = vadd.f32 0.0, %v1802
      %v1804 = vpop.f32.mrb[0].mxu0
      %v1805 = vadd.f32 0.0, %v1804
      %v1806 = vpop.f32.mrb[0].mxu0
      %v1807 = vadd.f32 0.0, %v1806
      %1808 = vmatprep.mubr.bf16.mxu0 0
      %1809 = vmatmul.mubr.bf16.gmra.mrb[0].mxu0 %v1087
      %v1810 = vpop.f32.mrb[0].mxu0
      %v1811 = vadd.f32 0.0, %v1810
      %v1812 = vpop.f32.mrb[0].mxu0
      %v1813 = vadd.f32 0.0, %v1812
      %v1814 = vpop.f32.mrb[0].mxu0
      %v1815 = vadd.f32 0.0, %v1814
      %v1816 = vpop.f32.mrb[0].mxu0
      %v1817 = vadd.f32 0.0, %v1816
      %1818 = vmatprep.mubr.bf16.mxu0 0
      %1819 = vmatmul.mubr.bf16.gmra.mrb[0].mxu0 %v1090
      %v1820 = vpop.f32.mrb[0].mxu0
      %v1821 = vadd.f32 0.0, %v1820
      %v1822 = vpop.f32.mrb[0].mxu0
      %v1823 = vadd.f32 0.0, %v1822
      %v1824 = vpop.f32.mrb[0].mxu0
      %v1825 = vadd.f32 0.0, %v1824
      %v1826 = vpop.f32.mrb[0].mxu0
      %v1827 = vadd.f32 0.0, %v1826
      %1828 = vmatprep.mubr.bf16.mxu0 0
      %1829 = vmatmul.mubr.bf16.gmra.mrb[0].mxu0 %v1093
      %v1830 = vpop.f32.mrb[0].mxu0
      %v1831 = vadd.f32 0.0, %v1830
      %v1832 = vpop.f32.mrb[0].mxu0
      %v1833 = vadd.f32 0.0, %v1832
      %v1834 = vpop.f32.mrb[0].mxu0
      %v1835 = vadd.f32 0.0, %v1834
      %v1836 = vpop.f32.mrb[0].mxu0
      %v1837 = vadd.f32 0.0, %v1836
      %1838 = vmatprep.mubr.bf16.mxu0 0
      %1839 = vmatmul.mubr.bf16.gmra.mrb[0].mxu0 %v1096
      %v1840 = vpop.f32.mrb[0].mxu0
      %v1841 = vadd.f32 0.0, %v1840
      %v1842 = vpop.f32.mrb[0].mxu0
      %v1843 = vadd.f32 0.0, %v1842
      %v1844 = vpop.f32.mrb[0].mxu0
      %v1845 = vadd.f32 0.0, %v1844
      %v1846 = vpop.f32.mrb[0].mxu0
      %v1847 = vadd.f32 0.0, %v1846
      %1848 = vmatprep.mubr.bf16.mxu0 0
      %1849 = vmatmul.mubr.bf16.gmra.mrb[0].mxu0 %v1099
      %v1850 = vpop.f32.mrb[0].mxu0
      %v1851 = vadd.f32 0.0, %v1850
      %v1852 = vpop.f32.mrb[0].mxu0
      %v1853 = vadd.f32 0.0, %v1852
      %v1854 = vpop.f32.mrb[0].mxu0
      %v1855 = vadd.f32 0.0, %v1854
      %v1856 = vpop.f32.mrb[0].mxu0
      %v1857 = vadd.f32 0.0, %v1856
      %1858 = vmatprep.mubr.bf16.mxu0 0
      %1859 = vmatmul.mubr.bf16.gmra.mrb[0].mxu0 %v1102
      %v1860 = vpop.f32.mrb[0].mxu0
      %v1861 = vadd.f32 0.0, %v1860
      %v1862 = vpop.f32.mrb[0].mxu0
      %v1863 = vadd.f32 0.0, %v1862
      %v1864 = vpop.f32.mrb[0].mxu0
      %v1865 = vadd.f32 0.0, %v1864
      %v1866 = vpop.f32.mrb[0].mxu0
      %v1867 = vadd.f32 0.0, %v1866
      %1868 = vmatprep.mubr.bf16.mxu0 0
      %1869 = vmatmul.mubr.bf16.gmra.mrb[0].mxu0 %v1105
      %v1870 = vpop.f32.mrb[0].mxu0
      %v1871 = vadd.f32 0.0, %v1870
      %v1872 = vpop.f32.mrb[0].mxu0
      %v1873 = vadd.f32 0.0, %v1872
      %v1874 = vpop.f32.mrb[0].mxu0
      %v1875 = vadd.f32 0.0, %v1874
      %v1876 = vpop.f32.mrb[0].mxu0
      %v1877 = vadd.f32 0.0, %v1876
      %1878 = vmatprep.mubr.bf16.mxu0 0
      %1879 = vmatmul.mubr.bf16.gmra.mrb[0].mxu0 %v1108
      %v1880 = vpop.f32.mrb[0].mxu0
      %v1881 = vadd.f32 0.0, %v1880
      %v1882 = vpop.f32.mrb[0].mxu0
      %v1883 = vadd.f32 0.0, %v1882
      %v1884 = vpop.f32.mrb[0].mxu0
      %v1885 = vadd.f32 0.0, %v1884
      %v1886 = vpop.f32.mrb[0].mxu0
      %v1887 = vadd.f32 0.0, %v1886
      %1888 = vmatprep.mubr.bf16.mxu0 0
      %1889 = vmatmul.mubr.bf16.gmra.mrb[0].mxu0 %v1111
      %v1890 = vpop.f32.mrb[0].mxu0
      %v1891 = vadd.f32 0.0, %v1890
      %v1892 = vpop.f32.mrb[0].mxu0
      %v1893 = vadd.f32 0.0, %v1892
      %v1894 = vpop.f32.mrb[0].mxu0
      %v1895 = vadd.f32 0.0, %v1894
      %v1896 = vpop.f32.mrb[0].mxu0
      %v1897 = vadd.f32 0.0, %v1896
      %1898 = vmatprep.mubr.bf16.mxu0 0
      %1899 = vmatmul.mubr.bf16.gmra.mrb[0].mxu0 %v1114
      %v1900 = vpop.f32.mrb[0].mxu0
      %v1901 = vadd.f32 0.0, %v1900
      %v1902 = vpop.f32.mrb[0].mxu0
      %v1903 = vadd.f32 0.0, %v1902
      %v1904 = vpop.f32.mrb[0].mxu0
      %v1905 = vadd.f32 0.0, %v1904
      %v1906 = vpop.f32.mrb[0].mxu0
      %v1907 = vadd.f32 0.0, %v1906
      %1908 = vmatprep.mubr.bf16.mxu0 0
      %1909 = vmatmul.mubr.bf16.gmra.mrb[0].mxu0 %v1117
      %v1910 = vpop.f32.mrb[0].mxu0
      %v1911 = vadd.f32 0.0, %v1910
      %v1912 = vpop.f32.mrb[0].mxu0
      %v1913 = vadd.f32 0.0, %v1912
      %v1914 = vpop.f32.mrb[0].mxu0
      %v1915 = vadd.f32 0.0, %v1914
      %v1916 = vpop.f32.mrb[0].mxu0
      %v1917 = vadd.f32 0.0, %v1916
      %1918 = vmatprep.mubr.bf16.mxu0 0
      %1919 = vmatmul.mubr.bf16.gmra.mrb[0].mxu0 %v1120
      %v1920 = vpop.f32.mrb[0].mxu0
      %v1921 = vadd.f32 0.0, %v1920
      %v1922 = vpop.f32.mrb[0].mxu0
      %v1923 = vadd.f32 0.0, %v1922
      %v1924 = vpop.f32.mrb[0].mxu0
      %v1925 = vadd.f32 0.0, %v1924
      %v1926 = vpop.f32.mrb[0].mxu0
      %v1927 = vadd.f32 0.0, %v1926
      %1928 = vmatprep.mubr.bf16.mxu0 0
      %1929 = vmatmul.mubr.bf16.gmra.mrb[0].mxu0 %v1123
      %v1930 = vpop.f32.mrb[0].mxu0
      %v1931 = vadd.f32 0.0, %v1930
      %v1932 = vpop.f32.mrb[0].mxu0
      %v1933 = vadd.f32 0.0, %v1932
      %v1934 = vpop.f32.mrb[0].mxu0
      %v1935 = vadd.f32 0.0, %v1934
      %v1936 = vpop.f32.mrb[0].mxu0
      %v1937 = vadd.f32 0.0, %v1936
      %1938 = vmatprep.mubr.bf16.mxu0 0
      %1939 = vmatmul.mubr.bf16.gmra.mrb[0].mxu0 %v1126
      %v1940 = vpop.f32.mrb[0].mxu0
      %v1941 = vadd.f32 0.0, %v1940
      %v1942 = vpop.f32.mrb[0].mxu0
      %v1943 = vadd.f32 0.0, %v1942
      %v1944 = vpop.f32.mrb[0].mxu0
      %v1945 = vadd.f32 0.0, %v1944
      %v1946 = vpop.f32.mrb[0].mxu0
      %v1947 = vadd.f32 0.0, %v1946
      %1948 = vmatprep.mubr.bf16.mxu0 0
      %1949 = vmatmul.mubr.bf16.gmra.mrb[0].mxu0 %v1129
      %v1950 = vpop.f32.mrb[0].mxu0
      %v1951 = vadd.f32 0.0, %v1950
      %v1952 = vpop.f32.mrb[0].mxu0
      %v1953 = vadd.f32 0.0, %v1952
      %v1954 = vpop.f32.mrb[0].mxu0
      %v1955 = vadd.f32 0.0, %v1954
      %v1956 = vpop.f32.mrb[0].mxu0
      %v1957 = vadd.f32 0.0, %v1956
      %1958 = vmatprep.mubr.bf16.mxu0 0
      %1959 = vmatmul.mubr.bf16.gmra.mrb[0].mxu0 %v1132
      %v1960 = vpop.f32.mrb[0].mxu0
      %v1961 = vadd.f32 0.0, %v1960
      %v1962 = vpop.f32.mrb[0].mxu0
      %v1963 = vadd.f32 0.0, %v1962
      %v1964 = vpop.f32.mrb[0].mxu0
      %v1965 = vadd.f32 0.0, %v1964
      %v1966 = vpop.f32.mrb[0].mxu0
      %v1967 = vadd.f32 0.0, %v1966
      %1968 = vmatprep.mubr.bf16.mxu0 0
      %1969 = vmatmul.mubr.bf16.gmra.mrb[0].mxu0 %v1135
      %v1970 = vpop.f32.mrb[0].mxu0
      %v1971 = vadd.f32 0.0, %v1970
      %v1972 = vpop.f32.mrb[0].mxu0
      %v1973 = vadd.f32 0.0, %v1972
      %v1974 = vpop.f32.mrb[0].mxu0
      %v1975 = vadd.f32 0.0, %v1974
      %v1976 = vpop.f32.mrb[0].mxu0
      %v1977 = vadd.f32 0.0, %v1976
      %1978 = vmatprep.mubr.bf16.mxu0 0
      %1979 = vmatmul.mubr.bf16.gmra.mrb[0].mxu0 %v1138
      %v1980 = vpop.f32.mrb[0].mxu0
      %v1981 = vadd.f32 0.0, %v1980
      %v1982 = vpop.f32.mrb[0].mxu0
      %v1983 = vadd.f32 0.0, %v1982
      %v1984 = vpop.f32.mrb[0].mxu0
      %v1985 = vadd.f32 0.0, %v1984
      %v1986 = vpop.f32.mrb[0].mxu0
      %v1987 = vadd.f32 0.0, %v1986
      %1988 = vmatprep.mubr.bf16.mxu0 0
      %1989 = vmatmul.mubr.bf16.gmra.mrb[0].mxu0 %v1141
      %v1990 = vpop.f32.mrb[0].mxu0
      %v1991 = vadd.f32 0.0, %v1990
      %v1992 = vpop.f32.mrb[0].mxu0
      %v1993 = vadd.f32 0.0, %v1992
      %v1994 = vpop.f32.mrb[0].mxu0
      %v1995 = vadd.f32 0.0, %v1994
      %v1996 = vpop.f32.mrb[0].mxu0
      %v1997 = vadd.f32 0.0, %v1996
      %1998 = vdwg.mxu0
      %1999 = vmatprep.subr.bf16.mxu0 %v1154
      %2000 = vmatpush1.bf16.msra.mxu0 %v1151
      %2001 = vmatprep.subr.bf16.mxu0 0
      %2002 = vmatpush1.bf16.msra.mxu0 0
      %2003 = vmatprep.subr.bf16.mxu0 0
      %2004 = vmatpush1.bf16.msra.mxu0 0
      %2005 = vmatprep.subr.bf16.mxu0 0
      %2006 = vmatpush1.bf16.msra.mxu0 0
      %2007 = vmatprep.subr.bf16.mxu0 0
      %2008 = vmatpush1.bf16.msra.mxu0 0
      %2009 = vmatprep.subr.bf16.mxu0 0
      %2010 = vmatpush1.bf16.msra.mxu0 0
      %2011 = vmatprep.subr.bf16.mxu0 0
      %2012 = vmatpush1.bf16.msra.mxu0 0
      %2013 = vmatprep.subr.bf16.mxu0 0
      %2014 = vmatpush1.bf16.msra.mxu0 0
      %2015 = vmatprep.subr.bf16.mxu0 0
      %2016 = vmatpush1.bf16.msra.mxu0 0
      %2017 = vmatprep.subr.bf16.mxu0 0
      %2018 = vmatpush1.bf16.msra.mxu0 0
      %2019 = vmatprep.subr.bf16.mxu0 0
      %2020 = vmatpush1.bf16.msra.mxu0 0
      %2021 = vmatprep.subr.bf16.mxu0 0
      %2022 = vmatpush1.bf16.msra.mxu0 0
      %2023 = vmatprep.subr.bf16.mxu0 0
      %2024 = vmatpush1.bf16.msra.mxu0 0
      %2025 = vmatprep.subr.bf16.mxu0 0
      %2026 = vmatpush1.bf16.msra.mxu0 0
      %2027 = vmatprep.subr.bf16.mxu0 0
      %2028 = vmatpush1.bf16.msra.mxu0 0
      %2029 = vmatprep.subr.bf16.mxu0 0
      %2030 = vmatpush1.bf16.msra.mxu0 0
      %2031 = vmatprep.mubr.bf16.mxu0 0
      %2032 = vmatmul.mubr.bf16.gmra.mrb[0].mxu0 %v901
      %v2033 = vpop.f32.mrb[0].mxu0
      %v2034 = vadd.f32 0.0, %v2033
      %v2035 = vpop.f32.mrb[0].mxu0
      %v2036 = vadd.f32 0.0, %v2035
      %v2037 = vpop.f32.mrb[0].mxu0
      %v2038 = vadd.f32 0.0, %v2037
      %v2039 = vpop.f32.mrb[0].mxu0
      %v2040 = vadd.f32 0.0, %v2039
      %2041 = vmatprep.mubr.bf16.mxu0 0
      %2042 = vmatmul.mubr.bf16.gmra.mrb[0].mxu0 %v904
      %v2043 = vpop.f32.mrb[0].mxu0
      %v2044 = vadd.f32 0.0, %v2043
      %v2045 = vpop.f32.mrb[0].mxu0
      %v2046 = vadd.f32 0.0, %v2045
      %v2047 = vpop.f32.mrb[0].mxu0
      %v2048 = vadd.f32 0.0, %v2047
      %v2049 = vpop.f32.mrb[0].mxu0
      %v2050 = vadd.f32 0.0, %v2049
      %2051 = vmatprep.mubr.bf16.mxu0 0
      %2052 = vmatmul.mubr.bf16.gmra.mrb[0].mxu0 %v907
      %v2053 = vpop.f32.mrb[0].mxu0
      %v2054 = vadd.f32 0.0, %v2053
      %v2055 = vpop.f32.mrb[0].mxu0
      %v2056 = vadd.f32 0.0, %v2055
      %v2057 = vpop.f32.mrb[0].mxu0
      %v2058 = vadd.f32 0.0, %v2057
      %v2059 = vpop.f32.mrb[0].mxu0
      %v2060 = vadd.f32 0.0, %v2059
      %2061 = vmatprep.mubr.bf16.mxu0 0
      %2062 = vmatmul.mubr.bf16.gmra.mrb[0].mxu0 %v910
      %v2063 = vpop.f32.mrb[0].mxu0
      %v2064 = vadd.f32 0.0, %v2063
      %v2065 = vpop.f32.mrb[0].mxu0
      %v2066 = vadd.f32 0.0, %v2065
      %v2067 = vpop.f32.mrb[0].mxu0
      %v2068 = vadd.f32 0.0, %v2067
      %v2069 = vpop.f32.mrb[0].mxu0
      %v2070 = vadd.f32 0.0, %v2069
      %2071 = vmatprep.mubr.bf16.mxu0 0
      %2072 = vmatmul.mubr.bf16.gmra.mrb[0].mxu0 %v913
      %v2073 = vpop.f32.mrb[0].mxu0
      %v2074 = vadd.f32 0.0, %v2073
      %v2075 = vpop.f32.mrb[0].mxu0
      %v2076 = vadd.f32 0.0, %v2075
      %v2077 = vpop.f32.mrb[0].mxu0
      %v2078 = vadd.f32 0.0, %v2077
      %v2079 = vpop.f32.mrb[0].mxu0
      %v2080 = vadd.f32 0.0, %v2079
      %2081 = vmatprep.mubr.bf16.mxu0 0
      %2082 = vmatmul.mubr.bf16.gmra.mrb[0].mxu0 %v916
      %v2083 = vpop.f32.mrb[0].mxu0
      %v2084 = vadd.f32 0.0, %v2083
      %v2085 = vpop.f32.mrb[0].mxu0
      %v2086 = vadd.f32 0.0, %v2085
      %v2087 = vpop.f32.mrb[0].mxu0
      %v2088 = vadd.f32 0.0, %v2087
      %v2089 = vpop.f32.mrb[0].mxu0
      %v2090 = vadd.f32 0.0, %v2089
      %2091 = vmatprep.mubr.bf16.mxu0 0
      %2092 = vmatmul.mubr.bf16.gmra.mrb[0].mxu0 %v919
      %v2093 = vpop.f32.mrb[0].mxu0
      %v2094 = vadd.f32 0.0, %v2093
      %v2095 = vpop.f32.mrb[0].mxu0
      %v2096 = vadd.f32 0.0, %v2095
      %v2097 = vpop.f32.mrb[0].mxu0
      %v2098 = vadd.f32 0.0, %v2097
      %v2099 = vpop.f32.mrb[0].mxu0
      %v2100 = vadd.f32 0.0, %v2099
      %2101 = vmatprep.mubr.bf16.mxu0 0
      %2102 = vmatmul.mubr.bf16.gmra.mrb[0].mxu0 %v922
      %v2103 = vpop.f32.mrb[0].mxu0
      %v2104 = vadd.f32 0.0, %v2103
      %v2105 = vpop.f32.mrb[0].mxu0
      %v2106 = vadd.f32 0.0, %v2105
      %v2107 = vpop.f32.mrb[0].mxu0
      %v2108 = vadd.f32 0.0, %v2107
      %v2109 = vpop.f32.mrb[0].mxu0
      %v2110 = vadd.f32 0.0, %v2109
      %2111 = vmatprep.mubr.bf16.mxu0 0
      %2112 = vmatmul.mubr.bf16.gmra.mrb[0].mxu0 %v925
      %v2113 = vpop.f32.mrb[0].mxu0
      %v2114 = vadd.f32 0.0, %v2113
      %v2115 = vpop.f32.mrb[0].mxu0
      %v2116 = vadd.f32 0.0, %v2115
      %v2117 = vpop.f32.mrb[0].mxu0
      %v2118 = vadd.f32 0.0, %v2117
      %v2119 = vpop.f32.mrb[0].mxu0
      %v2120 = vadd.f32 0.0, %v2119
      %2121 = vmatprep.mubr.bf16.mxu0 0
      %2122 = vmatmul.mubr.bf16.gmra.mrb[0].mxu0 %v928
      %v2123 = vpop.f32.mrb[0].mxu0
      %v2124 = vadd.f32 0.0, %v2123
      %v2125 = vpop.f32.mrb[0].mxu0
      %v2126 = vadd.f32 0.0, %v2125
      %v2127 = vpop.f32.mrb[0].mxu0
      %v2128 = vadd.f32 0.0, %v2127
      %v2129 = vpop.f32.mrb[0].mxu0
      %v2130 = vadd.f32 0.0, %v2129
      %2131 = vmatprep.mubr.bf16.mxu0 0
      %2132 = vmatmul.mubr.bf16.gmra.mrb[0].mxu0 %v931
      %v2133 = vpop.f32.mrb[0].mxu0
      %v2134 = vadd.f32 0.0, %v2133
      %v2135 = vpop.f32.mrb[0].mxu0
      %v2136 = vadd.f32 0.0, %v2135
      %v2137 = vpop.f32.mrb[0].mxu0
      %v2138 = vadd.f32 0.0, %v2137
      %v2139 = vpop.f32.mrb[0].mxu0
      %v2140 = vadd.f32 0.0, %v2139
      %2141 = vmatprep.mubr.bf16.mxu0 0
      %2142 = vmatmul.mubr.bf16.gmra.mrb[0].mxu0 %v934
      %v2143 = vpop.f32.mrb[0].mxu0
      %v2144 = vadd.f32 0.0, %v2143
      %v2145 = vpop.f32.mrb[0].mxu0
      %v2146 = vadd.f32 0.0, %v2145
      %v2147 = vpop.f32.mrb[0].mxu0
      %v2148 = vadd.f32 0.0, %v2147
      %v2149 = vpop.f32.mrb[0].mxu0
      %v2150 = vadd.f32 0.0, %v2149
      %2151 = vmatprep.mubr.bf16.mxu0 0
      %2152 = vmatmul.mubr.bf16.gmra.mrb[0].mxu0 %v937
      %v2153 = vpop.f32.mrb[0].mxu0
      %v2154 = vadd.f32 0.0, %v2153
      %v2155 = vpop.f32.mrb[0].mxu0
      %v2156 = vadd.f32 0.0, %v2155
      %v2157 = vpop.f32.mrb[0].mxu0
      %v2158 = vadd.f32 0.0, %v2157
      %v2159 = vpop.f32.mrb[0].mxu0
      %v2160 = vadd.f32 0.0, %v2159
      %2161 = vmatprep.mubr.bf16.mxu0 0
      %2162 = vmatmul.mubr.bf16.gmra.mrb[0].mxu0 %v940
      %v2163 = vpop.f32.mrb[0].mxu0
      %v2164 = vadd.f32 0.0, %v2163
      %v2165 = vpop.f32.mrb[0].mxu0
      %v2166 = vadd.f32 0.0, %v2165
      %v2167 = vpop.f32.mrb[0].mxu0
      %v2168 = vadd.f32 0.0, %v2167
      %v2169 = vpop.f32.mrb[0].mxu0
      %v2170 = vadd.f32 0.0, %v2169
      %2171 = vmatprep.mubr.bf16.mxu0 0
      %2172 = vmatmul.mubr.bf16.gmra.mrb[0].mxu0 %v943
      %v2173 = vpop.f32.mrb[0].mxu0
      %v2174 = vadd.f32 0.0, %v2173
      %v2175 = vpop.f32.mrb[0].mxu0
      %v2176 = vadd.f32 0.0, %v2175
      %v2177 = vpop.f32.mrb[0].mxu0
      %v2178 = vadd.f32 0.0, %v2177
      %v2179 = vpop.f32.mrb[0].mxu0
      %v2180 = vadd.f32 0.0, %v2179
      %2181 = vmatprep.mubr.bf16.mxu0 0
      %2182 = vmatmul.mubr.bf16.gmra.mrb[0].mxu0 %v946
      %v2183 = vpop.f32.mrb[0].mxu0
      %v2184 = vadd.f32 0.0, %v2183
      %v2185 = vpop.f32.mrb[0].mxu0
      %v2186 = vadd.f32 0.0, %v2185
      %v2187 = vpop.f32.mrb[0].mxu0
      %v2188 = vadd.f32 0.0, %v2187
      %v2189 = vpop.f32.mrb[0].mxu0
      %v2190 = vadd.f32 0.0, %v2189
      %2191 = vmatprep.mubr.bf16.mxu0 0
      %2192 = vmatmul.mubr.bf16.gmra.mrb[0].mxu0 %v949
      %v2193 = vpop.f32.mrb[0].mxu0
      %v2194 = vadd.f32 0.0, %v2193
      %v2195 = vpop.f32.mrb[0].mxu0
      %v2196 = vadd.f32 0.0, %v2195
      %v2197 = vpop.f32.mrb[0].mxu0
      %v2198 = vadd.f32 0.0, %v2197
      %v2199 = vpop.f32.mrb[0].mxu0
      %v2200 = vadd.f32 0.0, %v2199
      %2201 = vmatprep.mubr.bf16.mxu0 0
      %2202 = vmatmul.mubr.bf16.gmra.mrb[0].mxu0 %v952
      %v2203 = vpop.f32.mrb[0].mxu0
      %v2204 = vadd.f32 0.0, %v2203
      %v2205 = vpop.f32.mrb[0].mxu0
      %v2206 = vadd.f32 0.0, %v2205
      %v2207 = vpop.f32.mrb[0].mxu0
      %v2208 = vadd.f32 0.0, %v2207
      %v2209 = vpop.f32.mrb[0].mxu0
      %v2210 = vadd.f32 0.0, %v2209
      %2211 = vmatprep.mubr.bf16.mxu0 0
      %2212 = vmatmul.mubr.bf16.gmra.mrb[0].mxu0 %v955
      %v2213 = vpop.f32.mrb[0].mxu0
      %v2214 = vadd.f32 0.0, %v2213
      %v2215 = vpop.f32.mrb[0].mxu0
      %v2216 = vadd.f32 0.0, %v2215
      %v2217 = vpop.f32.mrb[0].mxu0
      %v2218 = vadd.f32 0.0, %v2217
      %v2219 = vpop.f32.mrb[0].mxu0
      %v2220 = vadd.f32 0.0, %v2219
      %2221 = vmatprep.mubr.bf16.mxu0 0
      %2222 = vmatmul.mubr.bf16.gmra.mrb[0].mxu0 %v958
      %v2223 = vpop.f32.mrb[0].mxu0
      %v2224 = vadd.f32 0.0, %v2223
      %v2225 = vpop.f32.mrb[0].mxu0
      %v2226 = vadd.f32 0.0, %v2225
      %v2227 = vpop.f32.mrb[0].mxu0
      %v2228 = vadd.f32 0.0, %v2227
      %v2229 = vpop.f32.mrb[0].mxu0
      %v2230 = vadd.f32 0.0, %v2229
      %2231 = vmatprep.mubr.bf16.mxu0 0
      %2232 = vmatmul.mubr.bf16.gmra.mrb[0].mxu0 %v961
      %v2233 = vpop.f32.mrb[0].mxu0
      %v2234 = vadd.f32 0.0, %v2233
      %v2235 = vpop.f32.mrb[0].mxu0
      %v2236 = vadd.f32 0.0, %v2235
      %v2237 = vpop.f32.mrb[0].mxu0
      %v2238 = vadd.f32 0.0, %v2237
      %v2239 = vpop.f32.mrb[0].mxu0
      %v2240 = vadd.f32 0.0, %v2239
      %2241 = vmatprep.mubr.bf16.mxu0 0
      %2242 = vmatmul.mubr.bf16.gmra.mrb[0].mxu0 %v964
      %v2243 = vpop.f32.mrb[0].mxu0
      %v2244 = vadd.f32 0.0, %v2243
      %v2245 = vpop.f32.mrb[0].mxu0
      %v2246 = vadd.f32 0.0, %v2245
      %v2247 = vpop.f32.mrb[0].mxu0
      %v2248 = vadd.f32 0.0, %v2247
      %v2249 = vpop.f32.mrb[0].mxu0
      %v2250 = vadd.f32 0.0, %v2249
      %2251 = vmatprep.mubr.bf16.mxu0 0
      %2252 = vmatmul.mubr.bf16.gmra.mrb[0].mxu0 %v967
      %v2253 = vpop.f32.mrb[0].mxu0
      %v2254 = vadd.f32 0.0, %v2253
      %v2255 = vpop.f32.mrb[0].mxu0
      %v2256 = vadd.f32 0.0, %v2255
      %v2257 = vpop.f32.mrb[0].mxu0
      %v2258 = vadd.f32 0.0, %v2257
      %v2259 = vpop.f32.mrb[0].mxu0
      %v2260 = vadd.f32 0.0, %v2259
      %2261 = vmatprep.mubr.bf16.mxu0 0
      %2262 = vmatmul.mubr.bf16.gmra.mrb[0].mxu0 %v970
      %v2263 = vpop.f32.mrb[0].mxu0
      %v2264 = vadd.f32 0.0, %v2263
      %v2265 = vpop.f32.mrb[0].mxu0
      %v2266 = vadd.f32 0.0, %v2265
      %v2267 = vpop.f32.mrb[0].mxu0
      %v2268 = vadd.f32 0.0, %v2267
      %v2269 = vpop.f32.mrb[0].mxu0
      %v2270 = vadd.f32 0.0, %v2269
      %2271 = vmatprep.mubr.bf16.mxu0 0
      %2272 = vmatmul.mubr.bf16.gmra.mrb[0].mxu0 %v973
      %v2273 = vpop.f32.mrb[0].mxu0
      %v2274 = vadd.f32 0.0, %v2273
      %v2275 = vpop.f32.mrb[0].mxu0
      %v2276 = vadd.f32 0.0, %v2275
      %v2277 = vpop.f32.mrb[0].mxu0
      %v2278 = vadd.f32 0.0, %v2277
      %v2279 = vpop.f32.mrb[0].mxu0
      %v2280 = vadd.f32 0.0, %v2279
      %2281 = vmatprep.mubr.bf16.mxu0 0
      %2282 = vmatmul.mubr.bf16.gmra.mrb[0].mxu0 %v976
      %v2283 = vpop.f32.mrb[0].mxu0
      %v2284 = vadd.f32 0.0, %v2283
      %v2285 = vpop.f32.mrb[0].mxu0
      %v2286 = vadd.f32 0.0, %v2285
      %v2287 = vpop.f32.mrb[0].mxu0
      %v2288 = vadd.f32 0.0, %v2287
      %v2289 = vpop.f32.mrb[0].mxu0
      %v2290 = vadd.f32 0.0, %v2289
      %2291 = vmatprep.mubr.bf16.mxu0 0
      %2292 = vmatmul.mubr.bf16.gmra.mrb[0].mxu0 %v979
      %v2293 = vpop.f32.mrb[0].mxu0
      %v2294 = vadd.f32 0.0, %v2293
      %v2295 = vpop.f32.mrb[0].mxu0
      %v2296 = vadd.f32 0.0, %v2295
      %v2297 = vpop.f32.mrb[0].mxu0
      %v2298 = vadd.f32 0.0, %v2297
      %v2299 = vpop.f32.mrb[0].mxu0
      %v2300 = vadd.f32 0.0, %v2299
      %2301 = vmatprep.mubr.bf16.mxu0 0
      %2302 = vmatmul.mubr.bf16.gmra.mrb[0].mxu0 %v982
      %v2303 = vpop.f32.mrb[0].mxu0
      %v2304 = vadd.f32 0.0, %v2303
      %v2305 = vpop.f32.mrb[0].mxu0
      %v2306 = vadd.f32 0.0, %v2305
      %v2307 = vpop.f32.mrb[0].mxu0
      %v2308 = vadd.f32 0.0, %v2307
      %v2309 = vpop.f32.mrb[0].mxu0
      %v2310 = vadd.f32 0.0, %v2309
      %2311 = vmatprep.mubr.bf16.mxu0 0
      %2312 = vmatmul.mubr.bf16.gmra.mrb[0].mxu0 %v985
      %v2313 = vpop.f32.mrb[0].mxu0
      %v2314 = vadd.f32 0.0, %v2313
      %v2315 = vpop.f32.mrb[0].mxu0
      %v2316 = vadd.f32 0.0, %v2315
      %v2317 = vpop.f32.mrb[0].mxu0
      %v2318 = vadd.f32 0.0, %v2317
      %v2319 = vpop.f32.mrb[0].mxu0
      %v2320 = vadd.f32 0.0, %v2319
      %2321 = vmatprep.mubr.bf16.mxu0 0
      %2322 = vmatmul.mubr.bf16.gmra.mrb[0].mxu0 %v988
      %v2323 = vpop.f32.mrb[0].mxu0
      %v2324 = vadd.f32 0.0, %v2323
      %v2325 = vpop.f32.mrb[0].mxu0
      %v2326 = vadd.f32 0.0, %v2325
      %v2327 = vpop.f32.mrb[0].mxu0
      %v2328 = vadd.f32 0.0, %v2327
      %v2329 = vpop.f32.mrb[0].mxu0
      %v2330 = vadd.f32 0.0, %v2329
      %2331 = vmatprep.mubr.bf16.mxu0 0
      %2332 = vmatmul.mubr.bf16.gmra.mrb[0].mxu0 %v991
      %v2333 = vpop.f32.mrb[0].mxu0
      %v2334 = vadd.f32 0.0, %v2333
      %v2335 = vpop.f32.mrb[0].mxu0
      %v2336 = vadd.f32 0.0, %v2335
      %v2337 = vpop.f32.mrb[0].mxu0
      %v2338 = vadd.f32 0.0, %v2337
      %v2339 = vpop.f32.mrb[0].mxu0
      %v2340 = vadd.f32 0.0, %v2339
      %2341 = vmatprep.mubr.bf16.mxu0 0
      %2342 = vmatmul.mubr.bf16.gmra.mrb[0].mxu0 %v994
      %v2343 = vpop.f32.mrb[0].mxu0
      %v2344 = vadd.f32 0.0, %v2343
      %v2345 = vpop.f32.mrb[0].mxu0
      %v2346 = vadd.f32 0.0, %v2345
      %v2347 = vpop.f32.mrb[0].mxu0
      %v2348 = vadd.f32 0.0, %v2347
      %v2349 = vpop.f32.mrb[0].mxu0
      %v2350 = vadd.f32 0.0, %v2349
      %2351 = vmatprep.mubr.bf16.mxu0 0
      %2352 = vmatmul.mubr.bf16.gmra.mrb[0].mxu0 %v997
      %v2353 = vpop.f32.mrb[0].mxu0
      %v2354 = vadd.f32 0.0, %v2353
      %v2355 = vpop.f32.mrb[0].mxu0
      %v2356 = vadd.f32 0.0, %v2355
      %v2357 = vpop.f32.mrb[0].mxu0
      %v2358 = vadd.f32 0.0, %v2357
      %v2359 = vpop.f32.mrb[0].mxu0
      %v2360 = vadd.f32 0.0, %v2359
      %2361 = vmatprep.mubr.bf16.mxu0 0
      %2362 = vmatmul.mubr.bf16.gmra.mrb[0].mxu0 %v1000
      %v2363 = vpop.f32.mrb[0].mxu0
      %v2364 = vadd.f32 0.0, %v2363
      %v2365 = vpop.f32.mrb[0].mxu0
      %v2366 = vadd.f32 0.0, %v2365
      %v2367 = vpop.f32.mrb[0].mxu0
      %v2368 = vadd.f32 0.0, %v2367
      %v2369 = vpop.f32.mrb[0].mxu0
      %v2370 = vadd.f32 0.0, %v2369
      %2371 = vmatprep.mubr.bf16.mxu0 0
      %2372 = vmatmul.mubr.bf16.gmra.mrb[0].mxu0 %v1003
      %v2373 = vpop.f32.mrb[0].mxu0
      %v2374 = vadd.f32 0.0, %v2373
      %v2375 = vpop.f32.mrb[0].mxu0
      %v2376 = vadd.f32 0.0, %v2375
      %v2377 = vpop.f32.mrb[0].mxu0
      %v2378 = vadd.f32 0.0, %v2377
      %v2379 = vpop.f32.mrb[0].mxu0
      %v2380 = vadd.f32 0.0, %v2379
      %2381 = vmatprep.mubr.bf16.mxu0 0
      %2382 = vmatmul.mubr.bf16.gmra.mrb[0].mxu0 %v1006
      %v2383 = vpop.f32.mrb[0].mxu0
      %v2384 = vadd.f32 0.0, %v2383
      %v2385 = vpop.f32.mrb[0].mxu0
      %v2386 = vadd.f32 0.0, %v2385
      %v2387 = vpop.f32.mrb[0].mxu0
      %v2388 = vadd.f32 0.0, %v2387
      %v2389 = vpop.f32.mrb[0].mxu0
      %v2390 = vadd.f32 0.0, %v2389
      %2391 = vmatprep.mubr.bf16.mxu0 0
      %2392 = vmatmul.mubr.bf16.gmra.mrb[0].mxu0 %v1009
      %v2393 = vpop.f32.mrb[0].mxu0
      %v2394 = vadd.f32 0.0, %v2393
      %v2395 = vpop.f32.mrb[0].mxu0
      %v2396 = vadd.f32 0.0, %v2395
      %v2397 = vpop.f32.mrb[0].mxu0
      %v2398 = vadd.f32 0.0, %v2397
      %v2399 = vpop.f32.mrb[0].mxu0
      %v2400 = vadd.f32 0.0, %v2399
      %2401 = vmatprep.mubr.bf16.mxu0 0
      %2402 = vmatmul.mubr.bf16.gmra.mrb[0].mxu0 %v1012
      %v2403 = vpop.f32.mrb[0].mxu0
      %v2404 = vadd.f32 0.0, %v2403
      %v2405 = vpop.f32.mrb[0].mxu0
      %v2406 = vadd.f32 0.0, %v2405
      %v2407 = vpop.f32.mrb[0].mxu0
      %v2408 = vadd.f32 0.0, %v2407
      %v2409 = vpop.f32.mrb[0].mxu0
      %v2410 = vadd.f32 0.0, %v2409
      %2411 = vmatprep.mubr.bf16.mxu0 0
      %2412 = vmatmul.mubr.bf16.gmra.mrb[0].mxu0 %v1015
      %v2413 = vpop.f32.mrb[0].mxu0
      %v2414 = vadd.f32 0.0, %v2413
      %v2415 = vpop.f32.mrb[0].mxu0
      %v2416 = vadd.f32 0.0, %v2415
      %v2417 = vpop.f32.mrb[0].mxu0
      %v2418 = vadd.f32 0.0, %v2417
      %v2419 = vpop.f32.mrb[0].mxu0
      %v2420 = vadd.f32 0.0, %v2419
      %2421 = vmatprep.mubr.bf16.mxu0 0
      %2422 = vmatmul.mubr.bf16.gmra.mrb[0].mxu0 %v1018
      %v2423 = vpop.f32.mrb[0].mxu0
      %v2424 = vadd.f32 0.0, %v2423
      %v2425 = vpop.f32.mrb[0].mxu0
      %v2426 = vadd.f32 0.0, %v2425
      %v2427 = vpop.f32.mrb[0].mxu0
      %v2428 = vadd.f32 0.0, %v2427
      %v2429 = vpop.f32.mrb[0].mxu0
      %v2430 = vadd.f32 0.0, %v2429
      %2431 = vmatprep.mubr.bf16.mxu0 0
      %2432 = vmatmul.mubr.bf16.gmra.mrb[0].mxu0 %v1021
      %v2433 = vpop.f32.mrb[0].mxu0
      %v2434 = vadd.f32 0.0, %v2433
      %v2435 = vpop.f32.mrb[0].mxu0
      %v2436 = vadd.f32 0.0, %v2435
      %v2437 = vpop.f32.mrb[0].mxu0
      %v2438 = vadd.f32 0.0, %v2437
      %v2439 = vpop.f32.mrb[0].mxu0
      %v2440 = vadd.f32 0.0, %v2439
      %2441 = vmatprep.mubr.bf16.mxu0 0
      %2442 = vmatmul.mubr.bf16.gmra.mrb[0].mxu0 %v1024
      %v2443 = vpop.f32.mrb[0].mxu0
      %v2444 = vadd.f32 0.0, %v2443
      %v2445 = vpop.f32.mrb[0].mxu0
      %v2446 = vadd.f32 0.0, %v2445
      %v2447 = vpop.f32.mrb[0].mxu0
      %v2448 = vadd.f32 0.0, %v2447
      %v2449 = vpop.f32.mrb[0].mxu0
      %v2450 = vadd.f32 0.0, %v2449
      %2451 = vmatprep.mubr.bf16.mxu0 0
      %2452 = vmatmul.mubr.bf16.gmra.mrb[0].mxu0 %v1027
      %v2453 = vpop.f32.mrb[0].mxu0
      %v2454 = vadd.f32 0.0, %v2453
      %v2455 = vpop.f32.mrb[0].mxu0
      %v2456 = vadd.f32 0.0, %v2455
      %v2457 = vpop.f32.mrb[0].mxu0
      %v2458 = vadd.f32 0.0, %v2457
      %v2459 = vpop.f32.mrb[0].mxu0
      %v2460 = vadd.f32 0.0, %v2459
      %2461 = vmatprep.mubr.bf16.mxu0 0
      %2462 = vmatmul.mubr.bf16.gmra.mrb[0].mxu0 %v1030
      %v2463 = vpop.f32.mrb[0].mxu0
      %v2464 = vadd.f32 0.0, %v2463
      %v2465 = vpop.f32.mrb[0].mxu0
      %v2466 = vadd.f32 0.0, %v2465
      %v2467 = vpop.f32.mrb[0].mxu0
      %v2468 = vadd.f32 0.0, %v2467
      %v2469 = vpop.f32.mrb[0].mxu0
      %v2470 = vadd.f32 0.0, %v2469
      %2471 = vmatprep.mubr.bf16.mxu0 0
      %2472 = vmatmul.mubr.bf16.gmra.mrb[0].mxu0 %v1033
      %v2473 = vpop.f32.mrb[0].mxu0
      %v2474 = vadd.f32 0.0, %v2473
      %v2475 = vpop.f32.mrb[0].mxu0
      %v2476 = vadd.f32 0.0, %v2475
      %v2477 = vpop.f32.mrb[0].mxu0
      %v2478 = vadd.f32 0.0, %v2477
      %v2479 = vpop.f32.mrb[0].mxu0
      %v2480 = vadd.f32 0.0, %v2479
      %2481 = vmatprep.mubr.bf16.mxu0 0
      %2482 = vmatmul.mubr.bf16.gmra.mrb[0].mxu0 %v1036
      %v2483 = vpop.f32.mrb[0].mxu0
      %v2484 = vadd.f32 0.0, %v2483
      %v2485 = vpop.f32.mrb[0].mxu0
      %v2486 = vadd.f32 0.0, %v2485
      %v2487 = vpop.f32.mrb[0].mxu0
      %v2488 = vadd.f32 0.0, %v2487
      %v2489 = vpop.f32.mrb[0].mxu0
      %v2490 = vadd.f32 0.0, %v2489
      %2491 = vmatprep.mubr.bf16.mxu0 0
      %2492 = vmatmul.mubr.bf16.gmra.mrb[0].mxu0 %v1039
      %v2493 = vpop.f32.mrb[0].mxu0
      %v2494 = vadd.f32 0.0, %v2493
      %v2495 = vpop.f32.mrb[0].mxu0
      %v2496 = vadd.f32 0.0, %v2495
      %v2497 = vpop.f32.mrb[0].mxu0
      %v2498 = vadd.f32 0.0, %v2497
      %v2499 = vpop.f32.mrb[0].mxu0
      %v2500 = vadd.f32 0.0, %v2499
      %2501 = vmatprep.mubr.bf16.mxu0 0
      %2502 = vmatmul.mubr.bf16.gmra.mrb[0].mxu0 %v1042
      %v2503 = vpop.f32.mrb[0].mxu0
      %v2504 = vadd.f32 0.0, %v2503
      %v2505 = vpop.f32.mrb[0].mxu0
      %v2506 = vadd.f32 0.0, %v2505
      %v2507 = vpop.f32.mrb[0].mxu0
      %v2508 = vadd.f32 0.0, %v2507
      %v2509 = vpop.f32.mrb[0].mxu0
      %v2510 = vadd.f32 0.0, %v2509
      %2511 = vmatprep.mubr.bf16.mxu0 0
      %2512 = vmatmul.mubr.bf16.gmra.mrb[0].mxu0 %v1045
      %v2513 = vpop.f32.mrb[0].mxu0
      %v2514 = vadd.f32 0.0, %v2513
      %v2515 = vpop.f32.mrb[0].mxu0
      %v2516 = vadd.f32 0.0, %v2515
      %v2517 = vpop.f32.mrb[0].mxu0
      %v2518 = vadd.f32 0.0, %v2517
      %v2519 = vpop.f32.mrb[0].mxu0
      %v2520 = vadd.f32 0.0, %v2519
      %2521 = vmatprep.mubr.bf16.mxu0 0
      %2522 = vmatmul.mubr.bf16.gmra.mrb[0].mxu0 %v1048
      %v2523 = vpop.f32.mrb[0].mxu0
      %v2524 = vadd.f32 0.0, %v2523
      %v2525 = vpop.f32.mrb[0].mxu0
      %v2526 = vadd.f32 0.0, %v2525
      %v2527 = vpop.f32.mrb[0].mxu0
      %v2528 = vadd.f32 0.0, %v2527
      %v2529 = vpop.f32.mrb[0].mxu0
      %v2530 = vadd.f32 0.0, %v2529
      %2531 = vmatprep.mubr.bf16.mxu0 0
      %2532 = vmatmul.mubr.bf16.gmra.mrb[0].mxu0 %v1051
      %v2533 = vpop.f32.mrb[0].mxu0
      %v2534 = vadd.f32 0.0, %v2533
      %v2535 = vpop.f32.mrb[0].mxu0
      %v2536 = vadd.f32 0.0, %v2535
      %v2537 = vpop.f32.mrb[0].mxu0
      %v2538 = vadd.f32 0.0, %v2537
      %v2539 = vpop.f32.mrb[0].mxu0
      %v2540 = vadd.f32 0.0, %v2539
      %2541 = vmatprep.mubr.bf16.mxu0 0
      %2542 = vmatmul.mubr.bf16.gmra.mrb[0].mxu0 %v1054
      %v2543 = vpop.f32.mrb[0].mxu0
      %v2544 = vadd.f32 0.0, %v2543
      %v2545 = vpop.f32.mrb[0].mxu0
      %v2546 = vadd.f32 0.0, %v2545
      %v2547 = vpop.f32.mrb[0].mxu0
      %v2548 = vadd.f32 0.0, %v2547
      %v2549 = vpop.f32.mrb[0].mxu0
      %v2550 = vadd.f32 0.0, %v2549
      %2551 = vmatprep.mubr.bf16.mxu0 0
      %2552 = vmatmul.mubr.bf16.gmra.mrb[0].mxu0 %v1057
      %v2553 = vpop.f32.mrb[0].mxu0
      %v2554 = vadd.f32 0.0, %v2553
      %v2555 = vpop.f32.mrb[0].mxu0
      %v2556 = vadd.f32 0.0, %v2555
      %v2557 = vpop.f32.mrb[0].mxu0
      %v2558 = vadd.f32 0.0, %v2557
      %v2559 = vpop.f32.mrb[0].mxu0
      %v2560 = vadd.f32 0.0, %v2559
      %2561 = vmatprep.mubr.bf16.mxu0 0
      %2562 = vmatmul.mubr.bf16.gmra.mrb[0].mxu0 %v1060
      %v2563 = vpop.f32.mrb[0].mxu0
      %v2564 = vadd.f32 0.0, %v2563
      %v2565 = vpop.f32.mrb[0].mxu0
      %v2566 = vadd.f32 0.0, %v2565
      %v2567 = vpop.f32.mrb[0].mxu0
      %v2568 = vadd.f32 0.0, %v2567
      %v2569 = vpop.f32.mrb[0].mxu0
      %v2570 = vadd.f32 0.0, %v2569
      %2571 = vmatprep.mubr.bf16.mxu0 0
      %2572 = vmatmul.mubr.bf16.gmra.mrb[0].mxu0 %v1063
      %v2573 = vpop.f32.mrb[0].mxu0
      %v2574 = vadd.f32 0.0, %v2573
      %v2575 = vpop.f32.mrb[0].mxu0
      %v2576 = vadd.f32 0.0, %v2575
      %v2577 = vpop.f32.mrb[0].mxu0
      %v2578 = vadd.f32 0.0, %v2577
      %v2579 = vpop.f32.mrb[0].mxu0
      %v2580 = vadd.f32 0.0, %v2579
      %2581 = vmatprep.mubr.bf16.mxu0 0
      %2582 = vmatmul.mubr.bf16.gmra.mrb[0].mxu0 %v1066
      %v2583 = vpop.f32.mrb[0].mxu0
      %v2584 = vadd.f32 0.0, %v2583
      %v2585 = vpop.f32.mrb[0].mxu0
      %v2586 = vadd.f32 0.0, %v2585
      %v2587 = vpop.f32.mrb[0].mxu0
      %v2588 = vadd.f32 0.0, %v2587
      %v2589 = vpop.f32.mrb[0].mxu0
      %v2590 = vadd.f32 0.0, %v2589
      %2591 = vmatprep.mubr.bf16.mxu0 0
      %2592 = vmatmul.mubr.bf16.gmra.mrb[0].mxu0 %v1069
      %v2593 = vpop.f32.mrb[0].mxu0
      %v2594 = vadd.f32 0.0, %v2593
      %v2595 = vpop.f32.mrb[0].mxu0
      %v2596 = vadd.f32 0.0, %v2595
      %v2597 = vpop.f32.mrb[0].mxu0
      %v2598 = vadd.f32 0.0, %v2597
      %v2599 = vpop.f32.mrb[0].mxu0
      %v2600 = vadd.f32 0.0, %v2599
      %2601 = vmatprep.mubr.bf16.mxu0 0
      %2602 = vmatmul.mubr.bf16.gmra.mrb[0].mxu0 %v1072
      %v2603 = vpop.f32.mrb[0].mxu0
      %v2604 = vadd.f32 0.0, %v2603
      %v2605 = vpop.f32.mrb[0].mxu0
      %v2606 = vadd.f32 0.0, %v2605
      %v2607 = vpop.f32.mrb[0].mxu0
      %v2608 = vadd.f32 0.0, %v2607
      %v2609 = vpop.f32.mrb[0].mxu0
      %v2610 = vadd.f32 0.0, %v2609
      %2611 = vmatprep.mubr.bf16.mxu0 0
      %2612 = vmatmul.mubr.bf16.gmra.mrb[0].mxu0 %v1075
      %v2613 = vpop.f32.mrb[0].mxu0
      %v2614 = vadd.f32 0.0, %v2613
      %v2615 = vpop.f32.mrb[0].mxu0
      %v2616 = vadd.f32 0.0, %v2615
      %v2617 = vpop.f32.mrb[0].mxu0
      %v2618 = vadd.f32 0.0, %v2617
      %v2619 = vpop.f32.mrb[0].mxu0
      %v2620 = vadd.f32 0.0, %v2619
      %2621 = vmatprep.mubr.bf16.mxu0 0
      %2622 = vmatmul.mubr.bf16.gmra.mrb[0].mxu0 %v1078
      %v2623 = vpop.f32.mrb[0].mxu0
      %v2624 = vadd.f32 0.0, %v2623
      %v2625 = vpop.f32.mrb[0].mxu0
      %v2626 = vadd.f32 0.0, %v2625
      %v2627 = vpop.f32.mrb[0].mxu0
      %v2628 = vadd.f32 0.0, %v2627
      %v2629 = vpop.f32.mrb[0].mxu0
      %v2630 = vadd.f32 0.0, %v2629
      %2631 = vmatprep.mubr.bf16.mxu0 0
      %2632 = vmatmul.mubr.bf16.gmra.mrb[0].mxu0 %v1081
      %v2633 = vpop.f32.mrb[0].mxu0
      %v2634 = vadd.f32 0.0, %v2633
      %v2635 = vpop.f32.mrb[0].mxu0
      %v2636 = vadd.f32 0.0, %v2635
      %v2637 = vpop.f32.mrb[0].mxu0
      %v2638 = vadd.f32 0.0, %v2637
      %v2639 = vpop.f32.mrb[0].mxu0
      %v2640 = vadd.f32 0.0, %v2639
      %2641 = vmatprep.mubr.bf16.mxu0 0
      %2642 = vmatmul.mubr.bf16.gmra.mrb[0].mxu0 %v1084
      %v2643 = vpop.f32.mrb[0].mxu0
      %v2644 = vadd.f32 0.0, %v2643
      %v2645 = vpop.f32.mrb[0].mxu0
      %v2646 = vadd.f32 0.0, %v2645
      %v2647 = vpop.f32.mrb[0].mxu0
      %v2648 = vadd.f32 0.0, %v2647
      %v2649 = vpop.f32.mrb[0].mxu0
      %v2650 = vadd.f32 0.0, %v2649
      %2651 = vmatprep.mubr.bf16.mxu0 0
      %2652 = vmatmul.mubr.bf16.gmra.mrb[0].mxu0 %v1087
      %v2653 = vpop.f32.mrb[0].mxu0
      %v2654 = vadd.f32 0.0, %v2653
      %v2655 = vpop.f32.mrb[0].mxu0
      %v2656 = vadd.f32 0.0, %v2655
      %v2657 = vpop.f32.mrb[0].mxu0
      %v2658 = vadd.f32 0.0, %v2657
      %v2659 = vpop.f32.mrb[0].mxu0
      %v2660 = vadd.f32 0.0, %v2659
      %2661 = vmatprep.mubr.bf16.mxu0 0
      %2662 = vmatmul.mubr.bf16.gmra.mrb[0].mxu0 %v1090
      %v2663 = vpop.f32.mrb[0].mxu0
      %v2664 = vadd.f32 0.0, %v2663
      %v2665 = vpop.f32.mrb[0].mxu0
      %v2666 = vadd.f32 0.0, %v2665
      %v2667 = vpop.f32.mrb[0].mxu0
      %v2668 = vadd.f32 0.0, %v2667
      %v2669 = vpop.f32.mrb[0].mxu0
      %v2670 = vadd.f32 0.0, %v2669
      %2671 = vmatprep.mubr.bf16.mxu0 0
      %2672 = vmatmul.mubr.bf16.gmra.mrb[0].mxu0 %v1093
      %v2673 = vpop.f32.mrb[0].mxu0
      %v2674 = vadd.f32 0.0, %v2673
      %v2675 = vpop.f32.mrb[0].mxu0
      %v2676 = vadd.f32 0.0, %v2675
      %v2677 = vpop.f32.mrb[0].mxu0
      %v2678 = vadd.f32 0.0, %v2677
      %v2679 = vpop.f32.mrb[0].mxu0
      %v2680 = vadd.f32 0.0, %v2679
      %2681 = vmatprep.mubr.bf16.mxu0 0
      %2682 = vmatmul.mubr.bf16.gmra.mrb[0].mxu0 %v1096
      %v2683 = vpop.f32.mrb[0].mxu0
      %v2684 = vadd.f32 0.0, %v2683
      %v2685 = vpop.f32.mrb[0].mxu0
      %v2686 = vadd.f32 0.0, %v2685
      %v2687 = vpop.f32.mrb[0].mxu0
      %v2688 = vadd.f32 0.0, %v2687
      %v2689 = vpop.f32.mrb[0].mxu0
      %v2690 = vadd.f32 0.0, %v2689
      %2691 = vmatprep.mubr.bf16.mxu0 0
      %2692 = vmatmul.mubr.bf16.gmra.mrb[0].mxu0 %v1099
      %v2693 = vpop.f32.mrb[0].mxu0
      %v2694 = vadd.f32 0.0, %v2693
      %v2695 = vpop.f32.mrb[0].mxu0
      %v2696 = vadd.f32 0.0, %v2695
      %v2697 = vpop.f32.mrb[0].mxu0
      %v2698 = vadd.f32 0.0, %v2697
      %v2699 = vpop.f32.mrb[0].mxu0
      %v2700 = vadd.f32 0.0, %v2699
      %2701 = vmatprep.mubr.bf16.mxu0 0
      %2702 = vmatmul.mubr.bf16.gmra.mrb[0].mxu0 %v1102
      %v2703 = vpop.f32.mrb[0].mxu0
      %v2704 = vadd.f32 0.0, %v2703
      %v2705 = vpop.f32.mrb[0].mxu0
      %v2706 = vadd.f32 0.0, %v2705
      %v2707 = vpop.f32.mrb[0].mxu0
      %v2708 = vadd.f32 0.0, %v2707
      %v2709 = vpop.f32.mrb[0].mxu0
      %v2710 = vadd.f32 0.0, %v2709
      %2711 = vmatprep.mubr.bf16.mxu0 0
      %2712 = vmatmul.mubr.bf16.gmra.mrb[0].mxu0 %v1105
      %v2713 = vpop.f32.mrb[0].mxu0
      %v2714 = vadd.f32 0.0, %v2713
      %v2715 = vpop.f32.mrb[0].mxu0
      %v2716 = vadd.f32 0.0, %v2715
      %v2717 = vpop.f32.mrb[0].mxu0
      %v2718 = vadd.f32 0.0, %v2717
      %v2719 = vpop.f32.mrb[0].mxu0
      %v2720 = vadd.f32 0.0, %v2719
      %2721 = vmatprep.mubr.bf16.mxu0 0
      %2722 = vmatmul.mubr.bf16.gmra.mrb[0].mxu0 %v1108
      %v2723 = vpop.f32.mrb[0].mxu0
      %v2724 = vadd.f32 0.0, %v2723
      %v2725 = vpop.f32.mrb[0].mxu0
      %v2726 = vadd.f32 0.0, %v2725
      %v2727 = vpop.f32.mrb[0].mxu0
      %v2728 = vadd.f32 0.0, %v2727
      %v2729 = vpop.f32.mrb[0].mxu0
      %v2730 = vadd.f32 0.0, %v2729
      %2731 = vmatprep.mubr.bf16.mxu0 0
      %2732 = vmatmul.mubr.bf16.gmra.mrb[0].mxu0 %v1111
      %v2733 = vpop.f32.mrb[0].mxu0
      %v2734 = vadd.f32 0.0, %v2733
      %v2735 = vpop.f32.mrb[0].mxu0
      %v2736 = vadd.f32 0.0, %v2735
      %v2737 = vpop.f32.mrb[0].mxu0
      %v2738 = vadd.f32 0.0, %v2737
      %v2739 = vpop.f32.mrb[0].mxu0
      %v2740 = vadd.f32 0.0, %v2739
      %2741 = vmatprep.mubr.bf16.mxu0 0
      %2742 = vmatmul.mubr.bf16.gmra.mrb[0].mxu0 %v1114
      %v2743 = vpop.f32.mrb[0].mxu0
      %v2744 = vadd.f32 0.0, %v2743
      %v2745 = vpop.f32.mrb[0].mxu0
      %v2746 = vadd.f32 0.0, %v2745
      %v2747 = vpop.f32.mrb[0].mxu0
      %v2748 = vadd.f32 0.0, %v2747
      %v2749 = vpop.f32.mrb[0].mxu0
      %v2750 = vadd.f32 0.0, %v2749
      %2751 = vmatprep.mubr.bf16.mxu0 0
      %2752 = vmatmul.mubr.bf16.gmra.mrb[0].mxu0 %v1117
      %v2753 = vpop.f32.mrb[0].mxu0
      %v2754 = vadd.f32 0.0, %v2753
      %v2755 = vpop.f32.mrb[0].mxu0
      %v2756 = vadd.f32 0.0, %v2755
      %v2757 = vpop.f32.mrb[0].mxu0
      %v2758 = vadd.f32 0.0, %v2757
      %v2759 = vpop.f32.mrb[0].mxu0
      %v2760 = vadd.f32 0.0, %v2759
      %2761 = vmatprep.mubr.bf16.mxu0 0
      %2762 = vmatmul.mubr.bf16.gmra.mrb[0].mxu0 %v1120
      %v2763 = vpop.f32.mrb[0].mxu0
      %v2764 = vadd.f32 0.0, %v2763
      %v2765 = vpop.f32.mrb[0].mxu0
      %v2766 = vadd.f32 0.0, %v2765
      %v2767 = vpop.f32.mrb[0].mxu0
      %v2768 = vadd.f32 0.0, %v2767
      %v2769 = vpop.f32.mrb[0].mxu0
      %v2770 = vadd.f32 0.0, %v2769
      %2771 = vmatprep.mubr.bf16.mxu0 0
      %2772 = vmatmul.mubr.bf16.gmra.mrb[0].mxu0 %v1123
      %v2773 = vpop.f32.mrb[0].mxu0
      %v2774 = vadd.f32 0.0, %v2773
      %v2775 = vpop.f32.mrb[0].mxu0
      %v2776 = vadd.f32 0.0, %v2775
      %v2777 = vpop.f32.mrb[0].mxu0
      %v2778 = vadd.f32 0.0, %v2777
      %v2779 = vpop.f32.mrb[0].mxu0
      %v2780 = vadd.f32 0.0, %v2779
      %2781 = vmatprep.mubr.bf16.mxu0 0
      %2782 = vmatmul.mubr.bf16.gmra.mrb[0].mxu0 %v1126
      %v2783 = vpop.f32.mrb[0].mxu0
      %v2784 = vadd.f32 0.0, %v2783
      %v2785 = vpop.f32.mrb[0].mxu0
      %v2786 = vadd.f32 0.0, %v2785
      %v2787 = vpop.f32.mrb[0].mxu0
      %v2788 = vadd.f32 0.0, %v2787
      %v2789 = vpop.f32.mrb[0].mxu0
      %v2790 = vadd.f32 0.0, %v2789
      %2791 = vmatprep.mubr.bf16.mxu0 0
      %2792 = vmatmul.mubr.bf16.gmra.mrb[0].mxu0 %v1129
      %v2793 = vpop.f32.mrb[0].mxu0
      %v2794 = vadd.f32 0.0, %v2793
      %v2795 = vpop.f32.mrb[0].mxu0
      %v2796 = vadd.f32 0.0, %v2795
      %v2797 = vpop.f32.mrb[0].mxu0
      %v2798 = vadd.f32 0.0, %v2797
      %v2799 = vpop.f32.mrb[0].mxu0
      %v2800 = vadd.f32 0.0, %v2799
      %2801 = vmatprep.mubr.bf16.mxu0 0
      %2802 = vmatmul.mubr.bf16.gmra.mrb[0].mxu0 %v1132
      %v2803 = vpop.f32.mrb[0].mxu0
      %v2804 = vadd.f32 0.0, %v2803
      %v2805 = vpop.f32.mrb[0].mxu0
      %v2806 = vadd.f32 0.0, %v2805
      %v2807 = vpop.f32.mrb[0].mxu0
      %v2808 = vadd.f32 0.0, %v2807
      %v2809 = vpop.f32.mrb[0].mxu0
      %v2810 = vadd.f32 0.0, %v2809
      %2811 = vmatprep.mubr.bf16.mxu0 0
      %2812 = vmatmul.mubr.bf16.gmra.mrb[0].mxu0 %v1135
      %v2813 = vpop.f32.mrb[0].mxu0
      %v2814 = vadd.f32 0.0, %v2813
      %v2815 = vpop.f32.mrb[0].mxu0
      %v2816 = vadd.f32 0.0, %v2815
      %v2817 = vpop.f32.mrb[0].mxu0
      %v2818 = vadd.f32 0.0, %v2817
      %v2819 = vpop.f32.mrb[0].mxu0
      %v2820 = vadd.f32 0.0, %v2819
      %2821 = vmatprep.mubr.bf16.mxu0 0
      %2822 = vmatmul.mubr.bf16.gmra.mrb[0].mxu0 %v1138
      %v2823 = vpop.f32.mrb[0].mxu0
      %v2824 = vadd.f32 0.0, %v2823
      %v2825 = vpop.f32.mrb[0].mxu0
      %v2826 = vadd.f32 0.0, %v2825
      %v2827 = vpop.f32.mrb[0].mxu0
      %v2828 = vadd.f32 0.0, %v2827
      %v2829 = vpop.f32.mrb[0].mxu0
      %v2830 = vadd.f32 0.0, %v2829
      %2831 = vmatprep.mubr.bf16.mxu0 0
      %2832 = vmatmul.mubr.bf16.gmra.mrb[0].mxu0 %v1141
      %v2833 = vpop.f32.mrb[0].mxu0
      %v2834 = vadd.f32 0.0, %v2833
      %v2835 = vpop.f32.mrb[0].mxu0
      %v2836 = vadd.f32 0.0, %v2835
      %v2837 = vpop.f32.mrb[0].mxu0
      %v2838 = vadd.f32 0.0, %v2837
      %v2839 = vpop.f32.mrb[0].mxu0
      %v2840 = vadd.f32 0.0, %v2839
      %2841 = vdwg.mxu0
      %v2842 = vpack.c.bf16 %v1195, %v1191
      %v2843 = vpack.c.bf16 %v1197, %v1193
      %v2844 = vpack.c.bf16 %v2038, %v2034
      %v2845 = vpack.c.bf16 %v2040, %v2036
      %v2846 = vpack.c.bf16 %v1205, %v1201
      %v2847 = vpack.c.bf16 %v1207, %v1203
      %v2848 = vpack.c.bf16 %v2048, %v2044
      %v2849 = vpack.c.bf16 %v2050, %v2046
      %v2850 = vpack.c.bf16 %v1215, %v1211
      %v2851 = vpack.c.bf16 %v1217, %v1213
      %v2852 = vpack.c.bf16 %v2058, %v2054
      %v2853 = vpack.c.bf16 %v2060, %v2056
      %v2854 = vpack.c.bf16 %v1225, %v1221
      %v2855 = vpack.c.bf16 %v1227, %v1223
      %v2856 = vpack.c.bf16 %v2068, %v2064
      %v2857 = vpack.c.bf16 %v2070, %v2066
      %v2858 = vpack.c.bf16 %v1235, %v1231
      %v2859 = vpack.c.bf16 %v1237, %v1233
      %v2860 = vpack.c.bf16 %v2078, %v2074
      %v2861 = vpack.c.bf16 %v2080, %v2076
      %v2862 = vpack.c.bf16 %v1245, %v1241
      %v2863 = vpack.c.bf16 %v1247, %v1243
      %v2864 = vpack.c.bf16 %v2088, %v2084
      %v2865 = vpack.c.bf16 %v2090, %v2086
      %v2866 = vpack.c.bf16 %v1255, %v1251
      %v2867 = vpack.c.bf16 %v1257, %v1253
      %v2868 = vpack.c.bf16 %v2098, %v2094
      %v2869 = vpack.c.bf16 %v2100, %v2096
      %v2870 = vpack.c.bf16 %v1265, %v1261
      %v2871 = vpack.c.bf16 %v1267, %v1263
      %v2872 = vpack.c.bf16 %v2108, %v2104
      %v2873 = vpack.c.bf16 %v2110, %v2106
      %v2874 = vpack.c.bf16 %v1275, %v1271
      %v2875 = vpack.c.bf16 %v1277, %v1273
      %v2876 = vpack.c.bf16 %v2118, %v2114
      %v2877 = vpack.c.bf16 %v2120, %v2116
      %v2878 = vpack.c.bf16 %v1285, %v1281
      %v2879 = vpack.c.bf16 %v1287, %v1283
      %v2880 = vpack.c.bf16 %v2128, %v2124
      %v2881 = vpack.c.bf16 %v2130, %v2126
      %v2882 = vpack.c.bf16 %v1295, %v1291
      %v2883 = vpack.c.bf16 %v1297, %v1293
      %v2884 = vpack.c.bf16 %v2138, %v2134
      %v2885 = vpack.c.bf16 %v2140, %v2136
      %v2886 = vpack.c.bf16 %v1305, %v1301
      %v2887 = vpack.c.bf16 %v1307, %v1303
      %v2888 = vpack.c.bf16 %v2148, %v2144
      %v2889 = vpack.c.bf16 %v2150, %v2146
      %v2890 = vpack.c.bf16 %v1315, %v1311
      %v2891 = vpack.c.bf16 %v1317, %v1313
      %v2892 = vpack.c.bf16 %v2158, %v2154
      %v2893 = vpack.c.bf16 %v2160, %v2156
      %v2894 = vpack.c.bf16 %v1325, %v1321
      %v2895 = vpack.c.bf16 %v1327, %v1323
      %v2896 = vpack.c.bf16 %v2168, %v2164
      %v2897 = vpack.c.bf16 %v2170, %v2166
      %v2898 = vpack.c.bf16 %v1335, %v1331
      %v2899 = vpack.c.bf16 %v1337, %v1333
      %v2900 = vpack.c.bf16 %v2178, %v2174
      %v2901 = vpack.c.bf16 %v2180, %v2176
      %v2902 = vpack.c.bf16 %v1345, %v1341
      %v2903 = vpack.c.bf16 %v1347, %v1343
      %v2904 = vpack.c.bf16 %v2188, %v2184
      %v2905 = vpack.c.bf16 %v2190, %v2186
      %v2906 = vpack.c.bf16 %v1355, %v1351
      %v2907 = vpack.c.bf16 %v1357, %v1353
      %v2908 = vpack.c.bf16 %v2198, %v2194
      %v2909 = vpack.c.bf16 %v2200, %v2196
      %v2910 = vpack.c.bf16 %v1365, %v1361
      %v2911 = vpack.c.bf16 %v1367, %v1363
      %v2912 = vpack.c.bf16 %v2208, %v2204
      %v2913 = vpack.c.bf16 %v2210, %v2206
      %v2914 = vpack.c.bf16 %v1375, %v1371
      %v2915 = vpack.c.bf16 %v1377, %v1373
      %v2916 = vpack.c.bf16 %v2218, %v2214
      %v2917 = vpack.c.bf16 %v2220, %v2216
      %v2918 = vpack.c.bf16 %v1385, %v1381
      %v2919 = vpack.c.bf16 %v1387, %v1383
      %v2920 = vpack.c.bf16 %v2228, %v2224
      %v2921 = vpack.c.bf16 %v2230, %v2226
      %v2922 = vpack.c.bf16 %v1395, %v1391
      %v2923 = vpack.c.bf16 %v1397, %v1393
      %v2924 = vpack.c.bf16 %v2238, %v2234
      %v2925 = vpack.c.bf16 %v2240, %v2236
      %v2926 = vpack.c.bf16 %v1405, %v1401
      %v2927 = vpack.c.bf16 %v1407, %v1403
      %v2928 = vpack.c.bf16 %v2248, %v2244
      %v2929 = vpack.c.bf16 %v2250, %v2246
      %v2930 = vpack.c.bf16 %v1415, %v1411
      %v2931 = vpack.c.bf16 %v1417, %v1413
      %v2932 = vpack.c.bf16 %v2258, %v2254
      %v2933 = vpack.c.bf16 %v2260, %v2256
      %v2934 = vpack.c.bf16 %v1425, %v1421
      %v2935 = vpack.c.bf16 %v1427, %v1423
      %v2936 = vpack.c.bf16 %v2268, %v2264
      %v2937 = vpack.c.bf16 %v2270, %v2266
      %v2938 = vpack.c.bf16 %v1435, %v1431
      %v2939 = vpack.c.bf16 %v1437, %v1433
      %v2940 = vpack.c.bf16 %v2278, %v2274
      %v2941 = vpack.c.bf16 %v2280, %v2276
      %v2942 = vpack.c.bf16 %v1445, %v1441
      %v2943 = vpack.c.bf16 %v1447, %v1443
      %v2944 = vpack.c.bf16 %v2288, %v2284
      %v2945 = vpack.c.bf16 %v2290, %v2286
      %v2946 = vpack.c.bf16 %v1455, %v1451
      %v2947 = vpack.c.bf16 %v1457, %v1453
      %v2948 = vpack.c.bf16 %v2298, %v2294
      %v2949 = vpack.c.bf16 %v2300, %v2296
      %v2950 = vpack.c.bf16 %v1465, %v1461
      %v2951 = vpack.c.bf16 %v1467, %v1463
      %v2952 = vpack.c.bf16 %v2308, %v2304
      %v2953 = vpack.c.bf16 %v2310, %v2306
      %v2954 = vpack.c.bf16 %v1475, %v1471
      %v2955 = vpack.c.bf16 %v1477, %v1473
      %v2956 = vpack.c.bf16 %v2318, %v2314
      %v2957 = vpack.c.bf16 %v2320, %v2316
      %v2958 = vpack.c.bf16 %v1485, %v1481
      %v2959 = vpack.c.bf16 %v1487, %v1483
      %v2960 = vpack.c.bf16 %v2328, %v2324
      %v2961 = vpack.c.bf16 %v2330, %v2326
      %v2962 = vpack.c.bf16 %v1495, %v1491
      %v2963 = vpack.c.bf16 %v1497, %v1493
      %v2964 = vpack.c.bf16 %v2338, %v2334
      %v2965 = vpack.c.bf16 %v2340, %v2336
      %v2966 = vpack.c.bf16 %v1505, %v1501
      %v2967 = vpack.c.bf16 %v1507, %v1503
      %v2968 = vpack.c.bf16 %v2348, %v2344
      %v2969 = vpack.c.bf16 %v2350, %v2346
      %v2970 = vpack.c.bf16 %v1515, %v1511
      %v2971 = vpack.c.bf16 %v1517, %v1513
      %v2972 = vpack.c.bf16 %v2358, %v2354
      %v2973 = vpack.c.bf16 %v2360, %v2356
      %v2974 = vpack.c.bf16 %v1525, %v1521
      %v2975 = vpack.c.bf16 %v1527, %v1523
      %v2976 = vpack.c.bf16 %v2368, %v2364
      %v2977 = vpack.c.bf16 %v2370, %v2366
      %v2978 = vpack.c.bf16 %v1535, %v1531
      %v2979 = vpack.c.bf16 %v1537, %v1533
      %v2980 = vpack.c.bf16 %v2378, %v2374
      %v2981 = vpack.c.bf16 %v2380, %v2376
      %v2982 = vpack.c.bf16 %v1545, %v1541
      %v2983 = vpack.c.bf16 %v1547, %v1543
      %v2984 = vpack.c.bf16 %v2388, %v2384
      %v2985 = vpack.c.bf16 %v2390, %v2386
      %v2986 = vpack.c.bf16 %v1555, %v1551
      %v2987 = vpack.c.bf16 %v1557, %v1553
      %v2988 = vpack.c.bf16 %v2398, %v2394
      %v2989 = vpack.c.bf16 %v2400, %v2396
      %v2990 = vpack.c.bf16 %v1565, %v1561
      %v2991 = vpack.c.bf16 %v1567, %v1563
      %v2992 = vpack.c.bf16 %v2408, %v2404
      %v2993 = vpack.c.bf16 %v2410, %v2406
      %v2994 = vpack.c.bf16 %v1575, %v1571
      %v2995 = vpack.c.bf16 %v1577, %v1573
      %v2996 = vpack.c.bf16 %v2418, %v2414
      %v2997 = vpack.c.bf16 %v2420, %v2416
      %v2998 = vpack.c.bf16 %v1585, %v1581
      %v2999 = vpack.c.bf16 %v1587, %v1583
      %v3000 = vpack.c.bf16 %v2428, %v2424
      %v3001 = vpack.c.bf16 %v2430, %v2426
      %v3002 = vpack.c.bf16 %v1595, %v1591
      %v3003 = vpack.c.bf16 %v1597, %v1593
      %v3004 = vpack.c.bf16 %v2438, %v2434
      %v3005 = vpack.c.bf16 %v2440, %v2436
      %v3006 = vpack.c.bf16 %v1605, %v1601
      %v3007 = vpack.c.bf16 %v1607, %v1603
      %v3008 = vpack.c.bf16 %v2448, %v2444
      %v3009 = vpack.c.bf16 %v2450, %v2446
      %v3010 = vpack.c.bf16 %v1615, %v1611
      %v3011 = vpack.c.bf16 %v1617, %v1613
      %v3012 = vpack.c.bf16 %v2458, %v2454
      %v3013 = vpack.c.bf16 %v2460, %v2456
      %v3014 = vpack.c.bf16 %v1625, %v1621
      %v3015 = vpack.c.bf16 %v1627, %v1623
      %v3016 = vpack.c.bf16 %v2468, %v2464
      %v3017 = vpack.c.bf16 %v2470, %v2466
      %v3018 = vpack.c.bf16 %v1635, %v1631
      %v3019 = vpack.c.bf16 %v1637, %v1633
      %v3020 = vpack.c.bf16 %v2478, %v2474
      %v3021 = vpack.c.bf16 %v2480, %v2476
      %v3022 = vpack.c.bf16 %v1645, %v1641
      %v3023 = vpack.c.bf16 %v1647, %v1643
      %v3024 = vpack.c.bf16 %v2488, %v2484
      %v3025 = vpack.c.bf16 %v2490, %v2486
      %v3026 = vpack.c.bf16 %v1655, %v1651
      %v3027 = vpack.c.bf16 %v1657, %v1653
      %v3028 = vpack.c.bf16 %v2498, %v2494
      %v3029 = vpack.c.bf16 %v2500, %v2496
      %v3030 = vpack.c.bf16 %v1665, %v1661
      %v3031 = vpack.c.bf16 %v1667, %v1663
      %v3032 = vpack.c.bf16 %v2508, %v2504
      %v3033 = vpack.c.bf16 %v2510, %v2506
      %v3034 = vpack.c.bf16 %v1675, %v1671
      %v3035 = vpack.c.bf16 %v1677, %v1673
      %v3036 = vpack.c.bf16 %v2518, %v2514
      %v3037 = vpack.c.bf16 %v2520, %v2516
      %v3038 = vpack.c.bf16 %v1685, %v1681
      %v3039 = vpack.c.bf16 %v1687, %v1683
      %v3040 = vpack.c.bf16 %v2528, %v2524
      %v3041 = vpack.c.bf16 %v2530, %v2526
      %v3042 = vpack.c.bf16 %v1695, %v1691
      %v3043 = vpack.c.bf16 %v1697, %v1693
      %v3044 = vpack.c.bf16 %v2538, %v2534
      %v3045 = vpack.c.bf16 %v2540, %v2536
      %v3046 = vpack.c.bf16 %v1705, %v1701
      %v3047 = vpack.c.bf16 %v1707, %v1703
      %v3048 = vpack.c.bf16 %v2548, %v2544
      %v3049 = vpack.c.bf16 %v2550, %v2546
      %v3050 = vpack.c.bf16 %v1715, %v1711
      %v3051 = vpack.c.bf16 %v1717, %v1713
      %v3052 = vpack.c.bf16 %v2558, %v2554
      %v3053 = vpack.c.bf16 %v2560, %v2556
      %v3054 = vpack.c.bf16 %v1725, %v1721
      %v3055 = vpack.c.bf16 %v1727, %v1723
      %v3056 = vpack.c.bf16 %v2568, %v2564
      %v3057 = vpack.c.bf16 %v2570, %v2566
      %v3058 = vpack.c.bf16 %v1735, %v1731
      %v3059 = vpack.c.bf16 %v1737, %v1733
      %v3060 = vpack.c.bf16 %v2578, %v2574
      %v3061 = vpack.c.bf16 %v2580, %v2576
      %v3062 = vpack.c.bf16 %v1745, %v1741
      %v3063 = vpack.c.bf16 %v1747, %v1743
      %v3064 = vpack.c.bf16 %v2588, %v2584
      %v3065 = vpack.c.bf16 %v2590, %v2586
      %v3066 = vpack.c.bf16 %v1755, %v1751
      %v3067 = vpack.c.bf16 %v1757, %v1753
      %v3068 = vpack.c.bf16 %v2598, %v2594
      %v3069 = vpack.c.bf16 %v2600, %v2596
      %v3070 = vpack.c.bf16 %v1765, %v1761
      %v3071 = vpack.c.bf16 %v1767, %v1763
      %v3072 = vpack.c.bf16 %v2608, %v2604
      %v3073 = vpack.c.bf16 %v2610, %v2606
      %v3074 = vpack.c.bf16 %v1775, %v1771
      %v3075 = vpack.c.bf16 %v1777, %v1773
      %v3076 = vpack.c.bf16 %v2618, %v2614
      %v3077 = vpack.c.bf16 %v2620, %v2616
      %v3078 = vpack.c.bf16 %v1785, %v1781
      %v3079 = vpack.c.bf16 %v1787, %v1783
      %v3080 = vpack.c.bf16 %v2628, %v2624
      %v3081 = vpack.c.bf16 %v2630, %v2626
      %v3082 = vpack.c.bf16 %v1795, %v1791
      %v3083 = vpack.c.bf16 %v1797, %v1793
      %v3084 = vpack.c.bf16 %v2638, %v2634
      %v3085 = vpack.c.bf16 %v2640, %v2636
      %v3086 = vpack.c.bf16 %v1805, %v1801
      %v3087 = vpack.c.bf16 %v1807, %v1803
      %v3088 = vpack.c.bf16 %v2648, %v2644
      %v3089 = vpack.c.bf16 %v2650, %v2646
      %v3090 = vpack.c.bf16 %v1815, %v1811
      %v3091 = vpack.c.bf16 %v1817, %v1813
      %v3092 = vpack.c.bf16 %v2658, %v2654
      %v3093 = vpack.c.bf16 %v2660, %v2656
      %v3094 = vpack.c.bf16 %v1825, %v1821
      %v3095 = vpack.c.bf16 %v1827, %v1823
      %v3096 = vpack.c.bf16 %v2668, %v2664
      %v3097 = vpack.c.bf16 %v2670, %v2666
      %v3098 = vpack.c.bf16 %v1835, %v1831
      %v3099 = vpack.c.bf16 %v1837, %v1833
      %v3100 = vpack.c.bf16 %v2678, %v2674
      %v3101 = vpack.c.bf16 %v2680, %v2676
      %v3102 = vpack.c.bf16 %v1845, %v1841
      %v3103 = vpack.c.bf16 %v1847, %v1843
      %v3104 = vpack.c.bf16 %v2688, %v2684
      %v3105 = vpack.c.bf16 %v2690, %v2686
      %v3106 = vpack.c.bf16 %v1855, %v1851
      %v3107 = vpack.c.bf16 %v1857, %v1853
      %v3108 = vpack.c.bf16 %v2698, %v2694
      %v3109 = vpack.c.bf16 %v2700, %v2696
      %v3110 = vpack.c.bf16 %v1865, %v1861
      %v3111 = vpack.c.bf16 %v1867, %v1863
      %v3112 = vpack.c.bf16 %v2708, %v2704
      %v3113 = vpack.c.bf16 %v2710, %v2706
      %v3114 = vpack.c.bf16 %v1875, %v1871
      %v3115 = vpack.c.bf16 %v1877, %v1873
      %v3116 = vpack.c.bf16 %v2718, %v2714
      %v3117 = vpack.c.bf16 %v2720, %v2716
      %v3118 = vpack.c.bf16 %v1885, %v1881
      %v3119 = vpack.c.bf16 %v1887, %v1883
      %v3120 = vpack.c.bf16 %v2728, %v2724
      %v3121 = vpack.c.bf16 %v2730, %v2726
      %v3122 = vpack.c.bf16 %v1895, %v1891
      %v3123 = vpack.c.bf16 %v1897, %v1893
      %v3124 = vpack.c.bf16 %v2738, %v2734
      %v3125 = vpack.c.bf16 %v2740, %v2736
      %v3126 = vpack.c.bf16 %v1905, %v1901
      %v3127 = vpack.c.bf16 %v1907, %v1903
      %v3128 = vpack.c.bf16 %v2748, %v2744
      %v3129 = vpack.c.bf16 %v2750, %v2746
      %v3130 = vpack.c.bf16 %v1915, %v1911
      %v3131 = vpack.c.bf16 %v1917, %v1913
      %v3132 = vpack.c.bf16 %v2758, %v2754
      %v3133 = vpack.c.bf16 %v2760, %v2756
      %v3134 = vpack.c.bf16 %v1925, %v1921
      %v3135 = vpack.c.bf16 %v1927, %v1923
      %v3136 = vpack.c.bf16 %v2768, %v2764
      %v3137 = vpack.c.bf16 %v2770, %v2766
      %v3138 = vpack.c.bf16 %v1935, %v1931
      %v3139 = vpack.c.bf16 %v1937, %v1933
      %v3140 = vpack.c.bf16 %v2778, %v2774
      %v3141 = vpack.c.bf16 %v2780, %v2776
      %v3142 = vpack.c.bf16 %v1945, %v1941
      %v3143 = vpack.c.bf16 %v1947, %v1943
      %v3144 = vpack.c.bf16 %v2788, %v2784
      %v3145 = vpack.c.bf16 %v2790, %v2786
      %v3146 = vpack.c.bf16 %v1955, %v1951
      %v3147 = vpack.c.bf16 %v1957, %v1953
      %v3148 = vpack.c.bf16 %v2798, %v2794
      %v3149 = vpack.c.bf16 %v2800, %v2796
      %v3150 = vpack.c.bf16 %v1965, %v1961
      %v3151 = vpack.c.bf16 %v1967, %v1963
      %v3152 = vpack.c.bf16 %v2808, %v2804
      %v3153 = vpack.c.bf16 %v2810, %v2806
      %v3154 = vpack.c.bf16 %v1975, %v1971
      %v3155 = vpack.c.bf16 %v1977, %v1973
      %v3156 = vpack.c.bf16 %v2818, %v2814
      %v3157 = vpack.c.bf16 %v2820, %v2816
      %v3158 = vpack.c.bf16 %v1985, %v1981
      %v3159 = vpack.c.bf16 %v1987, %v1983
      %v3160 = vpack.c.bf16 %v2828, %v2824
      %v3161 = vpack.c.bf16 %v2830, %v2826
      %v3162 = vpack.c.bf16 %v1995, %v1991
      %v3163 = vpack.c.bf16 %v1997, %v1993
      %v3164 = vpack.c.bf16 %v2838, %v2834
      %v3165 = vpack.c.bf16 %v2840, %v2836
      %v3168 = vunpack.c.l.s4 1966171168
      %v3169 = vunpack.c.0.s8 %v3168
      %v3170 = vlaneseq
      %v3171 = vshrl.u32 %v3170, 7
      %v3172 = vsub.s32 %v3169, %v3171
      %v3173 = vrot.slane %v475, %v3172
      %v3174 = vcombine.high %v3173, %v3173
      %v3176 = vunpack.c.l.s4 1966171168
      %v3177 = vunpack.c.0.s8 %v3176
      %v3178 = vlaneseq
      %v3179 = vshrl.u32 %v3178, 7
      %v3180 = vsub.s32 %v3177, %v3179
      %v3181 = vrot.slane %v3173, %v3180
      %v3183 = vunpack.c.l.s4 1966171168
      %v3184 = vunpack.c.0.s8 %v3183
      %v3185 = vlaneseq
      %v3186 = vshrl.u32 %v3185, 7
      %v3187 = vsub.s32 %v3184, %v3186
      %v3188 = vrot.slane %v3174, %v3187
      %v3189 = vcombine.high %v3181, %v3181
      %v3190 = vcombine.high %v3188, %v3188
      %v3192 = vpack.i.b16 %v3181, %v3181
      %v3194 = vlaneseq
      %v3195 = vshrl.u32 %v3194, 7
      %v3196 = vsub.s32 0, %v3195
      %v3197 = vrot.slane %v3192, %v3196
      %v3199 = vpack.i.b16 %v3188, %v3188
      %v3201 = vlaneseq
      %v3202 = vshrl.u32 %v3201, 7
      %v3203 = vsub.s32 0, %v3202
      %v3204 = vrot.slane %v3199, %v3203
      %v3206 = vpack.i.b16 %v3189, %v3189
      %v3208 = vlaneseq
      %v3209 = vshrl.u32 %v3208, 7
      %v3210 = vsub.s32 0, %v3209
      %v3211 = vrot.slane %v3206, %v3210
      %v3213 = vpack.i.b16 %v3190, %v3190
      %v3215 = vlaneseq
      %v3216 = vshrl.u32 %v3215, 7
      %v3217 = vsub.s32 0, %v3216
      %v3218 = vrot.slane %v3213, %v3217
      %v3219 = vadd.bf16 %v2842, %v3197
      %v3220 = vadd.bf16 %v2843, %v3204
      %v3221 = vadd.bf16 %v2844, %v3211
      %v3222 = vadd.bf16 %v2845, %v3218
      %v3223 = vadd.bf16 %v2846, %v3197
      %v3224 = vadd.bf16 %v2847, %v3204
      %v3225 = vadd.bf16 %v2848, %v3211
      %v3226 = vadd.bf16 %v2849, %v3218
      %v3227 = vadd.bf16 %v2850, %v3197
      %v3228 = vadd.bf16 %v2851, %v3204
      %v3229 = vadd.bf16 %v2852, %v3211
      %v3230 = vadd.bf16 %v2853, %v3218
      %v3231 = vadd.bf16 %v2854, %v3197
      %v3232 = vadd.bf16 %v2855, %v3204
      %v3233 = vadd.bf16 %v2856, %v3211
      %v3234 = vadd.bf16 %v2857, %v3218
      %v3235 = vadd.bf16 %v2858, %v3197
      %v3236 = vadd.bf16 %v2859, %v3204
      %v3237 = vadd.bf16 %v2860, %v3211
      %v3238 = vadd.bf16 %v2861, %v3218
      %v3239 = vadd.bf16 %v2862, %v3197
      %v3240 = vadd.bf16 %v2863, %v3204
      %v3241 = vadd.bf16 %v2864, %v3211
      %v3242 = vadd.bf16 %v2865, %v3218
      %v3243 = vadd.bf16 %v2866, %v3197
      %v3244 = vadd.bf16 %v2867, %v3204
      %v3245 = vadd.bf16 %v2868, %v3211
      %v3246 = vadd.bf16 %v2869, %v3218
      %v3247 = vadd.bf16 %v2870, %v3197
      %v3248 = vadd.bf16 %v2871, %v3204
      %v3249 = vadd.bf16 %v2872, %v3211
      %v3250 = vadd.bf16 %v2873, %v3218
      %v3251 = vadd.bf16 %v2874, %v3197
      %v3252 = vadd.bf16 %v2875, %v3204
      %v3253 = vadd.bf16 %v2876, %v3211
      %v3254 = vadd.bf16 %v2877, %v3218
      %v3255 = vadd.bf16 %v2878, %v3197
      %v3256 = vadd.bf16 %v2879, %v3204
      %v3257 = vadd.bf16 %v2880, %v3211
      %v3258 = vadd.bf16 %v2881, %v3218
      %v3259 = vadd.bf16 %v2882, %v3197
      %v3260 = vadd.bf16 %v2883, %v3204
      %v3261 = vadd.bf16 %v2884, %v3211
      %v3262 = vadd.bf16 %v2885, %v3218
      %v3263 = vadd.bf16 %v2886, %v3197
      %v3264 = vadd.bf16 %v2887, %v3204
      %v3265 = vadd.bf16 %v2888, %v3211
      %v3266 = vadd.bf16 %v2889, %v3218
      %v3267 = vadd.bf16 %v2890, %v3197
      %v3268 = vadd.bf16 %v2891, %v3204
      %v3269 = vadd.bf16 %v2892, %v3211
      %v3270 = vadd.bf16 %v2893, %v3218
      %v3271 = vadd.bf16 %v2894, %v3197
      %v3272 = vadd.bf16 %v2895, %v3204
      %v3273 = vadd.bf16 %v2896, %v3211
      %v3274 = vadd.bf16 %v2897, %v3218
      %v3275 = vadd.bf16 %v2898, %v3197
      %v3276 = vadd.bf16 %v2899, %v3204
      %v3277 = vadd.bf16 %v2900, %v3211
      %v3278 = vadd.bf16 %v2901, %v3218
      %v3279 = vadd.bf16 %v2902, %v3197
      %v3280 = vadd.bf16 %v2903, %v3204
      %v3281 = vadd.bf16 %v2904, %v3211
      %v3282 = vadd.bf16 %v2905, %v3218
      %v3283 = vadd.bf16 %v2906, %v3197
      %v3284 = vadd.bf16 %v2907, %v3204
      %v3285 = vadd.bf16 %v2908, %v3211
      %v3286 = vadd.bf16 %v2909, %v3218
      %v3287 = vadd.bf16 %v2910, %v3197
      %v3288 = vadd.bf16 %v2911, %v3204
      %v3289 = vadd.bf16 %v2912, %v3211
      %v3290 = vadd.bf16 %v2913, %v3218
      %v3291 = vadd.bf16 %v2914, %v3197
      %v3292 = vadd.bf16 %v2915, %v3204
      %v3293 = vadd.bf16 %v2916, %v3211
      %v3294 = vadd.bf16 %v2917, %v3218
      %v3295 = vadd.bf16 %v2918, %v3197
      %v3296 = vadd.bf16 %v2919, %v3204
      %v3297 = vadd.bf16 %v2920, %v3211
      %v3298 = vadd.bf16 %v2921, %v3218
      %v3299 = vadd.bf16 %v2922, %v3197
      %v3300 = vadd.bf16 %v2923, %v3204
      %v3301 = vadd.bf16 %v2924, %v3211
      %v3302 = vadd.bf16 %v2925, %v3218
      %v3303 = vadd.bf16 %v2926, %v3197
      %v3304 = vadd.bf16 %v2927, %v3204
      %v3305 = vadd.bf16 %v2928, %v3211
      %v3306 = vadd.bf16 %v2929, %v3218
      %v3307 = vadd.bf16 %v2930, %v3197
      %v3308 = vadd.bf16 %v2931, %v3204
      %v3309 = vadd.bf16 %v2932, %v3211
      %v3310 = vadd.bf16 %v2933, %v3218
      %v3311 = vadd.bf16 %v2934, %v3197
      %v3312 = vadd.bf16 %v2935, %v3204
      %v3313 = vadd.bf16 %v2936, %v3211
      %v3314 = vadd.bf16 %v2937, %v3218
      %v3315 = vadd.bf16 %v2938, %v3197
      %v3316 = vadd.bf16 %v2939, %v3204
      %v3317 = vadd.bf16 %v2940, %v3211
      %v3318 = vadd.bf16 %v2941, %v3218
      %v3319 = vadd.bf16 %v2942, %v3197
      %v3320 = vadd.bf16 %v2943, %v3204
      %v3321 = vadd.bf16 %v2944, %v3211
      %v3322 = vadd.bf16 %v2945, %v3218
      %v3323 = vadd.bf16 %v2946, %v3197
      %v3324 = vadd.bf16 %v2947, %v3204
      %v3325 = vadd.bf16 %v2948, %v3211
      %v3326 = vadd.bf16 %v2949, %v3218
      %v3327 = vadd.bf16 %v2950, %v3197
      %v3328 = vadd.bf16 %v2951, %v3204
      %v3329 = vadd.bf16 %v2952, %v3211
      %v3330 = vadd.bf16 %v2953, %v3218
      %v3331 = vadd.bf16 %v2954, %v3197
      %v3332 = vadd.bf16 %v2955, %v3204
      %v3333 = vadd.bf16 %v2956, %v3211
      %v3334 = vadd.bf16 %v2957, %v3218
      %v3335 = vadd.bf16 %v2958, %v3197
      %v3336 = vadd.bf16 %v2959, %v3204
      %v3337 = vadd.bf16 %v2960, %v3211
      %v3338 = vadd.bf16 %v2961, %v3218
      %v3339 = vadd.bf16 %v2962, %v3197
      %v3340 = vadd.bf16 %v2963, %v3204
      %v3341 = vadd.bf16 %v2964, %v3211
      %v3342 = vadd.bf16 %v2965, %v3218
      %v3343 = vadd.bf16 %v2966, %v3197
      %v3344 = vadd.bf16 %v2967, %v3204
      %v3345 = vadd.bf16 %v2968, %v3211
      %v3346 = vadd.bf16 %v2969, %v3218
      %v3347 = vadd.bf16 %v2970, %v3197
      %v3348 = vadd.bf16 %v2971, %v3204
      %v3349 = vadd.bf16 %v2972, %v3211
      %v3350 = vadd.bf16 %v2973, %v3218
      %v3351 = vadd.bf16 %v2974, %v3197
      %v3352 = vadd.bf16 %v2975, %v3204
      %v3353 = vadd.bf16 %v2976, %v3211
      %v3354 = vadd.bf16 %v2977, %v3218
      %v3355 = vadd.bf16 %v2978, %v3197
      %v3356 = vadd.bf16 %v2979, %v3204
      %v3357 = vadd.bf16 %v2980, %v3211
      %v3358 = vadd.bf16 %v2981, %v3218
      %v3359 = vadd.bf16 %v2982, %v3197
      %v3360 = vadd.bf16 %v2983, %v3204
      %v3361 = vadd.bf16 %v2984, %v3211
      %v3362 = vadd.bf16 %v2985, %v3218
      %v3363 = vadd.bf16 %v2986, %v3197
      %v3364 = vadd.bf16 %v2987, %v3204
      %v3365 = vadd.bf16 %v2988, %v3211
      %v3366 = vadd.bf16 %v2989, %v3218
      %v3367 = vadd.bf16 %v2990, %v3197
      %v3368 = vadd.bf16 %v2991, %v3204
      %v3369 = vadd.bf16 %v2992, %v3211
      %v3370 = vadd.bf16 %v2993, %v3218
      %v3371 = vadd.bf16 %v2994, %v3197
      %v3372 = vadd.bf16 %v2995, %v3204
      %v3373 = vadd.bf16 %v2996, %v3211
      %v3374 = vadd.bf16 %v2997, %v3218
      %v3375 = vadd.bf16 %v2998, %v3197
      %v3376 = vadd.bf16 %v2999, %v3204
      %v3377 = vadd.bf16 %v3000, %v3211
      %v3378 = vadd.bf16 %v3001, %v3218
      %v3379 = vadd.bf16 %v3002, %v3197
      %v3380 = vadd.bf16 %v3003, %v3204
      %v3381 = vadd.bf16 %v3004, %v3211
      %v3382 = vadd.bf16 %v3005, %v3218
      %v3383 = vadd.bf16 %v3006, %v3197
      %v3384 = vadd.bf16 %v3007, %v3204
      %v3385 = vadd.bf16 %v3008, %v3211
      %v3386 = vadd.bf16 %v3009, %v3218
      %v3387 = vadd.bf16 %v3010, %v3197
      %v3388 = vadd.bf16 %v3011, %v3204
      %v3389 = vadd.bf16 %v3012, %v3211
      %v3390 = vadd.bf16 %v3013, %v3218
      %v3391 = vadd.bf16 %v3014, %v3197
      %v3392 = vadd.bf16 %v3015, %v3204
      %v3393 = vadd.bf16 %v3016, %v3211
      %v3394 = vadd.bf16 %v3017, %v3218
      %v3395 = vadd.bf16 %v3018, %v3197
      %v3396 = vadd.bf16 %v3019, %v3204
      %v3397 = vadd.bf16 %v3020, %v3211
      %v3398 = vadd.bf16 %v3021, %v3218
      %v3399 = vadd.bf16 %v3022, %v3197
      %v3400 = vadd.bf16 %v3023, %v3204
      %v3401 = vadd.bf16 %v3024, %v3211
      %v3402 = vadd.bf16 %v3025, %v3218
      %v3403 = vadd.bf16 %v3026, %v3197
      %v3404 = vadd.bf16 %v3027, %v3204
      %v3405 = vadd.bf16 %v3028, %v3211
      %v3406 = vadd.bf16 %v3029, %v3218
      %v3407 = vadd.bf16 %v3030, %v3197
      %v3408 = vadd.bf16 %v3031, %v3204
      %v3409 = vadd.bf16 %v3032, %v3211
      %v3410 = vadd.bf16 %v3033, %v3218
      %v3411 = vadd.bf16 %v3034, %v3197
      %v3412 = vadd.bf16 %v3035, %v3204
      %v3413 = vadd.bf16 %v3036, %v3211
      %v3414 = vadd.bf16 %v3037, %v3218
      %v3415 = vadd.bf16 %v3038, %v3197
      %v3416 = vadd.bf16 %v3039, %v3204
      %v3417 = vadd.bf16 %v3040, %v3211
      %v3418 = vadd.bf16 %v3041, %v3218
      %v3419 = vadd.bf16 %v3042, %v3197
      %v3420 = vadd.bf16 %v3043, %v3204
      %v3421 = vadd.bf16 %v3044, %v3211
      %v3422 = vadd.bf16 %v3045, %v3218
      %v3423 = vadd.bf16 %v3046, %v3197
      %v3424 = vadd.bf16 %v3047, %v3204
      %v3425 = vadd.bf16 %v3048, %v3211
      %v3426 = vadd.bf16 %v3049, %v3218
      %v3427 = vadd.bf16 %v3050, %v3197
      %v3428 = vadd.bf16 %v3051, %v3204
      %v3429 = vadd.bf16 %v3052, %v3211
      %v3430 = vadd.bf16 %v3053, %v3218
      %v3431 = vadd.bf16 %v3054, %v3197
      %v3432 = vadd.bf16 %v3055, %v3204
      %v3433 = vadd.bf16 %v3056, %v3211
      %v3434 = vadd.bf16 %v3057, %v3218
      %v3435 = vadd.bf16 %v3058, %v3197
      %v3436 = vadd.bf16 %v3059, %v3204
      %v3437 = vadd.bf16 %v3060, %v3211
      %v3438 = vadd.bf16 %v3061, %v3218
      %v3439 = vadd.bf16 %v3062, %v3197
      %v3440 = vadd.bf16 %v3063, %v3204
      %v3441 = vadd.bf16 %v3064, %v3211
      %v3442 = vadd.bf16 %v3065, %v3218
      %v3443 = vadd.bf16 %v3066, %v3197
      %v3444 = vadd.bf16 %v3067, %v3204
      %v3445 = vadd.bf16 %v3068, %v3211
      %v3446 = vadd.bf16 %v3069, %v3218
      %v3447 = vadd.bf16 %v3070, %v3197
      %v3448 = vadd.bf16 %v3071, %v3204
      %v3449 = vadd.bf16 %v3072, %v3211
      %v3450 = vadd.bf16 %v3073, %v3218
      %v3451 = vadd.bf16 %v3074, %v3197
      %v3452 = vadd.bf16 %v3075, %v3204
      %v3453 = vadd.bf16 %v3076, %v3211
      %v3454 = vadd.bf16 %v3077, %v3218
      %v3455 = vadd.bf16 %v3078, %v3197
      %v3456 = vadd.bf16 %v3079, %v3204
      %v3457 = vadd.bf16 %v3080, %v3211
      %v3458 = vadd.bf16 %v3081, %v3218
      %v3459 = vadd.bf16 %v3082, %v3197
      %v3460 = vadd.bf16 %v3083, %v3204
      %v3461 = vadd.bf16 %v3084, %v3211
      %v3462 = vadd.bf16 %v3085, %v3218
      %v3463 = vadd.bf16 %v3086, %v3197
      %v3464 = vadd.bf16 %v3087, %v3204
      %v3465 = vadd.bf16 %v3088, %v3211
      %v3466 = vadd.bf16 %v3089, %v3218
      %v3467 = vadd.bf16 %v3090, %v3197
      %v3468 = vadd.bf16 %v3091, %v3204
      %v3469 = vadd.bf16 %v3092, %v3211
      %v3470 = vadd.bf16 %v3093, %v3218
      %v3471 = vadd.bf16 %v3094, %v3197
      %v3472 = vadd.bf16 %v3095, %v3204
      %v3473 = vadd.bf16 %v3096, %v3211
      %v3474 = vadd.bf16 %v3097, %v3218
      %v3475 = vadd.bf16 %v3098, %v3197
      %v3476 = vadd.bf16 %v3099, %v3204
      %v3477 = vadd.bf16 %v3100, %v3211
      %v3478 = vadd.bf16 %v3101, %v3218
      %v3479 = vadd.bf16 %v3102, %v3197
      %v3480 = vadd.bf16 %v3103, %v3204
      %v3481 = vadd.bf16 %v3104, %v3211
      %v3482 = vadd.bf16 %v3105, %v3218
      %v3483 = vadd.bf16 %v3106, %v3197
      %v3484 = vadd.bf16 %v3107, %v3204
      %v3485 = vadd.bf16 %v3108, %v3211
      %v3486 = vadd.bf16 %v3109, %v3218
      %v3487 = vadd.bf16 %v3110, %v3197
      %v3488 = vadd.bf16 %v3111, %v3204
      %v3489 = vadd.bf16 %v3112, %v3211
      %v3490 = vadd.bf16 %v3113, %v3218
      %v3491 = vadd.bf16 %v3114, %v3197
      %v3492 = vadd.bf16 %v3115, %v3204
      %v3493 = vadd.bf16 %v3116, %v3211
      %v3494 = vadd.bf16 %v3117, %v3218
      %v3495 = vadd.bf16 %v3118, %v3197
      %v3496 = vadd.bf16 %v3119, %v3204
      %v3497 = vadd.bf16 %v3120, %v3211
      %v3498 = vadd.bf16 %v3121, %v3218
      %v3499 = vadd.bf16 %v3122, %v3197
      %v3500 = vadd.bf16 %v3123, %v3204
      %v3501 = vadd.bf16 %v3124, %v3211
      %v3502 = vadd.bf16 %v3125, %v3218
      %v3503 = vadd.bf16 %v3126, %v3197
      %v3504 = vadd.bf16 %v3127, %v3204
      %v3505 = vadd.bf16 %v3128, %v3211
      %v3506 = vadd.bf16 %v3129, %v3218
      %v3507 = vadd.bf16 %v3130, %v3197
      %v3508 = vadd.bf16 %v3131, %v3204
      %v3509 = vadd.bf16 %v3132, %v3211
      %v3510 = vadd.bf16 %v3133, %v3218
      %v3511 = vadd.bf16 %v3134, %v3197
      %v3512 = vadd.bf16 %v3135, %v3204
      %v3513 = vadd.bf16 %v3136, %v3211
      %v3514 = vadd.bf16 %v3137, %v3218
      %v3515 = vadd.bf16 %v3138, %v3197
      %v3516 = vadd.bf16 %v3139, %v3204
      %v3517 = vadd.bf16 %v3140, %v3211
      %v3518 = vadd.bf16 %v3141, %v3218
      %v3519 = vadd.bf16 %v3142, %v3197
      %v3520 = vadd.bf16 %v3143, %v3204
      %v3521 = vadd.bf16 %v3144, %v3211
      %v3522 = vadd.bf16 %v3145, %v3218
      %v3523 = vadd.bf16 %v3146, %v3197
      %v3524 = vadd.bf16 %v3147, %v3204
      %v3525 = vadd.bf16 %v3148, %v3211
      %v3526 = vadd.bf16 %v3149, %v3218
      %v3527 = vadd.bf16 %v3150, %v3197
      %v3528 = vadd.bf16 %v3151, %v3204
      %v3529 = vadd.bf16 %v3152, %v3211
      %v3530 = vadd.bf16 %v3153, %v3218
      %v3531 = vadd.bf16 %v3154, %v3197
      %v3532 = vadd.bf16 %v3155, %v3204
      %v3533 = vadd.bf16 %v3156, %v3211
      %v3534 = vadd.bf16 %v3157, %v3218
      %v3535 = vadd.bf16 %v3158, %v3197
      %v3536 = vadd.bf16 %v3159, %v3204
      %v3537 = vadd.bf16 %v3160, %v3211
      %v3538 = vadd.bf16 %v3161, %v3218
      %v3539 = vadd.bf16 %v3162, %v3197
      %v3540 = vadd.bf16 %v3163, %v3204
      %v3541 = vadd.bf16 %v3164, %v3211
      %v3542 = vadd.bf16 %v3165, %v3218
      %v3543 = vmax.bf16 %v3219, 0
      %v3544 = vmax.bf16 %v3220, 0
      %v3545 = vmax.bf16 %v3221, 0
      %v3546 = vmax.bf16 %v3222, 0
      %v3547 = vmax.bf16 %v3223, 0
      %v3548 = vmax.bf16 %v3224, 0
      %v3549 = vmax.bf16 %v3225, 0
      %v3550 = vmax.bf16 %v3226, 0
      %v3551 = vmax.bf16 %v3227, 0
      %v3552 = vmax.bf16 %v3228, 0
      %v3553 = vmax.bf16 %v3229, 0
      %v3554 = vmax.bf16 %v3230, 0
      %v3555 = vmax.bf16 %v3231, 0
      %v3556 = vmax.bf16 %v3232, 0
      %v3557 = vmax.bf16 %v3233, 0
      %v3558 = vmax.bf16 %v3234, 0
      %v3559 = vmax.bf16 %v3235, 0
      %v3560 = vmax.bf16 %v3236, 0
      %v3561 = vmax.bf16 %v3237, 0
      %v3562 = vmax.bf16 %v3238, 0
      %v3563 = vmax.bf16 %v3239, 0
      %v3564 = vmax.bf16 %v3240, 0
      %v3565 = vmax.bf16 %v3241, 0
      %v3566 = vmax.bf16 %v3242, 0
      %v3567 = vmax.bf16 %v3243, 0
      %v3568 = vmax.bf16 %v3244, 0
      %v3569 = vmax.bf16 %v3245, 0
      %v3570 = vmax.bf16 %v3246, 0
      %v3571 = vmax.bf16 %v3247, 0
      %v3572 = vmax.bf16 %v3248, 0
      %v3573 = vmax.bf16 %v3249, 0
      %v3574 = vmax.bf16 %v3250, 0
      %v3575 = vmax.bf16 %v3251, 0
      %v3576 = vmax.bf16 %v3252, 0
      %v3577 = vmax.bf16 %v3253, 0
      %v3578 = vmax.bf16 %v3254, 0
      %v3579 = vmax.bf16 %v3255, 0
      %v3580 = vmax.bf16 %v3256, 0
      %v3581 = vmax.bf16 %v3257, 0
      %v3582 = vmax.bf16 %v3258, 0
      %v3583 = vmax.bf16 %v3259, 0
      %v3584 = vmax.bf16 %v3260, 0
      %v3585 = vmax.bf16 %v3261, 0
      %v3586 = vmax.bf16 %v3262, 0
      %v3587 = vmax.bf16 %v3263, 0
      %v3588 = vmax.bf16 %v3264, 0
      %v3589 = vmax.bf16 %v3265, 0
      %v3590 = vmax.bf16 %v3266, 0
      %v3591 = vmax.bf16 %v3267, 0
      %v3592 = vmax.bf16 %v3268, 0
      %v3593 = vmax.bf16 %v3269, 0
      %v3594 = vmax.bf16 %v3270, 0
      %v3595 = vmax.bf16 %v3271, 0
      %v3596 = vmax.bf16 %v3272, 0
      %v3597 = vmax.bf16 %v3273, 0
      %v3598 = vmax.bf16 %v3274, 0
      %v3599 = vmax.bf16 %v3275, 0
      %v3600 = vmax.bf16 %v3276, 0
      %v3601 = vmax.bf16 %v3277, 0
      %v3602 = vmax.bf16 %v3278, 0
      %v3603 = vmax.bf16 %v3279, 0
      %v3604 = vmax.bf16 %v3280, 0
      %v3605 = vmax.bf16 %v3281, 0
      %v3606 = vmax.bf16 %v3282, 0
      %v3607 = vmax.bf16 %v3283, 0
      %v3608 = vmax.bf16 %v3284, 0
      %v3609 = vmax.bf16 %v3285, 0
      %v3610 = vmax.bf16 %v3286, 0
      %v3611 = vmax.bf16 %v3287, 0
      %v3612 = vmax.bf16 %v3288, 0
      %v3613 = vmax.bf16 %v3289, 0
      %v3614 = vmax.bf16 %v3290, 0
      %v3615 = vmax.bf16 %v3291, 0
      %v3616 = vmax.bf16 %v3292, 0
      %v3617 = vmax.bf16 %v3293, 0
      %v3618 = vmax.bf16 %v3294, 0
      %v3619 = vmax.bf16 %v3295, 0
      %v3620 = vmax.bf16 %v3296, 0
      %v3621 = vmax.bf16 %v3297, 0
      %v3622 = vmax.bf16 %v3298, 0
      %v3623 = vmax.bf16 %v3299, 0
      %v3624 = vmax.bf16 %v3300, 0
      %v3625 = vmax.bf16 %v3301, 0
      %v3626 = vmax.bf16 %v3302, 0
      %v3627 = vmax.bf16 %v3303, 0
      %v3628 = vmax.bf16 %v3304, 0
      %v3629 = vmax.bf16 %v3305, 0
      %v3630 = vmax.bf16 %v3306, 0
      %v3631 = vmax.bf16 %v3307, 0
      %v3632 = vmax.bf16 %v3308, 0
      %v3633 = vmax.bf16 %v3309, 0
      %v3634 = vmax.bf16 %v3310, 0
      %v3635 = vmax.bf16 %v3311, 0
      %v3636 = vmax.bf16 %v3312, 0
      %v3637 = vmax.bf16 %v3313, 0
      %v3638 = vmax.bf16 %v3314, 0
      %v3639 = vmax.bf16 %v3315, 0
      %v3640 = vmax.bf16 %v3316, 0
      %v3641 = vmax.bf16 %v3317, 0
      %v3642 = vmax.bf16 %v3318, 0
      %v3643 = vmax.bf16 %v3319, 0
      %v3644 = vmax.bf16 %v3320, 0
      %v3645 = vmax.bf16 %v3321, 0
      %v3646 = vmax.bf16 %v3322, 0
      %v3647 = vmax.bf16 %v3323, 0
      %v3648 = vmax.bf16 %v3324, 0
      %v3649 = vmax.bf16 %v3325, 0
      %v3650 = vmax.bf16 %v3326, 0
      %v3651 = vmax.bf16 %v3327, 0
      %v3652 = vmax.bf16 %v3328, 0
      %v3653 = vmax.bf16 %v3329, 0
      %v3654 = vmax.bf16 %v3330, 0
      %v3655 = vmax.bf16 %v3331, 0
      %v3656 = vmax.bf16 %v3332, 0
      %v3657 = vmax.bf16 %v3333, 0
      %v3658 = vmax.bf16 %v3334, 0
      %v3659 = vmax.bf16 %v3335, 0
      %v3660 = vmax.bf16 %v3336, 0
      %v3661 = vmax.bf16 %v3337, 0
      %v3662 = vmax.bf16 %v3338, 0
      %v3663 = vmax.bf16 %v3339, 0
      %v3664 = vmax.bf16 %v3340, 0
      %v3665 = vmax.bf16 %v3341, 0
      %v3666 = vmax.bf16 %v3342, 0
      %v3667 = vmax.bf16 %v3343, 0
      %v3668 = vmax.bf16 %v3344, 0
      %v3669 = vmax.bf16 %v3345, 0
      %v3670 = vmax.bf16 %v3346, 0
      %v3671 = vmax.bf16 %v3347, 0
      %v3672 = vmax.bf16 %v3348, 0
      %v3673 = vmax.bf16 %v3349, 0
      %v3674 = vmax.bf16 %v3350, 0
      %v3675 = vmax.bf16 %v3351, 0
      %v3676 = vmax.bf16 %v3352, 0
      %v3677 = vmax.bf16 %v3353, 0
      %v3678 = vmax.bf16 %v3354, 0
      %v3679 = vmax.bf16 %v3355, 0
      %v3680 = vmax.bf16 %v3356, 0
      %v3681 = vmax.bf16 %v3357, 0
      %v3682 = vmax.bf16 %v3358, 0
      %v3683 = vmax.bf16 %v3359, 0
      %v3684 = vmax.bf16 %v3360, 0
      %v3685 = vmax.bf16 %v3361, 0
      %v3686 = vmax.bf16 %v3362, 0
      %v3687 = vmax.bf16 %v3363, 0
      %v3688 = vmax.bf16 %v3364, 0
      %v3689 = vmax.bf16 %v3365, 0
      %v3690 = vmax.bf16 %v3366, 0
      %v3691 = vmax.bf16 %v3367, 0
      %v3692 = vmax.bf16 %v3368, 0
      %v3693 = vmax.bf16 %v3369, 0
      %v3694 = vmax.bf16 %v3370, 0
      %v3695 = vmax.bf16 %v3371, 0
      %v3696 = vmax.bf16 %v3372, 0
      %v3697 = vmax.bf16 %v3373, 0
      %v3698 = vmax.bf16 %v3374, 0
      %v3699 = vmax.bf16 %v3375, 0
      %v3700 = vmax.bf16 %v3376, 0
      %v3701 = vmax.bf16 %v3377, 0
      %v3702 = vmax.bf16 %v3378, 0
      %v3703 = vmax.bf16 %v3379, 0
      %v3704 = vmax.bf16 %v3380, 0
      %v3705 = vmax.bf16 %v3381, 0
      %v3706 = vmax.bf16 %v3382, 0
      %v3707 = vmax.bf16 %v3383, 0
      %v3708 = vmax.bf16 %v3384, 0
      %v3709 = vmax.bf16 %v3385, 0
      %v3710 = vmax.bf16 %v3386, 0
      %v3711 = vmax.bf16 %v3387, 0
      %v3712 = vmax.bf16 %v3388, 0
      %v3713 = vmax.bf16 %v3389, 0
      %v3714 = vmax.bf16 %v3390, 0
      %v3715 = vmax.bf16 %v3391, 0
      %v3716 = vmax.bf16 %v3392, 0
      %v3717 = vmax.bf16 %v3393, 0
      %v3718 = vmax.bf16 %v3394, 0
      %v3719 = vmax.bf16 %v3395, 0
      %v3720 = vmax.bf16 %v3396, 0
      %v3721 = vmax.bf16 %v3397, 0
      %v3722 = vmax.bf16 %v3398, 0
      %v3723 = vmax.bf16 %v3399, 0
      %v3724 = vmax.bf16 %v3400, 0
      %v3725 = vmax.bf16 %v3401, 0
      %v3726 = vmax.bf16 %v3402, 0
      %v3727 = vmax.bf16 %v3403, 0
      %v3728 = vmax.bf16 %v3404, 0
      %v3729 = vmax.bf16 %v3405, 0
      %v3730 = vmax.bf16 %v3406, 0
      %v3731 = vmax.bf16 %v3407, 0
      %v3732 = vmax.bf16 %v3408, 0
      %v3733 = vmax.bf16 %v3409, 0
      %v3734 = vmax.bf16 %v3410, 0
      %v3735 = vmax.bf16 %v3411, 0
      %v3736 = vmax.bf16 %v3412, 0
      %v3737 = vmax.bf16 %v3413, 0
      %v3738 = vmax.bf16 %v3414, 0
      %v3739 = vmax.bf16 %v3415, 0
      %v3740 = vmax.bf16 %v3416, 0
      %v3741 = vmax.bf16 %v3417, 0
      %v3742 = vmax.bf16 %v3418, 0
      %v3743 = vmax.bf16 %v3419, 0
      %v3744 = vmax.bf16 %v3420, 0
      %v3745 = vmax.bf16 %v3421, 0
      %v3746 = vmax.bf16 %v3422, 0
      %v3747 = vmax.bf16 %v3423, 0
      %v3748 = vmax.bf16 %v3424, 0
      %v3749 = vmax.bf16 %v3425, 0
      %v3750 = vmax.bf16 %v3426, 0
      %v3751 = vmax.bf16 %v3427, 0
      %v3752 = vmax.bf16 %v3428, 0
      %v3753 = vmax.bf16 %v3429, 0
      %v3754 = vmax.bf16 %v3430, 0
      %v3755 = vmax.bf16 %v3431, 0
      %v3756 = vmax.bf16 %v3432, 0
      %v3757 = vmax.bf16 %v3433, 0
      %v3758 = vmax.bf16 %v3434, 0
      %v3759 = vmax.bf16 %v3435, 0
      %v3760 = vmax.bf16 %v3436, 0
      %v3761 = vmax.bf16 %v3437, 0
      %v3762 = vmax.bf16 %v3438, 0
      %v3763 = vmax.bf16 %v3439, 0
      %v3764 = vmax.bf16 %v3440, 0
      %v3765 = vmax.bf16 %v3441, 0
      %v3766 = vmax.bf16 %v3442, 0
      %v3767 = vmax.bf16 %v3443, 0
      %v3768 = vmax.bf16 %v3444, 0
      %v3769 = vmax.bf16 %v3445, 0
      %v3770 = vmax.bf16 %v3446, 0
      %v3771 = vmax.bf16 %v3447, 0
      %v3772 = vmax.bf16 %v3448, 0
      %v3773 = vmax.bf16 %v3449, 0
      %v3774 = vmax.bf16 %v3450, 0
      %v3775 = vmax.bf16 %v3451, 0
      %v3776 = vmax.bf16 %v3452, 0
      %v3777 = vmax.bf16 %v3453, 0
      %v3778 = vmax.bf16 %v3454, 0
      %v3779 = vmax.bf16 %v3455, 0
      %v3780 = vmax.bf16 %v3456, 0
      %v3781 = vmax.bf16 %v3457, 0
      %v3782 = vmax.bf16 %v3458, 0
      %v3783 = vmax.bf16 %v3459, 0
      %v3784 = vmax.bf16 %v3460, 0
      %v3785 = vmax.bf16 %v3461, 0
      %v3786 = vmax.bf16 %v3462, 0
      %v3787 = vmax.bf16 %v3463, 0
      %v3788 = vmax.bf16 %v3464, 0
      %v3789 = vmax.bf16 %v3465, 0
      %v3790 = vmax.bf16 %v3466, 0
      %v3791 = vmax.bf16 %v3467, 0
      %v3792 = vmax.bf16 %v3468, 0
      %v3793 = vmax.bf16 %v3469, 0
      %v3794 = vmax.bf16 %v3470, 0
      %v3795 = vmax.bf16 %v3471, 0
      %v3796 = vmax.bf16 %v3472, 0
      %v3797 = vmax.bf16 %v3473, 0
      %v3798 = vmax.bf16 %v3474, 0
      %v3799 = vmax.bf16 %v3475, 0
      %v3800 = vmax.bf16 %v3476, 0
      %v3801 = vmax.bf16 %v3477, 0
      %v3802 = vmax.bf16 %v3478, 0
      %v3803 = vmax.bf16 %v3479, 0
      %v3804 = vmax.bf16 %v3480, 0
      %v3805 = vmax.bf16 %v3481, 0
      %v3806 = vmax.bf16 %v3482, 0
      %v3807 = vmax.bf16 %v3483, 0
      %v3808 = vmax.bf16 %v3484, 0
      %v3809 = vmax.bf16 %v3485, 0
      %v3810 = vmax.bf16 %v3486, 0
      %v3811 = vmax.bf16 %v3487, 0
      %v3812 = vmax.bf16 %v3488, 0
      %v3813 = vmax.bf16 %v3489, 0
      %v3814 = vmax.bf16 %v3490, 0
      %v3815 = vmax.bf16 %v3491, 0
      %v3816 = vmax.bf16 %v3492, 0
      %v3817 = vmax.bf16 %v3493, 0
      %v3818 = vmax.bf16 %v3494, 0
      %v3819 = vmax.bf16 %v3495, 0
      %v3820 = vmax.bf16 %v3496, 0
      %v3821 = vmax.bf16 %v3497, 0
      %v3822 = vmax.bf16 %v3498, 0
      %v3823 = vmax.bf16 %v3499, 0
      %v3824 = vmax.bf16 %v3500, 0
      %v3825 = vmax.bf16 %v3501, 0
      %v3826 = vmax.bf16 %v3502, 0
      %v3827 = vmax.bf16 %v3503, 0
      %v3828 = vmax.bf16 %v3504, 0
      %v3829 = vmax.bf16 %v3505, 0
      %v3830 = vmax.bf16 %v3506, 0
      %v3831 = vmax.bf16 %v3507, 0
      %v3832 = vmax.bf16 %v3508, 0
      %v3833 = vmax.bf16 %v3509, 0
      %v3834 = vmax.bf16 %v3510, 0
      %v3835 = vmax.bf16 %v3511, 0
      %v3836 = vmax.bf16 %v3512, 0
      %v3837 = vmax.bf16 %v3513, 0
      %v3838 = vmax.bf16 %v3514, 0
      %v3839 = vmax.bf16 %v3515, 0
      %v3840 = vmax.bf16 %v3516, 0
      %v3841 = vmax.bf16 %v3517, 0
      %v3842 = vmax.bf16 %v3518, 0
      %v3843 = vmax.bf16 %v3519, 0
      %v3844 = vmax.bf16 %v3520, 0
      %v3845 = vmax.bf16 %v3521, 0
      %v3846 = vmax.bf16 %v3522, 0
      %v3847 = vmax.bf16 %v3523, 0
      %v3848 = vmax.bf16 %v3524, 0
      %v3849 = vmax.bf16 %v3525, 0
      %v3850 = vmax.bf16 %v3526, 0
      %v3851 = vmax.bf16 %v3527, 0
      %v3852 = vmax.bf16 %v3528, 0
      %v3853 = vmax.bf16 %v3529, 0
      %v3854 = vmax.bf16 %v3530, 0
      %v3855 = vmax.bf16 %v3531, 0
      %v3856 = vmax.bf16 %v3532, 0
      %v3857 = vmax.bf16 %v3533, 0
      %v3858 = vmax.bf16 %v3534, 0
      %v3859 = vmax.bf16 %v3535, 0
      %v3860 = vmax.bf16 %v3536, 0
      %v3861 = vmax.bf16 %v3537, 0
      %v3862 = vmax.bf16 %v3538, 0
      %v3863 = vmax.bf16 %v3539, 0
      %v3864 = vmax.bf16 %v3540, 0
      %v3865 = vmax.bf16 %v3541, 0
      %v3866 = vmax.bf16 %v3542, 0
      %v3867 = vld [vmem:[%s2] sm:$0xff]
      %v3868 = vld [vmem:[%s2 + $0x8] sm:$0xff]
      %v3869 = vld [vmem:[%s2 + $0x10] sm:$0xff]
      %v3870 = vld [vmem:[%s2 + $0x18] sm:$0xff]
      %v3871 = vld [vmem:[%s2 + $0x20] sm:$0xff]
      %v3872 = vld [vmem:[%s2 + $0x28] sm:$0xff]
      %v3873 = vld [vmem:[%s2 + $0x30] sm:$0xff]
      %v3874 = vld [vmem:[%s2 + $0x38] sm:$0xff]
      %v3875 = vld [vmem:[%s2 + $0x40] sm:$0xff]
      %v3876 = vld [vmem:[%s2 + $0x48] sm:$0xff]
      %v3877 = vld [vmem:[%s2 + $0x50] sm:$0xff]
      %v3878 = vld [vmem:[%s2 + $0x58] sm:$0xff]
      %v3879 = vld [vmem:[%s2 + $0x60] sm:$0xff]
      %v3880 = vld [vmem:[%s2 + $0x68] sm:$0xff]
      %v3881 = vld [vmem:[%s2 + $0x70] sm:$0xff]
      %v3882 = vld [vmem:[%s2 + $0x78] sm:$0xff]
      %v3883 = vld [vmem:[%s2 + $0x80] sm:$0xff]
      %v3884 = vld [vmem:[%s2 + $0x88] sm:$0xff]
      %v3885 = vld [vmem:[%s2 + $0x90] sm:$0xff]
      %v3886 = vld [vmem:[%s2 + $0x98] sm:$0xff]
      %v3887 = vld [vmem:[%s2 + $0xa0] sm:$0xff]
      %v3888 = vld [vmem:[%s2 + $0xa8] sm:$0xff]
      %v3889 = vld [vmem:[%s2 + $0xb0] sm:$0xff]
      %v3890 = vld [vmem:[%s2 + $0xb8] sm:$0xff]
      %v3891 = vld [vmem:[%s2 + $0xc0] sm:$0xff]
      %v3892 = vld [vmem:[%s2 + $0xc8] sm:$0xff]
      %v3893 = vld [vmem:[%s2 + $0xd0] sm:$0xff]
      %v3894 = vld [vmem:[%s2 + $0xd8] sm:$0xff]
      %v3895 = vld [vmem:[%s2 + $0xe0] sm:$0xff]
      %v3896 = vld [vmem:[%s2 + $0xe8] sm:$0xff]
      %v3897 = vld [vmem:[%s2 + $0xf0] sm:$0xff]
      %v3898 = vld [vmem:[%s2 + $0xf8] sm:$0xff]
      %v3899 = vld [vmem:[%s2 + $0x100] sm:$0xff]
      %v3900 = vld [vmem:[%s2 + $0x108] sm:$0xff]
      %v3901 = vld [vmem:[%s2 + $0x110] sm:$0xff]
      %v3902 = vld [vmem:[%s2 + $0x118] sm:$0xff]
      %v3903 = vld [vmem:[%s2 + $0x120] sm:$0xff]
      %v3904 = vld [vmem:[%s2 + $0x128] sm:$0xff]
      %v3905 = vld [vmem:[%s2 + $0x130] sm:$0xff]
      %v3906 = vld [vmem:[%s2 + $0x138] sm:$0xff]
      %v3907 = vld [vmem:[%s2 + $0x140] sm:$0xff]
      %v3908 = vld [vmem:[%s2 + $0x148] sm:$0xff]
      %v3909 = vld [vmem:[%s2 + $0x150] sm:$0xff]
      %v3910 = vld [vmem:[%s2 + $0x158] sm:$0xff]
      %v3911 = vld [vmem:[%s2 + $0x160] sm:$0xff]
      %v3912 = vld [vmem:[%s2 + $0x168] sm:$0xff]
      %v3913 = vld [vmem:[%s2 + $0x170] sm:$0xff]
      %v3914 = vld [vmem:[%s2 + $0x178] sm:$0xff]
      %v3915 = vld [vmem:[%s2 + $0x180] sm:$0xff]
      %v3916 = vld [vmem:[%s2 + $0x188] sm:$0xff]
      %v3917 = vld [vmem:[%s2 + $0x190] sm:$0xff]
      %v3918 = vld [vmem:[%s2 + $0x198] sm:$0xff]
      %v3919 = vld [vmem:[%s2 + $0x1a0] sm:$0xff]
      %v3920 = vld [vmem:[%s2 + $0x1a8] sm:$0xff]
      %v3921 = vld [vmem:[%s2 + $0x1b0] sm:$0xff]
      %v3922 = vld [vmem:[%s2 + $0x1b8] sm:$0xff]
      %v3923 = vld [vmem:[%s2 + $0x1c0] sm:$0xff]
      %v3924 = vld [vmem:[%s2 + $0x1c8] sm:$0xff]
      %v3925 = vld [vmem:[%s2 + $0x1d0] sm:$0xff]
      %v3926 = vld [vmem:[%s2 + $0x1d8] sm:$0xff]
      %v3927 = vld [vmem:[%s2 + $0x1e0] sm:$0xff]
      %v3928 = vld [vmem:[%s2 + $0x1e8] sm:$0xff]
      %v3929 = vld [vmem:[%s2 + $0x1f0] sm:$0xff]
      %v3930 = vld [vmem:[%s2 + $0x1f8] sm:$0xff]
      %v3931 = vld [vmem:[%s6 + $0x4] sm:$0x3]
      %v3996 = vunpack.c.l.b16 %v3867
      %v3997 = vunpack.c.h.b16 %v3867
      %v3998 = vunpack.c.l.b16 %v3868
      %v3999 = vunpack.c.h.b16 %v3868
      %v4000 = vunpack.c.l.b16 %v3869
      %v4001 = vunpack.c.h.b16 %v3869
      %v4002 = vunpack.c.l.b16 %v3870
      %v4003 = vunpack.c.h.b16 %v3870
      %v4004 = vunpack.c.l.b16 %v3871
      %v4005 = vunpack.c.h.b16 %v3871
      %v4006 = vunpack.c.l.b16 %v3872
      %v4007 = vunpack.c.h.b16 %v3872
      %v4008 = vunpack.c.l.b16 %v3873
      %v4009 = vunpack.c.h.b16 %v3873
      %v4010 = vunpack.c.l.b16 %v3874
      %v4011 = vunpack.c.h.b16 %v3874
      %v4012 = vunpack.c.l.b16 %v3875
      %v4013 = vunpack.c.h.b16 %v3875
      %v4014 = vunpack.c.l.b16 %v3876
      %v4015 = vunpack.c.h.b16 %v3876
      %v4016 = vunpack.c.l.b16 %v3877
      %v4017 = vunpack.c.h.b16 %v3877
      %v4018 = vunpack.c.l.b16 %v3878
      %v4019 = vunpack.c.h.b16 %v3878
      %v4020 = vunpack.c.l.b16 %v3879
      %v4021 = vunpack.c.h.b16 %v3879
      %v4022 = vunpack.c.l.b16 %v3880
      %v4023 = vunpack.c.h.b16 %v3880
      %v4024 = vunpack.c.l.b16 %v3881
      %v4025 = vunpack.c.h.b16 %v3881
      %v4026 = vunpack.c.l.b16 %v3882
      %v4027 = vunpack.c.h.b16 %v3882
      %v4028 = vunpack.c.l.b16 %v3883
      %v4029 = vunpack.c.h.b16 %v3883
      %v4030 = vunpack.c.l.b16 %v3884
      %v4031 = vunpack.c.h.b16 %v3884
      %v4032 = vunpack.c.l.b16 %v3885
      %v4033 = vunpack.c.h.b16 %v3885
      %v4034 = vunpack.c.l.b16 %v3886
      %v4035 = vunpack.c.h.b16 %v3886
      %v4036 = vunpack.c.l.b16 %v3887
      %v4037 = vunpack.c.h.b16 %v3887
      %v4038 = vunpack.c.l.b16 %v3888
      %v4039 = vunpack.c.h.b16 %v3888
      %v4040 = vunpack.c.l.b16 %v3889
      %v4041 = vunpack.c.h.b16 %v3889
      %v4042 = vunpack.c.l.b16 %v3890
      %v4043 = vunpack.c.h.b16 %v3890
      %v4044 = vunpack.c.l.b16 %v3891
      %v4045 = vunpack.c.h.b16 %v3891
      %v4046 = vunpack.c.l.b16 %v3892
      %v4047 = vunpack.c.h.b16 %v3892
      %v4048 = vunpack.c.l.b16 %v3893
      %v4049 = vunpack.c.h.b16 %v3893
      %v4050 = vunpack.c.l.b16 %v3894
      %v4051 = vunpack.c.h.b16 %v3894
      %v4052 = vunpack.c.l.b16 %v3895
      %v4053 = vunpack.c.h.b16 %v3895
      %v4054 = vunpack.c.l.b16 %v3896
      %v4055 = vunpack.c.h.b16 %v3896
      %v4056 = vunpack.c.l.b16 %v3897
      %v4057 = vunpack.c.h.b16 %v3897
      %v4058 = vunpack.c.l.b16 %v3898
      %v4059 = vunpack.c.h.b16 %v3898
      %v4060 = vunpack.c.l.b16 %v3899
      %v4061 = vunpack.c.h.b16 %v3899
      %v4062 = vunpack.c.l.b16 %v3900
      %v4063 = vunpack.c.h.b16 %v3900
      %v4064 = vunpack.c.l.b16 %v3901
      %v4065 = vunpack.c.h.b16 %v3901
      %v4066 = vunpack.c.l.b16 %v3902
      %v4067 = vunpack.c.h.b16 %v3902
      %v4068 = vunpack.c.l.b16 %v3903
      %v4069 = vunpack.c.h.b16 %v3903
      %v4070 = vunpack.c.l.b16 %v3904
      %v4071 = vunpack.c.h.b16 %v3904
      %v4072 = vunpack.c.l.b16 %v3905
      %v4073 = vunpack.c.h.b16 %v3905
      %v4074 = vunpack.c.l.b16 %v3906
      %v4075 = vunpack.c.h.b16 %v3906
      %v4076 = vunpack.c.l.b16 %v3907
      %v4077 = vunpack.c.h.b16 %v3907
      %v4078 = vunpack.c.l.b16 %v3908
      %v4079 = vunpack.c.h.b16 %v3908
      %v4080 = vunpack.c.l.b16 %v3909
      %v4081 = vunpack.c.h.b16 %v3909
      %v4082 = vunpack.c.l.b16 %v3910
      %v4083 = vunpack.c.h.b16 %v3910
      %v4084 = vunpack.c.l.b16 %v3911
      %v4085 = vunpack.c.h.b16 %v3911
      %v4086 = vunpack.c.l.b16 %v3912
      %v4087 = vunpack.c.h.b16 %v3912
      %v4088 = vunpack.c.l.b16 %v3913
      %v4089 = vunpack.c.h.b16 %v3913
      %v4090 = vunpack.c.l.b16 %v3914
      %v4091 = vunpack.c.h.b16 %v3914
      %v4092 = vunpack.c.l.b16 %v3915
      %v4093 = vunpack.c.h.b16 %v3915
      %v4094 = vunpack.c.l.b16 %v3916
      %v4095 = vunpack.c.h.b16 %v3916
      %v4096 = vunpack.c.l.b16 %v3917
      %v4097 = vunpack.c.h.b16 %v3917
      %v4098 = vunpack.c.l.b16 %v3918
      %v4099 = vunpack.c.h.b16 %v3918
      %v4100 = vunpack.c.l.b16 %v3919
      %v4101 = vunpack.c.h.b16 %v3919
      %v4102 = vunpack.c.l.b16 %v3920
      %v4103 = vunpack.c.h.b16 %v3920
      %v4104 = vunpack.c.l.b16 %v3921
      %v4105 = vunpack.c.h.b16 %v3921
      %v4106 = vunpack.c.l.b16 %v3922
      %v4107 = vunpack.c.h.b16 %v3922
      %v4108 = vunpack.c.l.b16 %v3923
      %v4109 = vunpack.c.h.b16 %v3923
      %v4110 = vunpack.c.l.b16 %v3924
      %v4111 = vunpack.c.h.b16 %v3924
      %v4112 = vunpack.c.l.b16 %v3925
      %v4113 = vunpack.c.h.b16 %v3925
      %v4114 = vunpack.c.l.b16 %v3926
      %v4115 = vunpack.c.h.b16 %v3926
      %v4116 = vunpack.c.l.b16 %v3927
      %v4117 = vunpack.c.h.b16 %v3927
      %v4118 = vunpack.c.l.b16 %v3928
      %v4119 = vunpack.c.h.b16 %v3928
      %v4120 = vunpack.c.l.b16 %v3929
      %v4121 = vunpack.c.h.b16 %v3929
      %v4122 = vunpack.c.l.b16 %v3930
      %v4123 = vunpack.c.h.b16 %v3930
      %v4124 = vpack.c.b16 %v3998, %v3996
      %v4125 = vpack.c.b16 %v3999, %v3997
      %v4126 = vpack.c.b16 %v4002, %v4000
      %v4127 = vpack.c.b16 %v4003, %v4001
      %v4128 = vpack.c.b16 %v4006, %v4004
      %v4129 = vpack.c.b16 %v4007, %v4005
      %v4130 = vpack.c.b16 %v4010, %v4008
      %v4131 = vpack.c.b16 %v4011, %v4009
      %v4132 = vpack.c.b16 %v4014, %v4012
      %v4133 = vpack.c.b16 %v4015, %v4013
      %v4134 = vpack.c.b16 %v4018, %v4016
      %v4135 = vpack.c.b16 %v4019, %v4017
      %v4136 = vpack.c.b16 %v4022, %v4020
      %v4137 = vpack.c.b16 %v4023, %v4021
      %v4138 = vpack.c.b16 %v4026, %v4024
      %v4139 = vpack.c.b16 %v4027, %v4025
      %v4140 = vpack.c.b16 %v4030, %v4028
      %v4141 = vpack.c.b16 %v4031, %v4029
      %v4142 = vpack.c.b16 %v4034, %v4032
      %v4143 = vpack.c.b16 %v4035, %v4033
      %v4144 = vpack.c.b16 %v4038, %v4036
      %v4145 = vpack.c.b16 %v4039, %v4037
      %v4146 = vpack.c.b16 %v4042, %v4040
      %v4147 = vpack.c.b16 %v4043, %v4041
      %v4148 = vpack.c.b16 %v4046, %v4044
      %v4149 = vpack.c.b16 %v4047, %v4045
      %v4150 = vpack.c.b16 %v4050, %v4048
      %v4151 = vpack.c.b16 %v4051, %v4049
      %v4152 = vpack.c.b16 %v4054, %v4052
      %v4153 = vpack.c.b16 %v4055, %v4053
      %v4154 = vpack.c.b16 %v4058, %v4056
      %v4155 = vpack.c.b16 %v4059, %v4057
      %v4156 = vpack.c.b16 %v4062, %v4060
      %v4157 = vpack.c.b16 %v4063, %v4061
      %v4158 = vpack.c.b16 %v4066, %v4064
      %v4159 = vpack.c.b16 %v4067, %v4065
      %v4160 = vpack.c.b16 %v4070, %v4068
      %v4161 = vpack.c.b16 %v4071, %v4069
      %v4162 = vpack.c.b16 %v4074, %v4072
      %v4163 = vpack.c.b16 %v4075, %v4073
      %v4164 = vpack.c.b16 %v4078, %v4076
      %v4165 = vpack.c.b16 %v4079, %v4077
      %v4166 = vpack.c.b16 %v4082, %v4080
      %v4167 = vpack.c.b16 %v4083, %v4081
      %v4168 = vpack.c.b16 %v4086, %v4084
      %v4169 = vpack.c.b16 %v4087, %v4085
      %v4170 = vpack.c.b16 %v4090, %v4088
      %v4171 = vpack.c.b16 %v4091, %v4089
      %v4172 = vpack.c.b16 %v4094, %v4092
      %v4173 = vpack.c.b16 %v4095, %v4093
      %v4174 = vpack.c.b16 %v4098, %v4096
      %v4175 = vpack.c.b16 %v4099, %v4097
      %v4176 = vpack.c.b16 %v4102, %v4100
      %v4177 = vpack.c.b16 %v4103, %v4101
      %v4178 = vpack.c.b16 %v4106, %v4104
      %v4179 = vpack.c.b16 %v4107, %v4105
      %v4180 = vpack.c.b16 %v4110, %v4108
      %v4181 = vpack.c.b16 %v4111, %v4109
      %v4182 = vpack.c.b16 %v4114, %v4112
      %v4183 = vpack.c.b16 %v4115, %v4113
      %v4184 = vpack.c.b16 %v4118, %v4116
      %v4185 = vpack.c.b16 %v4119, %v4117
      %v4186 = vpack.c.b16 %v4122, %v4120
      %v4187 = vpack.c.b16 %v4123, %v4121
      %4252 = vmatprep.subr.bf16.mxu0 %v4125
      %4253 = vmatpush1.bf16.msra.mxu0 %v4124
      %4254 = vmatprep.subr.bf16.mxu0 %v4127
      %4255 = vmatpush1.bf16.msra.mxu0 %v4126
      %4256 = vmatprep.subr.bf16.mxu0 %v4129
      %4257 = vmatpush1.bf16.msra.mxu0 %v4128
      %4258 = vmatprep.subr.bf16.mxu0 %v4131
      %4259 = vmatpush1.bf16.msra.mxu0 %v4130
      %4260 = vmatprep.subr.bf16.mxu0 %v4133
      %4261 = vmatpush1.bf16.msra.mxu0 %v4132
      %4262 = vmatprep.subr.bf16.mxu0 %v4135
      %4263 = vmatpush1.bf16.msra.mxu0 %v4134
      %4264 = vmatprep.subr.bf16.mxu0 %v4137
      %4265 = vmatpush1.bf16.msra.mxu0 %v4136
      %4266 = vmatprep.subr.bf16.mxu0 %v4139
      %4267 = vmatpush1.bf16.msra.mxu0 %v4138
      %4268 = vmatprep.subr.bf16.mxu0 %v4141
      %4269 = vmatpush1.bf16.msra.mxu0 %v4140
      %4270 = vmatprep.subr.bf16.mxu0 %v4143
      %4271 = vmatpush1.bf16.msra.mxu0 %v4142
      %4272 = vmatprep.subr.bf16.mxu0 %v4145
      %4273 = vmatpush1.bf16.msra.mxu0 %v4144
      %4274 = vmatprep.subr.bf16.mxu0 %v4147
      %4275 = vmatpush1.bf16.msra.mxu0 %v4146
      %4276 = vmatprep.subr.bf16.mxu0 %v4149
      %4277 = vmatpush1.bf16.msra.mxu0 %v4148
      %4278 = vmatprep.subr.bf16.mxu0 %v4151
      %4279 = vmatpush1.bf16.msra.mxu0 %v4150
      %4280 = vmatprep.subr.bf16.mxu0 %v4153
      %4281 = vmatpush1.bf16.msra.mxu0 %v4152
      %4282 = vmatprep.subr.bf16.mxu0 %v4155
      %4283 = vmatpush1.bf16.msra.mxu0 %v4154
      %4284 = vmatprep.mubr.bf16.mxu0 %v3544
      %4285 = vmatmul.mubr.bf16.gmra.mrb[0].mxu0 %v3543
      %v4286 = vpop.f32.mrb[0].mxu0
      %v4287 = vadd.f32 0.0, %v4286
      %v4288 = vpop.f32.mrb[0].mxu0
      %v4289 = vadd.f32 0.0, %v4288
      %v4290 = vpop.f32.mrb[0].mxu0
      %v4291 = vadd.f32 0.0, %v4290
      %v4292 = vpop.f32.mrb[0].mxu0
      %v4293 = vadd.f32 0.0, %v4292
      %4294 = vmatprep.mubr.bf16.mxu0 %v3548
      %4295 = vmatmul.mubr.bf16.gmra.mrb[0].mxu0 %v3547
      %v4296 = vpop.f32.mrb[0].mxu0
      %v4297 = vadd.f32 0.0, %v4296
      %v4298 = vpop.f32.mrb[0].mxu0
      %v4299 = vadd.f32 0.0, %v4298
      %v4300 = vpop.f32.mrb[0].mxu0
      %v4301 = vadd.f32 0.0, %v4300
      %v4302 = vpop.f32.mrb[0].mxu0
      %v4303 = vadd.f32 0.0, %v4302
      %4304 = vmatprep.mubr.bf16.mxu0 %v3552
      %4305 = vmatmul.mubr.bf16.gmra.mrb[0].mxu0 %v3551
      %v4306 = vpop.f32.mrb[0].mxu0
      %v4307 = vadd.f32 0.0, %v4306
      %v4308 = vpop.f32.mrb[0].mxu0
      %v4309 = vadd.f32 0.0, %v4308
      %v4310 = vpop.f32.mrb[0].mxu0
      %v4311 = vadd.f32 0.0, %v4310
      %v4312 = vpop.f32.mrb[0].mxu0
      %v4313 = vadd.f32 0.0, %v4312
      %4314 = vmatprep.mubr.bf16.mxu0 %v3556
      %4315 = vmatmul.mubr.bf16.gmra.mrb[0].mxu0 %v3555
      %v4316 = vpop.f32.mrb[0].mxu0
      %v4317 = vadd.f32 0.0, %v4316
      %v4318 = vpop.f32.mrb[0].mxu0
      %v4319 = vadd.f32 0.0, %v4318
      %v4320 = vpop.f32.mrb[0].mxu0
      %v4321 = vadd.f32 0.0, %v4320
      %v4322 = vpop.f32.mrb[0].mxu0
      %v4323 = vadd.f32 0.0, %v4322
      %4324 = vmatprep.mubr.bf16.mxu0 %v3560
      %4325 = vmatmul.mubr.bf16.gmra.mrb[0].mxu0 %v3559
      %v4326 = vpop.f32.mrb[0].mxu0
      %v4327 = vadd.f32 0.0, %v4326
      %v4328 = vpop.f32.mrb[0].mxu0
      %v4329 = vadd.f32 0.0, %v4328
      %v4330 = vpop.f32.mrb[0].mxu0
      %v4331 = vadd.f32 0.0, %v4330
      %v4332 = vpop.f32.mrb[0].mxu0
      %v4333 = vadd.f32 0.0, %v4332
      %4334 = vmatprep.mubr.bf16.mxu0 %v3564
      %4335 = vmatmul.mubr.bf16.gmra.mrb[0].mxu0 %v3563
      %v4336 = vpop.f32.mrb[0].mxu0
      %v4337 = vadd.f32 0.0, %v4336
      %v4338 = vpop.f32.mrb[0].mxu0
      %v4339 = vadd.f32 0.0, %v4338
      %v4340 = vpop.f32.mrb[0].mxu0
      %v4341 = vadd.f32 0.0, %v4340
      %v4342 = vpop.f32.mrb[0].mxu0
      %v4343 = vadd.f32 0.0, %v4342
      %4344 = vmatprep.mubr.bf16.mxu0 %v3568
      %4345 = vmatmul.mubr.bf16.gmra.mrb[0].mxu0 %v3567
      %v4346 = vpop.f32.mrb[0].mxu0
      %v4347 = vadd.f32 0.0, %v4346
      %v4348 = vpop.f32.mrb[0].mxu0
      %v4349 = vadd.f32 0.0, %v4348
      %v4350 = vpop.f32.mrb[0].mxu0
      %v4351 = vadd.f32 0.0, %v4350
      %v4352 = vpop.f32.mrb[0].mxu0
      %v4353 = vadd.f32 0.0, %v4352
      %4354 = vmatprep.mubr.bf16.mxu0 %v3572
      %4355 = vmatmul.mubr.bf16.gmra.mrb[0].mxu0 %v3571
      %v4356 = vpop.f32.mrb[0].mxu0
      %v4357 = vadd.f32 0.0, %v4356
      %v4358 = vpop.f32.mrb[0].mxu0
      %v4359 = vadd.f32 0.0, %v4358
      %v4360 = vpop.f32.mrb[0].mxu0
      %v4361 = vadd.f32 0.0, %v4360
      %v4362 = vpop.f32.mrb[0].mxu0
      %v4363 = vadd.f32 0.0, %v4362
      %4364 = vmatprep.mubr.bf16.mxu0 %v3576
      %4365 = vmatmul.mubr.bf16.gmra.mrb[0].mxu0 %v3575
      %v4366 = vpop.f32.mrb[0].mxu0
      %v4367 = vadd.f32 0.0, %v4366
      %v4368 = vpop.f32.mrb[0].mxu0
      %v4369 = vadd.f32 0.0, %v4368
      %v4370 = vpop.f32.mrb[0].mxu0
      %v4371 = vadd.f32 0.0, %v4370
      %v4372 = vpop.f32.mrb[0].mxu0
      %v4373 = vadd.f32 0.0, %v4372
      %4374 = vmatprep.mubr.bf16.mxu0 %v3580
      %4375 = vmatmul.mubr.bf16.gmra.mrb[0].mxu0 %v3579
      %v4376 = vpop.f32.mrb[0].mxu0
      %v4377 = vadd.f32 0.0, %v4376
      %v4378 = vpop.f32.mrb[0].mxu0
      %v4379 = vadd.f32 0.0, %v4378
      %v4380 = vpop.f32.mrb[0].mxu0
      %v4381 = vadd.f32 0.0, %v4380
      %v4382 = vpop.f32.mrb[0].mxu0
      %v4383 = vadd.f32 0.0, %v4382
      %4384 = vmatprep.mubr.bf16.mxu0 %v3584
      %4385 = vmatmul.mubr.bf16.gmra.mrb[0].mxu0 %v3583
      %v4386 = vpop.f32.mrb[0].mxu0
      %v4387 = vadd.f32 0.0, %v4386
      %v4388 = vpop.f32.mrb[0].mxu0
      %v4389 = vadd.f32 0.0, %v4388
      %v4390 = vpop.f32.mrb[0].mxu0
      %v4391 = vadd.f32 0.0, %v4390
      %v4392 = vpop.f32.mrb[0].mxu0
      %v4393 = vadd.f32 0.0, %v4392
      %4394 = vmatprep.mubr.bf16.mxu0 %v3588
      %4395 = vmatmul.mubr.bf16.gmra.mrb[0].mxu0 %v3587
      %v4396 = vpop.f32.mrb[0].mxu0
      %v4397 = vadd.f32 0.0, %v4396
      %v4398 = vpop.f32.mrb[0].mxu0
      %v4399 = vadd.f32 0.0, %v4398
      %v4400 = vpop.f32.mrb[0].mxu0
      %v4401 = vadd.f32 0.0, %v4400
      %v4402 = vpop.f32.mrb[0].mxu0
      %v4403 = vadd.f32 0.0, %v4402
      %4404 = vmatprep.mubr.bf16.mxu0 %v3592
      %4405 = vmatmul.mubr.bf16.gmra.mrb[0].mxu0 %v3591
      %v4406 = vpop.f32.mrb[0].mxu0
      %v4407 = vadd.f32 0.0, %v4406
      %v4408 = vpop.f32.mrb[0].mxu0
      %v4409 = vadd.f32 0.0, %v4408
      %v4410 = vpop.f32.mrb[0].mxu0
      %v4411 = vadd.f32 0.0, %v4410
      %v4412 = vpop.f32.mrb[0].mxu0
      %v4413 = vadd.f32 0.0, %v4412
      %4414 = vmatprep.mubr.bf16.mxu0 %v3596
      %4415 = vmatmul.mubr.bf16.gmra.mrb[0].mxu0 %v3595
      %v4416 = vpop.f32.mrb[0].mxu0
      %v4417 = vadd.f32 0.0, %v4416
      %v4418 = vpop.f32.mrb[0].mxu0
      %v4419 = vadd.f32 0.0, %v4418
      %v4420 = vpop.f32.mrb[0].mxu0
      %v4421 = vadd.f32 0.0, %v4420
      %v4422 = vpop.f32.mrb[0].mxu0
      %v4423 = vadd.f32 0.0, %v4422
      %4424 = vmatprep.mubr.bf16.mxu0 %v3600
      %4425 = vmatmul.mubr.bf16.gmra.mrb[0].mxu0 %v3599
      %v4426 = vpop.f32.mrb[0].mxu0
      %v4427 = vadd.f32 0.0, %v4426
      %v4428 = vpop.f32.mrb[0].mxu0
      %v4429 = vadd.f32 0.0, %v4428
      %v4430 = vpop.f32.mrb[0].mxu0
      %v4431 = vadd.f32 0.0, %v4430
      %v4432 = vpop.f32.mrb[0].mxu0
      %v4433 = vadd.f32 0.0, %v4432
      %4434 = vmatprep.mubr.bf16.mxu0 %v3604
      %4435 = vmatmul.mubr.bf16.gmra.mrb[0].mxu0 %v3603
      %v4436 = vpop.f32.mrb[0].mxu0
      %v4437 = vadd.f32 0.0, %v4436
      %v4438 = vpop.f32.mrb[0].mxu0
      %v4439 = vadd.f32 0.0, %v4438
      %v4440 = vpop.f32.mrb[0].mxu0
      %v4441 = vadd.f32 0.0, %v4440
      %v4442 = vpop.f32.mrb[0].mxu0
      %v4443 = vadd.f32 0.0, %v4442
      %4444 = vmatprep.mubr.bf16.mxu0 %v3608
      %4445 = vmatmul.mubr.bf16.gmra.mrb[0].mxu0 %v3607
      %v4446 = vpop.f32.mrb[0].mxu0
      %v4447 = vadd.f32 0.0, %v4446
      %v4448 = vpop.f32.mrb[0].mxu0
      %v4449 = vadd.f32 0.0, %v4448
      %v4450 = vpop.f32.mrb[0].mxu0
      %v4451 = vadd.f32 0.0, %v4450
      %v4452 = vpop.f32.mrb[0].mxu0
      %v4453 = vadd.f32 0.0, %v4452
      %4454 = vmatprep.mubr.bf16.mxu0 %v3612
      %4455 = vmatmul.mubr.bf16.gmra.mrb[0].mxu0 %v3611
      %v4456 = vpop.f32.mrb[0].mxu0
      %v4457 = vadd.f32 0.0, %v4456
      %v4458 = vpop.f32.mrb[0].mxu0
      %v4459 = vadd.f32 0.0, %v4458
      %v4460 = vpop.f32.mrb[0].mxu0
      %v4461 = vadd.f32 0.0, %v4460
      %v4462 = vpop.f32.mrb[0].mxu0
      %v4463 = vadd.f32 0.0, %v4462
      %4464 = vmatprep.mubr.bf16.mxu0 %v3616
      %4465 = vmatmul.mubr.bf16.gmra.mrb[0].mxu0 %v3615
      %v4466 = vpop.f32.mrb[0].mxu0
      %v4467 = vadd.f32 0.0, %v4466
      %v4468 = vpop.f32.mrb[0].mxu0
      %v4469 = vadd.f32 0.0, %v4468
      %v4470 = vpop.f32.mrb[0].mxu0
      %v4471 = vadd.f32 0.0, %v4470
      %v4472 = vpop.f32.mrb[0].mxu0
      %v4473 = vadd.f32 0.0, %v4472
      %4474 = vmatprep.mubr.bf16.mxu0 %v3620
      %4475 = vmatmul.mubr.bf16.gmra.mrb[0].mxu0 %v3619
      %v4476 = vpop.f32.mrb[0].mxu0
      %v4477 = vadd.f32 0.0, %v4476
      %v4478 = vpop.f32.mrb[0].mxu0
      %v4479 = vadd.f32 0.0, %v4478
      %v4480 = vpop.f32.mrb[0].mxu0
      %v4481 = vadd.f32 0.0, %v4480
      %v4482 = vpop.f32.mrb[0].mxu0
      %v4483 = vadd.f32 0.0, %v4482
      %4484 = vmatprep.mubr.bf16.mxu0 %v3624
      %4485 = vmatmul.mubr.bf16.gmra.mrb[0].mxu0 %v3623
      %v4486 = vpop.f32.mrb[0].mxu0
      %v4487 = vadd.f32 0.0, %v4486
      %v4488 = vpop.f32.mrb[0].mxu0
      %v4489 = vadd.f32 0.0, %v4488
      %v4490 = vpop.f32.mrb[0].mxu0
      %v4491 = vadd.f32 0.0, %v4490
      %v4492 = vpop.f32.mrb[0].mxu0
      %v4493 = vadd.f32 0.0, %v4492
      %4494 = vmatprep.mubr.bf16.mxu0 %v3628
      %4495 = vmatmul.mubr.bf16.gmra.mrb[0].mxu0 %v3627
      %v4496 = vpop.f32.mrb[0].mxu0
      %v4497 = vadd.f32 0.0, %v4496
      %v4498 = vpop.f32.mrb[0].mxu0
      %v4499 = vadd.f32 0.0, %v4498
      %v4500 = vpop.f32.mrb[0].mxu0
      %v4501 = vadd.f32 0.0, %v4500
      %v4502 = vpop.f32.mrb[0].mxu0
      %v4503 = vadd.f32 0.0, %v4502
      %4504 = vmatprep.mubr.bf16.mxu0 %v3632
      %4505 = vmatmul.mubr.bf16.gmra.mrb[0].mxu0 %v3631
      %v4506 = vpop.f32.mrb[0].mxu0
      %v4507 = vadd.f32 0.0, %v4506
      %v4508 = vpop.f32.mrb[0].mxu0
      %v4509 = vadd.f32 0.0, %v4508
      %v4510 = vpop.f32.mrb[0].mxu0
      %v4511 = vadd.f32 0.0, %v4510
      %v4512 = vpop.f32.mrb[0].mxu0
      %v4513 = vadd.f32 0.0, %v4512
      %4514 = vmatprep.mubr.bf16.mxu0 %v3636
      %4515 = vmatmul.mubr.bf16.gmra.mrb[0].mxu0 %v3635
      %v4516 = vpop.f32.mrb[0].mxu0
      %v4517 = vadd.f32 0.0, %v4516
      %v4518 = vpop.f32.mrb[0].mxu0
      %v4519 = vadd.f32 0.0, %v4518
      %v4520 = vpop.f32.mrb[0].mxu0
      %v4521 = vadd.f32 0.0, %v4520
      %v4522 = vpop.f32.mrb[0].mxu0
      %v4523 = vadd.f32 0.0, %v4522
      %4524 = vmatprep.mubr.bf16.mxu0 %v3640
      %4525 = vmatmul.mubr.bf16.gmra.mrb[0].mxu0 %v3639
      %v4526 = vpop.f32.mrb[0].mxu0
      %v4527 = vadd.f32 0.0, %v4526
      %v4528 = vpop.f32.mrb[0].mxu0
      %v4529 = vadd.f32 0.0, %v4528
      %v4530 = vpop.f32.mrb[0].mxu0
      %v4531 = vadd.f32 0.0, %v4530
      %v4532 = vpop.f32.mrb[0].mxu0
      %v4533 = vadd.f32 0.0, %v4532
      %4534 = vmatprep.mubr.bf16.mxu0 %v3644
      %4535 = vmatmul.mubr.bf16.gmra.mrb[0].mxu0 %v3643
      %v4536 = vpop.f32.mrb[0].mxu0
      %v4537 = vadd.f32 0.0, %v4536
      %v4538 = vpop.f32.mrb[0].mxu0
      %v4539 = vadd.f32 0.0, %v4538
      %v4540 = vpop.f32.mrb[0].mxu0
      %v4541 = vadd.f32 0.0, %v4540
      %v4542 = vpop.f32.mrb[0].mxu0
      %v4543 = vadd.f32 0.0, %v4542
      %4544 = vmatprep.mubr.bf16.mxu0 %v3648
      %4545 = vmatmul.mubr.bf16.gmra.mrb[0].mxu0 %v3647
      %v4546 = vpop.f32.mrb[0].mxu0
      %v4547 = vadd.f32 0.0, %v4546
      %v4548 = vpop.f32.mrb[0].mxu0
      %v4549 = vadd.f32 0.0, %v4548
      %v4550 = vpop.f32.mrb[0].mxu0
      %v4551 = vadd.f32 0.0, %v4550
      %v4552 = vpop.f32.mrb[0].mxu0
      %v4553 = vadd.f32 0.0, %v4552
      %4554 = vmatprep.mubr.bf16.mxu0 %v3652
      %4555 = vmatmul.mubr.bf16.gmra.mrb[0].mxu0 %v3651
      %v4556 = vpop.f32.mrb[0].mxu0
      %v4557 = vadd.f32 0.0, %v4556
      %v4558 = vpop.f32.mrb[0].mxu0
      %v4559 = vadd.f32 0.0, %v4558
      %v4560 = vpop.f32.mrb[0].mxu0
      %v4561 = vadd.f32 0.0, %v4560
      %v4562 = vpop.f32.mrb[0].mxu0
      %v4563 = vadd.f32 0.0, %v4562
      %4564 = vmatprep.mubr.bf16.mxu0 %v3656
      %4565 = vmatmul.mubr.bf16.gmra.mrb[0].mxu0 %v3655
      %v4566 = vpop.f32.mrb[0].mxu0
      %v4567 = vadd.f32 0.0, %v4566
      %v4568 = vpop.f32.mrb[0].mxu0
      %v4569 = vadd.f32 0.0, %v4568
      %v4570 = vpop.f32.mrb[0].mxu0
      %v4571 = vadd.f32 0.0, %v4570
      %v4572 = vpop.f32.mrb[0].mxu0
      %v4573 = vadd.f32 0.0, %v4572
      %4574 = vmatprep.mubr.bf16.mxu0 %v3660
      %4575 = vmatmul.mubr.bf16.gmra.mrb[0].mxu0 %v3659
      %v4576 = vpop.f32.mrb[0].mxu0
      %v4577 = vadd.f32 0.0, %v4576
      %v4578 = vpop.f32.mrb[0].mxu0
      %v4579 = vadd.f32 0.0, %v4578
      %v4580 = vpop.f32.mrb[0].mxu0
      %v4581 = vadd.f32 0.0, %v4580
      %v4582 = vpop.f32.mrb[0].mxu0
      %v4583 = vadd.f32 0.0, %v4582
      %4584 = vmatprep.mubr.bf16.mxu0 %v3664
      %4585 = vmatmul.mubr.bf16.gmra.mrb[0].mxu0 %v3663
      %v4586 = vpop.f32.mrb[0].mxu0
      %v4587 = vadd.f32 0.0, %v4586
      %v4588 = vpop.f32.mrb[0].mxu0
      %v4589 = vadd.f32 0.0, %v4588
      %v4590 = vpop.f32.mrb[0].mxu0
      %v4591 = vadd.f32 0.0, %v4590
      %v4592 = vpop.f32.mrb[0].mxu0
      %v4593 = vadd.f32 0.0, %v4592
      %4594 = vmatprep.mubr.bf16.mxu0 %v3668
      %4595 = vmatmul.mubr.bf16.gmra.mrb[0].mxu0 %v3667
      %v4596 = vpop.f32.mrb[0].mxu0
      %v4597 = vadd.f32 0.0, %v4596
      %v4598 = vpop.f32.mrb[0].mxu0
      %v4599 = vadd.f32 0.0, %v4598
      %v4600 = vpop.f32.mrb[0].mxu0
      %v4601 = vadd.f32 0.0, %v4600
      %v4602 = vpop.f32.mrb[0].mxu0
      %v4603 = vadd.f32 0.0, %v4602
      %4604 = vmatprep.mubr.bf16.mxu0 %v3672
      %4605 = vmatmul.mubr.bf16.gmra.mrb[0].mxu0 %v3671
      %v4606 = vpop.f32.mrb[0].mxu0
      %v4607 = vadd.f32 0.0, %v4606
      %v4608 = vpop.f32.mrb[0].mxu0
      %v4609 = vadd.f32 0.0, %v4608
      %v4610 = vpop.f32.mrb[0].mxu0
      %v4611 = vadd.f32 0.0, %v4610
      %v4612 = vpop.f32.mrb[0].mxu0
      %v4613 = vadd.f32 0.0, %v4612
      %4614 = vmatprep.mubr.bf16.mxu0 %v3676
      %4615 = vmatmul.mubr.bf16.gmra.mrb[0].mxu0 %v3675
      %v4616 = vpop.f32.mrb[0].mxu0
      %v4617 = vadd.f32 0.0, %v4616
      %v4618 = vpop.f32.mrb[0].mxu0
      %v4619 = vadd.f32 0.0, %v4618
      %v4620 = vpop.f32.mrb[0].mxu0
      %v4621 = vadd.f32 0.0, %v4620
      %v4622 = vpop.f32.mrb[0].mxu0
      %v4623 = vadd.f32 0.0, %v4622
      %4624 = vmatprep.mubr.bf16.mxu0 %v3680
      %4625 = vmatmul.mubr.bf16.gmra.mrb[0].mxu0 %v3679
      %v4626 = vpop.f32.mrb[0].mxu0
      %v4627 = vadd.f32 0.0, %v4626
      %v4628 = vpop.f32.mrb[0].mxu0
      %v4629 = vadd.f32 0.0, %v4628
      %v4630 = vpop.f32.mrb[0].mxu0
      %v4631 = vadd.f32 0.0, %v4630
      %v4632 = vpop.f32.mrb[0].mxu0
      %v4633 = vadd.f32 0.0, %v4632
      %4634 = vmatprep.mubr.bf16.mxu0 %v3684
      %4635 = vmatmul.mubr.bf16.gmra.mrb[0].mxu0 %v3683
      %v4636 = vpop.f32.mrb[0].mxu0
      %v4637 = vadd.f32 0.0, %v4636
      %v4638 = vpop.f32.mrb[0].mxu0
      %v4639 = vadd.f32 0.0, %v4638
      %v4640 = vpop.f32.mrb[0].mxu0
      %v4641 = vadd.f32 0.0, %v4640
      %v4642 = vpop.f32.mrb[0].mxu0
      %v4643 = vadd.f32 0.0, %v4642
      %4644 = vmatprep.mubr.bf16.mxu0 %v3688
      %4645 = vmatmul.mubr.bf16.gmra.mrb[0].mxu0 %v3687
      %v4646 = vpop.f32.mrb[0].mxu0
      %v4647 = vadd.f32 0.0, %v4646
      %v4648 = vpop.f32.mrb[0].mxu0
      %v4649 = vadd.f32 0.0, %v4648
      %v4650 = vpop.f32.mrb[0].mxu0
      %v4651 = vadd.f32 0.0, %v4650
      %v4652 = vpop.f32.mrb[0].mxu0
      %v4653 = vadd.f32 0.0, %v4652
      %4654 = vmatprep.mubr.bf16.mxu0 %v3692
      %4655 = vmatmul.mubr.bf16.gmra.mrb[0].mxu0 %v3691
      %v4656 = vpop.f32.mrb[0].mxu0
      %v4657 = vadd.f32 0.0, %v4656
      %v4658 = vpop.f32.mrb[0].mxu0
      %v4659 = vadd.f32 0.0, %v4658
      %v4660 = vpop.f32.mrb[0].mxu0
      %v4661 = vadd.f32 0.0, %v4660
      %v4662 = vpop.f32.mrb[0].mxu0
      %v4663 = vadd.f32 0.0, %v4662
      %4664 = vmatprep.mubr.bf16.mxu0 %v3696
      %4665 = vmatmul.mubr.bf16.gmra.mrb[0].mxu0 %v3695
      %v4666 = vpop.f32.mrb[0].mxu0
      %v4667 = vadd.f32 0.0, %v4666
      %v4668 = vpop.f32.mrb[0].mxu0
      %v4669 = vadd.f32 0.0, %v4668
      %v4670 = vpop.f32.mrb[0].mxu0
      %v4671 = vadd.f32 0.0, %v4670
      %v4672 = vpop.f32.mrb[0].mxu0
      %v4673 = vadd.f32 0.0, %v4672
      %4674 = vmatprep.mubr.bf16.mxu0 %v3700
      %4675 = vmatmul.mubr.bf16.gmra.mrb[0].mxu0 %v3699
      %v4676 = vpop.f32.mrb[0].mxu0
      %v4677 = vadd.f32 0.0, %v4676
      %v4678 = vpop.f32.mrb[0].mxu0
      %v4679 = vadd.f32 0.0, %v4678
      %v4680 = vpop.f32.mrb[0].mxu0
      %v4681 = vadd.f32 0.0, %v4680
      %v4682 = vpop.f32.mrb[0].mxu0
      %v4683 = vadd.f32 0.0, %v4682
      %4684 = vmatprep.mubr.bf16.mxu0 %v3704
      %4685 = vmatmul.mubr.bf16.gmra.mrb[0].mxu0 %v3703
      %v4686 = vpop.f32.mrb[0].mxu0
      %v4687 = vadd.f32 0.0, %v4686
      %v4688 = vpop.f32.mrb[0].mxu0
      %v4689 = vadd.f32 0.0, %v4688
      %v4690 = vpop.f32.mrb[0].mxu0
      %v4691 = vadd.f32 0.0, %v4690
      %v4692 = vpop.f32.mrb[0].mxu0
      %v4693 = vadd.f32 0.0, %v4692
      %4694 = vmatprep.mubr.bf16.mxu0 %v3708
      %4695 = vmatmul.mubr.bf16.gmra.mrb[0].mxu0 %v3707
      %v4696 = vpop.f32.mrb[0].mxu0
      %v4697 = vadd.f32 0.0, %v4696
      %v4698 = vpop.f32.mrb[0].mxu0
      %v4699 = vadd.f32 0.0, %v4698
      %v4700 = vpop.f32.mrb[0].mxu0
      %v4701 = vadd.f32 0.0, %v4700
      %v4702 = vpop.f32.mrb[0].mxu0
      %v4703 = vadd.f32 0.0, %v4702
      %4704 = vmatprep.mubr.bf16.mxu0 %v3712
      %4705 = vmatmul.mubr.bf16.gmra.mrb[0].mxu0 %v3711
      %v4706 = vpop.f32.mrb[0].mxu0
      %v4707 = vadd.f32 0.0, %v4706
      %v4708 = vpop.f32.mrb[0].mxu0
      %v4709 = vadd.f32 0.0, %v4708
      %v4710 = vpop.f32.mrb[0].mxu0
      %v4711 = vadd.f32 0.0, %v4710
      %v4712 = vpop.f32.mrb[0].mxu0
      %v4713 = vadd.f32 0.0, %v4712
      %4714 = vmatprep.mubr.bf16.mxu0 %v3716
      %4715 = vmatmul.mubr.bf16.gmra.mrb[0].mxu0 %v3715
      %v4716 = vpop.f32.mrb[0].mxu0
      %v4717 = vadd.f32 0.0, %v4716
      %v4718 = vpop.f32.mrb[0].mxu0
      %v4719 = vadd.f32 0.0, %v4718
      %v4720 = vpop.f32.mrb[0].mxu0
      %v4721 = vadd.f32 0.0, %v4720
      %v4722 = vpop.f32.mrb[0].mxu0
      %v4723 = vadd.f32 0.0, %v4722
      %4724 = vmatprep.mubr.bf16.mxu0 %v3720
      %4725 = vmatmul.mubr.bf16.gmra.mrb[0].mxu0 %v3719
      %v4726 = vpop.f32.mrb[0].mxu0
      %v4727 = vadd.f32 0.0, %v4726
      %v4728 = vpop.f32.mrb[0].mxu0
      %v4729 = vadd.f32 0.0, %v4728
      %v4730 = vpop.f32.mrb[0].mxu0
      %v4731 = vadd.f32 0.0, %v4730
      %v4732 = vpop.f32.mrb[0].mxu0
      %v4733 = vadd.f32 0.0, %v4732
      %4734 = vmatprep.mubr.bf16.mxu0 %v3724
      %4735 = vmatmul.mubr.bf16.gmra.mrb[0].mxu0 %v3723
      %v4736 = vpop.f32.mrb[0].mxu0
      %v4737 = vadd.f32 0.0, %v4736
      %v4738 = vpop.f32.mrb[0].mxu0
      %v4739 = vadd.f32 0.0, %v4738
      %v4740 = vpop.f32.mrb[0].mxu0
      %v4741 = vadd.f32 0.0, %v4740
      %v4742 = vpop.f32.mrb[0].mxu0
      %v4743 = vadd.f32 0.0, %v4742
      %4744 = vmatprep.mubr.bf16.mxu0 %v3728
      %4745 = vmatmul.mubr.bf16.gmra.mrb[0].mxu0 %v3727
      %v4746 = vpop.f32.mrb[0].mxu0
      %v4747 = vadd.f32 0.0, %v4746
      %v4748 = vpop.f32.mrb[0].mxu0
      %v4749 = vadd.f32 0.0, %v4748
      %v4750 = vpop.f32.mrb[0].mxu0
      %v4751 = vadd.f32 0.0, %v4750
      %v4752 = vpop.f32.mrb[0].mxu0
      %v4753 = vadd.f32 0.0, %v4752
      %4754 = vmatprep.mubr.bf16.mxu0 %v3732
      %4755 = vmatmul.mubr.bf16.gmra.mrb[0].mxu0 %v3731
      %v4756 = vpop.f32.mrb[0].mxu0
      %v4757 = vadd.f32 0.0, %v4756
      %v4758 = vpop.f32.mrb[0].mxu0
      %v4759 = vadd.f32 0.0, %v4758
      %v4760 = vpop.f32.mrb[0].mxu0
      %v4761 = vadd.f32 0.0, %v4760
      %v4762 = vpop.f32.mrb[0].mxu0
      %v4763 = vadd.f32 0.0, %v4762
      %4764 = vmatprep.mubr.bf16.mxu0 %v3736
      %4765 = vmatmul.mubr.bf16.gmra.mrb[0].mxu0 %v3735
      %v4766 = vpop.f32.mrb[0].mxu0
      %v4767 = vadd.f32 0.0, %v4766
      %v4768 = vpop.f32.mrb[0].mxu0
      %v4769 = vadd.f32 0.0, %v4768
      %v4770 = vpop.f32.mrb[0].mxu0
      %v4771 = vadd.f32 0.0, %v4770
      %v4772 = vpop.f32.mrb[0].mxu0
      %v4773 = vadd.f32 0.0, %v4772
      %4774 = vmatprep.mubr.bf16.mxu0 %v3740
      %4775 = vmatmul.mubr.bf16.gmra.mrb[0].mxu0 %v3739
      %v4776 = vpop.f32.mrb[0].mxu0
      %v4777 = vadd.f32 0.0, %v4776
      %v4778 = vpop.f32.mrb[0].mxu0
      %v4779 = vadd.f32 0.0, %v4778
      %v4780 = vpop.f32.mrb[0].mxu0
      %v4781 = vadd.f32 0.0, %v4780
      %v4782 = vpop.f32.mrb[0].mxu0
      %v4783 = vadd.f32 0.0, %v4782
      %4784 = vmatprep.mubr.bf16.mxu0 %v3744
      %4785 = vmatmul.mubr.bf16.gmra.mrb[0].mxu0 %v3743
      %v4786 = vpop.f32.mrb[0].mxu0
      %v4787 = vadd.f32 0.0, %v4786
      %v4788 = vpop.f32.mrb[0].mxu0
      %v4789 = vadd.f32 0.0, %v4788
      %v4790 = vpop.f32.mrb[0].mxu0
      %v4791 = vadd.f32 0.0, %v4790
      %v4792 = vpop.f32.mrb[0].mxu0
      %v4793 = vadd.f32 0.0, %v4792
      %4794 = vmatprep.mubr.bf16.mxu0 %v3748
      %4795 = vmatmul.mubr.bf16.gmra.mrb[0].mxu0 %v3747
      %v4796 = vpop.f32.mrb[0].mxu0
      %v4797 = vadd.f32 0.0, %v4796
      %v4798 = vpop.f32.mrb[0].mxu0
      %v4799 = vadd.f32 0.0, %v4798
      %v4800 = vpop.f32.mrb[0].mxu0
      %v4801 = vadd.f32 0.0, %v4800
      %v4802 = vpop.f32.mrb[0].mxu0
      %v4803 = vadd.f32 0.0, %v4802
      %4804 = vmatprep.mubr.bf16.mxu0 %v3752
      %4805 = vmatmul.mubr.bf16.gmra.mrb[0].mxu0 %v3751
      %v4806 = vpop.f32.mrb[0].mxu0
      %v4807 = vadd.f32 0.0, %v4806
      %v4808 = vpop.f32.mrb[0].mxu0
      %v4809 = vadd.f32 0.0, %v4808
      %v4810 = vpop.f32.mrb[0].mxu0
      %v4811 = vadd.f32 0.0, %v4810
      %v4812 = vpop.f32.mrb[0].mxu0
      %v4813 = vadd.f32 0.0, %v4812
      %4814 = vmatprep.mubr.bf16.mxu0 %v3756
      %4815 = vmatmul.mubr.bf16.gmra.mrb[0].mxu0 %v3755
      %v4816 = vpop.f32.mrb[0].mxu0
      %v4817 = vadd.f32 0.0, %v4816
      %v4818 = vpop.f32.mrb[0].mxu0
      %v4819 = vadd.f32 0.0, %v4818
      %v4820 = vpop.f32.mrb[0].mxu0
      %v4821 = vadd.f32 0.0, %v4820
      %v4822 = vpop.f32.mrb[0].mxu0
      %v4823 = vadd.f32 0.0, %v4822
      %4824 = vmatprep.mubr.bf16.mxu0 %v3760
      %4825 = vmatmul.mubr.bf16.gmra.mrb[0].mxu0 %v3759
      %v4826 = vpop.f32.mrb[0].mxu0
      %v4827 = vadd.f32 0.0, %v4826
      %v4828 = vpop.f32.mrb[0].mxu0
      %v4829 = vadd.f32 0.0, %v4828
      %v4830 = vpop.f32.mrb[0].mxu0
      %v4831 = vadd.f32 0.0, %v4830
      %v4832 = vpop.f32.mrb[0].mxu0
      %v4833 = vadd.f32 0.0, %v4832
      %4834 = vmatprep.mubr.bf16.mxu0 %v3764
      %4835 = vmatmul.mubr.bf16.gmra.mrb[0].mxu0 %v3763
      %v4836 = vpop.f32.mrb[0].mxu0
      %v4837 = vadd.f32 0.0, %v4836
      %v4838 = vpop.f32.mrb[0].mxu0
      %v4839 = vadd.f32 0.0, %v4838
      %v4840 = vpop.f32.mrb[0].mxu0
      %v4841 = vadd.f32 0.0, %v4840
      %v4842 = vpop.f32.mrb[0].mxu0
      %v4843 = vadd.f32 0.0, %v4842
      %4844 = vmatprep.mubr.bf16.mxu0 %v3768
      %4845 = vmatmul.mubr.bf16.gmra.mrb[0].mxu0 %v3767
      %v4846 = vpop.f32.mrb[0].mxu0
      %v4847 = vadd.f32 0.0, %v4846
      %v4848 = vpop.f32.mrb[0].mxu0
      %v4849 = vadd.f32 0.0, %v4848
      %v4850 = vpop.f32.mrb[0].mxu0
      %v4851 = vadd.f32 0.0, %v4850
      %v4852 = vpop.f32.mrb[0].mxu0
      %v4853 = vadd.f32 0.0, %v4852
      %4854 = vmatprep.mubr.bf16.mxu0 %v3772
      %4855 = vmatmul.mubr.bf16.gmra.mrb[0].mxu0 %v3771
      %v4856 = vpop.f32.mrb[0].mxu0
      %v4857 = vadd.f32 0.0, %v4856
      %v4858 = vpop.f32.mrb[0].mxu0
      %v4859 = vadd.f32 0.0, %v4858
      %v4860 = vpop.f32.mrb[0].mxu0
      %v4861 = vadd.f32 0.0, %v4860
      %v4862 = vpop.f32.mrb[0].mxu0
      %v4863 = vadd.f32 0.0, %v4862
      %4864 = vmatprep.mubr.bf16.mxu0 %v3776
      %4865 = vmatmul.mubr.bf16.gmra.mrb[0].mxu0 %v3775
      %v4866 = vpop.f32.mrb[0].mxu0
      %v4867 = vadd.f32 0.0, %v4866
      %v4868 = vpop.f32.mrb[0].mxu0
      %v4869 = vadd.f32 0.0, %v4868
      %v4870 = vpop.f32.mrb[0].mxu0
      %v4871 = vadd.f32 0.0, %v4870
      %v4872 = vpop.f32.mrb[0].mxu0
      %v4873 = vadd.f32 0.0, %v4872
      %4874 = vmatprep.mubr.bf16.mxu0 %v3780
      %4875 = vmatmul.mubr.bf16.gmra.mrb[0].mxu0 %v3779
      %v4876 = vpop.f32.mrb[0].mxu0
      %v4877 = vadd.f32 0.0, %v4876
      %v4878 = vpop.f32.mrb[0].mxu0
      %v4879 = vadd.f32 0.0, %v4878
      %v4880 = vpop.f32.mrb[0].mxu0
      %v4881 = vadd.f32 0.0, %v4880
      %v4882 = vpop.f32.mrb[0].mxu0
      %v4883 = vadd.f32 0.0, %v4882
      %4884 = vmatprep.mubr.bf16.mxu0 %v3784
      %4885 = vmatmul.mubr.bf16.gmra.mrb[0].mxu0 %v3783
      %v4886 = vpop.f32.mrb[0].mxu0
      %v4887 = vadd.f32 0.0, %v4886
      %v4888 = vpop.f32.mrb[0].mxu0
      %v4889 = vadd.f32 0.0, %v4888
      %v4890 = vpop.f32.mrb[0].mxu0
      %v4891 = vadd.f32 0.0, %v4890
      %v4892 = vpop.f32.mrb[0].mxu0
      %v4893 = vadd.f32 0.0, %v4892
      %4894 = vmatprep.mubr.bf16.mxu0 %v3788
      %4895 = vmatmul.mubr.bf16.gmra.mrb[0].mxu0 %v3787
      %v4896 = vpop.f32.mrb[0].mxu0
      %v4897 = vadd.f32 0.0, %v4896
      %v4898 = vpop.f32.mrb[0].mxu0
      %v4899 = vadd.f32 0.0, %v4898
      %v4900 = vpop.f32.mrb[0].mxu0
      %v4901 = vadd.f32 0.0, %v4900
      %v4902 = vpop.f32.mrb[0].mxu0
      %v4903 = vadd.f32 0.0, %v4902
      %4904 = vmatprep.mubr.bf16.mxu0 %v3792
      %4905 = vmatmul.mubr.bf16.gmra.mrb[0].mxu0 %v3791
      %v4906 = vpop.f32.mrb[0].mxu0
      %v4907 = vadd.f32 0.0, %v4906
      %v4908 = vpop.f32.mrb[0].mxu0
      %v4909 = vadd.f32 0.0, %v4908
      %v4910 = vpop.f32.mrb[0].mxu0
      %v4911 = vadd.f32 0.0, %v4910
      %v4912 = vpop.f32.mrb[0].mxu0
      %v4913 = vadd.f32 0.0, %v4912
      %4914 = vmatprep.mubr.bf16.mxu0 %v3796
      %4915 = vmatmul.mubr.bf16.gmra.mrb[0].mxu0 %v3795
      %v4916 = vpop.f32.mrb[0].mxu0
      %v4917 = vadd.f32 0.0, %v4916
      %v4918 = vpop.f32.mrb[0].mxu0
      %v4919 = vadd.f32 0.0, %v4918
      %v4920 = vpop.f32.mrb[0].mxu0
      %v4921 = vadd.f32 0.0, %v4920
      %v4922 = vpop.f32.mrb[0].mxu0
      %v4923 = vadd.f32 0.0, %v4922
      %4924 = vmatprep.mubr.bf16.mxu0 %v3800
      %4925 = vmatmul.mubr.bf16.gmra.mrb[0].mxu0 %v3799
      %v4926 = vpop.f32.mrb[0].mxu0
      %v4927 = vadd.f32 0.0, %v4926
      %v4928 = vpop.f32.mrb[0].mxu0
      %v4929 = vadd.f32 0.0, %v4928
      %v4930 = vpop.f32.mrb[0].mxu0
      %v4931 = vadd.f32 0.0, %v4930
      %v4932 = vpop.f32.mrb[0].mxu0
      %v4933 = vadd.f32 0.0, %v4932
      %4934 = vmatprep.mubr.bf16.mxu0 %v3804
      %4935 = vmatmul.mubr.bf16.gmra.mrb[0].mxu0 %v3803
      %v4936 = vpop.f32.mrb[0].mxu0
      %v4937 = vadd.f32 0.0, %v4936
      %v4938 = vpop.f32.mrb[0].mxu0
      %v4939 = vadd.f32 0.0, %v4938
      %v4940 = vpop.f32.mrb[0].mxu0
      %v4941 = vadd.f32 0.0, %v4940
      %v4942 = vpop.f32.mrb[0].mxu0
      %v4943 = vadd.f32 0.0, %v4942
      %4944 = vmatprep.mubr.bf16.mxu0 %v3808
      %4945 = vmatmul.mubr.bf16.gmra.mrb[0].mxu0 %v3807
      %v4946 = vpop.f32.mrb[0].mxu0
      %v4947 = vadd.f32 0.0, %v4946
      %v4948 = vpop.f32.mrb[0].mxu0
      %v4949 = vadd.f32 0.0, %v4948
      %v4950 = vpop.f32.mrb[0].mxu0
      %v4951 = vadd.f32 0.0, %v4950
      %v4952 = vpop.f32.mrb[0].mxu0
      %v4953 = vadd.f32 0.0, %v4952
      %4954 = vmatprep.mubr.bf16.mxu0 %v3812
      %4955 = vmatmul.mubr.bf16.gmra.mrb[0].mxu0 %v3811
      %v4956 = vpop.f32.mrb[0].mxu0
      %v4957 = vadd.f32 0.0, %v4956
      %v4958 = vpop.f32.mrb[0].mxu0
      %v4959 = vadd.f32 0.0, %v4958
      %v4960 = vpop.f32.mrb[0].mxu0
      %v4961 = vadd.f32 0.0, %v4960
      %v4962 = vpop.f32.mrb[0].mxu0
      %v4963 = vadd.f32 0.0, %v4962
      %4964 = vmatprep.mubr.bf16.mxu0 %v3816
      %4965 = vmatmul.mubr.bf16.gmra.mrb[0].mxu0 %v3815
      %v4966 = vpop.f32.mrb[0].mxu0
      %v4967 = vadd.f32 0.0, %v4966
      %v4968 = vpop.f32.mrb[0].mxu0
      %v4969 = vadd.f32 0.0, %v4968
      %v4970 = vpop.f32.mrb[0].mxu0
      %v4971 = vadd.f32 0.0, %v4970
      %v4972 = vpop.f32.mrb[0].mxu0
      %v4973 = vadd.f32 0.0, %v4972
      %4974 = vmatprep.mubr.bf16.mxu0 %v3820
      %4975 = vmatmul.mubr.bf16.gmra.mrb[0].mxu0 %v3819
      %v4976 = vpop.f32.mrb[0].mxu0
      %v4977 = vadd.f32 0.0, %v4976
      %v4978 = vpop.f32.mrb[0].mxu0
      %v4979 = vadd.f32 0.0, %v4978
      %v4980 = vpop.f32.mrb[0].mxu0
      %v4981 = vadd.f32 0.0, %v4980
      %v4982 = vpop.f32.mrb[0].mxu0
      %v4983 = vadd.f32 0.0, %v4982
      %4984 = vmatprep.mubr.bf16.mxu0 %v3824
      %4985 = vmatmul.mubr.bf16.gmra.mrb[0].mxu0 %v3823
      %v4986 = vpop.f32.mrb[0].mxu0
      %v4987 = vadd.f32 0.0, %v4986
      %v4988 = vpop.f32.mrb[0].mxu0
      %v4989 = vadd.f32 0.0, %v4988
      %v4990 = vpop.f32.mrb[0].mxu0
      %v4991 = vadd.f32 0.0, %v4990
      %v4992 = vpop.f32.mrb[0].mxu0
      %v4993 = vadd.f32 0.0, %v4992
      %4994 = vmatprep.mubr.bf16.mxu0 %v3828
      %4995 = vmatmul.mubr.bf16.gmra.mrb[0].mxu0 %v3827
      %v4996 = vpop.f32.mrb[0].mxu0
      %v4997 = vadd.f32 0.0, %v4996
      %v4998 = vpop.f32.mrb[0].mxu0
      %v4999 = vadd.f32 0.0, %v4998
      %v5000 = vpop.f32.mrb[0].mxu0
      %v5001 = vadd.f32 0.0, %v5000
      %v5002 = vpop.f32.mrb[0].mxu0
      %v5003 = vadd.f32 0.0, %v5002
      %5004 = vmatprep.mubr.bf16.mxu0 %v3832
      %5005 = vmatmul.mubr.bf16.gmra.mrb[0].mxu0 %v3831
      %v5006 = vpop.f32.mrb[0].mxu0
      %v5007 = vadd.f32 0.0, %v5006
      %v5008 = vpop.f32.mrb[0].mxu0
      %v5009 = vadd.f32 0.0, %v5008
      %v5010 = vpop.f32.mrb[0].mxu0
      %v5011 = vadd.f32 0.0, %v5010
      %v5012 = vpop.f32.mrb[0].mxu0
      %v5013 = vadd.f32 0.0, %v5012
      %5014 = vmatprep.mubr.bf16.mxu0 %v3836
      %5015 = vmatmul.mubr.bf16.gmra.mrb[0].mxu0 %v3835
      %v5016 = vpop.f32.mrb[0].mxu0
      %v5017 = vadd.f32 0.0, %v5016
      %v5018 = vpop.f32.mrb[0].mxu0
      %v5019 = vadd.f32 0.0, %v5018
      %v5020 = vpop.f32.mrb[0].mxu0
      %v5021 = vadd.f32 0.0, %v5020
      %v5022 = vpop.f32.mrb[0].mxu0
      %v5023 = vadd.f32 0.0, %v5022
      %5024 = vmatprep.mubr.bf16.mxu0 %v3840
      %5025 = vmatmul.mubr.bf16.gmra.mrb[0].mxu0 %v3839
      %v5026 = vpop.f32.mrb[0].mxu0
      %v5027 = vadd.f32 0.0, %v5026
      %v5028 = vpop.f32.mrb[0].mxu0
      %v5029 = vadd.f32 0.0, %v5028
      %v5030 = vpop.f32.mrb[0].mxu0
      %v5031 = vadd.f32 0.0, %v5030
      %v5032 = vpop.f32.mrb[0].mxu0
      %v5033 = vadd.f32 0.0, %v5032
      %5034 = vmatprep.mubr.bf16.mxu0 %v3844
      %5035 = vmatmul.mubr.bf16.gmra.mrb[0].mxu0 %v3843
      %v5036 = vpop.f32.mrb[0].mxu0
      %v5037 = vadd.f32 0.0, %v5036
      %v5038 = vpop.f32.mrb[0].mxu0
      %v5039 = vadd.f32 0.0, %v5038
      %v5040 = vpop.f32.mrb[0].mxu0
      %v5041 = vadd.f32 0.0, %v5040
      %v5042 = vpop.f32.mrb[0].mxu0
      %v5043 = vadd.f32 0.0, %v5042
      %5044 = vmatprep.mubr.bf16.mxu0 %v3848
      %5045 = vmatmul.mubr.bf16.gmra.mrb[0].mxu0 %v3847
      %v5046 = vpop.f32.mrb[0].mxu0
      %v5047 = vadd.f32 0.0, %v5046
      %v5048 = vpop.f32.mrb[0].mxu0
      %v5049 = vadd.f32 0.0, %v5048
      %v5050 = vpop.f32.mrb[0].mxu0
      %v5051 = vadd.f32 0.0, %v5050
      %v5052 = vpop.f32.mrb[0].mxu0
      %v5053 = vadd.f32 0.0, %v5052
      %5054 = vmatprep.mubr.bf16.mxu0 %v3852
      %5055 = vmatmul.mubr.bf16.gmra.mrb[0].mxu0 %v3851
      %v5056 = vpop.f32.mrb[0].mxu0
      %v5057 = vadd.f32 0.0, %v5056
      %v5058 = vpop.f32.mrb[0].mxu0
      %v5059 = vadd.f32 0.0, %v5058
      %v5060 = vpop.f32.mrb[0].mxu0
      %v5061 = vadd.f32 0.0, %v5060
      %v5062 = vpop.f32.mrb[0].mxu0
      %v5063 = vadd.f32 0.0, %v5062
      %5064 = vmatprep.mubr.bf16.mxu0 %v3856
      %5065 = vmatmul.mubr.bf16.gmra.mrb[0].mxu0 %v3855
      %v5066 = vpop.f32.mrb[0].mxu0
      %v5067 = vadd.f32 0.0, %v5066
      %v5068 = vpop.f32.mrb[0].mxu0
      %v5069 = vadd.f32 0.0, %v5068
      %v5070 = vpop.f32.mrb[0].mxu0
      %v5071 = vadd.f32 0.0, %v5070
      %v5072 = vpop.f32.mrb[0].mxu0
      %v5073 = vadd.f32 0.0, %v5072
      %5074 = vmatprep.mubr.bf16.mxu0 %v3860
      %5075 = vmatmul.mubr.bf16.gmra.mrb[0].mxu0 %v3859
      %v5076 = vpop.f32.mrb[0].mxu0
      %v5077 = vadd.f32 0.0, %v5076
      %v5078 = vpop.f32.mrb[0].mxu0
      %v5079 = vadd.f32 0.0, %v5078
      %v5080 = vpop.f32.mrb[0].mxu0
      %v5081 = vadd.f32 0.0, %v5080
      %v5082 = vpop.f32.mrb[0].mxu0
      %v5083 = vadd.f32 0.0, %v5082
      %5084 = vmatprep.mubr.bf16.mxu0 %v3864
      %5085 = vmatmul.mubr.bf16.gmra.mrb[0].mxu0 %v3863
      %v5086 = vpop.f32.mrb[0].mxu0
      %v5087 = vadd.f32 0.0, %v5086
      %v5088 = vpop.f32.mrb[0].mxu0
      %v5089 = vadd.f32 0.0, %v5088
      %v5090 = vpop.f32.mrb[0].mxu0
      %v5091 = vadd.f32 0.0, %v5090
      %v5092 = vpop.f32.mrb[0].mxu0
      %v5093 = vadd.f32 0.0, %v5092
      %5094 = vdwg.mxu0
      %5095 = vmatprep.subr.bf16.mxu0 %v4157
      %5096 = vmatpush1.bf16.msra.mxu0 %v4156
      %5097 = vmatprep.subr.bf16.mxu0 %v4159
      %5098 = vmatpush1.bf16.msra.mxu0 %v4158
      %5099 = vmatprep.subr.bf16.mxu0 %v4161
      %5100 = vmatpush1.bf16.msra.mxu0 %v4160
      %5101 = vmatprep.subr.bf16.mxu0 %v4163
      %5102 = vmatpush1.bf16.msra.mxu0 %v4162
      %5103 = vmatprep.subr.bf16.mxu0 %v4165
      %5104 = vmatpush1.bf16.msra.mxu0 %v4164
      %5105 = vmatprep.subr.bf16.mxu0 %v4167
      %5106 = vmatpush1.bf16.msra.mxu0 %v4166
      %5107 = vmatprep.subr.bf16.mxu0 %v4169
      %5108 = vmatpush1.bf16.msra.mxu0 %v4168
      %5109 = vmatprep.subr.bf16.mxu0 %v4171
      %5110 = vmatpush1.bf16.msra.mxu0 %v4170
      %5111 = vmatprep.subr.bf16.mxu0 %v4173
      %5112 = vmatpush1.bf16.msra.mxu0 %v4172
      %5113 = vmatprep.subr.bf16.mxu0 %v4175
      %5114 = vmatpush1.bf16.msra.mxu0 %v4174
      %5115 = vmatprep.subr.bf16.mxu0 %v4177
      %5116 = vmatpush1.bf16.msra.mxu0 %v4176
      %5117 = vmatprep.subr.bf16.mxu0 %v4179
      %5118 = vmatpush1.bf16.msra.mxu0 %v4178
      %5119 = vmatprep.subr.bf16.mxu0 %v4181
      %5120 = vmatpush1.bf16.msra.mxu0 %v4180
      %5121 = vmatprep.subr.bf16.mxu0 %v4183
      %5122 = vmatpush1.bf16.msra.mxu0 %v4182
      %5123 = vmatprep.subr.bf16.mxu0 %v4185
      %5124 = vmatpush1.bf16.msra.mxu0 %v4184
      %5125 = vmatprep.subr.bf16.mxu0 %v4187
      %5126 = vmatpush1.bf16.msra.mxu0 %v4186
      %5127 = vmatprep.mubr.bf16.mxu0 %v3546
      %5128 = vmatmul.mubr.bf16.gmra.mrb[0].mxu0 %v3545
      %v5129 = vpop.f32.mrb[0].mxu0
      %v5130 = vadd.f32 %v4287, %v5129
      %v5131 = vpop.f32.mrb[0].mxu0
      %v5132 = vadd.f32 %v4289, %v5131
      %v5133 = vpop.f32.mrb[0].mxu0
      %v5134 = vadd.f32 %v4291, %v5133
      %v5135 = vpop.f32.mrb[0].mxu0
      %v5136 = vadd.f32 %v4293, %v5135
      %5137 = vmatprep.mubr.bf16.mxu0 %v3550
      %5138 = vmatmul.mubr.bf16.gmra.mrb[0].mxu0 %v3549
      %v5139 = vpop.f32.mrb[0].mxu0
      %v5140 = vadd.f32 %v4297, %v5139
      %v5141 = vpop.f32.mrb[0].mxu0
      %v5142 = vadd.f32 %v4299, %v5141
      %v5143 = vpop.f32.mrb[0].mxu0
      %v5144 = vadd.f32 %v4301, %v5143
      %v5145 = vpop.f32.mrb[0].mxu0
      %v5146 = vadd.f32 %v4303, %v5145
      %5147 = vmatprep.mubr.bf16.mxu0 %v3554
      %5148 = vmatmul.mubr.bf16.gmra.mrb[0].mxu0 %v3553
      %v5149 = vpop.f32.mrb[0].mxu0
      %v5150 = vadd.f32 %v4307, %v5149
      %v5151 = vpop.f32.mrb[0].mxu0
      %v5152 = vadd.f32 %v4309, %v5151
      %v5153 = vpop.f32.mrb[0].mxu0
      %v5154 = vadd.f32 %v4311, %v5153
      %v5155 = vpop.f32.mrb[0].mxu0
      %v5156 = vadd.f32 %v4313, %v5155
      %5157 = vmatprep.mubr.bf16.mxu0 %v3558
      %5158 = vmatmul.mubr.bf16.gmra.mrb[0].mxu0 %v3557
      %v5159 = vpop.f32.mrb[0].mxu0
      %v5160 = vadd.f32 %v4317, %v5159
      %v5161 = vpop.f32.mrb[0].mxu0
      %v5162 = vadd.f32 %v4319, %v5161
      %v5163 = vpop.f32.mrb[0].mxu0
      %v5164 = vadd.f32 %v4321, %v5163
      %v5165 = vpop.f32.mrb[0].mxu0
      %v5166 = vadd.f32 %v4323, %v5165
      %5167 = vmatprep.mubr.bf16.mxu0 %v3562
      %5168 = vmatmul.mubr.bf16.gmra.mrb[0].mxu0 %v3561
      %v5169 = vpop.f32.mrb[0].mxu0
      %v5170 = vadd.f32 %v4327, %v5169
      %v5171 = vpop.f32.mrb[0].mxu0
      %v5172 = vadd.f32 %v4329, %v5171
      %v5173 = vpop.f32.mrb[0].mxu0
      %v5174 = vadd.f32 %v4331, %v5173
      %v5175 = vpop.f32.mrb[0].mxu0
      %v5176 = vadd.f32 %v4333, %v5175
      %5177 = vmatprep.mubr.bf16.mxu0 %v3566
      %5178 = vmatmul.mubr.bf16.gmra.mrb[0].mxu0 %v3565
      %v5179 = vpop.f32.mrb[0].mxu0
      %v5180 = vadd.f32 %v4337, %v5179
      %v5181 = vpop.f32.mrb[0].mxu0
      %v5182 = vadd.f32 %v4339, %v5181
      %v5183 = vpop.f32.mrb[0].mxu0
      %v5184 = vadd.f32 %v4341, %v5183
      %v5185 = vpop.f32.mrb[0].mxu0
      %v5186 = vadd.f32 %v4343, %v5185
      %5187 = vmatprep.mubr.bf16.mxu0 %v3570
      %5188 = vmatmul.mubr.bf16.gmra.mrb[0].mxu0 %v3569
      %v5189 = vpop.f32.mrb[0].mxu0
      %v5190 = vadd.f32 %v4347, %v5189
      %v5191 = vpop.f32.mrb[0].mxu0
      %v5192 = vadd.f32 %v4349, %v5191
      %v5193 = vpop.f32.mrb[0].mxu0
      %v5194 = vadd.f32 %v4351, %v5193
      %v5195 = vpop.f32.mrb[0].mxu0
      %v5196 = vadd.f32 %v4353, %v5195
      %5197 = vmatprep.mubr.bf16.mxu0 %v3574
      %5198 = vmatmul.mubr.bf16.gmra.mrb[0].mxu0 %v3573
      %v5199 = vpop.f32.mrb[0].mxu0
      %v5200 = vadd.f32 %v4357, %v5199
      %v5201 = vpop.f32.mrb[0].mxu0
      %v5202 = vadd.f32 %v4359, %v5201
      %v5203 = vpop.f32.mrb[0].mxu0
      %v5204 = vadd.f32 %v4361, %v5203
      %v5205 = vpop.f32.mrb[0].mxu0
      %v5206 = vadd.f32 %v4363, %v5205
      %5207 = vmatprep.mubr.bf16.mxu0 %v3578
      %5208 = vmatmul.mubr.bf16.gmra.mrb[0].mxu0 %v3577
      %v5209 = vpop.f32.mrb[0].mxu0
      %v5210 = vadd.f32 %v4367, %v5209
      %v5211 = vpop.f32.mrb[0].mxu0
      %v5212 = vadd.f32 %v4369, %v5211
      %v5213 = vpop.f32.mrb[0].mxu0
      %v5214 = vadd.f32 %v4371, %v5213
      %v5215 = vpop.f32.mrb[0].mxu0
      %v5216 = vadd.f32 %v4373, %v5215
      %5217 = vmatprep.mubr.bf16.mxu0 %v3582
      %5218 = vmatmul.mubr.bf16.gmra.mrb[0].mxu0 %v3581
      %v5219 = vpop.f32.mrb[0].mxu0
      %v5220 = vadd.f32 %v4377, %v5219
      %v5221 = vpop.f32.mrb[0].mxu0
      %v5222 = vadd.f32 %v4379, %v5221
      %v5223 = vpop.f32.mrb[0].mxu0
      %v5224 = vadd.f32 %v4381, %v5223
      %v5225 = vpop.f32.mrb[0].mxu0
      %v5226 = vadd.f32 %v4383, %v5225
      %5227 = vmatprep.mubr.bf16.mxu0 %v3586
      %5228 = vmatmul.mubr.bf16.gmra.mrb[0].mxu0 %v3585
      %v5229 = vpop.f32.mrb[0].mxu0
      %v5230 = vadd.f32 %v4387, %v5229
      %v5231 = vpop.f32.mrb[0].mxu0
      %v5232 = vadd.f32 %v4389, %v5231
      %v5233 = vpop.f32.mrb[0].mxu0
      %v5234 = vadd.f32 %v4391, %v5233
      %v5235 = vpop.f32.mrb[0].mxu0
      %v5236 = vadd.f32 %v4393, %v5235
      %5237 = vmatprep.mubr.bf16.mxu0 %v3590
      %5238 = vmatmul.mubr.bf16.gmra.mrb[0].mxu0 %v3589
      %v5239 = vpop.f32.mrb[0].mxu0
      %v5240 = vadd.f32 %v4397, %v5239
      %v5241 = vpop.f32.mrb[0].mxu0
      %v5242 = vadd.f32 %v4399, %v5241
      %v5243 = vpop.f32.mrb[0].mxu0
      %v5244 = vadd.f32 %v4401, %v5243
      %v5245 = vpop.f32.mrb[0].mxu0
      %v5246 = vadd.f32 %v4403, %v5245
      %5247 = vmatprep.mubr.bf16.mxu0 %v3594
      %5248 = vmatmul.mubr.bf16.gmra.mrb[0].mxu0 %v3593
      %v5249 = vpop.f32.mrb[0].mxu0
      %v5250 = vadd.f32 %v4407, %v5249
      %v5251 = vpop.f32.mrb[0].mxu0
      %v5252 = vadd.f32 %v4409, %v5251
      %v5253 = vpop.f32.mrb[0].mxu0
      %v5254 = vadd.f32 %v4411, %v5253
      %v5255 = vpop.f32.mrb[0].mxu0
      %v5256 = vadd.f32 %v4413, %v5255
      %5257 = vmatprep.mubr.bf16.mxu0 %v3598
      %5258 = vmatmul.mubr.bf16.gmra.mrb[0].mxu0 %v3597
      %v5259 = vpop.f32.mrb[0].mxu0
      %v5260 = vadd.f32 %v4417, %v5259
      %v5261 = vpop.f32.mrb[0].mxu0
      %v5262 = vadd.f32 %v4419, %v5261
      %v5263 = vpop.f32.mrb[0].mxu0
      %v5264 = vadd.f32 %v4421, %v5263
      %v5265 = vpop.f32.mrb[0].mxu0
      %v5266 = vadd.f32 %v4423, %v5265
      %5267 = vmatprep.mubr.bf16.mxu0 %v3602
      %5268 = vmatmul.mubr.bf16.gmra.mrb[0].mxu0 %v3601
      %v5269 = vpop.f32.mrb[0].mxu0
      %v5270 = vadd.f32 %v4427, %v5269
      %v5271 = vpop.f32.mrb[0].mxu0
      %v5272 = vadd.f32 %v4429, %v5271
      %v5273 = vpop.f32.mrb[0].mxu0
      %v5274 = vadd.f32 %v4431, %v5273
      %v5275 = vpop.f32.mrb[0].mxu0
      %v5276 = vadd.f32 %v4433, %v5275
      %5277 = vmatprep.mubr.bf16.mxu0 %v3606
      %5278 = vmatmul.mubr.bf16.gmra.mrb[0].mxu0 %v3605
      %v5279 = vpop.f32.mrb[0].mxu0
      %v5280 = vadd.f32 %v4437, %v5279
      %v5281 = vpop.f32.mrb[0].mxu0
      %v5282 = vadd.f32 %v4439, %v5281
      %v5283 = vpop.f32.mrb[0].mxu0
      %v5284 = vadd.f32 %v4441, %v5283
      %v5285 = vpop.f32.mrb[0].mxu0
      %v5286 = vadd.f32 %v4443, %v5285
      %5287 = vmatprep.mubr.bf16.mxu0 %v3610
      %5288 = vmatmul.mubr.bf16.gmra.mrb[0].mxu0 %v3609
      %v5289 = vpop.f32.mrb[0].mxu0
      %v5290 = vadd.f32 %v4447, %v5289
      %v5291 = vpop.f32.mrb[0].mxu0
      %v5292 = vadd.f32 %v4449, %v5291
      %v5293 = vpop.f32.mrb[0].mxu0
      %v5294 = vadd.f32 %v4451, %v5293
      %v5295 = vpop.f32.mrb[0].mxu0
      %v5296 = vadd.f32 %v4453, %v5295
      %5297 = vmatprep.mubr.bf16.mxu0 %v3614
      %5298 = vmatmul.mubr.bf16.gmra.mrb[0].mxu0 %v3613
      %v5299 = vpop.f32.mrb[0].mxu0
      %v5300 = vadd.f32 %v4457, %v5299
      %v5301 = vpop.f32.mrb[0].mxu0
      %v5302 = vadd.f32 %v4459, %v5301
      %v5303 = vpop.f32.mrb[0].mxu0
      %v5304 = vadd.f32 %v4461, %v5303
      %v5305 = vpop.f32.mrb[0].mxu0
      %v5306 = vadd.f32 %v4463, %v5305
      %5307 = vmatprep.mubr.bf16.mxu0 %v3618
      %5308 = vmatmul.mubr.bf16.gmra.mrb[0].mxu0 %v3617
      %v5309 = vpop.f32.mrb[0].mxu0
      %v5310 = vadd.f32 %v4467, %v5309
      %v5311 = vpop.f32.mrb[0].mxu0
      %v5312 = vadd.f32 %v4469, %v5311
      %v5313 = vpop.f32.mrb[0].mxu0
      %v5314 = vadd.f32 %v4471, %v5313
      %v5315 = vpop.f32.mrb[0].mxu0
      %v5316 = vadd.f32 %v4473, %v5315
      %5317 = vmatprep.mubr.bf16.mxu0 %v3622
      %5318 = vmatmul.mubr.bf16.gmra.mrb[0].mxu0 %v3621
      %v5319 = vpop.f32.mrb[0].mxu0
      %v5320 = vadd.f32 %v4477, %v5319
      %v5321 = vpop.f32.mrb[0].mxu0
      %v5322 = vadd.f32 %v4479, %v5321
      %v5323 = vpop.f32.mrb[0].mxu0
      %v5324 = vadd.f32 %v4481, %v5323
      %v5325 = vpop.f32.mrb[0].mxu0
      %v5326 = vadd.f32 %v4483, %v5325
      %5327 = vmatprep.mubr.bf16.mxu0 %v3626
      %5328 = vmatmul.mubr.bf16.gmra.mrb[0].mxu0 %v3625
      %v5329 = vpop.f32.mrb[0].mxu0
      %v5330 = vadd.f32 %v4487, %v5329
      %v5331 = vpop.f32.mrb[0].mxu0
      %v5332 = vadd.f32 %v4489, %v5331
      %v5333 = vpop.f32.mrb[0].mxu0
      %v5334 = vadd.f32 %v4491, %v5333
      %v5335 = vpop.f32.mrb[0].mxu0
      %v5336 = vadd.f32 %v4493, %v5335
      %5337 = vmatprep.mubr.bf16.mxu0 %v3630
      %5338 = vmatmul.mubr.bf16.gmra.mrb[0].mxu0 %v3629
      %v5339 = vpop.f32.mrb[0].mxu0
      %v5340 = vadd.f32 %v4497, %v5339
      %v5341 = vpop.f32.mrb[0].mxu0
      %v5342 = vadd.f32 %v4499, %v5341
      %v5343 = vpop.f32.mrb[0].mxu0
      %v5344 = vadd.f32 %v4501, %v5343
      %v5345 = vpop.f32.mrb[0].mxu0
      %v5346 = vadd.f32 %v4503, %v5345
      %5347 = vmatprep.mubr.bf16.mxu0 %v3634
      %5348 = vmatmul.mubr.bf16.gmra.mrb[0].mxu0 %v3633
      %v5349 = vpop.f32.mrb[0].mxu0
      %v5350 = vadd.f32 %v4507, %v5349
      %v5351 = vpop.f32.mrb[0].mxu0
      %v5352 = vadd.f32 %v4509, %v5351
      %v5353 = vpop.f32.mrb[0].mxu0
      %v5354 = vadd.f32 %v4511, %v5353
      %v5355 = vpop.f32.mrb[0].mxu0
      %v5356 = vadd.f32 %v4513, %v5355
      %5357 = vmatprep.mubr.bf16.mxu0 %v3638
      %5358 = vmatmul.mubr.bf16.gmra.mrb[0].mxu0 %v3637
      %v5359 = vpop.f32.mrb[0].mxu0
      %v5360 = vadd.f32 %v4517, %v5359
      %v5361 = vpop.f32.mrb[0].mxu0
      %v5362 = vadd.f32 %v4519, %v5361
      %v5363 = vpop.f32.mrb[0].mxu0
      %v5364 = vadd.f32 %v4521, %v5363
      %v5365 = vpop.f32.mrb[0].mxu0
      %v5366 = vadd.f32 %v4523, %v5365
      %5367 = vmatprep.mubr.bf16.mxu0 %v3642
      %5368 = vmatmul.mubr.bf16.gmra.mrb[0].mxu0 %v3641
      %v5369 = vpop.f32.mrb[0].mxu0
      %v5370 = vadd.f32 %v4527, %v5369
      %v5371 = vpop.f32.mrb[0].mxu0
      %v5372 = vadd.f32 %v4529, %v5371
      %v5373 = vpop.f32.mrb[0].mxu0
      %v5374 = vadd.f32 %v4531, %v5373
      %v5375 = vpop.f32.mrb[0].mxu0
      %v5376 = vadd.f32 %v4533, %v5375
      %5377 = vmatprep.mubr.bf16.mxu0 %v3646
      %5378 = vmatmul.mubr.bf16.gmra.mrb[0].mxu0 %v3645
      %v5379 = vpop.f32.mrb[0].mxu0
      %v5380 = vadd.f32 %v4537, %v5379
      %v5381 = vpop.f32.mrb[0].mxu0
      %v5382 = vadd.f32 %v4539, %v5381
      %v5383 = vpop.f32.mrb[0].mxu0
      %v5384 = vadd.f32 %v4541, %v5383
      %v5385 = vpop.f32.mrb[0].mxu0
      %v5386 = vadd.f32 %v4543, %v5385
      %5387 = vmatprep.mubr.bf16.mxu0 %v3650
      %5388 = vmatmul.mubr.bf16.gmra.mrb[0].mxu0 %v3649
      %v5389 = vpop.f32.mrb[0].mxu0
      %v5390 = vadd.f32 %v4547, %v5389
      %v5391 = vpop.f32.mrb[0].mxu0
      %v5392 = vadd.f32 %v4549, %v5391
      %v5393 = vpop.f32.mrb[0].mxu0
      %v5394 = vadd.f32 %v4551, %v5393
      %v5395 = vpop.f32.mrb[0].mxu0
      %v5396 = vadd.f32 %v4553, %v5395
      %5397 = vmatprep.mubr.bf16.mxu0 %v3654
      %5398 = vmatmul.mubr.bf16.gmra.mrb[0].mxu0 %v3653
      %v5399 = vpop.f32.mrb[0].mxu0
      %v5400 = vadd.f32 %v4557, %v5399
      %v5401 = vpop.f32.mrb[0].mxu0
      %v5402 = vadd.f32 %v4559, %v5401
      %v5403 = vpop.f32.mrb[0].mxu0
      %v5404 = vadd.f32 %v4561, %v5403
      %v5405 = vpop.f32.mrb[0].mxu0
      %v5406 = vadd.f32 %v4563, %v5405
      %5407 = vmatprep.mubr.bf16.mxu0 %v3658
      %5408 = vmatmul.mubr.bf16.gmra.mrb[0].mxu0 %v3657
      %v5409 = vpop.f32.mrb[0].mxu0
      %v5410 = vadd.f32 %v4567, %v5409
      %v5411 = vpop.f32.mrb[0].mxu0
      %v5412 = vadd.f32 %v4569, %v5411
      %v5413 = vpop.f32.mrb[0].mxu0
      %v5414 = vadd.f32 %v4571, %v5413
      %v5415 = vpop.f32.mrb[0].mxu0
      %v5416 = vadd.f32 %v4573, %v5415
      %5417 = vmatprep.mubr.bf16.mxu0 %v3662
      %5418 = vmatmul.mubr.bf16.gmra.mrb[0].mxu0 %v3661
      %v5419 = vpop.f32.mrb[0].mxu0
      %v5420 = vadd.f32 %v4577, %v5419
      %v5421 = vpop.f32.mrb[0].mxu0
      %v5422 = vadd.f32 %v4579, %v5421
      %v5423 = vpop.f32.mrb[0].mxu0
      %v5424 = vadd.f32 %v4581, %v5423
      %v5425 = vpop.f32.mrb[0].mxu0
      %v5426 = vadd.f32 %v4583, %v5425
      %5427 = vmatprep.mubr.bf16.mxu0 %v3666
      %5428 = vmatmul.mubr.bf16.gmra.mrb[0].mxu0 %v3665
      %v5429 = vpop.f32.mrb[0].mxu0
      %v5430 = vadd.f32 %v4587, %v5429
      %v5431 = vpop.f32.mrb[0].mxu0
      %v5432 = vadd.f32 %v4589, %v5431
      %v5433 = vpop.f32.mrb[0].mxu0
      %v5434 = vadd.f32 %v4591, %v5433
      %v5435 = vpop.f32.mrb[0].mxu0
      %v5436 = vadd.f32 %v4593, %v5435
      %5437 = vmatprep.mubr.bf16.mxu0 %v3670
      %5438 = vmatmul.mubr.bf16.gmra.mrb[0].mxu0 %v3669
      %v5439 = vpop.f32.mrb[0].mxu0
      %v5440 = vadd.f32 %v4597, %v5439
      %v5441 = vpop.f32.mrb[0].mxu0
      %v5442 = vadd.f32 %v4599, %v5441
      %v5443 = vpop.f32.mrb[0].mxu0
      %v5444 = vadd.f32 %v4601, %v5443
      %v5445 = vpop.f32.mrb[0].mxu0
      %v5446 = vadd.f32 %v4603, %v5445
      %5447 = vmatprep.mubr.bf16.mxu0 %v3674
      %5448 = vmatmul.mubr.bf16.gmra.mrb[0].mxu0 %v3673
      %v5449 = vpop.f32.mrb[0].mxu0
      %v5450 = vadd.f32 %v4607, %v5449
      %v5451 = vpop.f32.mrb[0].mxu0
      %v5452 = vadd.f32 %v4609, %v5451
      %v5453 = vpop.f32.mrb[0].mxu0
      %v5454 = vadd.f32 %v4611, %v5453
      %v5455 = vpop.f32.mrb[0].mxu0
      %v5456 = vadd.f32 %v4613, %v5455
      %5457 = vmatprep.mubr.bf16.mxu0 %v3678
      %5458 = vmatmul.mubr.bf16.gmra.mrb[0].mxu0 %v3677
      %v5459 = vpop.f32.mrb[0].mxu0
      %v5460 = vadd.f32 %v4617, %v5459
      %v5461 = vpop.f32.mrb[0].mxu0
      %v5462 = vadd.f32 %v4619, %v5461
      %v5463 = vpop.f32.mrb[0].mxu0
      %v5464 = vadd.f32 %v4621, %v5463
      %v5465 = vpop.f32.mrb[0].mxu0
      %v5466 = vadd.f32 %v4623, %v5465
      %5467 = vmatprep.mubr.bf16.mxu0 %v3682
      %5468 = vmatmul.mubr.bf16.gmra.mrb[0].mxu0 %v3681
      %v5469 = vpop.f32.mrb[0].mxu0
      %v5470 = vadd.f32 %v4627, %v5469
      %v5471 = vpop.f32.mrb[0].mxu0
      %v5472 = vadd.f32 %v4629, %v5471
      %v5473 = vpop.f32.mrb[0].mxu0
      %v5474 = vadd.f32 %v4631, %v5473
      %v5475 = vpop.f32.mrb[0].mxu0
      %v5476 = vadd.f32 %v4633, %v5475
      %5477 = vmatprep.mubr.bf16.mxu0 %v3686
      %5478 = vmatmul.mubr.bf16.gmra.mrb[0].mxu0 %v3685
      %v5479 = vpop.f32.mrb[0].mxu0
      %v5480 = vadd.f32 %v4637, %v5479
      %v5481 = vpop.f32.mrb[0].mxu0
      %v5482 = vadd.f32 %v4639, %v5481
      %v5483 = vpop.f32.mrb[0].mxu0
      %v5484 = vadd.f32 %v4641, %v5483
      %v5485 = vpop.f32.mrb[0].mxu0
      %v5486 = vadd.f32 %v4643, %v5485
      %5487 = vmatprep.mubr.bf16.mxu0 %v3690
      %5488 = vmatmul.mubr.bf16.gmra.mrb[0].mxu0 %v3689
      %v5489 = vpop.f32.mrb[0].mxu0
      %v5490 = vadd.f32 %v4647, %v5489
      %v5491 = vpop.f32.mrb[0].mxu0
      %v5492 = vadd.f32 %v4649, %v5491
      %v5493 = vpop.f32.mrb[0].mxu0
      %v5494 = vadd.f32 %v4651, %v5493
      %v5495 = vpop.f32.mrb[0].mxu0
      %v5496 = vadd.f32 %v4653, %v5495
      %5497 = vmatprep.mubr.bf16.mxu0 %v3694
      %5498 = vmatmul.mubr.bf16.gmra.mrb[0].mxu0 %v3693
      %v5499 = vpop.f32.mrb[0].mxu0
      %v5500 = vadd.f32 %v4657, %v5499
      %v5501 = vpop.f32.mrb[0].mxu0
      %v5502 = vadd.f32 %v4659, %v5501
      %v5503 = vpop.f32.mrb[0].mxu0
      %v5504 = vadd.f32 %v4661, %v5503
      %v5505 = vpop.f32.mrb[0].mxu0
      %v5506 = vadd.f32 %v4663, %v5505
      %5507 = vmatprep.mubr.bf16.mxu0 %v3698
      %5508 = vmatmul.mubr.bf16.gmra.mrb[0].mxu0 %v3697
      %v5509 = vpop.f32.mrb[0].mxu0
      %v5510 = vadd.f32 %v4667, %v5509
      %v5511 = vpop.f32.mrb[0].mxu0
      %v5512 = vadd.f32 %v4669, %v5511
      %v5513 = vpop.f32.mrb[0].mxu0
      %v5514 = vadd.f32 %v4671, %v5513
      %v5515 = vpop.f32.mrb[0].mxu0
      %v5516 = vadd.f32 %v4673, %v5515
      %5517 = vmatprep.mubr.bf16.mxu0 %v3702
      %5518 = vmatmul.mubr.bf16.gmra.mrb[0].mxu0 %v3701
      %v5519 = vpop.f32.mrb[0].mxu0
      %v5520 = vadd.f32 %v4677, %v5519
      %v5521 = vpop.f32.mrb[0].mxu0
      %v5522 = vadd.f32 %v4679, %v5521
      %v5523 = vpop.f32.mrb[0].mxu0
      %v5524 = vadd.f32 %v4681, %v5523
      %v5525 = vpop.f32.mrb[0].mxu0
      %v5526 = vadd.f32 %v4683, %v5525
      %5527 = vmatprep.mubr.bf16.mxu0 %v3706
      %5528 = vmatmul.mubr.bf16.gmra.mrb[0].mxu0 %v3705
      %v5529 = vpop.f32.mrb[0].mxu0
      %v5530 = vadd.f32 %v4687, %v5529
      %v5531 = vpop.f32.mrb[0].mxu0
      %v5532 = vadd.f32 %v4689, %v5531
      %v5533 = vpop.f32.mrb[0].mxu0
      %v5534 = vadd.f32 %v4691, %v5533
      %v5535 = vpop.f32.mrb[0].mxu0
      %v5536 = vadd.f32 %v4693, %v5535
      %5537 = vmatprep.mubr.bf16.mxu0 %v3710
      %5538 = vmatmul.mubr.bf16.gmra.mrb[0].mxu0 %v3709
      %v5539 = vpop.f32.mrb[0].mxu0
      %v5540 = vadd.f32 %v4697, %v5539
      %v5541 = vpop.f32.mrb[0].mxu0
      %v5542 = vadd.f32 %v4699, %v5541
      %v5543 = vpop.f32.mrb[0].mxu0
      %v5544 = vadd.f32 %v4701, %v5543
      %v5545 = vpop.f32.mrb[0].mxu0
      %v5546 = vadd.f32 %v4703, %v5545
      %5547 = vmatprep.mubr.bf16.mxu0 %v3714
      %5548 = vmatmul.mubr.bf16.gmra.mrb[0].mxu0 %v3713
      %v5549 = vpop.f32.mrb[0].mxu0
      %v5550 = vadd.f32 %v4707, %v5549
      %v5551 = vpop.f32.mrb[0].mxu0
      %v5552 = vadd.f32 %v4709, %v5551
      %v5553 = vpop.f32.mrb[0].mxu0
      %v5554 = vadd.f32 %v4711, %v5553
      %v5555 = vpop.f32.mrb[0].mxu0
      %v5556 = vadd.f32 %v4713, %v5555
      %5557 = vmatprep.mubr.bf16.mxu0 %v3718
      %5558 = vmatmul.mubr.bf16.gmra.mrb[0].mxu0 %v3717
      %v5559 = vpop.f32.mrb[0].mxu0
      %v5560 = vadd.f32 %v4717, %v5559
      %v5561 = vpop.f32.mrb[0].mxu0
      %v5562 = vadd.f32 %v4719, %v5561
      %v5563 = vpop.f32.mrb[0].mxu0
      %v5564 = vadd.f32 %v4721, %v5563
      %v5565 = vpop.f32.mrb[0].mxu0
      %v5566 = vadd.f32 %v4723, %v5565
      %5567 = vmatprep.mubr.bf16.mxu0 %v3722
      %5568 = vmatmul.mubr.bf16.gmra.mrb[0].mxu0 %v3721
      %v5569 = vpop.f32.mrb[0].mxu0
      %v5570 = vadd.f32 %v4727, %v5569
      %v5571 = vpop.f32.mrb[0].mxu0
      %v5572 = vadd.f32 %v4729, %v5571
      %v5573 = vpop.f32.mrb[0].mxu0
      %v5574 = vadd.f32 %v4731, %v5573
      %v5575 = vpop.f32.mrb[0].mxu0
      %v5576 = vadd.f32 %v4733, %v5575
      %5577 = vmatprep.mubr.bf16.mxu0 %v3726
      %5578 = vmatmul.mubr.bf16.gmra.mrb[0].mxu0 %v3725
      %v5579 = vpop.f32.mrb[0].mxu0
      %v5580 = vadd.f32 %v4737, %v5579
      %v5581 = vpop.f32.mrb[0].mxu0
      %v5582 = vadd.f32 %v4739, %v5581
      %v5583 = vpop.f32.mrb[0].mxu0
      %v5584 = vadd.f32 %v4741, %v5583
      %v5585 = vpop.f32.mrb[0].mxu0
      %v5586 = vadd.f32 %v4743, %v5585
      %5587 = vmatprep.mubr.bf16.mxu0 %v3730
      %5588 = vmatmul.mubr.bf16.gmra.mrb[0].mxu0 %v3729
      %v5589 = vpop.f32.mrb[0].mxu0
      %v5590 = vadd.f32 %v4747, %v5589
      %v5591 = vpop.f32.mrb[0].mxu0
      %v5592 = vadd.f32 %v4749, %v5591
      %v5593 = vpop.f32.mrb[0].mxu0
      %v5594 = vadd.f32 %v4751, %v5593
      %v5595 = vpop.f32.mrb[0].mxu0
      %v5596 = vadd.f32 %v4753, %v5595
      %5597 = vmatprep.mubr.bf16.mxu0 %v3734
      %5598 = vmatmul.mubr.bf16.gmra.mrb[0].mxu0 %v3733
      %v5599 = vpop.f32.mrb[0].mxu0
      %v5600 = vadd.f32 %v4757, %v5599
      %v5601 = vpop.f32.mrb[0].mxu0
      %v5602 = vadd.f32 %v4759, %v5601
      %v5603 = vpop.f32.mrb[0].mxu0
      %v5604 = vadd.f32 %v4761, %v5603
      %v5605 = vpop.f32.mrb[0].mxu0
      %v5606 = vadd.f32 %v4763, %v5605
      %5607 = vmatprep.mubr.bf16.mxu0 %v3738
      %5608 = vmatmul.mubr.bf16.gmra.mrb[0].mxu0 %v3737
      %v5609 = vpop.f32.mrb[0].mxu0
      %v5610 = vadd.f32 %v4767, %v5609
      %v5611 = vpop.f32.mrb[0].mxu0
      %v5612 = vadd.f32 %v4769, %v5611
      %v5613 = vpop.f32.mrb[0].mxu0
      %v5614 = vadd.f32 %v4771, %v5613
      %v5615 = vpop.f32.mrb[0].mxu0
      %v5616 = vadd.f32 %v4773, %v5615
      %5617 = vmatprep.mubr.bf16.mxu0 %v3742
      %5618 = vmatmul.mubr.bf16.gmra.mrb[0].mxu0 %v3741
      %v5619 = vpop.f32.mrb[0].mxu0
      %v5620 = vadd.f32 %v4777, %v5619
      %v5621 = vpop.f32.mrb[0].mxu0
      %v5622 = vadd.f32 %v4779, %v5621
      %v5623 = vpop.f32.mrb[0].mxu0
      %v5624 = vadd.f32 %v4781, %v5623
      %v5625 = vpop.f32.mrb[0].mxu0
      %v5626 = vadd.f32 %v4783, %v5625
      %5627 = vmatprep.mubr.bf16.mxu0 %v3746
      %5628 = vmatmul.mubr.bf16.gmra.mrb[0].mxu0 %v3745
      %v5629 = vpop.f32.mrb[0].mxu0
      %v5630 = vadd.f32 %v4787, %v5629
      %v5631 = vpop.f32.mrb[0].mxu0
      %v5632 = vadd.f32 %v4789, %v5631
      %v5633 = vpop.f32.mrb[0].mxu0
      %v5634 = vadd.f32 %v4791, %v5633
      %v5635 = vpop.f32.mrb[0].mxu0
      %v5636 = vadd.f32 %v4793, %v5635
      %5637 = vmatprep.mubr.bf16.mxu0 %v3750
      %5638 = vmatmul.mubr.bf16.gmra.mrb[0].mxu0 %v3749
      %v5639 = vpop.f32.mrb[0].mxu0
      %v5640 = vadd.f32 %v4797, %v5639
      %v5641 = vpop.f32.mrb[0].mxu0
      %v5642 = vadd.f32 %v4799, %v5641
      %v5643 = vpop.f32.mrb[0].mxu0
      %v5644 = vadd.f32 %v4801, %v5643
      %v5645 = vpop.f32.mrb[0].mxu0
      %v5646 = vadd.f32 %v4803, %v5645
      %5647 = vmatprep.mubr.bf16.mxu0 %v3754
      %5648 = vmatmul.mubr.bf16.gmra.mrb[0].mxu0 %v3753
      %v5649 = vpop.f32.mrb[0].mxu0
      %v5650 = vadd.f32 %v4807, %v5649
      %v5651 = vpop.f32.mrb[0].mxu0
      %v5652 = vadd.f32 %v4809, %v5651
      %v5653 = vpop.f32.mrb[0].mxu0
      %v5654 = vadd.f32 %v4811, %v5653
      %v5655 = vpop.f32.mrb[0].mxu0
      %v5656 = vadd.f32 %v4813, %v5655
      %5657 = vmatprep.mubr.bf16.mxu0 %v3758
      %5658 = vmatmul.mubr.bf16.gmra.mrb[0].mxu0 %v3757
      %v5659 = vpop.f32.mrb[0].mxu0
      %v5660 = vadd.f32 %v4817, %v5659
      %v5661 = vpop.f32.mrb[0].mxu0
      %v5662 = vadd.f32 %v4819, %v5661
      %v5663 = vpop.f32.mrb[0].mxu0
      %v5664 = vadd.f32 %v4821, %v5663
      %v5665 = vpop.f32.mrb[0].mxu0
      %v5666 = vadd.f32 %v4823, %v5665
      %5667 = vmatprep.mubr.bf16.mxu0 %v3762
      %5668 = vmatmul.mubr.bf16.gmra.mrb[0].mxu0 %v3761
      %v5669 = vpop.f32.mrb[0].mxu0
      %v5670 = vadd.f32 %v4827, %v5669
      %v5671 = vpop.f32.mrb[0].mxu0
      %v5672 = vadd.f32 %v4829, %v5671
      %v5673 = vpop.f32.mrb[0].mxu0
      %v5674 = vadd.f32 %v4831, %v5673
      %v5675 = vpop.f32.mrb[0].mxu0
      %v5676 = vadd.f32 %v4833, %v5675
      %5677 = vmatprep.mubr.bf16.mxu0 %v3766
      %5678 = vmatmul.mubr.bf16.gmra.mrb[0].mxu0 %v3765
      %v5679 = vpop.f32.mrb[0].mxu0
      %v5680 = vadd.f32 %v4837, %v5679
      %v5681 = vpop.f32.mrb[0].mxu0
      %v5682 = vadd.f32 %v4839, %v5681
      %v5683 = vpop.f32.mrb[0].mxu0
      %v5684 = vadd.f32 %v4841, %v5683
      %v5685 = vpop.f32.mrb[0].mxu0
      %v5686 = vadd.f32 %v4843, %v5685
      %5687 = vmatprep.mubr.bf16.mxu0 %v3770
      %5688 = vmatmul.mubr.bf16.gmra.mrb[0].mxu0 %v3769
      %v5689 = vpop.f32.mrb[0].mxu0
      %v5690 = vadd.f32 %v4847, %v5689
      %v5691 = vpop.f32.mrb[0].mxu0
      %v5692 = vadd.f32 %v4849, %v5691
      %v5693 = vpop.f32.mrb[0].mxu0
      %v5694 = vadd.f32 %v4851, %v5693
      %v5695 = vpop.f32.mrb[0].mxu0
      %v5696 = vadd.f32 %v4853, %v5695
      %5697 = vmatprep.mubr.bf16.mxu0 %v3774
      %5698 = vmatmul.mubr.bf16.gmra.mrb[0].mxu0 %v3773
      %v5699 = vpop.f32.mrb[0].mxu0
      %v5700 = vadd.f32 %v4857, %v5699
      %v5701 = vpop.f32.mrb[0].mxu0
      %v5702 = vadd.f32 %v4859, %v5701
      %v5703 = vpop.f32.mrb[0].mxu0
      %v5704 = vadd.f32 %v4861, %v5703
      %v5705 = vpop.f32.mrb[0].mxu0
      %v5706 = vadd.f32 %v4863, %v5705
      %5707 = vmatprep.mubr.bf16.mxu0 %v3778
      %5708 = vmatmul.mubr.bf16.gmra.mrb[0].mxu0 %v3777
      %v5709 = vpop.f32.mrb[0].mxu0
      %v5710 = vadd.f32 %v4867, %v5709
      %v5711 = vpop.f32.mrb[0].mxu0
      %v5712 = vadd.f32 %v4869, %v5711
      %v5713 = vpop.f32.mrb[0].mxu0
      %v5714 = vadd.f32 %v4871, %v5713
      %v5715 = vpop.f32.mrb[0].mxu0
      %v5716 = vadd.f32 %v4873, %v5715
      %5717 = vmatprep.mubr.bf16.mxu0 %v3782
      %5718 = vmatmul.mubr.bf16.gmra.mrb[0].mxu0 %v3781
      %v5719 = vpop.f32.mrb[0].mxu0
      %v5720 = vadd.f32 %v4877, %v5719
      %v5721 = vpop.f32.mrb[0].mxu0
      %v5722 = vadd.f32 %v4879, %v5721
      %v5723 = vpop.f32.mrb[0].mxu0
      %v5724 = vadd.f32 %v4881, %v5723
      %v5725 = vpop.f32.mrb[0].mxu0
      %v5726 = vadd.f32 %v4883, %v5725
      %5727 = vmatprep.mubr.bf16.mxu0 %v3786
      %5728 = vmatmul.mubr.bf16.gmra.mrb[0].mxu0 %v3785
      %v5729 = vpop.f32.mrb[0].mxu0
      %v5730 = vadd.f32 %v4887, %v5729
      %v5731 = vpop.f32.mrb[0].mxu0
      %v5732 = vadd.f32 %v4889, %v5731
      %v5733 = vpop.f32.mrb[0].mxu0
      %v5734 = vadd.f32 %v4891, %v5733
      %v5735 = vpop.f32.mrb[0].mxu0
      %v5736 = vadd.f32 %v4893, %v5735
      %5737 = vmatprep.mubr.bf16.mxu0 %v3790
      %5738 = vmatmul.mubr.bf16.gmra.mrb[0].mxu0 %v3789
      %v5739 = vpop.f32.mrb[0].mxu0
      %v5740 = vadd.f32 %v4897, %v5739
      %v5741 = vpop.f32.mrb[0].mxu0
      %v5742 = vadd.f32 %v4899, %v5741
      %v5743 = vpop.f32.mrb[0].mxu0
      %v5744 = vadd.f32 %v4901, %v5743
      %v5745 = vpop.f32.mrb[0].mxu0
      %v5746 = vadd.f32 %v4903, %v5745
      %5747 = vmatprep.mubr.bf16.mxu0 %v3794
      %5748 = vmatmul.mubr.bf16.gmra.mrb[0].mxu0 %v3793
      %v5749 = vpop.f32.mrb[0].mxu0
      %v5750 = vadd.f32 %v4907, %v5749
      %v5751 = vpop.f32.mrb[0].mxu0
      %v5752 = vadd.f32 %v4909, %v5751
      %v5753 = vpop.f32.mrb[0].mxu0
      %v5754 = vadd.f32 %v4911, %v5753
      %v5755 = vpop.f32.mrb[0].mxu0
      %v5756 = vadd.f32 %v4913, %v5755
      %5757 = vmatprep.mubr.bf16.mxu0 %v3798
      %5758 = vmatmul.mubr.bf16.gmra.mrb[0].mxu0 %v3797
      %v5759 = vpop.f32.mrb[0].mxu0
      %v5760 = vadd.f32 %v4917, %v5759
      %v5761 = vpop.f32.mrb[0].mxu0
      %v5762 = vadd.f32 %v4919, %v5761
      %v5763 = vpop.f32.mrb[0].mxu0
      %v5764 = vadd.f32 %v4921, %v5763
      %v5765 = vpop.f32.mrb[0].mxu0
      %v5766 = vadd.f32 %v4923, %v5765
      %5767 = vmatprep.mubr.bf16.mxu0 %v3802
      %5768 = vmatmul.mubr.bf16.gmra.mrb[0].mxu0 %v3801
      %v5769 = vpop.f32.mrb[0].mxu0
      %v5770 = vadd.f32 %v4927, %v5769
      %v5771 = vpop.f32.mrb[0].mxu0
      %v5772 = vadd.f32 %v4929, %v5771
      %v5773 = vpop.f32.mrb[0].mxu0
      %v5774 = vadd.f32 %v4931, %v5773
      %v5775 = vpop.f32.mrb[0].mxu0
      %v5776 = vadd.f32 %v4933, %v5775
      %5777 = vmatprep.mubr.bf16.mxu0 %v3806
      %5778 = vmatmul.mubr.bf16.gmra.mrb[0].mxu0 %v3805
      %v5779 = vpop.f32.mrb[0].mxu0
      %v5780 = vadd.f32 %v4937, %v5779
      %v5781 = vpop.f32.mrb[0].mxu0
      %v5782 = vadd.f32 %v4939, %v5781
      %v5783 = vpop.f32.mrb[0].mxu0
      %v5784 = vadd.f32 %v4941, %v5783
      %v5785 = vpop.f32.mrb[0].mxu0
      %v5786 = vadd.f32 %v4943, %v5785
      %5787 = vmatprep.mubr.bf16.mxu0 %v3810
      %5788 = vmatmul.mubr.bf16.gmra.mrb[0].mxu0 %v3809
      %v5789 = vpop.f32.mrb[0].mxu0
      %v5790 = vadd.f32 %v4947, %v5789
      %v5791 = vpop.f32.mrb[0].mxu0
      %v5792 = vadd.f32 %v4949, %v5791
      %v5793 = vpop.f32.mrb[0].mxu0
      %v5794 = vadd.f32 %v4951, %v5793
      %v5795 = vpop.f32.mrb[0].mxu0
      %v5796 = vadd.f32 %v4953, %v5795
      %5797 = vmatprep.mubr.bf16.mxu0 %v3814
      %5798 = vmatmul.mubr.bf16.gmra.mrb[0].mxu0 %v3813
      %v5799 = vpop.f32.mrb[0].mxu0
      %v5800 = vadd.f32 %v4957, %v5799
      %v5801 = vpop.f32.mrb[0].mxu0
      %v5802 = vadd.f32 %v4959, %v5801
      %v5803 = vpop.f32.mrb[0].mxu0
      %v5804 = vadd.f32 %v4961, %v5803
      %v5805 = vpop.f32.mrb[0].mxu0
      %v5806 = vadd.f32 %v4963, %v5805
      %5807 = vmatprep.mubr.bf16.mxu0 %v3818
      %5808 = vmatmul.mubr.bf16.gmra.mrb[0].mxu0 %v3817
      %v5809 = vpop.f32.mrb[0].mxu0
      %v5810 = vadd.f32 %v4967, %v5809
      %v5811 = vpop.f32.mrb[0].mxu0
      %v5812 = vadd.f32 %v4969, %v5811
      %v5813 = vpop.f32.mrb[0].mxu0
      %v5814 = vadd.f32 %v4971, %v5813
      %v5815 = vpop.f32.mrb[0].mxu0
      %v5816 = vadd.f32 %v4973, %v5815
      %5817 = vmatprep.mubr.bf16.mxu0 %v3822
      %5818 = vmatmul.mubr.bf16.gmra.mrb[0].mxu0 %v3821
      %v5819 = vpop.f32.mrb[0].mxu0
      %v5820 = vadd.f32 %v4977, %v5819
      %v5821 = vpop.f32.mrb[0].mxu0
      %v5822 = vadd.f32 %v4979, %v5821
      %v5823 = vpop.f32.mrb[0].mxu0
      %v5824 = vadd.f32 %v4981, %v5823
      %v5825 = vpop.f32.mrb[0].mxu0
      %v5826 = vadd.f32 %v4983, %v5825
      %5827 = vmatprep.mubr.bf16.mxu0 %v3826
      %5828 = vmatmul.mubr.bf16.gmra.mrb[0].mxu0 %v3825
      %v5829 = vpop.f32.mrb[0].mxu0
      %v5830 = vadd.f32 %v4987, %v5829
      %v5831 = vpop.f32.mrb[0].mxu0
      %v5832 = vadd.f32 %v4989, %v5831
      %v5833 = vpop.f32.mrb[0].mxu0
      %v5834 = vadd.f32 %v4991, %v5833
      %v5835 = vpop.f32.mrb[0].mxu0
      %v5836 = vadd.f32 %v4993, %v5835
      %5837 = vmatprep.mubr.bf16.mxu0 %v3830
      %5838 = vmatmul.mubr.bf16.gmra.mrb[0].mxu0 %v3829
      %v5839 = vpop.f32.mrb[0].mxu0
      %v5840 = vadd.f32 %v4997, %v5839
      %v5841 = vpop.f32.mrb[0].mxu0
      %v5842 = vadd.f32 %v4999, %v5841
      %v5843 = vpop.f32.mrb[0].mxu0
      %v5844 = vadd.f32 %v5001, %v5843
      %v5845 = vpop.f32.mrb[0].mxu0
      %v5846 = vadd.f32 %v5003, %v5845
      %5847 = vmatprep.mubr.bf16.mxu0 %v3834
      %5848 = vmatmul.mubr.bf16.gmra.mrb[0].mxu0 %v3833
      %v5849 = vpop.f32.mrb[0].mxu0
      %v5850 = vadd.f32 %v5007, %v5849
      %v5851 = vpop.f32.mrb[0].mxu0
      %v5852 = vadd.f32 %v5009, %v5851
      %v5853 = vpop.f32.mrb[0].mxu0
      %v5854 = vadd.f32 %v5011, %v5853
      %v5855 = vpop.f32.mrb[0].mxu0
      %v5856 = vadd.f32 %v5013, %v5855
      %5857 = vmatprep.mubr.bf16.mxu0 %v3838
      %5858 = vmatmul.mubr.bf16.gmra.mrb[0].mxu0 %v3837
      %v5859 = vpop.f32.mrb[0].mxu0
      %v5860 = vadd.f32 %v5017, %v5859
      %v5861 = vpop.f32.mrb[0].mxu0
      %v5862 = vadd.f32 %v5019, %v5861
      %v5863 = vpop.f32.mrb[0].mxu0
      %v5864 = vadd.f32 %v5021, %v5863
      %v5865 = vpop.f32.mrb[0].mxu0
      %v5866 = vadd.f32 %v5023, %v5865
      %5867 = vmatprep.mubr.bf16.mxu0 %v3842
      %5868 = vmatmul.mubr.bf16.gmra.mrb[0].mxu0 %v3841
      %v5869 = vpop.f32.mrb[0].mxu0
      %v5870 = vadd.f32 %v5027, %v5869
      %v5871 = vpop.f32.mrb[0].mxu0
      %v5872 = vadd.f32 %v5029, %v5871
      %v5873 = vpop.f32.mrb[0].mxu0
      %v5874 = vadd.f32 %v5031, %v5873
      %v5875 = vpop.f32.mrb[0].mxu0
      %v5876 = vadd.f32 %v5033, %v5875
      %5877 = vmatprep.mubr.bf16.mxu0 %v3846
      %5878 = vmatmul.mubr.bf16.gmra.mrb[0].mxu0 %v3845
      %v5879 = vpop.f32.mrb[0].mxu0
      %v5880 = vadd.f32 %v5037, %v5879
      %v5881 = vpop.f32.mrb[0].mxu0
      %v5882 = vadd.f32 %v5039, %v5881
      %v5883 = vpop.f32.mrb[0].mxu0
      %v5884 = vadd.f32 %v5041, %v5883
      %v5885 = vpop.f32.mrb[0].mxu0
      %v5886 = vadd.f32 %v5043, %v5885
      %5887 = vmatprep.mubr.bf16.mxu0 %v3850
      %5888 = vmatmul.mubr.bf16.gmra.mrb[0].mxu0 %v3849
      %v5889 = vpop.f32.mrb[0].mxu0
      %v5890 = vadd.f32 %v5047, %v5889
      %v5891 = vpop.f32.mrb[0].mxu0
      %v5892 = vadd.f32 %v5049, %v5891
      %v5893 = vpop.f32.mrb[0].mxu0
      %v5894 = vadd.f32 %v5051, %v5893
      %v5895 = vpop.f32.mrb[0].mxu0
      %v5896 = vadd.f32 %v5053, %v5895
      %5897 = vmatprep.mubr.bf16.mxu0 %v3854
      %5898 = vmatmul.mubr.bf16.gmra.mrb[0].mxu0 %v3853
      %v5899 = vpop.f32.mrb[0].mxu0
      %v5900 = vadd.f32 %v5057, %v5899
      %v5901 = vpop.f32.mrb[0].mxu0
      %v5902 = vadd.f32 %v5059, %v5901
      %v5903 = vpop.f32.mrb[0].mxu0
      %v5904 = vadd.f32 %v5061, %v5903
      %v5905 = vpop.f32.mrb[0].mxu0
      %v5906 = vadd.f32 %v5063, %v5905
      %5907 = vmatprep.mubr.bf16.mxu0 %v3858
      %5908 = vmatmul.mubr.bf16.gmra.mrb[0].mxu0 %v3857
      %v5909 = vpop.f32.mrb[0].mxu0
      %v5910 = vadd.f32 %v5067, %v5909
      %v5911 = vpop.f32.mrb[0].mxu0
      %v5912 = vadd.f32 %v5069, %v5911
      %v5913 = vpop.f32.mrb[0].mxu0
      %v5914 = vadd.f32 %v5071, %v5913
      %v5915 = vpop.f32.mrb[0].mxu0
      %v5916 = vadd.f32 %v5073, %v5915
      %5917 = vmatprep.mubr.bf16.mxu0 %v3862
      %5918 = vmatmul.mubr.bf16.gmra.mrb[0].mxu0 %v3861
      %v5919 = vpop.f32.mrb[0].mxu0
      %v5920 = vadd.f32 %v5077, %v5919
      %v5921 = vpop.f32.mrb[0].mxu0
      %v5922 = vadd.f32 %v5079, %v5921
      %v5923 = vpop.f32.mrb[0].mxu0
      %v5924 = vadd.f32 %v5081, %v5923
      %v5925 = vpop.f32.mrb[0].mxu0
      %v5926 = vadd.f32 %v5083, %v5925
      %5927 = vmatprep.mubr.bf16.mxu0 %v3866
      %5928 = vmatmul.mubr.bf16.gmra.mrb[0].mxu0 %v3865
      %v5929 = vpop.f32.mrb[0].mxu0
      %v5930 = vadd.f32 %v5087, %v5929
      %v5931 = vpop.f32.mrb[0].mxu0
      %v5932 = vadd.f32 %v5089, %v5931
      %v5933 = vpop.f32.mrb[0].mxu0
      %v5934 = vadd.f32 %v5091, %v5933
      %v5935 = vpop.f32.mrb[0].mxu0
      %v5936 = vadd.f32 %v5093, %v5935
      %5937 = vdwg.mxu0
      %v5938 = vpack.c.bf16 %v5134, %v5130
      %v5939 = vpack.c.bf16 %v5136, %v5132
      %v5940 = vpack.c.bf16 %v5144, %v5140
      %v5941 = vpack.c.bf16 %v5146, %v5142
      %v5942 = vpack.c.bf16 %v5154, %v5150
      %v5943 = vpack.c.bf16 %v5156, %v5152
      %v5944 = vpack.c.bf16 %v5164, %v5160
      %v5945 = vpack.c.bf16 %v5166, %v5162
      %v5946 = vpack.c.bf16 %v5174, %v5170
      %v5947 = vpack.c.bf16 %v5176, %v5172
      %v5948 = vpack.c.bf16 %v5184, %v5180
      %v5949 = vpack.c.bf16 %v5186, %v5182
      %v5950 = vpack.c.bf16 %v5194, %v5190
      %v5951 = vpack.c.bf16 %v5196, %v5192
      %v5952 = vpack.c.bf16 %v5204, %v5200
      %v5953 = vpack.c.bf16 %v5206, %v5202
      %v5954 = vpack.c.bf16 %v5214, %v5210
      %v5955 = vpack.c.bf16 %v5216, %v5212
      %v5956 = vpack.c.bf16 %v5224, %v5220
      %v5957 = vpack.c.bf16 %v5226, %v5222
      %v5958 = vpack.c.bf16 %v5234, %v5230
      %v5959 = vpack.c.bf16 %v5236, %v5232
      %v5960 = vpack.c.bf16 %v5244, %v5240
      %v5961 = vpack.c.bf16 %v5246, %v5242
      %v5962 = vpack.c.bf16 %v5254, %v5250
      %v5963 = vpack.c.bf16 %v5256, %v5252
      %v5964 = vpack.c.bf16 %v5264, %v5260
      %v5965 = vpack.c.bf16 %v5266, %v5262
      %v5966 = vpack.c.bf16 %v5274, %v5270
      %v5967 = vpack.c.bf16 %v5276, %v5272
      %v5968 = vpack.c.bf16 %v5284, %v5280
      %v5969 = vpack.c.bf16 %v5286, %v5282
      %v5970 = vpack.c.bf16 %v5294, %v5290
      %v5971 = vpack.c.bf16 %v5296, %v5292
      %v5972 = vpack.c.bf16 %v5304, %v5300
      %v5973 = vpack.c.bf16 %v5306, %v5302
      %v5974 = vpack.c.bf16 %v5314, %v5310
      %v5975 = vpack.c.bf16 %v5316, %v5312
      %v5976 = vpack.c.bf16 %v5324, %v5320
      %v5977 = vpack.c.bf16 %v5326, %v5322
      %v5978 = vpack.c.bf16 %v5334, %v5330
      %v5979 = vpack.c.bf16 %v5336, %v5332
      %v5980 = vpack.c.bf16 %v5344, %v5340
      %v5981 = vpack.c.bf16 %v5346, %v5342
      %v5982 = vpack.c.bf16 %v5354, %v5350
      %v5983 = vpack.c.bf16 %v5356, %v5352
      %v5984 = vpack.c.bf16 %v5364, %v5360
      %v5985 = vpack.c.bf16 %v5366, %v5362
      %v5986 = vpack.c.bf16 %v5374, %v5370
      %v5987 = vpack.c.bf16 %v5376, %v5372
      %v5988 = vpack.c.bf16 %v5384, %v5380
      %v5989 = vpack.c.bf16 %v5386, %v5382
      %v5990 = vpack.c.bf16 %v5394, %v5390
      %v5991 = vpack.c.bf16 %v5396, %v5392
      %v5992 = vpack.c.bf16 %v5404, %v5400
      %v5993 = vpack.c.bf16 %v5406, %v5402
      %v5994 = vpack.c.bf16 %v5414, %v5410
      %v5995 = vpack.c.bf16 %v5416, %v5412
      %v5996 = vpack.c.bf16 %v5424, %v5420
      %v5997 = vpack.c.bf16 %v5426, %v5422
      %v5998 = vpack.c.bf16 %v5434, %v5430
      %v5999 = vpack.c.bf16 %v5436, %v5432
      %v6000 = vpack.c.bf16 %v5444, %v5440
      %v6001 = vpack.c.bf16 %v5446, %v5442
      %v6002 = vpack.c.bf16 %v5454, %v5450
      %v6003 = vpack.c.bf16 %v5456, %v5452
      %v6004 = vpack.c.bf16 %v5464, %v5460
      %v6005 = vpack.c.bf16 %v5466, %v5462
      %v6006 = vpack.c.bf16 %v5474, %v5470
      %v6007 = vpack.c.bf16 %v5476, %v5472
      %v6008 = vpack.c.bf16 %v5484, %v5480
      %v6009 = vpack.c.bf16 %v5486, %v5482
      %v6010 = vpack.c.bf16 %v5494, %v5490
      %v6011 = vpack.c.bf16 %v5496, %v5492
      %v6012 = vpack.c.bf16 %v5504, %v5500
      %v6013 = vpack.c.bf16 %v5506, %v5502
      %v6014 = vpack.c.bf16 %v5514, %v5510
      %v6015 = vpack.c.bf16 %v5516, %v5512
      %v6016 = vpack.c.bf16 %v5524, %v5520
      %v6017 = vpack.c.bf16 %v5526, %v5522
      %v6018 = vpack.c.bf16 %v5534, %v5530
      %v6019 = vpack.c.bf16 %v5536, %v5532
      %v6020 = vpack.c.bf16 %v5544, %v5540
      %v6021 = vpack.c.bf16 %v5546, %v5542
      %v6022 = vpack.c.bf16 %v5554, %v5550
      %v6023 = vpack.c.bf16 %v5556, %v5552
      %v6024 = vpack.c.bf16 %v5564, %v5560
      %v6025 = vpack.c.bf16 %v5566, %v5562
      %v6026 = vpack.c.bf16 %v5574, %v5570
      %v6027 = vpack.c.bf16 %v5576, %v5572
      %v6028 = vpack.c.bf16 %v5584, %v5580
      %v6029 = vpack.c.bf16 %v5586, %v5582
      %v6030 = vpack.c.bf16 %v5594, %v5590
      %v6031 = vpack.c.bf16 %v5596, %v5592
      %v6032 = vpack.c.bf16 %v5604, %v5600
      %v6033 = vpack.c.bf16 %v5606, %v5602
      %v6034 = vpack.c.bf16 %v5614, %v5610
      %v6035 = vpack.c.bf16 %v5616, %v5612
      %v6036 = vpack.c.bf16 %v5624, %v5620
      %v6037 = vpack.c.bf16 %v5626, %v5622
      %v6038 = vpack.c.bf16 %v5634, %v5630
      %v6039 = vpack.c.bf16 %v5636, %v5632
      %v6040 = vpack.c.bf16 %v5644, %v5640
      %v6041 = vpack.c.bf16 %v5646, %v5642
      %v6042 = vpack.c.bf16 %v5654, %v5650
      %v6043 = vpack.c.bf16 %v5656, %v5652
      %v6044 = vpack.c.bf16 %v5664, %v5660
      %v6045 = vpack.c.bf16 %v5666, %v5662
      %v6046 = vpack.c.bf16 %v5674, %v5670
      %v6047 = vpack.c.bf16 %v5676, %v5672
      %v6048 = vpack.c.bf16 %v5684, %v5680
      %v6049 = vpack.c.bf16 %v5686, %v5682
      %v6050 = vpack.c.bf16 %v5694, %v5690
      %v6051 = vpack.c.bf16 %v5696, %v5692
      %v6052 = vpack.c.bf16 %v5704, %v5700
      %v6053 = vpack.c.bf16 %v5706, %v5702
      %v6054 = vpack.c.bf16 %v5714, %v5710
      %v6055 = vpack.c.bf16 %v5716, %v5712
      %v6056 = vpack.c.bf16 %v5724, %v5720
      %v6057 = vpack.c.bf16 %v5726, %v5722
      %v6058 = vpack.c.bf16 %v5734, %v5730
      %v6059 = vpack.c.bf16 %v5736, %v5732
      %v6060 = vpack.c.bf16 %v5744, %v5740
      %v6061 = vpack.c.bf16 %v5746, %v5742
      %v6062 = vpack.c.bf16 %v5754, %v5750
      %v6063 = vpack.c.bf16 %v5756, %v5752
      %v6064 = vpack.c.bf16 %v5764, %v5760
      %v6065 = vpack.c.bf16 %v5766, %v5762
      %v6066 = vpack.c.bf16 %v5774, %v5770
      %v6067 = vpack.c.bf16 %v5776, %v5772
      %v6068 = vpack.c.bf16 %v5784, %v5780
      %v6069 = vpack.c.bf16 %v5786, %v5782
      %v6070 = vpack.c.bf16 %v5794, %v5790
      %v6071 = vpack.c.bf16 %v5796, %v5792
      %v6072 = vpack.c.bf16 %v5804, %v5800
      %v6073 = vpack.c.bf16 %v5806, %v5802
      %v6074 = vpack.c.bf16 %v5814, %v5810
      %v6075 = vpack.c.bf16 %v5816, %v5812
      %v6076 = vpack.c.bf16 %v5824, %v5820
      %v6077 = vpack.c.bf16 %v5826, %v5822
      %v6078 = vpack.c.bf16 %v5834, %v5830
      %v6079 = vpack.c.bf16 %v5836, %v5832
      %v6080 = vpack.c.bf16 %v5844, %v5840
      %v6081 = vpack.c.bf16 %v5846, %v5842
      %v6082 = vpack.c.bf16 %v5854, %v5850
      %v6083 = vpack.c.bf16 %v5856, %v5852
      %v6084 = vpack.c.bf16 %v5864, %v5860
      %v6085 = vpack.c.bf16 %v5866, %v5862
      %v6086 = vpack.c.bf16 %v5874, %v5870
      %v6087 = vpack.c.bf16 %v5876, %v5872
      %v6088 = vpack.c.bf16 %v5884, %v5880
      %v6089 = vpack.c.bf16 %v5886, %v5882
      %v6090 = vpack.c.bf16 %v5894, %v5890
      %v6091 = vpack.c.bf16 %v5896, %v5892
      %v6092 = vpack.c.bf16 %v5904, %v5900
      %v6093 = vpack.c.bf16 %v5906, %v5902
      %v6094 = vpack.c.bf16 %v5914, %v5910
      %v6095 = vpack.c.bf16 %v5916, %v5912
      %v6096 = vpack.c.bf16 %v5924, %v5920
      %v6097 = vpack.c.bf16 %v5926, %v5922
      %v6098 = vpack.c.bf16 %v5934, %v5930
      %v6099 = vpack.c.bf16 %v5936, %v5932
      %v6102 = vunpack.c.l.s4 1966171168
      %v6103 = vunpack.c.0.s8 %v6102
      %v6104 = vlaneseq
      %v6105 = vshrl.u32 %v6104, 7
      %v6106 = vsub.s32 %v6103, %v6105
      %v6107 = vrot.slane %v3931, %v6106
      %v6108 = vcombine.high %v6107, %v6107
      %v6110 = vunpack.c.l.s4 1966171168
      %v6111 = vunpack.c.0.s8 %v6110
      %v6112 = vlaneseq
      %v6113 = vshrl.u32 %v6112, 7
      %v6114 = vsub.s32 %v6111, %v6113
      %v6115 = vrot.slane %v6107, %v6114
      %v6117 = vunpack.c.l.s4 1966171168
      %v6118 = vunpack.c.0.s8 %v6117
      %v6119 = vlaneseq
      %v6120 = vshrl.u32 %v6119, 7
      %v6121 = vsub.s32 %v6118, %v6120
      %v6122 = vrot.slane %v6108, %v6121
      %v6124 = vpack.i.b16 %v6115, %v6115
      %v6126 = vlaneseq
      %v6127 = vshrl.u32 %v6126, 7
      %v6128 = vsub.s32 0, %v6127
      %v6129 = vrot.slane %v6124, %v6128
      %v6131 = vpack.i.b16 %v6122, %v6122
      %v6133 = vlaneseq
      %v6134 = vshrl.u32 %v6133, 7
      %v6135 = vsub.s32 0, %v6134
      %v6136 = vrot.slane %v6131, %v6135
      %v6137 = vadd.bf16 %v5938, %v6129
      %v6138 = vadd.bf16 %v5939, %v6136
      %v6139 = vadd.bf16 %v5940, %v6129
      %v6140 = vadd.bf16 %v5941, %v6136
      %v6141 = vadd.bf16 %v5942, %v6129
      %v6142 = vadd.bf16 %v5943, %v6136
      %v6143 = vadd.bf16 %v5944, %v6129
      %v6144 = vadd.bf16 %v5945, %v6136
      %v6145 = vadd.bf16 %v5946, %v6129
      %v6146 = vadd.bf16 %v5947, %v6136
      %v6147 = vadd.bf16 %v5948, %v6129
      %v6148 = vadd.bf16 %v5949, %v6136
      %v6149 = vadd.bf16 %v5950, %v6129
      %v6150 = vadd.bf16 %v5951, %v6136
      %v6151 = vadd.bf16 %v5952, %v6129
      %v6152 = vadd.bf16 %v5953, %v6136
      %v6153 = vadd.bf16 %v5954, %v6129
      %v6154 = vadd.bf16 %v5955, %v6136
      %v6155 = vadd.bf16 %v5956, %v6129
      %v6156 = vadd.bf16 %v5957, %v6136
      %v6157 = vadd.bf16 %v5958, %v6129
      %v6158 = vadd.bf16 %v5959, %v6136
      %v6159 = vadd.bf16 %v5960, %v6129
      %v6160 = vadd.bf16 %v5961, %v6136
      %v6161 = vadd.bf16 %v5962, %v6129
      %v6162 = vadd.bf16 %v5963, %v6136
      %v6163 = vadd.bf16 %v5964, %v6129
      %v6164 = vadd.bf16 %v5965, %v6136
      %v6165 = vadd.bf16 %v5966, %v6129
      %v6166 = vadd.bf16 %v5967, %v6136
      %v6167 = vadd.bf16 %v5968, %v6129
      %v6168 = vadd.bf16 %v5969, %v6136
      %v6169 = vadd.bf16 %v5970, %v6129
      %v6170 = vadd.bf16 %v5971, %v6136
      %v6171 = vadd.bf16 %v5972, %v6129
      %v6172 = vadd.bf16 %v5973, %v6136
      %v6173 = vadd.bf16 %v5974, %v6129
      %v6174 = vadd.bf16 %v5975, %v6136
      %v6175 = vadd.bf16 %v5976, %v6129
      %v6176 = vadd.bf16 %v5977, %v6136
      %v6177 = vadd.bf16 %v5978, %v6129
      %v6178 = vadd.bf16 %v5979, %v6136
      %v6179 = vadd.bf16 %v5980, %v6129
      %v6180 = vadd.bf16 %v5981, %v6136
      %v6181 = vadd.bf16 %v5982, %v6129
      %v6182 = vadd.bf16 %v5983, %v6136
      %v6183 = vadd.bf16 %v5984, %v6129
      %v6184 = vadd.bf16 %v5985, %v6136
      %v6185 = vadd.bf16 %v5986, %v6129
      %v6186 = vadd.bf16 %v5987, %v6136
      %v6187 = vadd.bf16 %v5988, %v6129
      %v6188 = vadd.bf16 %v5989, %v6136
      %v6189 = vadd.bf16 %v5990, %v6129
      %v6190 = vadd.bf16 %v5991, %v6136
      %v6191 = vadd.bf16 %v5992, %v6129
      %v6192 = vadd.bf16 %v5993, %v6136
      %v6193 = vadd.bf16 %v5994, %v6129
      %v6194 = vadd.bf16 %v5995, %v6136
      %v6195 = vadd.bf16 %v5996, %v6129
      %v6196 = vadd.bf16 %v5997, %v6136
      %v6197 = vadd.bf16 %v5998, %v6129
      %v6198 = vadd.bf16 %v5999, %v6136
      %v6199 = vadd.bf16 %v6000, %v6129
      %v6200 = vadd.bf16 %v6001, %v6136
      %v6201 = vadd.bf16 %v6002, %v6129
      %v6202 = vadd.bf16 %v6003, %v6136
      %v6203 = vadd.bf16 %v6004, %v6129
      %v6204 = vadd.bf16 %v6005, %v6136
      %v6205 = vadd.bf16 %v6006, %v6129
      %v6206 = vadd.bf16 %v6007, %v6136
      %v6207 = vadd.bf16 %v6008, %v6129
      %v6208 = vadd.bf16 %v6009, %v6136
      %v6209 = vadd.bf16 %v6010, %v6129
      %v6210 = vadd.bf16 %v6011, %v6136
      %v6211 = vadd.bf16 %v6012, %v6129
      %v6212 = vadd.bf16 %v6013, %v6136
      %v6213 = vadd.bf16 %v6014, %v6129
      %v6214 = vadd.bf16 %v6015, %v6136
      %v6215 = vadd.bf16 %v6016, %v6129
      %v6216 = vadd.bf16 %v6017, %v6136
      %v6217 = vadd.bf16 %v6018, %v6129
      %v6218 = vadd.bf16 %v6019, %v6136
      %v6219 = vadd.bf16 %v6020, %v6129
      %v6220 = vadd.bf16 %v6021, %v6136
      %v6221 = vadd.bf16 %v6022, %v6129
      %v6222 = vadd.bf16 %v6023, %v6136
      %v6223 = vadd.bf16 %v6024, %v6129
      %v6224 = vadd.bf16 %v6025, %v6136
      %v6225 = vadd.bf16 %v6026, %v6129
      %v6226 = vadd.bf16 %v6027, %v6136
      %v6227 = vadd.bf16 %v6028, %v6129
      %v6228 = vadd.bf16 %v6029, %v6136
      %v6229 = vadd.bf16 %v6030, %v6129
      %v6230 = vadd.bf16 %v6031, %v6136
      %v6231 = vadd.bf16 %v6032, %v6129
      %v6232 = vadd.bf16 %v6033, %v6136
      %v6233 = vadd.bf16 %v6034, %v6129
      %v6234 = vadd.bf16 %v6035, %v6136
      %v6235 = vadd.bf16 %v6036, %v6129
      %v6236 = vadd.bf16 %v6037, %v6136
      %v6237 = vadd.bf16 %v6038, %v6129
      %v6238 = vadd.bf16 %v6039, %v6136
      %v6239 = vadd.bf16 %v6040, %v6129
      %v6240 = vadd.bf16 %v6041, %v6136
      %v6241 = vadd.bf16 %v6042, %v6129
      %v6242 = vadd.bf16 %v6043, %v6136
      %v6243 = vadd.bf16 %v6044, %v6129
      %v6244 = vadd.bf16 %v6045, %v6136
      %v6245 = vadd.bf16 %v6046, %v6129
      %v6246 = vadd.bf16 %v6047, %v6136
      %v6247 = vadd.bf16 %v6048, %v6129
      %v6248 = vadd.bf16 %v6049, %v6136
      %v6249 = vadd.bf16 %v6050, %v6129
      %v6250 = vadd.bf16 %v6051, %v6136
      %v6251 = vadd.bf16 %v6052, %v6129
      %v6252 = vadd.bf16 %v6053, %v6136
      %v6253 = vadd.bf16 %v6054, %v6129
      %v6254 = vadd.bf16 %v6055, %v6136
      %v6255 = vadd.bf16 %v6056, %v6129
      %v6256 = vadd.bf16 %v6057, %v6136
      %v6257 = vadd.bf16 %v6058, %v6129
      %v6258 = vadd.bf16 %v6059, %v6136
      %v6259 = vadd.bf16 %v6060, %v6129
      %v6260 = vadd.bf16 %v6061, %v6136
      %v6261 = vadd.bf16 %v6062, %v6129
      %v6262 = vadd.bf16 %v6063, %v6136
      %v6263 = vadd.bf16 %v6064, %v6129
      %v6264 = vadd.bf16 %v6065, %v6136
      %v6265 = vadd.bf16 %v6066, %v6129
      %v6266 = vadd.bf16 %v6067, %v6136
      %v6267 = vadd.bf16 %v6068, %v6129
      %v6268 = vadd.bf16 %v6069, %v6136
      %v6269 = vadd.bf16 %v6070, %v6129
      %v6270 = vadd.bf16 %v6071, %v6136
      %v6271 = vadd.bf16 %v6072, %v6129
      %v6272 = vadd.bf16 %v6073, %v6136
      %v6273 = vadd.bf16 %v6074, %v6129
      %v6274 = vadd.bf16 %v6075, %v6136
      %v6275 = vadd.bf16 %v6076, %v6129
      %v6276 = vadd.bf16 %v6077, %v6136
      %v6277 = vadd.bf16 %v6078, %v6129
      %v6278 = vadd.bf16 %v6079, %v6136
      %v6279 = vadd.bf16 %v6080, %v6129
      %v6280 = vadd.bf16 %v6081, %v6136
      %v6281 = vadd.bf16 %v6082, %v6129
      %v6282 = vadd.bf16 %v6083, %v6136
      %v6283 = vadd.bf16 %v6084, %v6129
      %v6284 = vadd.bf16 %v6085, %v6136
      %v6285 = vadd.bf16 %v6086, %v6129
      %v6286 = vadd.bf16 %v6087, %v6136
      %v6287 = vadd.bf16 %v6088, %v6129
      %v6288 = vadd.bf16 %v6089, %v6136
      %v6289 = vadd.bf16 %v6090, %v6129
      %v6290 = vadd.bf16 %v6091, %v6136
      %v6291 = vadd.bf16 %v6092, %v6129
      %v6292 = vadd.bf16 %v6093, %v6136
      %v6293 = vadd.bf16 %v6094, %v6129
      %v6294 = vadd.bf16 %v6095, %v6136
      %v6295 = vadd.bf16 %v6096, %v6129
      %v6296 = vadd.bf16 %v6097, %v6136
      %v6297 = vadd.bf16 %v6098, %v6129
      %v6298 = vadd.bf16 %v6099, %v6136
      %v6299 = vmax.bf16 %v6137, 0
      %v6300 = vmax.bf16 %v6138, 0
      %v6301 = vmax.bf16 %v6139, 0
      %v6302 = vmax.bf16 %v6140, 0
      %v6303 = vmax.bf16 %v6141, 0
      %v6304 = vmax.bf16 %v6142, 0
      %v6305 = vmax.bf16 %v6143, 0
      %v6306 = vmax.bf16 %v6144, 0
      %v6307 = vmax.bf16 %v6145, 0
      %v6308 = vmax.bf16 %v6146, 0
      %v6309 = vmax.bf16 %v6147, 0
      %v6310 = vmax.bf16 %v6148, 0
      %v6311 = vmax.bf16 %v6149, 0
      %v6312 = vmax.bf16 %v6150, 0
      %v6313 = vmax.bf16 %v6151, 0
      %v6314 = vmax.bf16 %v6152, 0
      %v6315 = vmax.bf16 %v6153, 0
      %v6316 = vmax.bf16 %v6154, 0
      %v6317 = vmax.bf16 %v6155, 0
      %v6318 = vmax.bf16 %v6156, 0
      %v6319 = vmax.bf16 %v6157, 0
      %v6320 = vmax.bf16 %v6158, 0
      %v6321 = vmax.bf16 %v6159, 0
      %v6322 = vmax.bf16 %v6160, 0
      %v6323 = vmax.bf16 %v6161, 0
      %v6324 = vmax.bf16 %v6162, 0
      %v6325 = vmax.bf16 %v6163, 0
      %v6326 = vmax.bf16 %v6164, 0
      %v6327 = vmax.bf16 %v6165, 0
      %v6328 = vmax.bf16 %v6166, 0
      %v6329 = vmax.bf16 %v6167, 0
      %v6330 = vmax.bf16 %v6168, 0
      %v6331 = vmax.bf16 %v6169, 0
      %v6332 = vmax.bf16 %v6170, 0
      %v6333 = vmax.bf16 %v6171, 0
      %v6334 = vmax.bf16 %v6172, 0
      %v6335 = vmax.bf16 %v6173, 0
      %v6336 = vmax.bf16 %v6174, 0
      %v6337 = vmax.bf16 %v6175, 0
      %v6338 = vmax.bf16 %v6176, 0
      %v6339 = vmax.bf16 %v6177, 0
      %v6340 = vmax.bf16 %v6178, 0
      %v6341 = vmax.bf16 %v6179, 0
      %v6342 = vmax.bf16 %v6180, 0
      %v6343 = vmax.bf16 %v6181, 0
      %v6344 = vmax.bf16 %v6182, 0
      %v6345 = vmax.bf16 %v6183, 0
      %v6346 = vmax.bf16 %v6184, 0
      %v6347 = vmax.bf16 %v6185, 0
      %v6348 = vmax.bf16 %v6186, 0
      %v6349 = vmax.bf16 %v6187, 0
      %v6350 = vmax.bf16 %v6188, 0
      %v6351 = vmax.bf16 %v6189, 0
      %v6352 = vmax.bf16 %v6190, 0
      %v6353 = vmax.bf16 %v6191, 0
      %v6354 = vmax.bf16 %v6192, 0
      %v6355 = vmax.bf16 %v6193, 0
      %v6356 = vmax.bf16 %v6194, 0
      %v6357 = vmax.bf16 %v6195, 0
      %v6358 = vmax.bf16 %v6196, 0
      %v6359 = vmax.bf16 %v6197, 0
      %v6360 = vmax.bf16 %v6198, 0
      %v6361 = vmax.bf16 %v6199, 0
      %v6362 = vmax.bf16 %v6200, 0
      %v6363 = vmax.bf16 %v6201, 0
      %v6364 = vmax.bf16 %v6202, 0
      %v6365 = vmax.bf16 %v6203, 0
      %v6366 = vmax.bf16 %v6204, 0
      %v6367 = vmax.bf16 %v6205, 0
      %v6368 = vmax.bf16 %v6206, 0
      %v6369 = vmax.bf16 %v6207, 0
      %v6370 = vmax.bf16 %v6208, 0
      %v6371 = vmax.bf16 %v6209, 0
      %v6372 = vmax.bf16 %v6210, 0
      %v6373 = vmax.bf16 %v6211, 0
      %v6374 = vmax.bf16 %v6212, 0
      %v6375 = vmax.bf16 %v6213, 0
      %v6376 = vmax.bf16 %v6214, 0
      %v6377 = vmax.bf16 %v6215, 0
      %v6378 = vmax.bf16 %v6216, 0
      %v6379 = vmax.bf16 %v6217, 0
      %v6380 = vmax.bf16 %v6218, 0
      %v6381 = vmax.bf16 %v6219, 0
      %v6382 = vmax.bf16 %v6220, 0
      %v6383 = vmax.bf16 %v6221, 0
      %v6384 = vmax.bf16 %v6222, 0
      %v6385 = vmax.bf16 %v6223, 0
      %v6386 = vmax.bf16 %v6224, 0
      %v6387 = vmax.bf16 %v6225, 0
      %v6388 = vmax.bf16 %v6226, 0
      %v6389 = vmax.bf16 %v6227, 0
      %v6390 = vmax.bf16 %v6228, 0
      %v6391 = vmax.bf16 %v6229, 0
      %v6392 = vmax.bf16 %v6230, 0
      %v6393 = vmax.bf16 %v6231, 0
      %v6394 = vmax.bf16 %v6232, 0
      %v6395 = vmax.bf16 %v6233, 0
      %v6396 = vmax.bf16 %v6234, 0
      %v6397 = vmax.bf16 %v6235, 0
      %v6398 = vmax.bf16 %v6236, 0
      %v6399 = vmax.bf16 %v6237, 0
      %v6400 = vmax.bf16 %v6238, 0
      %v6401 = vmax.bf16 %v6239, 0
      %v6402 = vmax.bf16 %v6240, 0
      %v6403 = vmax.bf16 %v6241, 0
      %v6404 = vmax.bf16 %v6242, 0
      %v6405 = vmax.bf16 %v6243, 0
      %v6406 = vmax.bf16 %v6244, 0
      %v6407 = vmax.bf16 %v6245, 0
      %v6408 = vmax.bf16 %v6246, 0
      %v6409 = vmax.bf16 %v6247, 0
      %v6410 = vmax.bf16 %v6248, 0
      %v6411 = vmax.bf16 %v6249, 0
      %v6412 = vmax.bf16 %v6250, 0
      %v6413 = vmax.bf16 %v6251, 0
      %v6414 = vmax.bf16 %v6252, 0
      %v6415 = vmax.bf16 %v6253, 0
      %v6416 = vmax.bf16 %v6254, 0
      %v6417 = vmax.bf16 %v6255, 0
      %v6418 = vmax.bf16 %v6256, 0
      %v6419 = vmax.bf16 %v6257, 0
      %v6420 = vmax.bf16 %v6258, 0
      %v6421 = vmax.bf16 %v6259, 0
      %v6422 = vmax.bf16 %v6260, 0
      %v6423 = vmax.bf16 %v6261, 0
      %v6424 = vmax.bf16 %v6262, 0
      %v6425 = vmax.bf16 %v6263, 0
      %v6426 = vmax.bf16 %v6264, 0
      %v6427 = vmax.bf16 %v6265, 0
      %v6428 = vmax.bf16 %v6266, 0
      %v6429 = vmax.bf16 %v6267, 0
      %v6430 = vmax.bf16 %v6268, 0
      %v6431 = vmax.bf16 %v6269, 0
      %v6432 = vmax.bf16 %v6270, 0
      %v6433 = vmax.bf16 %v6271, 0
      %v6434 = vmax.bf16 %v6272, 0
      %v6435 = vmax.bf16 %v6273, 0
      %v6436 = vmax.bf16 %v6274, 0
      %v6437 = vmax.bf16 %v6275, 0
      %v6438 = vmax.bf16 %v6276, 0
      %v6439 = vmax.bf16 %v6277, 0
      %v6440 = vmax.bf16 %v6278, 0
      %v6441 = vmax.bf16 %v6279, 0
      %v6442 = vmax.bf16 %v6280, 0
      %v6443 = vmax.bf16 %v6281, 0
      %v6444 = vmax.bf16 %v6282, 0
      %v6445 = vmax.bf16 %v6283, 0
      %v6446 = vmax.bf16 %v6284, 0
      %v6447 = vmax.bf16 %v6285, 0
      %v6448 = vmax.bf16 %v6286, 0
      %v6449 = vmax.bf16 %v6287, 0
      %v6450 = vmax.bf16 %v6288, 0
      %v6451 = vmax.bf16 %v6289, 0
      %v6452 = vmax.bf16 %v6290, 0
      %v6453 = vmax.bf16 %v6291, 0
      %v6454 = vmax.bf16 %v6292, 0
      %v6455 = vmax.bf16 %v6293, 0
      %v6456 = vmax.bf16 %v6294, 0
      %v6457 = vmax.bf16 %v6295, 0
      %v6458 = vmax.bf16 %v6296, 0
      %v6459 = vmax.bf16 %v6297, 0
      %v6460 = vmax.bf16 %v6298, 0
      %v6461 = vld [vmem:[%s3] sm:$0xf]
      %v6462 = vld [vmem:[%s3 + $0x4] sm:$0xf]
      %v6463 = vld [vmem:[%s3 + $0x8] sm:$0xf]
      %v6464 = vld [vmem:[%s3 + $0xc] sm:$0xf]
      %v6465 = vld [vmem:[%s3 + $0x10] sm:$0xf]
      %v6466 = vld [vmem:[%s3 + $0x14] sm:$0xf]
      %v6467 = vld [vmem:[%s3 + $0x18] sm:$0xf]
      %v6468 = vld [vmem:[%s3 + $0x1c] sm:$0xf]
      %v6469 = vld [vmem:[%s3 + $0x20] sm:$0xf]
      %v6470 = vld [vmem:[%s3 + $0x24] sm:$0xf]
      %v6471 = vld [vmem:[%s3 + $0x28] sm:$0xf]
      %v6472 = vld [vmem:[%s3 + $0x2c] sm:$0xf]
      %v6473 = vld [vmem:[%s3 + $0x30] sm:$0xf]
      %v6474 = vld [vmem:[%s3 + $0x34] sm:$0xf]
      %v6475 = vld [vmem:[%s3 + $0x38] sm:$0xf]
      %v6476 = vld [vmem:[%s3 + $0x3c] sm:$0xf]
      %v6477 = vld [vmem:[%s3 + $0x40] sm:$0xf]
      %v6478 = vld [vmem:[%s3 + $0x44] sm:$0xf]
      %v6479 = vld [vmem:[%s3 + $0x48] sm:$0xf]
      %v6480 = vld [vmem:[%s3 + $0x4c] sm:$0xf]
      %v6481 = vld [vmem:[%s3 + $0x50] sm:$0xf]
      %v6482 = vld [vmem:[%s3 + $0x54] sm:$0xf]
      %v6483 = vld [vmem:[%s3 + $0x58] sm:$0xf]
      %v6484 = vld [vmem:[%s3 + $0x5c] sm:$0xf]
      %v6485 = vld [vmem:[%s3 + $0x60] sm:$0xf]
      %v6486 = vld [vmem:[%s3 + $0x64] sm:$0xf]
      %v6487 = vld [vmem:[%s3 + $0x68] sm:$0xf]
      %v6488 = vld [vmem:[%s3 + $0x6c] sm:$0xf]
      %v6489 = vld [vmem:[%s3 + $0x70] sm:$0xf]
      %v6490 = vld [vmem:[%s3 + $0x74] sm:$0xf]
      %v6491 = vld [vmem:[%s3 + $0x78] sm:$0xf]
      %v6492 = vld [vmem:[%s3 + $0x7c] sm:$0xf]
      %v6493 = vld [vmem:[%s6 + $0x6] sm:$0x1]
      %v6526 = vunpack.c.l.b16 %v6461
      %v6527 = vunpack.c.l.b16 %v6462
      %v6528 = vunpack.c.l.b16 %v6463
      %v6529 = vunpack.c.l.b16 %v6464
      %v6530 = vunpack.c.l.b16 %v6465
      %v6531 = vunpack.c.l.b16 %v6466
      %v6532 = vunpack.c.l.b16 %v6467
      %v6533 = vunpack.c.l.b16 %v6468
      %v6534 = vunpack.c.l.b16 %v6469
      %v6535 = vunpack.c.l.b16 %v6470
      %v6536 = vunpack.c.l.b16 %v6471
      %v6537 = vunpack.c.l.b16 %v6472
      %v6538 = vunpack.c.l.b16 %v6473
      %v6539 = vunpack.c.l.b16 %v6474
      %v6540 = vunpack.c.l.b16 %v6475
      %v6541 = vunpack.c.l.b16 %v6476
      %v6542 = vunpack.c.l.b16 %v6477
      %v6543 = vunpack.c.l.b16 %v6478
      %v6544 = vunpack.c.l.b16 %v6479
      %v6545 = vunpack.c.l.b16 %v6480
      %v6546 = vunpack.c.l.b16 %v6481
      %v6547 = vunpack.c.l.b16 %v6482
      %v6548 = vunpack.c.l.b16 %v6483
      %v6549 = vunpack.c.l.b16 %v6484
      %v6550 = vunpack.c.l.b16 %v6485
      %v6551 = vunpack.c.l.b16 %v6486
      %v6552 = vunpack.c.l.b16 %v6487
      %v6553 = vunpack.c.l.b16 %v6488
      %v6554 = vunpack.c.l.b16 %v6489
      %v6555 = vunpack.c.l.b16 %v6490
      %v6556 = vunpack.c.l.b16 %v6491
      %v6557 = vunpack.c.l.b16 %v6492
      %v6558 = vpack.c.b16 %v6527, %v6526
      %v6559 = vpack.c.b16 %v6529, %v6528
      %v6560 = vpack.c.b16 %v6531, %v6530
      %v6561 = vpack.c.b16 %v6533, %v6532
      %v6562 = vpack.c.b16 %v6535, %v6534
      %v6563 = vpack.c.b16 %v6537, %v6536
      %v6564 = vpack.c.b16 %v6539, %v6538
      %v6565 = vpack.c.b16 %v6541, %v6540
      %v6566 = vpack.c.b16 %v6543, %v6542
      %v6567 = vpack.c.b16 %v6545, %v6544
      %v6568 = vpack.c.b16 %v6547, %v6546
      %v6569 = vpack.c.b16 %v6549, %v6548
      %v6570 = vpack.c.b16 %v6551, %v6550
      %v6571 = vpack.c.b16 %v6553, %v6552
      %v6572 = vpack.c.b16 %v6555, %v6554
      %v6573 = vpack.c.b16 %v6557, %v6556
      %6590 = vmatprep.subr.bf16.mxu0 0
      %6591 = vmatpush1.bf16.msra.mxu0 %v6558
      %6592 = vmatprep.subr.bf16.mxu0 0
      %6593 = vmatpush1.bf16.msra.mxu0 %v6559
      %6594 = vmatprep.subr.bf16.mxu0 0
      %6595 = vmatpush1.bf16.msra.mxu0 %v6560
      %6596 = vmatprep.subr.bf16.mxu0 0
      %6597 = vmatpush1.bf16.msra.mxu0 %v6561
      %6598 = vmatprep.subr.bf16.mxu0 0
      %6599 = vmatpush1.bf16.msra.mxu0 %v6562
      %6600 = vmatprep.subr.bf16.mxu0 0
      %6601 = vmatpush1.bf16.msra.mxu0 %v6563
      %6602 = vmatprep.subr.bf16.mxu0 0
      %6603 = vmatpush1.bf16.msra.mxu0 %v6564
      %6604 = vmatprep.subr.bf16.mxu0 0
      %6605 = vmatpush1.bf16.msra.mxu0 %v6565
      %6606 = vmatprep.subr.bf16.mxu0 0
      %6607 = vmatpush1.bf16.msra.mxu0 %v6566
      %6608 = vmatprep.subr.bf16.mxu0 0
      %6609 = vmatpush1.bf16.msra.mxu0 %v6567
      %6610 = vmatprep.subr.bf16.mxu0 0
      %6611 = vmatpush1.bf16.msra.mxu0 %v6568
      %6612 = vmatprep.subr.bf16.mxu0 0
      %6613 = vmatpush1.bf16.msra.mxu0 %v6569
      %6614 = vmatprep.subr.bf16.mxu0 0
      %6615 = vmatpush1.bf16.msra.mxu0 %v6570
      %6616 = vmatprep.subr.bf16.mxu0 0
      %6617 = vmatpush1.bf16.msra.mxu0 %v6571
      %6618 = vmatprep.subr.bf16.mxu0 0
      %6619 = vmatpush1.bf16.msra.mxu0 %v6572
      %6620 = vmatprep.subr.bf16.mxu0 0
      %6621 = vmatpush1.bf16.msra.mxu0 %v6573
      %6622 = vmatprep.mubr.bf16.mxu0 %v6300
      %6623 = vmatmul.mubr.bf16.gmra.mrb[0].mxu0 %v6299
      %v6624 = vpop.f32.mrb[0].mxu0
      %v6625 = vadd.f32 0.0, %v6624
      %v6626 = vpop.f32.mrb[0].mxu0
      %v6627 = vpop.f32.mrb[0].mxu0
      %v6628 = vadd.f32 0.0, %v6627
      %v6629 = vpop.f32.mrb[0].mxu0
      %6630 = vmatprep.mubr.bf16.mxu0 %v6302
      %6631 = vmatmul.mubr.bf16.gmra.mrb[0].mxu0 %v6301
      %v6632 = vpop.f32.mrb[0].mxu0
      %v6633 = vadd.f32 0.0, %v6632
      %v6634 = vpop.f32.mrb[0].mxu0
      %v6635 = vpop.f32.mrb[0].mxu0
      %v6636 = vadd.f32 0.0, %v6635
      %v6637 = vpop.f32.mrb[0].mxu0
      %6638 = vmatprep.mubr.bf16.mxu0 %v6304
      %6639 = vmatmul.mubr.bf16.gmra.mrb[0].mxu0 %v6303
      %v6640 = vpop.f32.mrb[0].mxu0
      %v6641 = vadd.f32 0.0, %v6640
      %v6642 = vpop.f32.mrb[0].mxu0
      %v6643 = vpop.f32.mrb[0].mxu0
      %v6644 = vadd.f32 0.0, %v6643
      %v6645 = vpop.f32.mrb[0].mxu0
      %6646 = vmatprep.mubr.bf16.mxu0 %v6306
      %6647 = vmatmul.mubr.bf16.gmra.mrb[0].mxu0 %v6305
      %v6648 = vpop.f32.mrb[0].mxu0
      %v6649 = vadd.f32 0.0, %v6648
      %v6650 = vpop.f32.mrb[0].mxu0
      %v6651 = vpop.f32.mrb[0].mxu0
      %v6652 = vadd.f32 0.0, %v6651
      %v6653 = vpop.f32.mrb[0].mxu0
      %6654 = vmatprep.mubr.bf16.mxu0 %v6308
      %6655 = vmatmul.mubr.bf16.gmra.mrb[0].mxu0 %v6307
      %v6656 = vpop.f32.mrb[0].mxu0
      %v6657 = vadd.f32 0.0, %v6656
      %v6658 = vpop.f32.mrb[0].mxu0
      %v6659 = vpop.f32.mrb[0].mxu0
      %v6660 = vadd.f32 0.0, %v6659
      %v6661 = vpop.f32.mrb[0].mxu0
      %6662 = vmatprep.mubr.bf16.mxu0 %v6310
      %6663 = vmatmul.mubr.bf16.gmra.mrb[0].mxu0 %v6309
      %v6664 = vpop.f32.mrb[0].mxu0
      %v6665 = vadd.f32 0.0, %v6664
      %v6666 = vpop.f32.mrb[0].mxu0
      %v6667 = vpop.f32.mrb[0].mxu0
      %v6668 = vadd.f32 0.0, %v6667
      %v6669 = vpop.f32.mrb[0].mxu0
      %6670 = vmatprep.mubr.bf16.mxu0 %v6312
      %6671 = vmatmul.mubr.bf16.gmra.mrb[0].mxu0 %v6311
      %v6672 = vpop.f32.mrb[0].mxu0
      %v6673 = vadd.f32 0.0, %v6672
      %v6674 = vpop.f32.mrb[0].mxu0
      %v6675 = vpop.f32.mrb[0].mxu0
      %v6676 = vadd.f32 0.0, %v6675
      %v6677 = vpop.f32.mrb[0].mxu0
      %6678 = vmatprep.mubr.bf16.mxu0 %v6314
      %6679 = vmatmul.mubr.bf16.gmra.mrb[0].mxu0 %v6313
      %v6680 = vpop.f32.mrb[0].mxu0
      %v6681 = vadd.f32 0.0, %v6680
      %v6682 = vpop.f32.mrb[0].mxu0
      %v6683 = vpop.f32.mrb[0].mxu0
      %v6684 = vadd.f32 0.0, %v6683
      %v6685 = vpop.f32.mrb[0].mxu0
      %6686 = vmatprep.mubr.bf16.mxu0 %v6316
      %6687 = vmatmul.mubr.bf16.gmra.mrb[0].mxu0 %v6315
      %v6688 = vpop.f32.mrb[0].mxu0
      %v6689 = vadd.f32 0.0, %v6688
      %v6690 = vpop.f32.mrb[0].mxu0
      %v6691 = vpop.f32.mrb[0].mxu0
      %v6692 = vadd.f32 0.0, %v6691
      %v6693 = vpop.f32.mrb[0].mxu0
      %6694 = vmatprep.mubr.bf16.mxu0 %v6318
      %6695 = vmatmul.mubr.bf16.gmra.mrb[0].mxu0 %v6317
      %v6696 = vpop.f32.mrb[0].mxu0
      %v6697 = vadd.f32 0.0, %v6696
      %v6698 = vpop.f32.mrb[0].mxu0
      %v6699 = vpop.f32.mrb[0].mxu0
      %v6700 = vadd.f32 0.0, %v6699
      %v6701 = vpop.f32.mrb[0].mxu0
      %6702 = vmatprep.mubr.bf16.mxu0 %v6320
      %6703 = vmatmul.mubr.bf16.gmra.mrb[0].mxu0 %v6319
      %v6704 = vpop.f32.mrb[0].mxu0
      %v6705 = vadd.f32 0.0, %v6704
      %v6706 = vpop.f32.mrb[0].mxu0
      %v6707 = vpop.f32.mrb[0].mxu0
      %v6708 = vadd.f32 0.0, %v6707
      %v6709 = vpop.f32.mrb[0].mxu0
      %6710 = vmatprep.mubr.bf16.mxu0 %v6322
      %6711 = vmatmul.mubr.bf16.gmra.mrb[0].mxu0 %v6321
      %v6712 = vpop.f32.mrb[0].mxu0
      %v6713 = vadd.f32 0.0, %v6712
      %v6714 = vpop.f32.mrb[0].mxu0
      %v6715 = vpop.f32.mrb[0].mxu0
      %v6716 = vadd.f32 0.0, %v6715
      %v6717 = vpop.f32.mrb[0].mxu0
      %6718 = vmatprep.mubr.bf16.mxu0 %v6324
      %6719 = vmatmul.mubr.bf16.gmra.mrb[0].mxu0 %v6323
      %v6720 = vpop.f32.mrb[0].mxu0
      %v6721 = vadd.f32 0.0, %v6720
      %v6722 = vpop.f32.mrb[0].mxu0
      %v6723 = vpop.f32.mrb[0].mxu0
      %v6724 = vadd.f32 0.0, %v6723
      %v6725 = vpop.f32.mrb[0].mxu0
      %6726 = vmatprep.mubr.bf16.mxu0 %v6326
      %6727 = vmatmul.mubr.bf16.gmra.mrb[0].mxu0 %v6325
      %v6728 = vpop.f32.mrb[0].mxu0
      %v6729 = vadd.f32 0.0, %v6728
      %v6730 = vpop.f32.mrb[0].mxu0
      %v6731 = vpop.f32.mrb[0].mxu0
      %v6732 = vadd.f32 0.0, %v6731
      %v6733 = vpop.f32.mrb[0].mxu0
      %6734 = vmatprep.mubr.bf16.mxu0 %v6328
      %6735 = vmatmul.mubr.bf16.gmra.mrb[0].mxu0 %v6327
      %v6736 = vpop.f32.mrb[0].mxu0
      %v6737 = vadd.f32 0.0, %v6736
      %v6738 = vpop.f32.mrb[0].mxu0
      %v6739 = vpop.f32.mrb[0].mxu0
      %v6740 = vadd.f32 0.0, %v6739
      %v6741 = vpop.f32.mrb[0].mxu0
      %6742 = vmatprep.mubr.bf16.mxu0 %v6330
      %6743 = vmatmul.mubr.bf16.gmra.mrb[0].mxu0 %v6329
      %v6744 = vpop.f32.mrb[0].mxu0
      %v6745 = vadd.f32 0.0, %v6744
      %v6746 = vpop.f32.mrb[0].mxu0
      %v6747 = vpop.f32.mrb[0].mxu0
      %v6748 = vadd.f32 0.0, %v6747
      %v6749 = vpop.f32.mrb[0].mxu0
      %6750 = vmatprep.mubr.bf16.mxu0 %v6332
      %6751 = vmatmul.mubr.bf16.gmra.mrb[0].mxu0 %v6331
      %v6752 = vpop.f32.mrb[0].mxu0
      %v6753 = vadd.f32 0.0, %v6752
      %v6754 = vpop.f32.mrb[0].mxu0
      %v6755 = vpop.f32.mrb[0].mxu0
      %v6756 = vadd.f32 0.0, %v6755
      %v6757 = vpop.f32.mrb[0].mxu0
      %6758 = vmatprep.mubr.bf16.mxu0 %v6334
      %6759 = vmatmul.mubr.bf16.gmra.mrb[0].mxu0 %v6333
      %v6760 = vpop.f32.mrb[0].mxu0
      %v6761 = vadd.f32 0.0, %v6760
      %v6762 = vpop.f32.mrb[0].mxu0
      %v6763 = vpop.f32.mrb[0].mxu0
      %v6764 = vadd.f32 0.0, %v6763
      %v6765 = vpop.f32.mrb[0].mxu0
      %6766 = vmatprep.mubr.bf16.mxu0 %v6336
      %6767 = vmatmul.mubr.bf16.gmra.mrb[0].mxu0 %v6335
      %v6768 = vpop.f32.mrb[0].mxu0
      %v6769 = vadd.f32 0.0, %v6768
      %v6770 = vpop.f32.mrb[0].mxu0
      %v6771 = vpop.f32.mrb[0].mxu0
      %v6772 = vadd.f32 0.0, %v6771
      %v6773 = vpop.f32.mrb[0].mxu0
      %6774 = vmatprep.mubr.bf16.mxu0 %v6338
      %6775 = vmatmul.mubr.bf16.gmra.mrb[0].mxu0 %v6337
      %v6776 = vpop.f32.mrb[0].mxu0
      %v6777 = vadd.f32 0.0, %v6776
      %v6778 = vpop.f32.mrb[0].mxu0
      %v6779 = vpop.f32.mrb[0].mxu0
      %v6780 = vadd.f32 0.0, %v6779
      %v6781 = vpop.f32.mrb[0].mxu0
      %6782 = vmatprep.mubr.bf16.mxu0 %v6340
      %6783 = vmatmul.mubr.bf16.gmra.mrb[0].mxu0 %v6339
      %v6784 = vpop.f32.mrb[0].mxu0
      %v6785 = vadd.f32 0.0, %v6784
      %v6786 = vpop.f32.mrb[0].mxu0
      %v6787 = vpop.f32.mrb[0].mxu0
      %v6788 = vadd.f32 0.0, %v6787
      %v6789 = vpop.f32.mrb[0].mxu0
      %6790 = vmatprep.mubr.bf16.mxu0 %v6342
      %6791 = vmatmul.mubr.bf16.gmra.mrb[0].mxu0 %v6341
      %v6792 = vpop.f32.mrb[0].mxu0
      %v6793 = vadd.f32 0.0, %v6792
      %v6794 = vpop.f32.mrb[0].mxu0
      %v6795 = vpop.f32.mrb[0].mxu0
      %v6796 = vadd.f32 0.0, %v6795
      %v6797 = vpop.f32.mrb[0].mxu0
      %6798 = vmatprep.mubr.bf16.mxu0 %v6344
      %6799 = vmatmul.mubr.bf16.gmra.mrb[0].mxu0 %v6343
      %v6800 = vpop.f32.mrb[0].mxu0
      %v6801 = vadd.f32 0.0, %v6800
      %v6802 = vpop.f32.mrb[0].mxu0
      %v6803 = vpop.f32.mrb[0].mxu0
      %v6804 = vadd.f32 0.0, %v6803
      %v6805 = vpop.f32.mrb[0].mxu0
      %6806 = vmatprep.mubr.bf16.mxu0 %v6346
      %6807 = vmatmul.mubr.bf16.gmra.mrb[0].mxu0 %v6345
      %v6808 = vpop.f32.mrb[0].mxu0
      %v6809 = vadd.f32 0.0, %v6808
      %v6810 = vpop.f32.mrb[0].mxu0
      %v6811 = vpop.f32.mrb[0].mxu0
      %v6812 = vadd.f32 0.0, %v6811
      %v6813 = vpop.f32.mrb[0].mxu0
      %6814 = vmatprep.mubr.bf16.mxu0 %v6348
      %6815 = vmatmul.mubr.bf16.gmra.mrb[0].mxu0 %v6347
      %v6816 = vpop.f32.mrb[0].mxu0
      %v6817 = vadd.f32 0.0, %v6816
      %v6818 = vpop.f32.mrb[0].mxu0
      %v6819 = vpop.f32.mrb[0].mxu0
      %v6820 = vadd.f32 0.0, %v6819
      %v6821 = vpop.f32.mrb[0].mxu0
      %6822 = vmatprep.mubr.bf16.mxu0 %v6350
      %6823 = vmatmul.mubr.bf16.gmra.mrb[0].mxu0 %v6349
      %v6824 = vpop.f32.mrb[0].mxu0
      %v6825 = vadd.f32 0.0, %v6824
      %v6826 = vpop.f32.mrb[0].mxu0
      %v6827 = vpop.f32.mrb[0].mxu0
      %v6828 = vadd.f32 0.0, %v6827
      %v6829 = vpop.f32.mrb[0].mxu0
      %6830 = vmatprep.mubr.bf16.mxu0 %v6352
      %6831 = vmatmul.mubr.bf16.gmra.mrb[0].mxu0 %v6351
      %v6832 = vpop.f32.mrb[0].mxu0
      %v6833 = vadd.f32 0.0, %v6832
      %v6834 = vpop.f32.mrb[0].mxu0
      %v6835 = vpop.f32.mrb[0].mxu0
      %v6836 = vadd.f32 0.0, %v6835
      %v6837 = vpop.f32.mrb[0].mxu0
      %6838 = vmatprep.mubr.bf16.mxu0 %v6354
      %6839 = vmatmul.mubr.bf16.gmra.mrb[0].mxu0 %v6353
      %v6840 = vpop.f32.mrb[0].mxu0
      %v6841 = vadd.f32 0.0, %v6840
      %v6842 = vpop.f32.mrb[0].mxu0
      %v6843 = vpop.f32.mrb[0].mxu0
      %v6844 = vadd.f32 0.0, %v6843
      %v6845 = vpop.f32.mrb[0].mxu0
      %6846 = vmatprep.mubr.bf16.mxu0 %v6356
      %6847 = vmatmul.mubr.bf16.gmra.mrb[0].mxu0 %v6355
      %v6848 = vpop.f32.mrb[0].mxu0
      %v6849 = vadd.f32 0.0, %v6848
      %v6850 = vpop.f32.mrb[0].mxu0
      %v6851 = vpop.f32.mrb[0].mxu0
      %v6852 = vadd.f32 0.0, %v6851
      %v6853 = vpop.f32.mrb[0].mxu0
      %6854 = vmatprep.mubr.bf16.mxu0 %v6358
      %6855 = vmatmul.mubr.bf16.gmra.mrb[0].mxu0 %v6357
      %v6856 = vpop.f32.mrb[0].mxu0
      %v6857 = vadd.f32 0.0, %v6856
      %v6858 = vpop.f32.mrb[0].mxu0
      %v6859 = vpop.f32.mrb[0].mxu0
      %v6860 = vadd.f32 0.0, %v6859
      %v6861 = vpop.f32.mrb[0].mxu0
      %6862 = vmatprep.mubr.bf16.mxu0 %v6360
      %6863 = vmatmul.mubr.bf16.gmra.mrb[0].mxu0 %v6359
      %v6864 = vpop.f32.mrb[0].mxu0
      %v6865 = vadd.f32 0.0, %v6864
      %v6866 = vpop.f32.mrb[0].mxu0
      %v6867 = vpop.f32.mrb[0].mxu0
      %v6868 = vadd.f32 0.0, %v6867
      %v6869 = vpop.f32.mrb[0].mxu0
      %6870 = vmatprep.mubr.bf16.mxu0 %v6362
      %6871 = vmatmul.mubr.bf16.gmra.mrb[0].mxu0 %v6361
      %v6872 = vpop.f32.mrb[0].mxu0
      %v6873 = vadd.f32 0.0, %v6872
      %v6874 = vpop.f32.mrb[0].mxu0
      %v6875 = vpop.f32.mrb[0].mxu0
      %v6876 = vadd.f32 0.0, %v6875
      %v6877 = vpop.f32.mrb[0].mxu0
      %6878 = vmatprep.mubr.bf16.mxu0 %v6364
      %6879 = vmatmul.mubr.bf16.gmra.mrb[0].mxu0 %v6363
      %v6880 = vpop.f32.mrb[0].mxu0
      %v6881 = vadd.f32 0.0, %v6880
      %v6882 = vpop.f32.mrb[0].mxu0
      %v6883 = vpop.f32.mrb[0].mxu0
      %v6884 = vadd.f32 0.0, %v6883
      %v6885 = vpop.f32.mrb[0].mxu0
      %6886 = vmatprep.mubr.bf16.mxu0 %v6366
      %6887 = vmatmul.mubr.bf16.gmra.mrb[0].mxu0 %v6365
      %v6888 = vpop.f32.mrb[0].mxu0
      %v6889 = vadd.f32 0.0, %v6888
      %v6890 = vpop.f32.mrb[0].mxu0
      %v6891 = vpop.f32.mrb[0].mxu0
      %v6892 = vadd.f32 0.0, %v6891
      %v6893 = vpop.f32.mrb[0].mxu0
      %6894 = vmatprep.mubr.bf16.mxu0 %v6368
      %6895 = vmatmul.mubr.bf16.gmra.mrb[0].mxu0 %v6367
      %v6896 = vpop.f32.mrb[0].mxu0
      %v6897 = vadd.f32 0.0, %v6896
      %v6898 = vpop.f32.mrb[0].mxu0
      %v6899 = vpop.f32.mrb[0].mxu0
      %v6900 = vadd.f32 0.0, %v6899
      %v6901 = vpop.f32.mrb[0].mxu0
      %6902 = vmatprep.mubr.bf16.mxu0 %v6370
      %6903 = vmatmul.mubr.bf16.gmra.mrb[0].mxu0 %v6369
      %v6904 = vpop.f32.mrb[0].mxu0
      %v6905 = vadd.f32 0.0, %v6904
      %v6906 = vpop.f32.mrb[0].mxu0
      %v6907 = vpop.f32.mrb[0].mxu0
      %v6908 = vadd.f32 0.0, %v6907
      %v6909 = vpop.f32.mrb[0].mxu0
      %6910 = vmatprep.mubr.bf16.mxu0 %v6372
      %6911 = vmatmul.mubr.bf16.gmra.mrb[0].mxu0 %v6371
      %v6912 = vpop.f32.mrb[0].mxu0
      %v6913 = vadd.f32 0.0, %v6912
      %v6914 = vpop.f32.mrb[0].mxu0
      %v6915 = vpop.f32.mrb[0].mxu0
      %v6916 = vadd.f32 0.0, %v6915
      %v6917 = vpop.f32.mrb[0].mxu0
      %6918 = vmatprep.mubr.bf16.mxu0 %v6374
      %6919 = vmatmul.mubr.bf16.gmra.mrb[0].mxu0 %v6373
      %v6920 = vpop.f32.mrb[0].mxu0
      %v6921 = vadd.f32 0.0, %v6920
      %v6922 = vpop.f32.mrb[0].mxu0
      %v6923 = vpop.f32.mrb[0].mxu0
      %v6924 = vadd.f32 0.0, %v6923
      %v6925 = vpop.f32.mrb[0].mxu0
      %6926 = vmatprep.mubr.bf16.mxu0 %v6376
      %6927 = vmatmul.mubr.bf16.gmra.mrb[0].mxu0 %v6375
      %v6928 = vpop.f32.mrb[0].mxu0
      %v6929 = vadd.f32 0.0, %v6928
      %v6930 = vpop.f32.mrb[0].mxu0
      %v6931 = vpop.f32.mrb[0].mxu0
      %v6932 = vadd.f32 0.0, %v6931
      %v6933 = vpop.f32.mrb[0].mxu0
      %6934 = vmatprep.mubr.bf16.mxu0 %v6378
      %6935 = vmatmul.mubr.bf16.gmra.mrb[0].mxu0 %v6377
      %v6936 = vpop.f32.mrb[0].mxu0
      %v6937 = vadd.f32 0.0, %v6936
      %v6938 = vpop.f32.mrb[0].mxu0
      %v6939 = vpop.f32.mrb[0].mxu0
      %v6940 = vadd.f32 0.0, %v6939
      %v6941 = vpop.f32.mrb[0].mxu0
      %6942 = vmatprep.mubr.bf16.mxu0 %v6380
      %6943 = vmatmul.mubr.bf16.gmra.mrb[0].mxu0 %v6379
      %v6944 = vpop.f32.mrb[0].mxu0
      %v6945 = vadd.f32 0.0, %v6944
      %v6946 = vpop.f32.mrb[0].mxu0
      %v6947 = vpop.f32.mrb[0].mxu0
      %v6948 = vadd.f32 0.0, %v6947
      %v6949 = vpop.f32.mrb[0].mxu0
      %6950 = vmatprep.mubr.bf16.mxu0 %v6382
      %6951 = vmatmul.mubr.bf16.gmra.mrb[0].mxu0 %v6381
      %v6952 = vpop.f32.mrb[0].mxu0
      %v6953 = vadd.f32 0.0, %v6952
      %v6954 = vpop.f32.mrb[0].mxu0
      %v6955 = vpop.f32.mrb[0].mxu0
      %v6956 = vadd.f32 0.0, %v6955
      %v6957 = vpop.f32.mrb[0].mxu0
      %6958 = vmatprep.mubr.bf16.mxu0 %v6384
      %6959 = vmatmul.mubr.bf16.gmra.mrb[0].mxu0 %v6383
      %v6960 = vpop.f32.mrb[0].mxu0
      %v6961 = vadd.f32 0.0, %v6960
      %v6962 = vpop.f32.mrb[0].mxu0
      %v6963 = vpop.f32.mrb[0].mxu0
      %v6964 = vadd.f32 0.0, %v6963
      %v6965 = vpop.f32.mrb[0].mxu0
      %6966 = vmatprep.mubr.bf16.mxu0 %v6386
      %6967 = vmatmul.mubr.bf16.gmra.mrb[0].mxu0 %v6385
      %v6968 = vpop.f32.mrb[0].mxu0
      %v6969 = vadd.f32 0.0, %v6968
      %v6970 = vpop.f32.mrb[0].mxu0
      %v6971 = vpop.f32.mrb[0].mxu0
      %v6972 = vadd.f32 0.0, %v6971
      %v6973 = vpop.f32.mrb[0].mxu0
      %6974 = vmatprep.mubr.bf16.mxu0 %v6388
      %6975 = vmatmul.mubr.bf16.gmra.mrb[0].mxu0 %v6387
      %v6976 = vpop.f32.mrb[0].mxu0
      %v6977 = vadd.f32 0.0, %v6976
      %v6978 = vpop.f32.mrb[0].mxu0
      %v6979 = vpop.f32.mrb[0].mxu0
      %v6980 = vadd.f32 0.0, %v6979
      %v6981 = vpop.f32.mrb[0].mxu0
      %6982 = vmatprep.mubr.bf16.mxu0 %v6390
      %6983 = vmatmul.mubr.bf16.gmra.mrb[0].mxu0 %v6389
      %v6984 = vpop.f32.mrb[0].mxu0
      %v6985 = vadd.f32 0.0, %v6984
      %v6986 = vpop.f32.mrb[0].mxu0
      %v6987 = vpop.f32.mrb[0].mxu0
      %v6988 = vadd.f32 0.0, %v6987
      %v6989 = vpop.f32.mrb[0].mxu0
      %6990 = vmatprep.mubr.bf16.mxu0 %v6392
      %6991 = vmatmul.mubr.bf16.gmra.mrb[0].mxu0 %v6391
      %v6992 = vpop.f32.mrb[0].mxu0
      %v6993 = vadd.f32 0.0, %v6992
      %v6994 = vpop.f32.mrb[0].mxu0
      %v6995 = vpop.f32.mrb[0].mxu0
      %v6996 = vadd.f32 0.0, %v6995
      %v6997 = vpop.f32.mrb[0].mxu0
      %6998 = vmatprep.mubr.bf16.mxu0 %v6394
      %6999 = vmatmul.mubr.bf16.gmra.mrb[0].mxu0 %v6393
      %v7000 = vpop.f32.mrb[0].mxu0
      %v7001 = vadd.f32 0.0, %v7000
      %v7002 = vpop.f32.mrb[0].mxu0
      %v7003 = vpop.f32.mrb[0].mxu0
      %v7004 = vadd.f32 0.0, %v7003
      %v7005 = vpop.f32.mrb[0].mxu0
      %7006 = vmatprep.mubr.bf16.mxu0 %v6396
      %7007 = vmatmul.mubr.bf16.gmra.mrb[0].mxu0 %v6395
      %v7008 = vpop.f32.mrb[0].mxu0
      %v7009 = vadd.f32 0.0, %v7008
      %v7010 = vpop.f32.mrb[0].mxu0
      %v7011 = vpop.f32.mrb[0].mxu0
      %v7012 = vadd.f32 0.0, %v7011
      %v7013 = vpop.f32.mrb[0].mxu0
      %7014 = vmatprep.mubr.bf16.mxu0 %v6398
      %7015 = vmatmul.mubr.bf16.gmra.mrb[0].mxu0 %v6397
      %v7016 = vpop.f32.mrb[0].mxu0
      %v7017 = vadd.f32 0.0, %v7016
      %v7018 = vpop.f32.mrb[0].mxu0
      %v7019 = vpop.f32.mrb[0].mxu0
      %v7020 = vadd.f32 0.0, %v7019
      %v7021 = vpop.f32.mrb[0].mxu0
      %7022 = vmatprep.mubr.bf16.mxu0 %v6400
      %7023 = vmatmul.mubr.bf16.gmra.mrb[0].mxu0 %v6399
      %v7024 = vpop.f32.mrb[0].mxu0
      %v7025 = vadd.f32 0.0, %v7024
      %v7026 = vpop.f32.mrb[0].mxu0
      %v7027 = vpop.f32.mrb[0].mxu0
      %v7028 = vadd.f32 0.0, %v7027
      %v7029 = vpop.f32.mrb[0].mxu0
      %7030 = vmatprep.mubr.bf16.mxu0 %v6402
      %7031 = vmatmul.mubr.bf16.gmra.mrb[0].mxu0 %v6401
      %v7032 = vpop.f32.mrb[0].mxu0
      %v7033 = vadd.f32 0.0, %v7032
      %v7034 = vpop.f32.mrb[0].mxu0
      %v7035 = vpop.f32.mrb[0].mxu0
      %v7036 = vadd.f32 0.0, %v7035
      %v7037 = vpop.f32.mrb[0].mxu0
      %7038 = vmatprep.mubr.bf16.mxu0 %v6404
      %7039 = vmatmul.mubr.bf16.gmra.mrb[0].mxu0 %v6403
      %v7040 = vpop.f32.mrb[0].mxu0
      %v7041 = vadd.f32 0.0, %v7040
      %v7042 = vpop.f32.mrb[0].mxu0
      %v7043 = vpop.f32.mrb[0].mxu0
      %v7044 = vadd.f32 0.0, %v7043
      %v7045 = vpop.f32.mrb[0].mxu0
      %7046 = vmatprep.mubr.bf16.mxu0 %v6406
      %7047 = vmatmul.mubr.bf16.gmra.mrb[0].mxu0 %v6405
      %v7048 = vpop.f32.mrb[0].mxu0
      %v7049 = vadd.f32 0.0, %v7048
      %v7050 = vpop.f32.mrb[0].mxu0
      %v7051 = vpop.f32.mrb[0].mxu0
      %v7052 = vadd.f32 0.0, %v7051
      %v7053 = vpop.f32.mrb[0].mxu0
      %7054 = vmatprep.mubr.bf16.mxu0 %v6408
      %7055 = vmatmul.mubr.bf16.gmra.mrb[0].mxu0 %v6407
      %v7056 = vpop.f32.mrb[0].mxu0
      %v7057 = vadd.f32 0.0, %v7056
      %v7058 = vpop.f32.mrb[0].mxu0
      %v7059 = vpop.f32.mrb[0].mxu0
      %v7060 = vadd.f32 0.0, %v7059
      %v7061 = vpop.f32.mrb[0].mxu0
      %7062 = vmatprep.mubr.bf16.mxu0 %v6410
      %7063 = vmatmul.mubr.bf16.gmra.mrb[0].mxu0 %v6409
      %v7064 = vpop.f32.mrb[0].mxu0
      %v7065 = vadd.f32 0.0, %v7064
      %v7066 = vpop.f32.mrb[0].mxu0
      %v7067 = vpop.f32.mrb[0].mxu0
      %v7068 = vadd.f32 0.0, %v7067
      %v7069 = vpop.f32.mrb[0].mxu0
      %7070 = vmatprep.mubr.bf16.mxu0 %v6412
      %7071 = vmatmul.mubr.bf16.gmra.mrb[0].mxu0 %v6411
      %v7072 = vpop.f32.mrb[0].mxu0
      %v7073 = vadd.f32 0.0, %v7072
      %v7074 = vpop.f32.mrb[0].mxu0
      %v7075 = vpop.f32.mrb[0].mxu0
      %v7076 = vadd.f32 0.0, %v7075
      %v7077 = vpop.f32.mrb[0].mxu0
      %7078 = vmatprep.mubr.bf16.mxu0 %v6414
      %7079 = vmatmul.mubr.bf16.gmra.mrb[0].mxu0 %v6413
      %v7080 = vpop.f32.mrb[0].mxu0
      %v7081 = vadd.f32 0.0, %v7080
      %v7082 = vpop.f32.mrb[0].mxu0
      %v7083 = vpop.f32.mrb[0].mxu0
      %v7084 = vadd.f32 0.0, %v7083
      %v7085 = vpop.f32.mrb[0].mxu0
      %7086 = vmatprep.mubr.bf16.mxu0 %v6416
      %7087 = vmatmul.mubr.bf16.gmra.mrb[0].mxu0 %v6415
      %v7088 = vpop.f32.mrb[0].mxu0
      %v7089 = vadd.f32 0.0, %v7088
      %v7090 = vpop.f32.mrb[0].mxu0
      %v7091 = vpop.f32.mrb[0].mxu0
      %v7092 = vadd.f32 0.0, %v7091
      %v7093 = vpop.f32.mrb[0].mxu0
      %7094 = vmatprep.mubr.bf16.mxu0 %v6418
      %7095 = vmatmul.mubr.bf16.gmra.mrb[0].mxu0 %v6417
      %v7096 = vpop.f32.mrb[0].mxu0
      %v7097 = vadd.f32 0.0, %v7096
      %v7098 = vpop.f32.mrb[0].mxu0
      %v7099 = vpop.f32.mrb[0].mxu0
      %v7100 = vadd.f32 0.0, %v7099
      %v7101 = vpop.f32.mrb[0].mxu0
      %7102 = vmatprep.mubr.bf16.mxu0 %v6420
      %7103 = vmatmul.mubr.bf16.gmra.mrb[0].mxu0 %v6419
      %v7104 = vpop.f32.mrb[0].mxu0
      %v7105 = vadd.f32 0.0, %v7104
      %v7106 = vpop.f32.mrb[0].mxu0
      %v7107 = vpop.f32.mrb[0].mxu0
      %v7108 = vadd.f32 0.0, %v7107
      %v7109 = vpop.f32.mrb[0].mxu0
      %7110 = vmatprep.mubr.bf16.mxu0 %v6422
      %7111 = vmatmul.mubr.bf16.gmra.mrb[0].mxu0 %v6421
      %v7112 = vpop.f32.mrb[0].mxu0
      %v7113 = vadd.f32 0.0, %v7112
      %v7114 = vpop.f32.mrb[0].mxu0
      %v7115 = vpop.f32.mrb[0].mxu0
      %v7116 = vadd.f32 0.0, %v7115
      %v7117 = vpop.f32.mrb[0].mxu0
      %7118 = vmatprep.mubr.bf16.mxu0 %v6424
      %7119 = vmatmul.mubr.bf16.gmra.mrb[0].mxu0 %v6423
      %v7120 = vpop.f32.mrb[0].mxu0
      %v7121 = vadd.f32 0.0, %v7120
      %v7122 = vpop.f32.mrb[0].mxu0
      %v7123 = vpop.f32.mrb[0].mxu0
      %v7124 = vadd.f32 0.0, %v7123
      %v7125 = vpop.f32.mrb[0].mxu0
      %7126 = vmatprep.mubr.bf16.mxu0 %v6426
      %7127 = vmatmul.mubr.bf16.gmra.mrb[0].mxu0 %v6425
      %v7128 = vpop.f32.mrb[0].mxu0
      %v7129 = vadd.f32 0.0, %v7128
      %v7130 = vpop.f32.mrb[0].mxu0
      %v7131 = vpop.f32.mrb[0].mxu0
      %v7132 = vadd.f32 0.0, %v7131
      %v7133 = vpop.f32.mrb[0].mxu0
      %7134 = vmatprep.mubr.bf16.mxu0 %v6428
      %7135 = vmatmul.mubr.bf16.gmra.mrb[0].mxu0 %v6427
      %v7136 = vpop.f32.mrb[0].mxu0
      %v7137 = vadd.f32 0.0, %v7136
      %v7138 = vpop.f32.mrb[0].mxu0
      %v7139 = vpop.f32.mrb[0].mxu0
      %v7140 = vadd.f32 0.0, %v7139
      %v7141 = vpop.f32.mrb[0].mxu0
      %7142 = vmatprep.mubr.bf16.mxu0 %v6430
      %7143 = vmatmul.mubr.bf16.gmra.mrb[0].mxu0 %v6429
      %v7144 = vpop.f32.mrb[0].mxu0
      %v7145 = vadd.f32 0.0, %v7144
      %v7146 = vpop.f32.mrb[0].mxu0
      %v7147 = vpop.f32.mrb[0].mxu0
      %v7148 = vadd.f32 0.0, %v7147
      %v7149 = vpop.f32.mrb[0].mxu0
      %7150 = vmatprep.mubr.bf16.mxu0 %v6432
      %7151 = vmatmul.mubr.bf16.gmra.mrb[0].mxu0 %v6431
      %v7152 = vpop.f32.mrb[0].mxu0
      %v7153 = vadd.f32 0.0, %v7152
      %v7154 = vpop.f32.mrb[0].mxu0
      %v7155 = vpop.f32.mrb[0].mxu0
      %v7156 = vadd.f32 0.0, %v7155
      %v7157 = vpop.f32.mrb[0].mxu0
      %7158 = vmatprep.mubr.bf16.mxu0 %v6434
      %7159 = vmatmul.mubr.bf16.gmra.mrb[0].mxu0 %v6433
      %v7160 = vpop.f32.mrb[0].mxu0
      %v7161 = vadd.f32 0.0, %v7160
      %v7162 = vpop.f32.mrb[0].mxu0
      %v7163 = vpop.f32.mrb[0].mxu0
      %v7164 = vadd.f32 0.0, %v7163
      %v7165 = vpop.f32.mrb[0].mxu0
      %7166 = vmatprep.mubr.bf16.mxu0 %v6436
      %7167 = vmatmul.mubr.bf16.gmra.mrb[0].mxu0 %v6435
      %v7168 = vpop.f32.mrb[0].mxu0
      %v7169 = vadd.f32 0.0, %v7168
      %v7170 = vpop.f32.mrb[0].mxu0
      %v7171 = vpop.f32.mrb[0].mxu0
      %v7172 = vadd.f32 0.0, %v7171
      %v7173 = vpop.f32.mrb[0].mxu0
      %7174 = vmatprep.mubr.bf16.mxu0 %v6438
      %7175 = vmatmul.mubr.bf16.gmra.mrb[0].mxu0 %v6437
      %v7176 = vpop.f32.mrb[0].mxu0
      %v7177 = vadd.f32 0.0, %v7176
      %v7178 = vpop.f32.mrb[0].mxu0
      %v7179 = vpop.f32.mrb[0].mxu0
      %v7180 = vadd.f32 0.0, %v7179
      %v7181 = vpop.f32.mrb[0].mxu0
      %7182 = vmatprep.mubr.bf16.mxu0 %v6440
      %7183 = vmatmul.mubr.bf16.gmra.mrb[0].mxu0 %v6439
      %v7184 = vpop.f32.mrb[0].mxu0
      %v7185 = vadd.f32 0.0, %v7184
      %v7186 = vpop.f32.mrb[0].mxu0
      %v7187 = vpop.f32.mrb[0].mxu0
      %v7188 = vadd.f32 0.0, %v7187
      %v7189 = vpop.f32.mrb[0].mxu0
      %7190 = vmatprep.mubr.bf16.mxu0 %v6442
      %7191 = vmatmul.mubr.bf16.gmra.mrb[0].mxu0 %v6441
      %v7192 = vpop.f32.mrb[0].mxu0
      %v7193 = vadd.f32 0.0, %v7192
      %v7194 = vpop.f32.mrb[0].mxu0
      %v7195 = vpop.f32.mrb[0].mxu0
      %v7196 = vadd.f32 0.0, %v7195
      %v7197 = vpop.f32.mrb[0].mxu0
      %7198 = vmatprep.mubr.bf16.mxu0 %v6444
      %7199 = vmatmul.mubr.bf16.gmra.mrb[0].mxu0 %v6443
      %v7200 = vpop.f32.mrb[0].mxu0
      %v7201 = vadd.f32 0.0, %v7200
      %v7202 = vpop.f32.mrb[0].mxu0
      %v7203 = vpop.f32.mrb[0].mxu0
      %v7204 = vadd.f32 0.0, %v7203
      %v7205 = vpop.f32.mrb[0].mxu0
      %7206 = vmatprep.mubr.bf16.mxu0 %v6446
      %7207 = vmatmul.mubr.bf16.gmra.mrb[0].mxu0 %v6445
      %v7208 = vpop.f32.mrb[0].mxu0
      %v7209 = vadd.f32 0.0, %v7208
      %v7210 = vpop.f32.mrb[0].mxu0
      %v7211 = vpop.f32.mrb[0].mxu0
      %v7212 = vadd.f32 0.0, %v7211
      %v7213 = vpop.f32.mrb[0].mxu0
      %7214 = vmatprep.mubr.bf16.mxu0 %v6448
      %7215 = vmatmul.mubr.bf16.gmra.mrb[0].mxu0 %v6447
      %v7216 = vpop.f32.mrb[0].mxu0
      %v7217 = vadd.f32 0.0, %v7216
      %v7218 = vpop.f32.mrb[0].mxu0
      %v7219 = vpop.f32.mrb[0].mxu0
      %v7220 = vadd.f32 0.0, %v7219
      %v7221 = vpop.f32.mrb[0].mxu0
      %7222 = vmatprep.mubr.bf16.mxu0 %v6450
      %7223 = vmatmul.mubr.bf16.gmra.mrb[0].mxu0 %v6449
      %v7224 = vpop.f32.mrb[0].mxu0
      %v7225 = vadd.f32 0.0, %v7224
      %v7226 = vpop.f32.mrb[0].mxu0
      %v7227 = vpop.f32.mrb[0].mxu0
      %v7228 = vadd.f32 0.0, %v7227
      %v7229 = vpop.f32.mrb[0].mxu0
      %7230 = vmatprep.mubr.bf16.mxu0 %v6452
      %7231 = vmatmul.mubr.bf16.gmra.mrb[0].mxu0 %v6451
      %v7232 = vpop.f32.mrb[0].mxu0
      %v7233 = vadd.f32 0.0, %v7232
      %v7234 = vpop.f32.mrb[0].mxu0
      %v7235 = vpop.f32.mrb[0].mxu0
      %v7236 = vadd.f32 0.0, %v7235
      %v7237 = vpop.f32.mrb[0].mxu0
      %7238 = vmatprep.mubr.bf16.mxu0 %v6454
      %7239 = vmatmul.mubr.bf16.gmra.mrb[0].mxu0 %v6453
      %v7240 = vpop.f32.mrb[0].mxu0
      %v7241 = vadd.f32 0.0, %v7240
      %v7242 = vpop.f32.mrb[0].mxu0
      %v7243 = vpop.f32.mrb[0].mxu0
      %v7244 = vadd.f32 0.0, %v7243
      %v7245 = vpop.f32.mrb[0].mxu0
      %7246 = vmatprep.mubr.bf16.mxu0 %v6456
      %7247 = vmatmul.mubr.bf16.gmra.mrb[0].mxu0 %v6455
      %v7248 = vpop.f32.mrb[0].mxu0
      %v7249 = vadd.f32 0.0, %v7248
      %v7250 = vpop.f32.mrb[0].mxu0
      %v7251 = vpop.f32.mrb[0].mxu0
      %v7252 = vadd.f32 0.0, %v7251
      %v7253 = vpop.f32.mrb[0].mxu0
      %7254 = vmatprep.mubr.bf16.mxu0 %v6458
      %7255 = vmatmul.mubr.bf16.gmra.mrb[0].mxu0 %v6457
      %v7256 = vpop.f32.mrb[0].mxu0
      %v7257 = vadd.f32 0.0, %v7256
      %v7258 = vpop.f32.mrb[0].mxu0
      %v7259 = vpop.f32.mrb[0].mxu0
      %v7260 = vadd.f32 0.0, %v7259
      %v7261 = vpop.f32.mrb[0].mxu0
      %7262 = vmatprep.mubr.bf16.mxu0 %v6460
      %7263 = vmatmul.mubr.bf16.gmra.mrb[0].mxu0 %v6459
      %v7264 = vpop.f32.mrb[0].mxu0
      %v7265 = vadd.f32 0.0, %v7264
      %v7266 = vpop.f32.mrb[0].mxu0
      %v7267 = vpop.f32.mrb[0].mxu0
      %v7268 = vadd.f32 0.0, %v7267
      %v7269 = vpop.f32.mrb[0].mxu0
      %7270 = vdwg.mxu0
      %v7271 = vpack.c.bf16 %v6628, %v6625
      %v7272 = vpack.c.bf16 %v6636, %v6633
      %v7273 = vpack.c.bf16 %v6644, %v6641
      %v7274 = vpack.c.bf16 %v6652, %v6649
      %v7275 = vpack.c.bf16 %v6660, %v6657
      %v7276 = vpack.c.bf16 %v6668, %v6665
      %v7277 = vpack.c.bf16 %v6676, %v6673
      %v7278 = vpack.c.bf16 %v6684, %v6681
      %v7279 = vpack.c.bf16 %v6692, %v6689
      %v7280 = vpack.c.bf16 %v6700, %v6697
      %v7281 = vpack.c.bf16 %v6708, %v6705
      %v7282 = vpack.c.bf16 %v6716, %v6713
      %v7283 = vpack.c.bf16 %v6724, %v6721
      %v7284 = vpack.c.bf16 %v6732, %v6729
      %v7285 = vpack.c.bf16 %v6740, %v6737
      %v7286 = vpack.c.bf16 %v6748, %v6745
      %v7287 = vpack.c.bf16 %v6756, %v6753
      %v7288 = vpack.c.bf16 %v6764, %v6761
      %v7289 = vpack.c.bf16 %v6772, %v6769
      %v7290 = vpack.c.bf16 %v6780, %v6777
      %v7291 = vpack.c.bf16 %v6788, %v6785
      %v7292 = vpack.c.bf16 %v6796, %v6793
      %v7293 = vpack.c.bf16 %v6804, %v6801
      %v7294 = vpack.c.bf16 %v6812, %v6809
      %v7295 = vpack.c.bf16 %v6820, %v6817
      %v7296 = vpack.c.bf16 %v6828, %v6825
      %v7297 = vpack.c.bf16 %v6836, %v6833
      %v7298 = vpack.c.bf16 %v6844, %v6841
      %v7299 = vpack.c.bf16 %v6852, %v6849
      %v7300 = vpack.c.bf16 %v6860, %v6857
      %v7301 = vpack.c.bf16 %v6868, %v6865
      %v7302 = vpack.c.bf16 %v6876, %v6873
      %v7303 = vpack.c.bf16 %v6884, %v6881
      %v7304 = vpack.c.bf16 %v6892, %v6889
      %v7305 = vpack.c.bf16 %v6900, %v6897
      %v7306 = vpack.c.bf16 %v6908, %v6905
      %v7307 = vpack.c.bf16 %v6916, %v6913
      %v7308 = vpack.c.bf16 %v6924, %v6921
      %v7309 = vpack.c.bf16 %v6932, %v6929
      %v7310 = vpack.c.bf16 %v6940, %v6937
      %v7311 = vpack.c.bf16 %v6948, %v6945
      %v7312 = vpack.c.bf16 %v6956, %v6953
      %v7313 = vpack.c.bf16 %v6964, %v6961
      %v7314 = vpack.c.bf16 %v6972, %v6969
      %v7315 = vpack.c.bf16 %v6980, %v6977
      %v7316 = vpack.c.bf16 %v6988, %v6985
      %v7317 = vpack.c.bf16 %v6996, %v6993
      %v7318 = vpack.c.bf16 %v7004, %v7001
      %v7319 = vpack.c.bf16 %v7012, %v7009
      %v7320 = vpack.c.bf16 %v7020, %v7017
      %v7321 = vpack.c.bf16 %v7028, %v7025
      %v7322 = vpack.c.bf16 %v7036, %v7033
      %v7323 = vpack.c.bf16 %v7044, %v7041
      %v7324 = vpack.c.bf16 %v7052, %v7049
      %v7325 = vpack.c.bf16 %v7060, %v7057
      %v7326 = vpack.c.bf16 %v7068, %v7065
      %v7327 = vpack.c.bf16 %v7076, %v7073
      %v7328 = vpack.c.bf16 %v7084, %v7081
      %v7329 = vpack.c.bf16 %v7092, %v7089
      %v7330 = vpack.c.bf16 %v7100, %v7097
      %v7331 = vpack.c.bf16 %v7108, %v7105
      %v7332 = vpack.c.bf16 %v7116, %v7113
      %v7333 = vpack.c.bf16 %v7124, %v7121
      %v7334 = vpack.c.bf16 %v7132, %v7129
      %v7335 = vpack.c.bf16 %v7140, %v7137
      %v7336 = vpack.c.bf16 %v7148, %v7145
      %v7337 = vpack.c.bf16 %v7156, %v7153
      %v7338 = vpack.c.bf16 %v7164, %v7161
      %v7339 = vpack.c.bf16 %v7172, %v7169
      %v7340 = vpack.c.bf16 %v7180, %v7177
      %v7341 = vpack.c.bf16 %v7188, %v7185
      %v7342 = vpack.c.bf16 %v7196, %v7193
      %v7343 = vpack.c.bf16 %v7204, %v7201
      %v7344 = vpack.c.bf16 %v7212, %v7209
      %v7345 = vpack.c.bf16 %v7220, %v7217
      %v7346 = vpack.c.bf16 %v7228, %v7225
      %v7347 = vpack.c.bf16 %v7236, %v7233
      %v7348 = vpack.c.bf16 %v7244, %v7241
      %v7349 = vpack.c.bf16 %v7252, %v7249
      %v7350 = vpack.c.bf16 %v7260, %v7257
      %v7351 = vpack.c.bf16 %v7268, %v7265
      %v7353 = vpack.i.b16 %v6493, %v6493
      %v7355 = vlaneseq
      %v7356 = vshrl.u32 %v7355, 7
      %v7357 = vsub.s32 0, %v7356
      %v7358 = vrot.slane %v7353, %v7357
      %v7359 = vadd.bf16 %v7271, %v7358
      %v7360 = vadd.bf16 %v7272, %v7358
      %v7361 = vadd.bf16 %v7273, %v7358
      %v7362 = vadd.bf16 %v7274, %v7358
      %v7363 = vadd.bf16 %v7275, %v7358
      %v7364 = vadd.bf16 %v7276, %v7358
      %v7365 = vadd.bf16 %v7277, %v7358
      %v7366 = vadd.bf16 %v7278, %v7358
      %v7367 = vadd.bf16 %v7279, %v7358
      %v7368 = vadd.bf16 %v7280, %v7358
      %v7369 = vadd.bf16 %v7281, %v7358
      %v7370 = vadd.bf16 %v7282, %v7358
      %v7371 = vadd.bf16 %v7283, %v7358
      %v7372 = vadd.bf16 %v7284, %v7358
      %v7373 = vadd.bf16 %v7285, %v7358
      %v7374 = vadd.bf16 %v7286, %v7358
      %v7375 = vadd.bf16 %v7287, %v7358
      %v7376 = vadd.bf16 %v7288, %v7358
      %v7377 = vadd.bf16 %v7289, %v7358
      %v7378 = vadd.bf16 %v7290, %v7358
      %v7379 = vadd.bf16 %v7291, %v7358
      %v7380 = vadd.bf16 %v7292, %v7358
      %v7381 = vadd.bf16 %v7293, %v7358
      %v7382 = vadd.bf16 %v7294, %v7358
      %v7383 = vadd.bf16 %v7295, %v7358
      %v7384 = vadd.bf16 %v7296, %v7358
      %v7385 = vadd.bf16 %v7297, %v7358
      %v7386 = vadd.bf16 %v7298, %v7358
      %v7387 = vadd.bf16 %v7299, %v7358
      %v7388 = vadd.bf16 %v7300, %v7358
      %v7389 = vadd.bf16 %v7301, %v7358
      %v7390 = vadd.bf16 %v7302, %v7358
      %v7391 = vadd.bf16 %v7303, %v7358
      %v7392 = vadd.bf16 %v7304, %v7358
      %v7393 = vadd.bf16 %v7305, %v7358
      %v7394 = vadd.bf16 %v7306, %v7358
      %v7395 = vadd.bf16 %v7307, %v7358
      %v7396 = vadd.bf16 %v7308, %v7358
      %v7397 = vadd.bf16 %v7309, %v7358
      %v7398 = vadd.bf16 %v7310, %v7358
      %v7399 = vadd.bf16 %v7311, %v7358
      %v7400 = vadd.bf16 %v7312, %v7358
      %v7401 = vadd.bf16 %v7313, %v7358
      %v7402 = vadd.bf16 %v7314, %v7358
      %v7403 = vadd.bf16 %v7315, %v7358
      %v7404 = vadd.bf16 %v7316, %v7358
      %v7405 = vadd.bf16 %v7317, %v7358
      %v7406 = vadd.bf16 %v7318, %v7358
      %v7407 = vadd.bf16 %v7319, %v7358
      %v7408 = vadd.bf16 %v7320, %v7358
      %v7409 = vadd.bf16 %v7321, %v7358
      %v7410 = vadd.bf16 %v7322, %v7358
      %v7411 = vadd.bf16 %v7323, %v7358
      %v7412 = vadd.bf16 %v7324, %v7358
      %v7413 = vadd.bf16 %v7325, %v7358
      %v7414 = vadd.bf16 %v7326, %v7358
      %v7415 = vadd.bf16 %v7327, %v7358
      %v7416 = vadd.bf16 %v7328, %v7358
      %v7417 = vadd.bf16 %v7329, %v7358
      %v7418 = vadd.bf16 %v7330, %v7358
      %v7419 = vadd.bf16 %v7331, %v7358
      %v7420 = vadd.bf16 %v7332, %v7358
      %v7421 = vadd.bf16 %v7333, %v7358
      %v7422 = vadd.bf16 %v7334, %v7358
      %v7423 = vadd.bf16 %v7335, %v7358
      %v7424 = vadd.bf16 %v7336, %v7358
      %v7425 = vadd.bf16 %v7337, %v7358
      %v7426 = vadd.bf16 %v7338, %v7358
      %v7427 = vadd.bf16 %v7339, %v7358
      %v7428 = vadd.bf16 %v7340, %v7358
      %v7429 = vadd.bf16 %v7341, %v7358
      %v7430 = vadd.bf16 %v7342, %v7358
      %v7431 = vadd.bf16 %v7343, %v7358
      %v7432 = vadd.bf16 %v7344, %v7358
      %v7433 = vadd.bf16 %v7345, %v7358
      %v7434 = vadd.bf16 %v7346, %v7358
      %v7435 = vadd.bf16 %v7347, %v7358
      %v7436 = vadd.bf16 %v7348, %v7358
      %v7437 = vadd.bf16 %v7349, %v7358
      %v7438 = vadd.bf16 %v7350, %v7358
      %v7439 = vadd.bf16 %v7351, %v7358
      %v7440 = vmax.bf16 %v7359, 0
      %v7441 = vmax.bf16 %v7360, 0
      %v7442 = vmax.bf16 %v7361, 0
      %v7443 = vmax.bf16 %v7362, 0
      %v7444 = vmax.bf16 %v7363, 0
      %v7445 = vmax.bf16 %v7364, 0
      %v7446 = vmax.bf16 %v7365, 0
      %v7447 = vmax.bf16 %v7366, 0
      %v7448 = vmax.bf16 %v7367, 0
      %v7449 = vmax.bf16 %v7368, 0
      %v7450 = vmax.bf16 %v7369, 0
      %v7451 = vmax.bf16 %v7370, 0
      %v7452 = vmax.bf16 %v7371, 0
      %v7453 = vmax.bf16 %v7372, 0
      %v7454 = vmax.bf16 %v7373, 0
      %v7455 = vmax.bf16 %v7374, 0
      %v7456 = vmax.bf16 %v7375, 0
      %v7457 = vmax.bf16 %v7376, 0
      %v7458 = vmax.bf16 %v7377, 0
      %v7459 = vmax.bf16 %v7378, 0
      %v7460 = vmax.bf16 %v7379, 0
      %v7461 = vmax.bf16 %v7380, 0
      %v7462 = vmax.bf16 %v7381, 0
      %v7463 = vmax.bf16 %v7382, 0
      %v7464 = vmax.bf16 %v7383, 0
      %v7465 = vmax.bf16 %v7384, 0
      %v7466 = vmax.bf16 %v7385, 0
      %v7467 = vmax.bf16 %v7386, 0
      %v7468 = vmax.bf16 %v7387, 0
      %v7469 = vmax.bf16 %v7388, 0
      %v7470 = vmax.bf16 %v7389, 0
      %v7471 = vmax.bf16 %v7390, 0
      %v7472 = vmax.bf16 %v7391, 0
      %v7473 = vmax.bf16 %v7392, 0
      %v7474 = vmax.bf16 %v7393, 0
      %v7475 = vmax.bf16 %v7394, 0
      %v7476 = vmax.bf16 %v7395, 0
      %v7477 = vmax.bf16 %v7396, 0
      %v7478 = vmax.bf16 %v7397, 0
      %v7479 = vmax.bf16 %v7398, 0
      %v7480 = vmax.bf16 %v7399, 0
      %v7481 = vmax.bf16 %v7400, 0
      %v7482 = vmax.bf16 %v7401, 0
      %v7483 = vmax.bf16 %v7402, 0
      %v7484 = vmax.bf16 %v7403, 0
      %v7485 = vmax.bf16 %v7404, 0
      %v7486 = vmax.bf16 %v7405, 0
      %v7487 = vmax.bf16 %v7406, 0
      %v7488 = vmax.bf16 %v7407, 0
      %v7489 = vmax.bf16 %v7408, 0
      %v7490 = vmax.bf16 %v7409, 0
      %v7491 = vmax.bf16 %v7410, 0
      %v7492 = vmax.bf16 %v7411, 0
      %v7493 = vmax.bf16 %v7412, 0
      %v7494 = vmax.bf16 %v7413, 0
      %v7495 = vmax.bf16 %v7414, 0
      %v7496 = vmax.bf16 %v7415, 0
      %v7497 = vmax.bf16 %v7416, 0
      %v7498 = vmax.bf16 %v7417, 0
      %v7499 = vmax.bf16 %v7418, 0
      %v7500 = vmax.bf16 %v7419, 0
      %v7501 = vmax.bf16 %v7420, 0
      %v7502 = vmax.bf16 %v7421, 0
      %v7503 = vmax.bf16 %v7422, 0
      %v7504 = vmax.bf16 %v7423, 0
      %v7505 = vmax.bf16 %v7424, 0
      %v7506 = vmax.bf16 %v7425, 0
      %v7507 = vmax.bf16 %v7426, 0
      %v7508 = vmax.bf16 %v7427, 0
      %v7509 = vmax.bf16 %v7428, 0
      %v7510 = vmax.bf16 %v7429, 0
      %v7511 = vmax.bf16 %v7430, 0
      %v7512 = vmax.bf16 %v7431, 0
      %v7513 = vmax.bf16 %v7432, 0
      %v7514 = vmax.bf16 %v7433, 0
      %v7515 = vmax.bf16 %v7434, 0
      %v7516 = vmax.bf16 %v7435, 0
      %v7517 = vmax.bf16 %v7436, 0
      %v7518 = vmax.bf16 %v7437, 0
      %v7519 = vmax.bf16 %v7438, 0
      %v7520 = vmax.bf16 %v7439, 0
      %v7521 = vld [vmem:[%s4] sm:$0xf]
      %v7522 = vld [vmem:[%s4 + $0x8] sm:$0xf]
      %v7523 = vld [vmem:[%s4 + $0x10] sm:$0xf]
      %v7524 = vld [vmem:[%s4 + $0x18] sm:$0xf]
      %v7525 = vld [vmem:[%s4 + $0x20] sm:$0xf]
      %v7526 = vld [vmem:[%s4 + $0x28] sm:$0xf]
      %v7527 = vld [vmem:[%s4 + $0x30] sm:$0xf]
      %v7528 = vld [vmem:[%s4 + $0x38] sm:$0xf]
      %v7529 = vld [vmem:[%s4 + $0x40] sm:$0xf]
      %v7530 = vld [vmem:[%s4 + $0x48] sm:$0xf]
      %v7531 = vld [vmem:[%s4 + $0x50] sm:$0xf]
      %v7532 = vld [vmem:[%s4 + $0x58] sm:$0xf]
      %v7533 = vld [vmem:[%s4 + $0x60] sm:$0xf]
      %v7534 = vld [vmem:[%s4 + $0x68] sm:$0xf]
      %v7535 = vld [vmem:[%s4 + $0x70] sm:$0xf]
      %v7536 = vld [vmem:[%s4 + $0x78] sm:$0xf]
      %v7537 = vld [vmem:[%s6 + $0x7] sm:$0x1]
      %v7554 = vunpack.c.l.b16 %v7521
      %v7555 = vunpack.c.l.b16 %v7522
      %v7556 = vunpack.c.l.b16 %v7523
      %v7557 = vunpack.c.l.b16 %v7524
      %v7558 = vunpack.c.l.b16 %v7525
      %v7559 = vunpack.c.l.b16 %v7526
      %v7560 = vunpack.c.l.b16 %v7527
      %v7561 = vunpack.c.l.b16 %v7528
      %v7562 = vunpack.c.l.b16 %v7529
      %v7563 = vunpack.c.l.b16 %v7530
      %v7564 = vunpack.c.l.b16 %v7531
      %v7565 = vunpack.c.l.b16 %v7532
      %v7566 = vunpack.c.l.b16 %v7533
      %v7567 = vunpack.c.l.b16 %v7534
      %v7568 = vunpack.c.l.b16 %v7535
      %v7569 = vunpack.c.l.b16 %v7536
      %v7570 = vpack.c.b16 %v7555, %v7554
      %v7571 = vpack.c.b16 %v7557, %v7556
      %v7572 = vpack.c.b16 %v7559, %v7558
      %v7573 = vpack.c.b16 %v7561, %v7560
      %v7574 = vpack.c.b16 %v7563, %v7562
      %v7575 = vpack.c.b16 %v7565, %v7564
      %v7576 = vpack.c.b16 %v7567, %v7566
      %v7577 = vpack.c.b16 %v7569, %v7568
      %7586 = vmatprep.subr.bf16.mxu0 0
      %7587 = vmatpush1.bf16.msra.mxu0 %v7570
      %7588 = vmatprep.subr.bf16.mxu0 0
      %7589 = vmatpush1.bf16.msra.mxu0 %v7571
      %7590 = vmatprep.subr.bf16.mxu0 0
      %7591 = vmatpush1.bf16.msra.mxu0 %v7572
      %7592 = vmatprep.subr.bf16.mxu0 0
      %7593 = vmatpush1.bf16.msra.mxu0 %v7573
      %7594 = vmatprep.subr.bf16.mxu0 0
      %7595 = vmatpush1.bf16.msra.mxu0 %v7574
      %7596 = vmatprep.subr.bf16.mxu0 0
      %7597 = vmatpush1.bf16.msra.mxu0 %v7575
      %7598 = vmatprep.subr.bf16.mxu0 0
      %7599 = vmatpush1.bf16.msra.mxu0 %v7576
      %7600 = vmatprep.subr.bf16.mxu0 0
      %7601 = vmatpush1.bf16.msra.mxu0 %v7577
      %7602 = vmatprep.subr.bf16.mxu0 0
      %7603 = vmatpush1.bf16.msra.mxu0 0
      %7604 = vmatprep.subr.bf16.mxu0 0
      %7605 = vmatpush1.bf16.msra.mxu0 0
      %7606 = vmatprep.subr.bf16.mxu0 0
      %7607 = vmatpush1.bf16.msra.mxu0 0
      %7608 = vmatprep.subr.bf16.mxu0 0
      %7609 = vmatpush1.bf16.msra.mxu0 0
      %7610 = vmatprep.subr.bf16.mxu0 0
      %7611 = vmatpush1.bf16.msra.mxu0 0
      %7612 = vmatprep.subr.bf16.mxu0 0
      %7613 = vmatpush1.bf16.msra.mxu0 0
      %7614 = vmatprep.subr.bf16.mxu0 0
      %7615 = vmatpush1.bf16.msra.mxu0 0
      %7616 = vmatprep.subr.bf16.mxu0 0
      %7617 = vmatpush1.bf16.msra.mxu0 0
      %7618 = vmatprep.mubr.bf16.mxu0 0
      %7619 = vmatmul.mubr.bf16.gmra.mrb[0].mxu0 %v7440
      %v7620 = vpop.f32.mrb[0].mxu0
      %v7621 = vadd.f32 0.0, %v7620
      %v7622 = vpop.f32.mrb[0].mxu0
      %v7623 = vpop.f32.mrb[0].mxu0
      %v7624 = vadd.f32 0.0, %v7623
      %v7625 = vpop.f32.mrb[0].mxu0
      %7626 = vmatprep.mubr.bf16.mxu0 0
      %7627 = vmatmul.mubr.bf16.gmra.mrb[0].mxu0 %v7441
      %v7628 = vpop.f32.mrb[0].mxu0
      %v7629 = vadd.f32 0.0, %v7628
      %v7630 = vpop.f32.mrb[0].mxu0
      %v7631 = vpop.f32.mrb[0].mxu0
      %v7632 = vadd.f32 0.0, %v7631
      %v7633 = vpop.f32.mrb[0].mxu0
      %7634 = vmatprep.mubr.bf16.mxu0 0
      %7635 = vmatmul.mubr.bf16.gmra.mrb[0].mxu0 %v7442
      %v7636 = vpop.f32.mrb[0].mxu0
      %v7637 = vadd.f32 0.0, %v7636
      %v7638 = vpop.f32.mrb[0].mxu0
      %v7639 = vpop.f32.mrb[0].mxu0
      %v7640 = vadd.f32 0.0, %v7639
      %v7641 = vpop.f32.mrb[0].mxu0
      %7642 = vmatprep.mubr.bf16.mxu0 0
      %7643 = vmatmul.mubr.bf16.gmra.mrb[0].mxu0 %v7443
      %v7644 = vpop.f32.mrb[0].mxu0
      %v7645 = vadd.f32 0.0, %v7644
      %v7646 = vpop.f32.mrb[0].mxu0
      %v7647 = vpop.f32.mrb[0].mxu0
      %v7648 = vadd.f32 0.0, %v7647
      %v7649 = vpop.f32.mrb[0].mxu0
      %7650 = vmatprep.mubr.bf16.mxu0 0
      %7651 = vmatmul.mubr.bf16.gmra.mrb[0].mxu0 %v7444
      %v7652 = vpop.f32.mrb[0].mxu0
      %v7653 = vadd.f32 0.0, %v7652
      %v7654 = vpop.f32.mrb[0].mxu0
      %v7655 = vpop.f32.mrb[0].mxu0
      %v7656 = vadd.f32 0.0, %v7655
      %v7657 = vpop.f32.mrb[0].mxu0
      %7658 = vmatprep.mubr.bf16.mxu0 0
      %7659 = vmatmul.mubr.bf16.gmra.mrb[0].mxu0 %v7445
      %v7660 = vpop.f32.mrb[0].mxu0
      %v7661 = vadd.f32 0.0, %v7660
      %v7662 = vpop.f32.mrb[0].mxu0
      %v7663 = vpop.f32.mrb[0].mxu0
      %v7664 = vadd.f32 0.0, %v7663
      %v7665 = vpop.f32.mrb[0].mxu0
      %7666 = vmatprep.mubr.bf16.mxu0 0
      %7667 = vmatmul.mubr.bf16.gmra.mrb[0].mxu0 %v7446
      %v7668 = vpop.f32.mrb[0].mxu0
      %v7669 = vadd.f32 0.0, %v7668
      %v7670 = vpop.f32.mrb[0].mxu0
      %v7671 = vpop.f32.mrb[0].mxu0
      %v7672 = vadd.f32 0.0, %v7671
      %v7673 = vpop.f32.mrb[0].mxu0
      %7674 = vmatprep.mubr.bf16.mxu0 0
      %7675 = vmatmul.mubr.bf16.gmra.mrb[0].mxu0 %v7447
      %v7676 = vpop.f32.mrb[0].mxu0
      %v7677 = vadd.f32 0.0, %v7676
      %v7678 = vpop.f32.mrb[0].mxu0
      %v7679 = vpop.f32.mrb[0].mxu0
      %v7680 = vadd.f32 0.0, %v7679
      %v7681 = vpop.f32.mrb[0].mxu0
      %7682 = vmatprep.mubr.bf16.mxu0 0
      %7683 = vmatmul.mubr.bf16.gmra.mrb[0].mxu0 %v7448
      %v7684 = vpop.f32.mrb[0].mxu0
      %v7685 = vadd.f32 0.0, %v7684
      %v7686 = vpop.f32.mrb[0].mxu0
      %v7687 = vpop.f32.mrb[0].mxu0
      %v7688 = vadd.f32 0.0, %v7687
      %v7689 = vpop.f32.mrb[0].mxu0
      %7690 = vmatprep.mubr.bf16.mxu0 0
      %7691 = vmatmul.mubr.bf16.gmra.mrb[0].mxu0 %v7449
      %v7692 = vpop.f32.mrb[0].mxu0
      %v7693 = vadd.f32 0.0, %v7692
      %v7694 = vpop.f32.mrb[0].mxu0
      %v7695 = vpop.f32.mrb[0].mxu0
      %v7696 = vadd.f32 0.0, %v7695
      %v7697 = vpop.f32.mrb[0].mxu0
      %7698 = vmatprep.mubr.bf16.mxu0 0
      %7699 = vmatmul.mubr.bf16.gmra.mrb[0].mxu0 %v7450
      %v7700 = vpop.f32.mrb[0].mxu0
      %v7701 = vadd.f32 0.0, %v7700
      %v7702 = vpop.f32.mrb[0].mxu0
      %v7703 = vpop.f32.mrb[0].mxu0
      %v7704 = vadd.f32 0.0, %v7703
      %v7705 = vpop.f32.mrb[0].mxu0
      %7706 = vmatprep.mubr.bf16.mxu0 0
      %7707 = vmatmul.mubr.bf16.gmra.mrb[0].mxu0 %v7451
      %v7708 = vpop.f32.mrb[0].mxu0
      %v7709 = vadd.f32 0.0, %v7708
      %v7710 = vpop.f32.mrb[0].mxu0
      %v7711 = vpop.f32.mrb[0].mxu0
      %v7712 = vadd.f32 0.0, %v7711
      %v7713 = vpop.f32.mrb[0].mxu0
      %7714 = vmatprep.mubr.bf16.mxu0 0
      %7715 = vmatmul.mubr.bf16.gmra.mrb[0].mxu0 %v7452
      %v7716 = vpop.f32.mrb[0].mxu0
      %v7717 = vadd.f32 0.0, %v7716
      %v7718 = vpop.f32.mrb[0].mxu0
      %v7719 = vpop.f32.mrb[0].mxu0
      %v7720 = vadd.f32 0.0, %v7719
      %v7721 = vpop.f32.mrb[0].mxu0
      %7722 = vmatprep.mubr.bf16.mxu0 0
      %7723 = vmatmul.mubr.bf16.gmra.mrb[0].mxu0 %v7453
      %v7724 = vpop.f32.mrb[0].mxu0
      %v7725 = vadd.f32 0.0, %v7724
      %v7726 = vpop.f32.mrb[0].mxu0
      %v7727 = vpop.f32.mrb[0].mxu0
      %v7728 = vadd.f32 0.0, %v7727
      %v7729 = vpop.f32.mrb[0].mxu0
      %7730 = vmatprep.mubr.bf16.mxu0 0
      %7731 = vmatmul.mubr.bf16.gmra.mrb[0].mxu0 %v7454
      %v7732 = vpop.f32.mrb[0].mxu0
      %v7733 = vadd.f32 0.0, %v7732
      %v7734 = vpop.f32.mrb[0].mxu0
      %v7735 = vpop.f32.mrb[0].mxu0
      %v7736 = vadd.f32 0.0, %v7735
      %v7737 = vpop.f32.mrb[0].mxu0
      %7738 = vmatprep.mubr.bf16.mxu0 0
      %7739 = vmatmul.mubr.bf16.gmra.mrb[0].mxu0 %v7455
      %v7740 = vpop.f32.mrb[0].mxu0
      %v7741 = vadd.f32 0.0, %v7740
      %v7742 = vpop.f32.mrb[0].mxu0
      %v7743 = vpop.f32.mrb[0].mxu0
      %v7744 = vadd.f32 0.0, %v7743
      %v7745 = vpop.f32.mrb[0].mxu0
      %7746 = vmatprep.mubr.bf16.mxu0 0
      %7747 = vmatmul.mubr.bf16.gmra.mrb[0].mxu0 %v7456
      %v7748 = vpop.f32.mrb[0].mxu0
      %v7749 = vadd.f32 0.0, %v7748
      %v7750 = vpop.f32.mrb[0].mxu0
      %v7751 = vpop.f32.mrb[0].mxu0
      %v7752 = vadd.f32 0.0, %v7751
      %v7753 = vpop.f32.mrb[0].mxu0
      %7754 = vmatprep.mubr.bf16.mxu0 0
      %7755 = vmatmul.mubr.bf16.gmra.mrb[0].mxu0 %v7457
      %v7756 = vpop.f32.mrb[0].mxu0
      %v7757 = vadd.f32 0.0, %v7756
      %v7758 = vpop.f32.mrb[0].mxu0
      %v7759 = vpop.f32.mrb[0].mxu0
      %v7760 = vadd.f32 0.0, %v7759
      %v7761 = vpop.f32.mrb[0].mxu0
      %7762 = vmatprep.mubr.bf16.mxu0 0
      %7763 = vmatmul.mubr.bf16.gmra.mrb[0].mxu0 %v7458
      %v7764 = vpop.f32.mrb[0].mxu0
      %v7765 = vadd.f32 0.0, %v7764
      %v7766 = vpop.f32.mrb[0].mxu0
      %v7767 = vpop.f32.mrb[0].mxu0
      %v7768 = vadd.f32 0.0, %v7767
      %v7769 = vpop.f32.mrb[0].mxu0
      %7770 = vmatprep.mubr.bf16.mxu0 0
      %7771 = vmatmul.mubr.bf16.gmra.mrb[0].mxu0 %v7459
      %v7772 = vpop.f32.mrb[0].mxu0
      %v7773 = vadd.f32 0.0, %v7772
      %v7774 = vpop.f32.mrb[0].mxu0
      %v7775 = vpop.f32.mrb[0].mxu0
      %v7776 = vadd.f32 0.0, %v7775
      %v7777 = vpop.f32.mrb[0].mxu0
      %7778 = vmatprep.mubr.bf16.mxu0 0
      %7779 = vmatmul.mubr.bf16.gmra.mrb[0].mxu0 %v7460
      %v7780 = vpop.f32.mrb[0].mxu0
      %v7781 = vadd.f32 0.0, %v7780
      %v7782 = vpop.f32.mrb[0].mxu0
      %v7783 = vpop.f32.mrb[0].mxu0
      %v7784 = vadd.f32 0.0, %v7783
      %v7785 = vpop.f32.mrb[0].mxu0
      %7786 = vmatprep.mubr.bf16.mxu0 0
      %7787 = vmatmul.mubr.bf16.gmra.mrb[0].mxu0 %v7461
      %v7788 = vpop.f32.mrb[0].mxu0
      %v7789 = vadd.f32 0.0, %v7788
      %v7790 = vpop.f32.mrb[0].mxu0
      %v7791 = vpop.f32.mrb[0].mxu0
      %v7792 = vadd.f32 0.0, %v7791
      %v7793 = vpop.f32.mrb[0].mxu0
      %7794 = vmatprep.mubr.bf16.mxu0 0
      %7795 = vmatmul.mubr.bf16.gmra.mrb[0].mxu0 %v7462
      %v7796 = vpop.f32.mrb[0].mxu0
      %v7797 = vadd.f32 0.0, %v7796
      %v7798 = vpop.f32.mrb[0].mxu0
      %v7799 = vpop.f32.mrb[0].mxu0
      %v7800 = vadd.f32 0.0, %v7799
      %v7801 = vpop.f32.mrb[0].mxu0
      %7802 = vmatprep.mubr.bf16.mxu0 0
      %7803 = vmatmul.mubr.bf16.gmra.mrb[0].mxu0 %v7463
      %v7804 = vpop.f32.mrb[0].mxu0
      %v7805 = vadd.f32 0.0, %v7804
      %v7806 = vpop.f32.mrb[0].mxu0
      %v7807 = vpop.f32.mrb[0].mxu0
      %v7808 = vadd.f32 0.0, %v7807
      %v7809 = vpop.f32.mrb[0].mxu0
      %7810 = vmatprep.mubr.bf16.mxu0 0
      %7811 = vmatmul.mubr.bf16.gmra.mrb[0].mxu0 %v7464
      %v7812 = vpop.f32.mrb[0].mxu0
      %v7813 = vadd.f32 0.0, %v7812
      %v7814 = vpop.f32.mrb[0].mxu0
      %v7815 = vpop.f32.mrb[0].mxu0
      %v7816 = vadd.f32 0.0, %v7815
      %v7817 = vpop.f32.mrb[0].mxu0
      %7818 = vmatprep.mubr.bf16.mxu0 0
      %7819 = vmatmul.mubr.bf16.gmra.mrb[0].mxu0 %v7465
      %v7820 = vpop.f32.mrb[0].mxu0
      %v7821 = vadd.f32 0.0, %v7820
      %v7822 = vpop.f32.mrb[0].mxu0
      %v7823 = vpop.f32.mrb[0].mxu0
      %v7824 = vadd.f32 0.0, %v7823
      %v7825 = vpop.f32.mrb[0].mxu0
      %7826 = vmatprep.mubr.bf16.mxu0 0
      %7827 = vmatmul.mubr.bf16.gmra.mrb[0].mxu0 %v7466
      %v7828 = vpop.f32.mrb[0].mxu0
      %v7829 = vadd.f32 0.0, %v7828
      %v7830 = vpop.f32.mrb[0].mxu0
      %v7831 = vpop.f32.mrb[0].mxu0
      %v7832 = vadd.f32 0.0, %v7831
      %v7833 = vpop.f32.mrb[0].mxu0
      %7834 = vmatprep.mubr.bf16.mxu0 0
      %7835 = vmatmul.mubr.bf16.gmra.mrb[0].mxu0 %v7467
      %v7836 = vpop.f32.mrb[0].mxu0
      %v7837 = vadd.f32 0.0, %v7836
      %v7838 = vpop.f32.mrb[0].mxu0
      %v7839 = vpop.f32.mrb[0].mxu0
      %v7840 = vadd.f32 0.0, %v7839
      %v7841 = vpop.f32.mrb[0].mxu0
      %7842 = vmatprep.mubr.bf16.mxu0 0
      %7843 = vmatmul.mubr.bf16.gmra.mrb[0].mxu0 %v7468
      %v7844 = vpop.f32.mrb[0].mxu0
      %v7845 = vadd.f32 0.0, %v7844
      %v7846 = vpop.f32.mrb[0].mxu0
      %v7847 = vpop.f32.mrb[0].mxu0
      %v7848 = vadd.f32 0.0, %v7847
      %v7849 = vpop.f32.mrb[0].mxu0
      %7850 = vmatprep.mubr.bf16.mxu0 0
      %7851 = vmatmul.mubr.bf16.gmra.mrb[0].mxu0 %v7469
      %v7852 = vpop.f32.mrb[0].mxu0
      %v7853 = vadd.f32 0.0, %v7852
      %v7854 = vpop.f32.mrb[0].mxu0
      %v7855 = vpop.f32.mrb[0].mxu0
      %v7856 = vadd.f32 0.0, %v7855
      %v7857 = vpop.f32.mrb[0].mxu0
      %7858 = vmatprep.mubr.bf16.mxu0 0
      %7859 = vmatmul.mubr.bf16.gmra.mrb[0].mxu0 %v7470
      %v7860 = vpop.f32.mrb[0].mxu0
      %v7861 = vadd.f32 0.0, %v7860
      %v7862 = vpop.f32.mrb[0].mxu0
      %v7863 = vpop.f32.mrb[0].mxu0
      %v7864 = vadd.f32 0.0, %v7863
      %v7865 = vpop.f32.mrb[0].mxu0
      %7866 = vmatprep.mubr.bf16.mxu0 0
      %7867 = vmatmul.mubr.bf16.gmra.mrb[0].mxu0 %v7471
      %v7868 = vpop.f32.mrb[0].mxu0
      %v7869 = vadd.f32 0.0, %v7868
      %v7870 = vpop.f32.mrb[0].mxu0
      %v7871 = vpop.f32.mrb[0].mxu0
      %v7872 = vadd.f32 0.0, %v7871
      %v7873 = vpop.f32.mrb[0].mxu0
      %7874 = vmatprep.mubr.bf16.mxu0 0
      %7875 = vmatmul.mubr.bf16.gmra.mrb[0].mxu0 %v7472
      %v7876 = vpop.f32.mrb[0].mxu0
      %v7877 = vadd.f32 0.0, %v7876
      %v7878 = vpop.f32.mrb[0].mxu0
      %v7879 = vpop.f32.mrb[0].mxu0
      %v7880 = vadd.f32 0.0, %v7879
      %v7881 = vpop.f32.mrb[0].mxu0
      %7882 = vmatprep.mubr.bf16.mxu0 0
      %7883 = vmatmul.mubr.bf16.gmra.mrb[0].mxu0 %v7473
      %v7884 = vpop.f32.mrb[0].mxu0
      %v7885 = vadd.f32 0.0, %v7884
      %v7886 = vpop.f32.mrb[0].mxu0
      %v7887 = vpop.f32.mrb[0].mxu0
      %v7888 = vadd.f32 0.0, %v7887
      %v7889 = vpop.f32.mrb[0].mxu0
      %7890 = vmatprep.mubr.bf16.mxu0 0
      %7891 = vmatmul.mubr.bf16.gmra.mrb[0].mxu0 %v7474
      %v7892 = vpop.f32.mrb[0].mxu0
      %v7893 = vadd.f32 0.0, %v7892
      %v7894 = vpop.f32.mrb[0].mxu0
      %v7895 = vpop.f32.mrb[0].mxu0
      %v7896 = vadd.f32 0.0, %v7895
      %v7897 = vpop.f32.mrb[0].mxu0
      %7898 = vmatprep.mubr.bf16.mxu0 0
      %7899 = vmatmul.mubr.bf16.gmra.mrb[0].mxu0 %v7475
      %v7900 = vpop.f32.mrb[0].mxu0
      %v7901 = vadd.f32 0.0, %v7900
      %v7902 = vpop.f32.mrb[0].mxu0
      %v7903 = vpop.f32.mrb[0].mxu0
      %v7904 = vadd.f32 0.0, %v7903
      %v7905 = vpop.f32.mrb[0].mxu0
      %7906 = vmatprep.mubr.bf16.mxu0 0
      %7907 = vmatmul.mubr.bf16.gmra.mrb[0].mxu0 %v7476
      %v7908 = vpop.f32.mrb[0].mxu0
      %v7909 = vadd.f32 0.0, %v7908
      %v7910 = vpop.f32.mrb[0].mxu0
      %v7911 = vpop.f32.mrb[0].mxu0
      %v7912 = vadd.f32 0.0, %v7911
      %v7913 = vpop.f32.mrb[0].mxu0
      %7914 = vmatprep.mubr.bf16.mxu0 0
      %7915 = vmatmul.mubr.bf16.gmra.mrb[0].mxu0 %v7477
      %v7916 = vpop.f32.mrb[0].mxu0
      %v7917 = vadd.f32 0.0, %v7916
      %v7918 = vpop.f32.mrb[0].mxu0
      %v7919 = vpop.f32.mrb[0].mxu0
      %v7920 = vadd.f32 0.0, %v7919
      %v7921 = vpop.f32.mrb[0].mxu0
      %7922 = vmatprep.mubr.bf16.mxu0 0
      %7923 = vmatmul.mubr.bf16.gmra.mrb[0].mxu0 %v7478
      %v7924 = vpop.f32.mrb[0].mxu0
      %v7925 = vadd.f32 0.0, %v7924
      %v7926 = vpop.f32.mrb[0].mxu0
      %v7927 = vpop.f32.mrb[0].mxu0
      %v7928 = vadd.f32 0.0, %v7927
      %v7929 = vpop.f32.mrb[0].mxu0
      %7930 = vmatprep.mubr.bf16.mxu0 0
      %7931 = vmatmul.mubr.bf16.gmra.mrb[0].mxu0 %v7479
      %v7932 = vpop.f32.mrb[0].mxu0
      %v7933 = vadd.f32 0.0, %v7932
      %v7934 = vpop.f32.mrb[0].mxu0
      %v7935 = vpop.f32.mrb[0].mxu0
      %v7936 = vadd.f32 0.0, %v7935
      %v7937 = vpop.f32.mrb[0].mxu0
      %7938 = vmatprep.mubr.bf16.mxu0 0
      %7939 = vmatmul.mubr.bf16.gmra.mrb[0].mxu0 %v7480
      %v7940 = vpop.f32.mrb[0].mxu0
      %v7941 = vadd.f32 0.0, %v7940
      %v7942 = vpop.f32.mrb[0].mxu0
      %v7943 = vpop.f32.mrb[0].mxu0
      %v7944 = vadd.f32 0.0, %v7943
      %v7945 = vpop.f32.mrb[0].mxu0
      %7946 = vmatprep.mubr.bf16.mxu0 0
      %7947 = vmatmul.mubr.bf16.gmra.mrb[0].mxu0 %v7481
      %v7948 = vpop.f32.mrb[0].mxu0
      %v7949 = vadd.f32 0.0, %v7948
      %v7950 = vpop.f32.mrb[0].mxu0
      %v7951 = vpop.f32.mrb[0].mxu0
      %v7952 = vadd.f32 0.0, %v7951
      %v7953 = vpop.f32.mrb[0].mxu0
      %7954 = vmatprep.mubr.bf16.mxu0 0
      %7955 = vmatmul.mubr.bf16.gmra.mrb[0].mxu0 %v7482
      %v7956 = vpop.f32.mrb[0].mxu0
      %v7957 = vadd.f32 0.0, %v7956
      %v7958 = vpop.f32.mrb[0].mxu0
      %v7959 = vpop.f32.mrb[0].mxu0
      %v7960 = vadd.f32 0.0, %v7959
      %v7961 = vpop.f32.mrb[0].mxu0
      %7962 = vmatprep.mubr.bf16.mxu0 0
      %7963 = vmatmul.mubr.bf16.gmra.mrb[0].mxu0 %v7483
      %v7964 = vpop.f32.mrb[0].mxu0
      %v7965 = vadd.f32 0.0, %v7964
      %v7966 = vpop.f32.mrb[0].mxu0
      %v7967 = vpop.f32.mrb[0].mxu0
      %v7968 = vadd.f32 0.0, %v7967
      %v7969 = vpop.f32.mrb[0].mxu0
      %7970 = vmatprep.mubr.bf16.mxu0 0
      %7971 = vmatmul.mubr.bf16.gmra.mrb[0].mxu0 %v7484
      %v7972 = vpop.f32.mrb[0].mxu0
      %v7973 = vadd.f32 0.0, %v7972
      %v7974 = vpop.f32.mrb[0].mxu0
      %v7975 = vpop.f32.mrb[0].mxu0
      %v7976 = vadd.f32 0.0, %v7975
      %v7977 = vpop.f32.mrb[0].mxu0
      %7978 = vmatprep.mubr.bf16.mxu0 0
      %7979 = vmatmul.mubr.bf16.gmra.mrb[0].mxu0 %v7485
      %v7980 = vpop.f32.mrb[0].mxu0
      %v7981 = vadd.f32 0.0, %v7980
      %v7982 = vpop.f32.mrb[0].mxu0
      %v7983 = vpop.f32.mrb[0].mxu0
      %v7984 = vadd.f32 0.0, %v7983
      %v7985 = vpop.f32.mrb[0].mxu0
      %7986 = vmatprep.mubr.bf16.mxu0 0
      %7987 = vmatmul.mubr.bf16.gmra.mrb[0].mxu0 %v7486
      %v7988 = vpop.f32.mrb[0].mxu0
      %v7989 = vadd.f32 0.0, %v7988
      %v7990 = vpop.f32.mrb[0].mxu0
      %v7991 = vpop.f32.mrb[0].mxu0
      %v7992 = vadd.f32 0.0, %v7991
      %v7993 = vpop.f32.mrb[0].mxu0
      %7994 = vmatprep.mubr.bf16.mxu0 0
      %7995 = vmatmul.mubr.bf16.gmra.mrb[0].mxu0 %v7487
      %v7996 = vpop.f32.mrb[0].mxu0
      %v7997 = vadd.f32 0.0, %v7996
      %v7998 = vpop.f32.mrb[0].mxu0
      %v7999 = vpop.f32.mrb[0].mxu0
      %v8000 = vadd.f32 0.0, %v7999
      %v8001 = vpop.f32.mrb[0].mxu0
      %8002 = vmatprep.mubr.bf16.mxu0 0
      %8003 = vmatmul.mubr.bf16.gmra.mrb[0].mxu0 %v7488
      %v8004 = vpop.f32.mrb[0].mxu0
      %v8005 = vadd.f32 0.0, %v8004
      %v8006 = vpop.f32.mrb[0].mxu0
      %v8007 = vpop.f32.mrb[0].mxu0
      %v8008 = vadd.f32 0.0, %v8007
      %v8009 = vpop.f32.mrb[0].mxu0
      %8010 = vmatprep.mubr.bf16.mxu0 0
      %8011 = vmatmul.mubr.bf16.gmra.mrb[0].mxu0 %v7489
      %v8012 = vpop.f32.mrb[0].mxu0
      %v8013 = vadd.f32 0.0, %v8012
      %v8014 = vpop.f32.mrb[0].mxu0
      %v8015 = vpop.f32.mrb[0].mxu0
      %v8016 = vadd.f32 0.0, %v8015
      %v8017 = vpop.f32.mrb[0].mxu0
      %8018 = vmatprep.mubr.bf16.mxu0 0
      %8019 = vmatmul.mubr.bf16.gmra.mrb[0].mxu0 %v7490
      %v8020 = vpop.f32.mrb[0].mxu0
      %v8021 = vadd.f32 0.0, %v8020
      %v8022 = vpop.f32.mrb[0].mxu0
      %v8023 = vpop.f32.mrb[0].mxu0
      %v8024 = vadd.f32 0.0, %v8023
      %v8025 = vpop.f32.mrb[0].mxu0
      %8026 = vmatprep.mubr.bf16.mxu0 0
      %8027 = vmatmul.mubr.bf16.gmra.mrb[0].mxu0 %v7491
      %v8028 = vpop.f32.mrb[0].mxu0
      %v8029 = vadd.f32 0.0, %v8028
      %v8030 = vpop.f32.mrb[0].mxu0
      %v8031 = vpop.f32.mrb[0].mxu0
      %v8032 = vadd.f32 0.0, %v8031
      %v8033 = vpop.f32.mrb[0].mxu0
      %8034 = vmatprep.mubr.bf16.mxu0 0
      %8035 = vmatmul.mubr.bf16.gmra.mrb[0].mxu0 %v7492
      %v8036 = vpop.f32.mrb[0].mxu0
      %v8037 = vadd.f32 0.0, %v8036
      %v8038 = vpop.f32.mrb[0].mxu0
      %v8039 = vpop.f32.mrb[0].mxu0
      %v8040 = vadd.f32 0.0, %v8039
      %v8041 = vpop.f32.mrb[0].mxu0
      %8042 = vmatprep.mubr.bf16.mxu0 0
      %8043 = vmatmul.mubr.bf16.gmra.mrb[0].mxu0 %v7493
      %v8044 = vpop.f32.mrb[0].mxu0
      %v8045 = vadd.f32 0.0, %v8044
      %v8046 = vpop.f32.mrb[0].mxu0
      %v8047 = vpop.f32.mrb[0].mxu0
      %v8048 = vadd.f32 0.0, %v8047
      %v8049 = vpop.f32.mrb[0].mxu0
      %8050 = vmatprep.mubr.bf16.mxu0 0
      %8051 = vmatmul.mubr.bf16.gmra.mrb[0].mxu0 %v7494
      %v8052 = vpop.f32.mrb[0].mxu0
      %v8053 = vadd.f32 0.0, %v8052
      %v8054 = vpop.f32.mrb[0].mxu0
      %v8055 = vpop.f32.mrb[0].mxu0
      %v8056 = vadd.f32 0.0, %v8055
      %v8057 = vpop.f32.mrb[0].mxu0
      %8058 = vmatprep.mubr.bf16.mxu0 0
      %8059 = vmatmul.mubr.bf16.gmra.mrb[0].mxu0 %v7495
      %v8060 = vpop.f32.mrb[0].mxu0
      %v8061 = vadd.f32 0.0, %v8060
      %v8062 = vpop.f32.mrb[0].mxu0
      %v8063 = vpop.f32.mrb[0].mxu0
      %v8064 = vadd.f32 0.0, %v8063
      %v8065 = vpop.f32.mrb[0].mxu0
      %8066 = vmatprep.mubr.bf16.mxu0 0
      %8067 = vmatmul.mubr.bf16.gmra.mrb[0].mxu0 %v7496
      %v8068 = vpop.f32.mrb[0].mxu0
      %v8069 = vadd.f32 0.0, %v8068
      %v8070 = vpop.f32.mrb[0].mxu0
      %v8071 = vpop.f32.mrb[0].mxu0
      %v8072 = vadd.f32 0.0, %v8071
      %v8073 = vpop.f32.mrb[0].mxu0
      %8074 = vmatprep.mubr.bf16.mxu0 0
      %8075 = vmatmul.mubr.bf16.gmra.mrb[0].mxu0 %v7497
      %v8076 = vpop.f32.mrb[0].mxu0
      %v8077 = vadd.f32 0.0, %v8076
      %v8078 = vpop.f32.mrb[0].mxu0
      %v8079 = vpop.f32.mrb[0].mxu0
      %v8080 = vadd.f32 0.0, %v8079
      %v8081 = vpop.f32.mrb[0].mxu0
      %8082 = vmatprep.mubr.bf16.mxu0 0
      %8083 = vmatmul.mubr.bf16.gmra.mrb[0].mxu0 %v7498
      %v8084 = vpop.f32.mrb[0].mxu0
      %v8085 = vadd.f32 0.0, %v8084
      %v8086 = vpop.f32.mrb[0].mxu0
      %v8087 = vpop.f32.mrb[0].mxu0
      %v8088 = vadd.f32 0.0, %v8087
      %v8089 = vpop.f32.mrb[0].mxu0
      %8090 = vmatprep.mubr.bf16.mxu0 0
      %8091 = vmatmul.mubr.bf16.gmra.mrb[0].mxu0 %v7499
      %v8092 = vpop.f32.mrb[0].mxu0
      %v8093 = vadd.f32 0.0, %v8092
      %v8094 = vpop.f32.mrb[0].mxu0
      %v8095 = vpop.f32.mrb[0].mxu0
      %v8096 = vadd.f32 0.0, %v8095
      %v8097 = vpop.f32.mrb[0].mxu0
      %8098 = vmatprep.mubr.bf16.mxu0 0
      %8099 = vmatmul.mubr.bf16.gmra.mrb[0].mxu0 %v7500
      %v8100 = vpop.f32.mrb[0].mxu0
      %v8101 = vadd.f32 0.0, %v8100
      %v8102 = vpop.f32.mrb[0].mxu0
      %v8103 = vpop.f32.mrb[0].mxu0
      %v8104 = vadd.f32 0.0, %v8103
      %v8105 = vpop.f32.mrb[0].mxu0
      %8106 = vmatprep.mubr.bf16.mxu0 0
      %8107 = vmatmul.mubr.bf16.gmra.mrb[0].mxu0 %v7501
      %v8108 = vpop.f32.mrb[0].mxu0
      %v8109 = vadd.f32 0.0, %v8108
      %v8110 = vpop.f32.mrb[0].mxu0
      %v8111 = vpop.f32.mrb[0].mxu0
      %v8112 = vadd.f32 0.0, %v8111
      %v8113 = vpop.f32.mrb[0].mxu0
      %8114 = vmatprep.mubr.bf16.mxu0 0
      %8115 = vmatmul.mubr.bf16.gmra.mrb[0].mxu0 %v7502
      %v8116 = vpop.f32.mrb[0].mxu0
      %v8117 = vadd.f32 0.0, %v8116
      %v8118 = vpop.f32.mrb[0].mxu0
      %v8119 = vpop.f32.mrb[0].mxu0
      %v8120 = vadd.f32 0.0, %v8119
      %v8121 = vpop.f32.mrb[0].mxu0
      %8122 = vmatprep.mubr.bf16.mxu0 0
      %8123 = vmatmul.mubr.bf16.gmra.mrb[0].mxu0 %v7503
      %v8124 = vpop.f32.mrb[0].mxu0
      %v8125 = vadd.f32 0.0, %v8124
      %v8126 = vpop.f32.mrb[0].mxu0
      %v8127 = vpop.f32.mrb[0].mxu0
      %v8128 = vadd.f32 0.0, %v8127
      %v8129 = vpop.f32.mrb[0].mxu0
      %8130 = vmatprep.mubr.bf16.mxu0 0
      %8131 = vmatmul.mubr.bf16.gmra.mrb[0].mxu0 %v7504
      %v8132 = vpop.f32.mrb[0].mxu0
      %v8133 = vadd.f32 0.0, %v8132
      %v8134 = vpop.f32.mrb[0].mxu0
      %v8135 = vpop.f32.mrb[0].mxu0
      %v8136 = vadd.f32 0.0, %v8135
      %v8137 = vpop.f32.mrb[0].mxu0
      %8138 = vmatprep.mubr.bf16.mxu0 0
      %8139 = vmatmul.mubr.bf16.gmra.mrb[0].mxu0 %v7505
      %v8140 = vpop.f32.mrb[0].mxu0
      %v8141 = vadd.f32 0.0, %v8140
      %v8142 = vpop.f32.mrb[0].mxu0
      %v8143 = vpop.f32.mrb[0].mxu0
      %v8144 = vadd.f32 0.0, %v8143
      %v8145 = vpop.f32.mrb[0].mxu0
      %8146 = vmatprep.mubr.bf16.mxu0 0
      %8147 = vmatmul.mubr.bf16.gmra.mrb[0].mxu0 %v7506
      %v8148 = vpop.f32.mrb[0].mxu0
      %v8149 = vadd.f32 0.0, %v8148
      %v8150 = vpop.f32.mrb[0].mxu0
      %v8151 = vpop.f32.mrb[0].mxu0
      %v8152 = vadd.f32 0.0, %v8151
      %v8153 = vpop.f32.mrb[0].mxu0
      %8154 = vmatprep.mubr.bf16.mxu0 0
      %8155 = vmatmul.mubr.bf16.gmra.mrb[0].mxu0 %v7507
      %v8156 = vpop.f32.mrb[0].mxu0
      %v8157 = vadd.f32 0.0, %v8156
      %v8158 = vpop.f32.mrb[0].mxu0
      %v8159 = vpop.f32.mrb[0].mxu0
      %v8160 = vadd.f32 0.0, %v8159
      %v8161 = vpop.f32.mrb[0].mxu0
      %8162 = vmatprep.mubr.bf16.mxu0 0
      %8163 = vmatmul.mubr.bf16.gmra.mrb[0].mxu0 %v7508
      %v8164 = vpop.f32.mrb[0].mxu0
      %v8165 = vadd.f32 0.0, %v8164
      %v8166 = vpop.f32.mrb[0].mxu0
      %v8167 = vpop.f32.mrb[0].mxu0
      %v8168 = vadd.f32 0.0, %v8167
      %v8169 = vpop.f32.mrb[0].mxu0
      %8170 = vmatprep.mubr.bf16.mxu0 0
      %8171 = vmatmul.mubr.bf16.gmra.mrb[0].mxu0 %v7509
      %v8172 = vpop.f32.mrb[0].mxu0
      %v8173 = vadd.f32 0.0, %v8172
      %v8174 = vpop.f32.mrb[0].mxu0
      %v8175 = vpop.f32.mrb[0].mxu0
      %v8176 = vadd.f32 0.0, %v8175
      %v8177 = vpop.f32.mrb[0].mxu0
      %8178 = vmatprep.mubr.bf16.mxu0 0
      %8179 = vmatmul.mubr.bf16.gmra.mrb[0].mxu0 %v7510
      %v8180 = vpop.f32.mrb[0].mxu0
      %v8181 = vadd.f32 0.0, %v8180
      %v8182 = vpop.f32.mrb[0].mxu0
      %v8183 = vpop.f32.mrb[0].mxu0
      %v8184 = vadd.f32 0.0, %v8183
      %v8185 = vpop.f32.mrb[0].mxu0
      %8186 = vmatprep.mubr.bf16.mxu0 0
      %8187 = vmatmul.mubr.bf16.gmra.mrb[0].mxu0 %v7511
      %v8188 = vpop.f32.mrb[0].mxu0
      %v8189 = vadd.f32 0.0, %v8188
      %v8190 = vpop.f32.mrb[0].mxu0
      %v8191 = vpop.f32.mrb[0].mxu0
      %v8192 = vadd.f32 0.0, %v8191
      %v8193 = vpop.f32.mrb[0].mxu0
      %8194 = vmatprep.mubr.bf16.mxu0 0
      %8195 = vmatmul.mubr.bf16.gmra.mrb[0].mxu0 %v7512
      %v8196 = vpop.f32.mrb[0].mxu0
      %v8197 = vadd.f32 0.0, %v8196
      %v8198 = vpop.f32.mrb[0].mxu0
      %v8199 = vpop.f32.mrb[0].mxu0
      %v8200 = vadd.f32 0.0, %v8199
      %v8201 = vpop.f32.mrb[0].mxu0
      %8202 = vmatprep.mubr.bf16.mxu0 0
      %8203 = vmatmul.mubr.bf16.gmra.mrb[0].mxu0 %v7513
      %v8204 = vpop.f32.mrb[0].mxu0
      %v8205 = vadd.f32 0.0, %v8204
      %v8206 = vpop.f32.mrb[0].mxu0
      %v8207 = vpop.f32.mrb[0].mxu0
      %v8208 = vadd.f32 0.0, %v8207
      %v8209 = vpop.f32.mrb[0].mxu0
      %8210 = vmatprep.mubr.bf16.mxu0 0
      %8211 = vmatmul.mubr.bf16.gmra.mrb[0].mxu0 %v7514
      %v8212 = vpop.f32.mrb[0].mxu0
      %v8213 = vadd.f32 0.0, %v8212
      %v8214 = vpop.f32.mrb[0].mxu0
      %v8215 = vpop.f32.mrb[0].mxu0
      %v8216 = vadd.f32 0.0, %v8215
      %v8217 = vpop.f32.mrb[0].mxu0
      %8218 = vmatprep.mubr.bf16.mxu0 0
      %8219 = vmatmul.mubr.bf16.gmra.mrb[0].mxu0 %v7515
      %v8220 = vpop.f32.mrb[0].mxu0
      %v8221 = vadd.f32 0.0, %v8220
      %v8222 = vpop.f32.mrb[0].mxu0
      %v8223 = vpop.f32.mrb[0].mxu0
      %v8224 = vadd.f32 0.0, %v8223
      %v8225 = vpop.f32.mrb[0].mxu0
      %8226 = vmatprep.mubr.bf16.mxu0 0
      %8227 = vmatmul.mubr.bf16.gmra.mrb[0].mxu0 %v7516
      %v8228 = vpop.f32.mrb[0].mxu0
      %v8229 = vadd.f32 0.0, %v8228
      %v8230 = vpop.f32.mrb[0].mxu0
      %v8231 = vpop.f32.mrb[0].mxu0
      %v8232 = vadd.f32 0.0, %v8231
      %v8233 = vpop.f32.mrb[0].mxu0
      %8234 = vmatprep.mubr.bf16.mxu0 0
      %8235 = vmatmul.mubr.bf16.gmra.mrb[0].mxu0 %v7517
      %v8236 = vpop.f32.mrb[0].mxu0
      %v8237 = vadd.f32 0.0, %v8236
      %v8238 = vpop.f32.mrb[0].mxu0
      %v8239 = vpop.f32.mrb[0].mxu0
      %v8240 = vadd.f32 0.0, %v8239
      %v8241 = vpop.f32.mrb[0].mxu0
      %8242 = vmatprep.mubr.bf16.mxu0 0
      %8243 = vmatmul.mubr.bf16.gmra.mrb[0].mxu0 %v7518
      %v8244 = vpop.f32.mrb[0].mxu0
      %v8245 = vadd.f32 0.0, %v8244
      %v8246 = vpop.f32.mrb[0].mxu0
      %v8247 = vpop.f32.mrb[0].mxu0
      %v8248 = vadd.f32 0.0, %v8247
      %v8249 = vpop.f32.mrb[0].mxu0
      %8250 = vmatprep.mubr.bf16.mxu0 0
      %8251 = vmatmul.mubr.bf16.gmra.mrb[0].mxu0 %v7519
      %v8252 = vpop.f32.mrb[0].mxu0
      %v8253 = vadd.f32 0.0, %v8252
      %v8254 = vpop.f32.mrb[0].mxu0
      %v8255 = vpop.f32.mrb[0].mxu0
      %v8256 = vadd.f32 0.0, %v8255
      %v8257 = vpop.f32.mrb[0].mxu0
      %8258 = vmatprep.mubr.bf16.mxu0 0
      %8259 = vmatmul.mubr.bf16.gmra.mrb[0].mxu0 %v7520
      %v8260 = vpop.f32.mrb[0].mxu0
      %v8261 = vadd.f32 0.0, %v8260
      %v8262 = vpop.f32.mrb[0].mxu0
      %v8263 = vpop.f32.mrb[0].mxu0
      %v8264 = vadd.f32 0.0, %v8263
      %v8265 = vpop.f32.mrb[0].mxu0
      %8266 = vdwg.mxu0
      %v8267 = vpack.c.bf16 %v7624, %v7621
      %v8268 = vpack.c.bf16 %v7632, %v7629
      %v8269 = vpack.c.bf16 %v7640, %v7637
      %v8270 = vpack.c.bf16 %v7648, %v7645
      %v8271 = vpack.c.bf16 %v7656, %v7653
      %v8272 = vpack.c.bf16 %v7664, %v7661
      %v8273 = vpack.c.bf16 %v7672, %v7669
      %v8274 = vpack.c.bf16 %v7680, %v7677
      %v8275 = vpack.c.bf16 %v7688, %v7685
      %v8276 = vpack.c.bf16 %v7696, %v7693
      %v8277 = vpack.c.bf16 %v7704, %v7701
      %v8278 = vpack.c.bf16 %v7712, %v7709
      %v8279 = vpack.c.bf16 %v7720, %v7717
      %v8280 = vpack.c.bf16 %v7728, %v7725
      %v8281 = vpack.c.bf16 %v7736, %v7733
      %v8282 = vpack.c.bf16 %v7744, %v7741
      %v8283 = vpack.c.bf16 %v7752, %v7749
      %v8284 = vpack.c.bf16 %v7760, %v7757
      %v8285 = vpack.c.bf16 %v7768, %v7765
      %v8286 = vpack.c.bf16 %v7776, %v7773
      %v8287 = vpack.c.bf16 %v7784, %v7781
      %v8288 = vpack.c.bf16 %v7792, %v7789
      %v8289 = vpack.c.bf16 %v7800, %v7797
      %v8290 = vpack.c.bf16 %v7808, %v7805
      %v8291 = vpack.c.bf16 %v7816, %v7813
      %v8292 = vpack.c.bf16 %v7824, %v7821
      %v8293 = vpack.c.bf16 %v7832, %v7829
      %v8294 = vpack.c.bf16 %v7840, %v7837
      %v8295 = vpack.c.bf16 %v7848, %v7845
      %v8296 = vpack.c.bf16 %v7856, %v7853
      %v8297 = vpack.c.bf16 %v7864, %v7861
      %v8298 = vpack.c.bf16 %v7872, %v7869
      %v8299 = vpack.c.bf16 %v7880, %v7877
      %v8300 = vpack.c.bf16 %v7888, %v7885
      %v8301 = vpack.c.bf16 %v7896, %v7893
      %v8302 = vpack.c.bf16 %v7904, %v7901
      %v8303 = vpack.c.bf16 %v7912, %v7909
      %v8304 = vpack.c.bf16 %v7920, %v7917
      %v8305 = vpack.c.bf16 %v7928, %v7925
      %v8306 = vpack.c.bf16 %v7936, %v7933
      %v8307 = vpack.c.bf16 %v7944, %v7941
      %v8308 = vpack.c.bf16 %v7952, %v7949
      %v8309 = vpack.c.bf16 %v7960, %v7957
      %v8310 = vpack.c.bf16 %v7968, %v7965
      %v8311 = vpack.c.bf16 %v7976, %v7973
      %v8312 = vpack.c.bf16 %v7984, %v7981
      %v8313 = vpack.c.bf16 %v7992, %v7989
      %v8314 = vpack.c.bf16 %v8000, %v7997
      %v8315 = vpack.c.bf16 %v8008, %v8005
      %v8316 = vpack.c.bf16 %v8016, %v8013
      %v8317 = vpack.c.bf16 %v8024, %v8021
      %v8318 = vpack.c.bf16 %v8032, %v8029
      %v8319 = vpack.c.bf16 %v8040, %v8037
      %v8320 = vpack.c.bf16 %v8048, %v8045
      %v8321 = vpack.c.bf16 %v8056, %v8053
      %v8322 = vpack.c.bf16 %v8064, %v8061
      %v8323 = vpack.c.bf16 %v8072, %v8069
      %v8324 = vpack.c.bf16 %v8080, %v8077
      %v8325 = vpack.c.bf16 %v8088, %v8085
      %v8326 = vpack.c.bf16 %v8096, %v8093
      %v8327 = vpack.c.bf16 %v8104, %v8101
      %v8328 = vpack.c.bf16 %v8112, %v8109
      %v8329 = vpack.c.bf16 %v8120, %v8117
      %v8330 = vpack.c.bf16 %v8128, %v8125
      %v8331 = vpack.c.bf16 %v8136, %v8133
      %v8332 = vpack.c.bf16 %v8144, %v8141
      %v8333 = vpack.c.bf16 %v8152, %v8149
      %v8334 = vpack.c.bf16 %v8160, %v8157
      %v8335 = vpack.c.bf16 %v8168, %v8165
      %v8336 = vpack.c.bf16 %v8176, %v8173
      %v8337 = vpack.c.bf16 %v8184, %v8181
      %v8338 = vpack.c.bf16 %v8192, %v8189
      %v8339 = vpack.c.bf16 %v8200, %v8197
      %v8340 = vpack.c.bf16 %v8208, %v8205
      %v8341 = vpack.c.bf16 %v8216, %v8213
      %v8342 = vpack.c.bf16 %v8224, %v8221
      %v8343 = vpack.c.bf16 %v8232, %v8229
      %v8344 = vpack.c.bf16 %v8240, %v8237
      %v8345 = vpack.c.bf16 %v8248, %v8245
      %v8346 = vpack.c.bf16 %v8256, %v8253
      %v8347 = vpack.c.bf16 %v8264, %v8261
      %v8349 = vpack.i.b16 %v7537, %v7537
      %v8351 = vlaneseq
      %v8352 = vshrl.u32 %v8351, 7
      %v8353 = vsub.s32 0, %v8352
      %v8354 = vrot.slane %v8349, %v8353
      %v8355 = vadd.bf16 %v8267, %v8354
      %v8356 = vadd.bf16 %v8268, %v8354
      %v8357 = vadd.bf16 %v8269, %v8354
      %v8358 = vadd.bf16 %v8270, %v8354
      %v8359 = vadd.bf16 %v8271, %v8354
      %v8360 = vadd.bf16 %v8272, %v8354
      %v8361 = vadd.bf16 %v8273, %v8354
      %v8362 = vadd.bf16 %v8274, %v8354
      %v8363 = vadd.bf16 %v8275, %v8354
      %v8364 = vadd.bf16 %v8276, %v8354
      %v8365 = vadd.bf16 %v8277, %v8354
      %v8366 = vadd.bf16 %v8278, %v8354
      %v8367 = vadd.bf16 %v8279, %v8354
      %v8368 = vadd.bf16 %v8280, %v8354
      %v8369 = vadd.bf16 %v8281, %v8354
      %v8370 = vadd.bf16 %v8282, %v8354
      %v8371 = vadd.bf16 %v8283, %v8354
      %v8372 = vadd.bf16 %v8284, %v8354
      %v8373 = vadd.bf16 %v8285, %v8354
      %v8374 = vadd.bf16 %v8286, %v8354
      %v8375 = vadd.bf16 %v8287, %v8354
      %v8376 = vadd.bf16 %v8288, %v8354
      %v8377 = vadd.bf16 %v8289, %v8354
      %v8378 = vadd.bf16 %v8290, %v8354
      %v8379 = vadd.bf16 %v8291, %v8354
      %v8380 = vadd.bf16 %v8292, %v8354
      %v8381 = vadd.bf16 %v8293, %v8354
      %v8382 = vadd.bf16 %v8294, %v8354
      %v8383 = vadd.bf16 %v8295, %v8354
      %v8384 = vadd.bf16 %v8296, %v8354
      %v8385 = vadd.bf16 %v8297, %v8354
      %v8386 = vadd.bf16 %v8298, %v8354
      %v8387 = vadd.bf16 %v8299, %v8354
      %v8388 = vadd.bf16 %v8300, %v8354
      %v8389 = vadd.bf16 %v8301, %v8354
      %v8390 = vadd.bf16 %v8302, %v8354
      %v8391 = vadd.bf16 %v8303, %v8354
      %v8392 = vadd.bf16 %v8304, %v8354
      %v8393 = vadd.bf16 %v8305, %v8354
      %v8394 = vadd.bf16 %v8306, %v8354
      %v8395 = vadd.bf16 %v8307, %v8354
      %v8396 = vadd.bf16 %v8308, %v8354
      %v8397 = vadd.bf16 %v8309, %v8354
      %v8398 = vadd.bf16 %v8310, %v8354
      %v8399 = vadd.bf16 %v8311, %v8354
      %v8400 = vadd.bf16 %v8312, %v8354
      %v8401 = vadd.bf16 %v8313, %v8354
      %v8402 = vadd.bf16 %v8314, %v8354
      %v8403 = vadd.bf16 %v8315, %v8354
      %v8404 = vadd.bf16 %v8316, %v8354
      %v8405 = vadd.bf16 %v8317, %v8354
      %v8406 = vadd.bf16 %v8318, %v8354
      %v8407 = vadd.bf16 %v8319, %v8354
      %v8408 = vadd.bf16 %v8320, %v8354
      %v8409 = vadd.bf16 %v8321, %v8354
      %v8410 = vadd.bf16 %v8322, %v8354
      %v8411 = vadd.bf16 %v8323, %v8354
      %v8412 = vadd.bf16 %v8324, %v8354
      %v8413 = vadd.bf16 %v8325, %v8354
      %v8414 = vadd.bf16 %v8326, %v8354
      %v8415 = vadd.bf16 %v8327, %v8354
      %v8416 = vadd.bf16 %v8328, %v8354
      %v8417 = vadd.bf16 %v8329, %v8354
      %v8418 = vadd.bf16 %v8330, %v8354
      %v8419 = vadd.bf16 %v8331, %v8354
      %v8420 = vadd.bf16 %v8332, %v8354
      %v8421 = vadd.bf16 %v8333, %v8354
      %v8422 = vadd.bf16 %v8334, %v8354
      %v8423 = vadd.bf16 %v8335, %v8354
      %v8424 = vadd.bf16 %v8336, %v8354
      %v8425 = vadd.bf16 %v8337, %v8354
      %v8426 = vadd.bf16 %v8338, %v8354
      %v8427 = vadd.bf16 %v8339, %v8354
      %v8428 = vadd.bf16 %v8340, %v8354
      %v8429 = vadd.bf16 %v8341, %v8354
      %v8430 = vadd.bf16 %v8342, %v8354
      %v8431 = vadd.bf16 %v8343, %v8354
      %v8432 = vadd.bf16 %v8344, %v8354
      %v8433 = vadd.bf16 %v8345, %v8354
      %v8434 = vadd.bf16 %v8346, %v8354
      %v8435 = vadd.bf16 %v8347, %v8354
      %v8436 = vmax.bf16 %v8355, 0
      %v8437 = vmax.bf16 %v8356, 0
      %v8438 = vmax.bf16 %v8357, 0
      %v8439 = vmax.bf16 %v8358, 0
      %v8440 = vmax.bf16 %v8359, 0
      %v8441 = vmax.bf16 %v8360, 0
      %v8442 = vmax.bf16 %v8361, 0
      %v8443 = vmax.bf16 %v8362, 0
      %v8444 = vmax.bf16 %v8363, 0
      %v8445 = vmax.bf16 %v8364, 0
      %v8446 = vmax.bf16 %v8365, 0
      %v8447 = vmax.bf16 %v8366, 0
      %v8448 = vmax.bf16 %v8367, 0
      %v8449 = vmax.bf16 %v8368, 0
      %v8450 = vmax.bf16 %v8369, 0
      %v8451 = vmax.bf16 %v8370, 0
      %v8452 = vmax.bf16 %v8371, 0
      %v8453 = vmax.bf16 %v8372, 0
      %v8454 = vmax.bf16 %v8373, 0
      %v8455 = vmax.bf16 %v8374, 0
      %v8456 = vmax.bf16 %v8375, 0
      %v8457 = vmax.bf16 %v8376, 0
      %v8458 = vmax.bf16 %v8377, 0
      %v8459 = vmax.bf16 %v8378, 0
      %v8460 = vmax.bf16 %v8379, 0
      %v8461 = vmax.bf16 %v8380, 0
      %v8462 = vmax.bf16 %v8381, 0
      %v8463 = vmax.bf16 %v8382, 0
      %v8464 = vmax.bf16 %v8383, 0
      %v8465 = vmax.bf16 %v8384, 0
      %v8466 = vmax.bf16 %v8385, 0
      %v8467 = vmax.bf16 %v8386, 0
      %v8468 = vmax.bf16 %v8387, 0
      %v8469 = vmax.bf16 %v8388, 0
      %v8470 = vmax.bf16 %v8389, 0
      %v8471 = vmax.bf16 %v8390, 0
      %v8472 = vmax.bf16 %v8391, 0
      %v8473 = vmax.bf16 %v8392, 0
      %v8474 = vmax.bf16 %v8393, 0
      %v8475 = vmax.bf16 %v8394, 0
      %v8476 = vmax.bf16 %v8395, 0
      %v8477 = vmax.bf16 %v8396, 0
      %v8478 = vmax.bf16 %v8397, 0
      %v8479 = vmax.bf16 %v8398, 0
      %v8480 = vmax.bf16 %v8399, 0
      %v8481 = vmax.bf16 %v8400, 0
      %v8482 = vmax.bf16 %v8401, 0
      %v8483 = vmax.bf16 %v8402, 0
      %v8484 = vmax.bf16 %v8403, 0
      %v8485 = vmax.bf16 %v8404, 0
      %v8486 = vmax.bf16 %v8405, 0
      %v8487 = vmax.bf16 %v8406, 0
      %v8488 = vmax.bf16 %v8407, 0
      %v8489 = vmax.bf16 %v8408, 0
      %v8490 = vmax.bf16 %v8409, 0
      %v8491 = vmax.bf16 %v8410, 0
      %v8492 = vmax.bf16 %v8411, 0
      %v8493 = vmax.bf16 %v8412, 0
      %v8494 = vmax.bf16 %v8413, 0
      %v8495 = vmax.bf16 %v8414, 0
      %v8496 = vmax.bf16 %v8415, 0
      %v8497 = vmax.bf16 %v8416, 0
      %v8498 = vmax.bf16 %v8417, 0
      %v8499 = vmax.bf16 %v8418, 0
      %v8500 = vmax.bf16 %v8419, 0
      %v8501 = vmax.bf16 %v8420, 0
      %v8502 = vmax.bf16 %v8421, 0
      %v8503 = vmax.bf16 %v8422, 0
      %v8504 = vmax.bf16 %v8423, 0
      %v8505 = vmax.bf16 %v8424, 0
      %v8506 = vmax.bf16 %v8425, 0
      %v8507 = vmax.bf16 %v8426, 0
      %v8508 = vmax.bf16 %v8427, 0
      %v8509 = vmax.bf16 %v8428, 0
      %v8510 = vmax.bf16 %v8429, 0
      %v8511 = vmax.bf16 %v8430, 0
      %v8512 = vmax.bf16 %v8431, 0
      %v8513 = vmax.bf16 %v8432, 0
      %v8514 = vmax.bf16 %v8433, 0
      %v8515 = vmax.bf16 %v8434, 0
      %v8516 = vmax.bf16 %v8435, 0
      %v8517 = vld [vmem:[%s4 + $0x4] sm:$0xf]
      %v8518 = vld [vmem:[%s4 + $0xc] sm:$0xf]
      %v8519 = vld [vmem:[%s4 + $0x14] sm:$0xf]
      %v8520 = vld [vmem:[%s4 + $0x1c] sm:$0xf]
      %v8521 = vld [vmem:[%s4 + $0x24] sm:$0xf]
      %v8522 = vld [vmem:[%s4 + $0x2c] sm:$0xf]
      %v8523 = vld [vmem:[%s4 + $0x34] sm:$0xf]
      %v8524 = vld [vmem:[%s4 + $0x3c] sm:$0xf]
      %v8525 = vld [vmem:[%s4 + $0x44] sm:$0xf]
      %v8526 = vld [vmem:[%s4 + $0x4c] sm:$0xf]
      %v8527 = vld [vmem:[%s4 + $0x54] sm:$0xf]
      %v8528 = vld [vmem:[%s4 + $0x5c] sm:$0xf]
      %v8529 = vld [vmem:[%s4 + $0x64] sm:$0xf]
      %v8530 = vld [vmem:[%s4 + $0x6c] sm:$0xf]
      %v8531 = vld [vmem:[%s4 + $0x74] sm:$0xf]
      %v8532 = vld [vmem:[%s4 + $0x7c] sm:$0xf]
      %v8533 = vld [vmem:[%s6 + $0x8] sm:$0x1]
      %v8550 = vunpack.c.l.b16 %v8517
      %v8551 = vunpack.c.l.b16 %v8518
      %v8552 = vunpack.c.l.b16 %v8519
      %v8553 = vunpack.c.l.b16 %v8520
      %v8554 = vunpack.c.l.b16 %v8521
      %v8555 = vunpack.c.l.b16 %v8522
      %v8556 = vunpack.c.l.b16 %v8523
      %v8557 = vunpack.c.l.b16 %v8524
      %v8558 = vunpack.c.l.b16 %v8525
      %v8559 = vunpack.c.l.b16 %v8526
      %v8560 = vunpack.c.l.b16 %v8527
      %v8561 = vunpack.c.l.b16 %v8528
      %v8562 = vunpack.c.l.b16 %v8529
      %v8563 = vunpack.c.l.b16 %v8530
      %v8564 = vunpack.c.l.b16 %v8531
      %v8565 = vunpack.c.l.b16 %v8532
      %v8566 = vpack.c.b16 %v8551, %v8550
      %v8567 = vpack.c.b16 %v8553, %v8552
      %v8568 = vpack.c.b16 %v8555, %v8554
      %v8569 = vpack.c.b16 %v8557, %v8556
      %v8570 = vpack.c.b16 %v8559, %v8558
      %v8571 = vpack.c.b16 %v8561, %v8560
      %v8572 = vpack.c.b16 %v8563, %v8562
      %v8573 = vpack.c.b16 %v8565, %v8564
      %8582 = vmatprep.subr.bf16.mxu0 0
      %8583 = vmatpush1.bf16.msra.mxu0 %v8566
      %8584 = vmatprep.subr.bf16.mxu0 0
      %8585 = vmatpush1.bf16.msra.mxu0 %v8567
      %8586 = vmatprep.subr.bf16.mxu0 0
      %8587 = vmatpush1.bf16.msra.mxu0 %v8568
      %8588 = vmatprep.subr.bf16.mxu0 0
      %8589 = vmatpush1.bf16.msra.mxu0 %v8569
      %8590 = vmatprep.subr.bf16.mxu0 0
      %8591 = vmatpush1.bf16.msra.mxu0 %v8570
      %8592 = vmatprep.subr.bf16.mxu0 0
      %8593 = vmatpush1.bf16.msra.mxu0 %v8571
      %8594 = vmatprep.subr.bf16.mxu0 0
      %8595 = vmatpush1.bf16.msra.mxu0 %v8572
      %8596 = vmatprep.subr.bf16.mxu0 0
      %8597 = vmatpush1.bf16.msra.mxu0 %v8573
      %8598 = vmatprep.subr.bf16.mxu0 0
      %8599 = vmatpush1.bf16.msra.mxu0 0
      %8600 = vmatprep.subr.bf16.mxu0 0
      %8601 = vmatpush1.bf16.msra.mxu0 0
      %8602 = vmatprep.subr.bf16.mxu0 0
      %8603 = vmatpush1.bf16.msra.mxu0 0
      %8604 = vmatprep.subr.bf16.mxu0 0
      %8605 = vmatpush1.bf16.msra.mxu0 0
      %8606 = vmatprep.subr.bf16.mxu0 0
      %8607 = vmatpush1.bf16.msra.mxu0 0
      %8608 = vmatprep.subr.bf16.mxu0 0
      %8609 = vmatpush1.bf16.msra.mxu0 0
      %8610 = vmatprep.subr.bf16.mxu0 0
      %8611 = vmatpush1.bf16.msra.mxu0 0
      %8612 = vmatprep.subr.bf16.mxu0 0
      %8613 = vmatpush1.bf16.msra.mxu0 0
      %8614 = vmatprep.mubr.bf16.mxu0 0
      %8615 = vmatmul.mubr.bf16.gmra.mrb[0].mxu0 %v8436
      %v8616 = vpop.f32.mrb[0].mxu0
      %v8617 = vadd.f32 0.0, %v8616
      %v8618 = vpop.f32.mrb[0].mxu0
      %v8619 = vpop.f32.mrb[0].mxu0
      %v8620 = vadd.f32 0.0, %v8619
      %v8621 = vpop.f32.mrb[0].mxu0
      %8622 = vmatprep.mubr.bf16.mxu0 0
      %8623 = vmatmul.mubr.bf16.gmra.mrb[0].mxu0 %v8437
      %v8624 = vpop.f32.mrb[0].mxu0
      %v8625 = vadd.f32 0.0, %v8624
      %v8626 = vpop.f32.mrb[0].mxu0
      %v8627 = vpop.f32.mrb[0].mxu0
      %v8628 = vadd.f32 0.0, %v8627
      %v8629 = vpop.f32.mrb[0].mxu0
      %8630 = vmatprep.mubr.bf16.mxu0 0
      %8631 = vmatmul.mubr.bf16.gmra.mrb[0].mxu0 %v8438
      %v8632 = vpop.f32.mrb[0].mxu0
      %v8633 = vadd.f32 0.0, %v8632
      %v8634 = vpop.f32.mrb[0].mxu0
      %v8635 = vpop.f32.mrb[0].mxu0
      %v8636 = vadd.f32 0.0, %v8635
      %v8637 = vpop.f32.mrb[0].mxu0
      %8638 = vmatprep.mubr.bf16.mxu0 0
      %8639 = vmatmul.mubr.bf16.gmra.mrb[0].mxu0 %v8439
      %v8640 = vpop.f32.mrb[0].mxu0
      %v8641 = vadd.f32 0.0, %v8640
      %v8642 = vpop.f32.mrb[0].mxu0
      %v8643 = vpop.f32.mrb[0].mxu0
      %v8644 = vadd.f32 0.0, %v8643
      %v8645 = vpop.f32.mrb[0].mxu0
      %8646 = vmatprep.mubr.bf16.mxu0 0
      %8647 = vmatmul.mubr.bf16.gmra.mrb[0].mxu0 %v8440
      %v8648 = vpop.f32.mrb[0].mxu0
      %v8649 = vadd.f32 0.0, %v8648
      %v8650 = vpop.f32.mrb[0].mxu0
      %v8651 = vpop.f32.mrb[0].mxu0
      %v8652 = vadd.f32 0.0, %v8651
      %v8653 = vpop.f32.mrb[0].mxu0
      %8654 = vmatprep.mubr.bf16.mxu0 0
      %8655 = vmatmul.mubr.bf16.gmra.mrb[0].mxu0 %v8441
      %v8656 = vpop.f32.mrb[0].mxu0
      %v8657 = vadd.f32 0.0, %v8656
      %v8658 = vpop.f32.mrb[0].mxu0
      %v8659 = vpop.f32.mrb[0].mxu0
      %v8660 = vadd.f32 0.0, %v8659
      %v8661 = vpop.f32.mrb[0].mxu0
      %8662 = vmatprep.mubr.bf16.mxu0 0
      %8663 = vmatmul.mubr.bf16.gmra.mrb[0].mxu0 %v8442
      %v8664 = vpop.f32.mrb[0].mxu0
      %v8665 = vadd.f32 0.0, %v8664
      %v8666 = vpop.f32.mrb[0].mxu0
      %v8667 = vpop.f32.mrb[0].mxu0
      %v8668 = vadd.f32 0.0, %v8667
      %v8669 = vpop.f32.mrb[0].mxu0
      %8670 = vmatprep.mubr.bf16.mxu0 0
      %8671 = vmatmul.mubr.bf16.gmra.mrb[0].mxu0 %v8443
      %v8672 = vpop.f32.mrb[0].mxu0
      %v8673 = vadd.f32 0.0, %v8672
      %v8674 = vpop.f32.mrb[0].mxu0
      %v8675 = vpop.f32.mrb[0].mxu0
      %v8676 = vadd.f32 0.0, %v8675
      %v8677 = vpop.f32.mrb[0].mxu0
      %8678 = vmatprep.mubr.bf16.mxu0 0
      %8679 = vmatmul.mubr.bf16.gmra.mrb[0].mxu0 %v8444
      %v8680 = vpop.f32.mrb[0].mxu0
      %v8681 = vadd.f32 0.0, %v8680
      %v8682 = vpop.f32.mrb[0].mxu0
      %v8683 = vpop.f32.mrb[0].mxu0
      %v8684 = vadd.f32 0.0, %v8683
      %v8685 = vpop.f32.mrb[0].mxu0
      %8686 = vmatprep.mubr.bf16.mxu0 0
      %8687 = vmatmul.mubr.bf16.gmra.mrb[0].mxu0 %v8445
      %v8688 = vpop.f32.mrb[0].mxu0
      %v8689 = vadd.f32 0.0, %v8688
      %v8690 = vpop.f32.mrb[0].mxu0
      %v8691 = vpop.f32.mrb[0].mxu0
      %v8692 = vadd.f32 0.0, %v8691
      %v8693 = vpop.f32.mrb[0].mxu0
      %8694 = vmatprep.mubr.bf16.mxu0 0
      %8695 = vmatmul.mubr.bf16.gmra.mrb[0].mxu0 %v8446
      %v8696 = vpop.f32.mrb[0].mxu0
      %v8697 = vadd.f32 0.0, %v8696
      %v8698 = vpop.f32.mrb[0].mxu0
      %v8699 = vpop.f32.mrb[0].mxu0
      %v8700 = vadd.f32 0.0, %v8699
      %v8701 = vpop.f32.mrb[0].mxu0
      %8702 = vmatprep.mubr.bf16.mxu0 0
      %8703 = vmatmul.mubr.bf16.gmra.mrb[0].mxu0 %v8447
      %v8704 = vpop.f32.mrb[0].mxu0
      %v8705 = vadd.f32 0.0, %v8704
      %v8706 = vpop.f32.mrb[0].mxu0
      %v8707 = vpop.f32.mrb[0].mxu0
      %v8708 = vadd.f32 0.0, %v8707
      %v8709 = vpop.f32.mrb[0].mxu0
      %8710 = vmatprep.mubr.bf16.mxu0 0
      %8711 = vmatmul.mubr.bf16.gmra.mrb[0].mxu0 %v8448
      %v8712 = vpop.f32.mrb[0].mxu0
      %v8713 = vadd.f32 0.0, %v8712
      %v8714 = vpop.f32.mrb[0].mxu0
      %v8715 = vpop.f32.mrb[0].mxu0
      %v8716 = vadd.f32 0.0, %v8715
      %v8717 = vpop.f32.mrb[0].mxu0
      %8718 = vmatprep.mubr.bf16.mxu0 0
      %8719 = vmatmul.mubr.bf16.gmra.mrb[0].mxu0 %v8449
      %v8720 = vpop.f32.mrb[0].mxu0
      %v8721 = vadd.f32 0.0, %v8720
      %v8722 = vpop.f32.mrb[0].mxu0
      %v8723 = vpop.f32.mrb[0].mxu0
      %v8724 = vadd.f32 0.0, %v8723
      %v8725 = vpop.f32.mrb[0].mxu0
      %8726 = vmatprep.mubr.bf16.mxu0 0
      %8727 = vmatmul.mubr.bf16.gmra.mrb[0].mxu0 %v8450
      %v8728 = vpop.f32.mrb[0].mxu0
      %v8729 = vadd.f32 0.0, %v8728
      %v8730 = vpop.f32.mrb[0].mxu0
      %v8731 = vpop.f32.mrb[0].mxu0
      %v8732 = vadd.f32 0.0, %v8731
      %v8733 = vpop.f32.mrb[0].mxu0
      %8734 = vmatprep.mubr.bf16.mxu0 0
      %8735 = vmatmul.mubr.bf16.gmra.mrb[0].mxu0 %v8451
      %v8736 = vpop.f32.mrb[0].mxu0
      %v8737 = vadd.f32 0.0, %v8736
      %v8738 = vpop.f32.mrb[0].mxu0
      %v8739 = vpop.f32.mrb[0].mxu0
      %v8740 = vadd.f32 0.0, %v8739
      %v8741 = vpop.f32.mrb[0].mxu0
      %8742 = vmatprep.mubr.bf16.mxu0 0
      %8743 = vmatmul.mubr.bf16.gmra.mrb[0].mxu0 %v8452
      %v8744 = vpop.f32.mrb[0].mxu0
      %v8745 = vadd.f32 0.0, %v8744
      %v8746 = vpop.f32.mrb[0].mxu0
      %v8747 = vpop.f32.mrb[0].mxu0
      %v8748 = vadd.f32 0.0, %v8747
      %v8749 = vpop.f32.mrb[0].mxu0
      %8750 = vmatprep.mubr.bf16.mxu0 0
      %8751 = vmatmul.mubr.bf16.gmra.mrb[0].mxu0 %v8453
      %v8752 = vpop.f32.mrb[0].mxu0
      %v8753 = vadd.f32 0.0, %v8752
      %v8754 = vpop.f32.mrb[0].mxu0
      %v8755 = vpop.f32.mrb[0].mxu0
      %v8756 = vadd.f32 0.0, %v8755
      %v8757 = vpop.f32.mrb[0].mxu0
      %8758 = vmatprep.mubr.bf16.mxu0 0
      %8759 = vmatmul.mubr.bf16.gmra.mrb[0].mxu0 %v8454
      %v8760 = vpop.f32.mrb[0].mxu0
      %v8761 = vadd.f32 0.0, %v8760
      %v8762 = vpop.f32.mrb[0].mxu0
      %v8763 = vpop.f32.mrb[0].mxu0
      %v8764 = vadd.f32 0.0, %v8763
      %v8765 = vpop.f32.mrb[0].mxu0
      %8766 = vmatprep.mubr.bf16.mxu0 0
      %8767 = vmatmul.mubr.bf16.gmra.mrb[0].mxu0 %v8455
      %v8768 = vpop.f32.mrb[0].mxu0
      %v8769 = vadd.f32 0.0, %v8768
      %v8770 = vpop.f32.mrb[0].mxu0
      %v8771 = vpop.f32.mrb[0].mxu0
      %v8772 = vadd.f32 0.0, %v8771
      %v8773 = vpop.f32.mrb[0].mxu0
      %8774 = vmatprep.mubr.bf16.mxu0 0
      %8775 = vmatmul.mubr.bf16.gmra.mrb[0].mxu0 %v8456
      %v8776 = vpop.f32.mrb[0].mxu0
      %v8777 = vadd.f32 0.0, %v8776
      %v8778 = vpop.f32.mrb[0].mxu0
      %v8779 = vpop.f32.mrb[0].mxu0
      %v8780 = vadd.f32 0.0, %v8779
      %v8781 = vpop.f32.mrb[0].mxu0
      %8782 = vmatprep.mubr.bf16.mxu0 0
      %8783 = vmatmul.mubr.bf16.gmra.mrb[0].mxu0 %v8457
      %v8784 = vpop.f32.mrb[0].mxu0
      %v8785 = vadd.f32 0.0, %v8784
      %v8786 = vpop.f32.mrb[0].mxu0
      %v8787 = vpop.f32.mrb[0].mxu0
      %v8788 = vadd.f32 0.0, %v8787
      %v8789 = vpop.f32.mrb[0].mxu0
      %8790 = vmatprep.mubr.bf16.mxu0 0
      %8791 = vmatmul.mubr.bf16.gmra.mrb[0].mxu0 %v8458
      %v8792 = vpop.f32.mrb[0].mxu0
      %v8793 = vadd.f32 0.0, %v8792
      %v8794 = vpop.f32.mrb[0].mxu0
      %v8795 = vpop.f32.mrb[0].mxu0
      %v8796 = vadd.f32 0.0, %v8795
      %v8797 = vpop.f32.mrb[0].mxu0
      %8798 = vmatprep.mubr.bf16.mxu0 0
      %8799 = vmatmul.mubr.bf16.gmra.mrb[0].mxu0 %v8459
      %v8800 = vpop.f32.mrb[0].mxu0
      %v8801 = vadd.f32 0.0, %v8800
      %v8802 = vpop.f32.mrb[0].mxu0
      %v8803 = vpop.f32.mrb[0].mxu0
      %v8804 = vadd.f32 0.0, %v8803
      %v8805 = vpop.f32.mrb[0].mxu0
      %8806 = vmatprep.mubr.bf16.mxu0 0
      %8807 = vmatmul.mubr.bf16.gmra.mrb[0].mxu0 %v8460
      %v8808 = vpop.f32.mrb[0].mxu0
      %v8809 = vadd.f32 0.0, %v8808
      %v8810 = vpop.f32.mrb[0].mxu0
      %v8811 = vpop.f32.mrb[0].mxu0
      %v8812 = vadd.f32 0.0, %v8811
      %v8813 = vpop.f32.mrb[0].mxu0
      %8814 = vmatprep.mubr.bf16.mxu0 0
      %8815 = vmatmul.mubr.bf16.gmra.mrb[0].mxu0 %v8461
      %v8816 = vpop.f32.mrb[0].mxu0
      %v8817 = vadd.f32 0.0, %v8816
      %v8818 = vpop.f32.mrb[0].mxu0
      %v8819 = vpop.f32.mrb[0].mxu0
      %v8820 = vadd.f32 0.0, %v8819
      %v8821 = vpop.f32.mrb[0].mxu0
      %8822 = vmatprep.mubr.bf16.mxu0 0
      %8823 = vmatmul.mubr.bf16.gmra.mrb[0].mxu0 %v8462
      %v8824 = vpop.f32.mrb[0].mxu0
      %v8825 = vadd.f32 0.0, %v8824
      %v8826 = vpop.f32.mrb[0].mxu0
      %v8827 = vpop.f32.mrb[0].mxu0
      %v8828 = vadd.f32 0.0, %v8827
      %v8829 = vpop.f32.mrb[0].mxu0
      %8830 = vmatprep.mubr.bf16.mxu0 0
      %8831 = vmatmul.mubr.bf16.gmra.mrb[0].mxu0 %v8463
      %v8832 = vpop.f32.mrb[0].mxu0
      %v8833 = vadd.f32 0.0, %v8832
      %v8834 = vpop.f32.mrb[0].mxu0
      %v8835 = vpop.f32.mrb[0].mxu0
      %v8836 = vadd.f32 0.0, %v8835
      %v8837 = vpop.f32.mrb[0].mxu0
      %8838 = vmatprep.mubr.bf16.mxu0 0
      %8839 = vmatmul.mubr.bf16.gmra.mrb[0].mxu0 %v8464
      %v8840 = vpop.f32.mrb[0].mxu0
      %v8841 = vadd.f32 0.0, %v8840
      %v8842 = vpop.f32.mrb[0].mxu0
      %v8843 = vpop.f32.mrb[0].mxu0
      %v8844 = vadd.f32 0.0, %v8843
      %v8845 = vpop.f32.mrb[0].mxu0
      %8846 = vmatprep.mubr.bf16.mxu0 0
      %8847 = vmatmul.mubr.bf16.gmra.mrb[0].mxu0 %v8465
      %v8848 = vpop.f32.mrb[0].mxu0
      %v8849 = vadd.f32 0.0, %v8848
      %v8850 = vpop.f32.mrb[0].mxu0
      %v8851 = vpop.f32.mrb[0].mxu0
      %v8852 = vadd.f32 0.0, %v8851
      %v8853 = vpop.f32.mrb[0].mxu0
      %8854 = vmatprep.mubr.bf16.mxu0 0
      %8855 = vmatmul.mubr.bf16.gmra.mrb[0].mxu0 %v8466
      %v8856 = vpop.f32.mrb[0].mxu0
      %v8857 = vadd.f32 0.0, %v8856
      %v8858 = vpop.f32.mrb[0].mxu0
      %v8859 = vpop.f32.mrb[0].mxu0
      %v8860 = vadd.f32 0.0, %v8859
      %v8861 = vpop.f32.mrb[0].mxu0
      %8862 = vmatprep.mubr.bf16.mxu0 0
      %8863 = vmatmul.mubr.bf16.gmra.mrb[0].mxu0 %v8467
      %v8864 = vpop.f32.mrb[0].mxu0
      %v8865 = vadd.f32 0.0, %v8864
      %v8866 = vpop.f32.mrb[0].mxu0
      %v8867 = vpop.f32.mrb[0].mxu0
      %v8868 = vadd.f32 0.0, %v8867
      %v8869 = vpop.f32.mrb[0].mxu0
      %8870 = vmatprep.mubr.bf16.mxu0 0
      %8871 = vmatmul.mubr.bf16.gmra.mrb[0].mxu0 %v8468
      %v8872 = vpop.f32.mrb[0].mxu0
      %v8873 = vadd.f32 0.0, %v8872
      %v8874 = vpop.f32.mrb[0].mxu0
      %v8875 = vpop.f32.mrb[0].mxu0
      %v8876 = vadd.f32 0.0, %v8875
      %v8877 = vpop.f32.mrb[0].mxu0
      %8878 = vmatprep.mubr.bf16.mxu0 0
      %8879 = vmatmul.mubr.bf16.gmra.mrb[0].mxu0 %v8469
      %v8880 = vpop.f32.mrb[0].mxu0
      %v8881 = vadd.f32 0.0, %v8880
      %v8882 = vpop.f32.mrb[0].mxu0
      %v8883 = vpop.f32.mrb[0].mxu0
      %v8884 = vadd.f32 0.0, %v8883
      %v8885 = vpop.f32.mrb[0].mxu0
      %8886 = vmatprep.mubr.bf16.mxu0 0
      %8887 = vmatmul.mubr.bf16.gmra.mrb[0].mxu0 %v8470
      %v8888 = vpop.f32.mrb[0].mxu0
      %v8889 = vadd.f32 0.0, %v8888
      %v8890 = vpop.f32.mrb[0].mxu0
      %v8891 = vpop.f32.mrb[0].mxu0
      %v8892 = vadd.f32 0.0, %v8891
      %v8893 = vpop.f32.mrb[0].mxu0
      %8894 = vmatprep.mubr.bf16.mxu0 0
      %8895 = vmatmul.mubr.bf16.gmra.mrb[0].mxu0 %v8471
      %v8896 = vpop.f32.mrb[0].mxu0
      %v8897 = vadd.f32 0.0, %v8896
      %v8898 = vpop.f32.mrb[0].mxu0
      %v8899 = vpop.f32.mrb[0].mxu0
      %v8900 = vadd.f32 0.0, %v8899
      %v8901 = vpop.f32.mrb[0].mxu0
      %8902 = vmatprep.mubr.bf16.mxu0 0
      %8903 = vmatmul.mubr.bf16.gmra.mrb[0].mxu0 %v8472
      %v8904 = vpop.f32.mrb[0].mxu0
      %v8905 = vadd.f32 0.0, %v8904
      %v8906 = vpop.f32.mrb[0].mxu0
      %v8907 = vpop.f32.mrb[0].mxu0
      %v8908 = vadd.f32 0.0, %v8907
      %v8909 = vpop.f32.mrb[0].mxu0
      %8910 = vmatprep.mubr.bf16.mxu0 0
      %8911 = vmatmul.mubr.bf16.gmra.mrb[0].mxu0 %v8473
      %v8912 = vpop.f32.mrb[0].mxu0
      %v8913 = vadd.f32 0.0, %v8912
      %v8914 = vpop.f32.mrb[0].mxu0
      %v8915 = vpop.f32.mrb[0].mxu0
      %v8916 = vadd.f32 0.0, %v8915
      %v8917 = vpop.f32.mrb[0].mxu0
      %8918 = vmatprep.mubr.bf16.mxu0 0
      %8919 = vmatmul.mubr.bf16.gmra.mrb[0].mxu0 %v8474
      %v8920 = vpop.f32.mrb[0].mxu0
      %v8921 = vadd.f32 0.0, %v8920
      %v8922 = vpop.f32.mrb[0].mxu0
      %v8923 = vpop.f32.mrb[0].mxu0
      %v8924 = vadd.f32 0.0, %v8923
      %v8925 = vpop.f32.mrb[0].mxu0
      %8926 = vmatprep.mubr.bf16.mxu0 0
      %8927 = vmatmul.mubr.bf16.gmra.mrb[0].mxu0 %v8475
      %v8928 = vpop.f32.mrb[0].mxu0
      %v8929 = vadd.f32 0.0, %v8928
      %v8930 = vpop.f32.mrb[0].mxu0
      %v8931 = vpop.f32.mrb[0].mxu0
      %v8932 = vadd.f32 0.0, %v8931
      %v8933 = vpop.f32.mrb[0].mxu0
      %8934 = vmatprep.mubr.bf16.mxu0 0
      %8935 = vmatmul.mubr.bf16.gmra.mrb[0].mxu0 %v8476
      %v8936 = vpop.f32.mrb[0].mxu0
      %v8937 = vadd.f32 0.0, %v8936
      %v8938 = vpop.f32.mrb[0].mxu0
      %v8939 = vpop.f32.mrb[0].mxu0
      %v8940 = vadd.f32 0.0, %v8939
      %v8941 = vpop.f32.mrb[0].mxu0
      %8942 = vmatprep.mubr.bf16.mxu0 0
      %8943 = vmatmul.mubr.bf16.gmra.mrb[0].mxu0 %v8477
      %v8944 = vpop.f32.mrb[0].mxu0
      %v8945 = vadd.f32 0.0, %v8944
      %v8946 = vpop.f32.mrb[0].mxu0
      %v8947 = vpop.f32.mrb[0].mxu0
      %v8948 = vadd.f32 0.0, %v8947
      %v8949 = vpop.f32.mrb[0].mxu0
      %8950 = vmatprep.mubr.bf16.mxu0 0
      %8951 = vmatmul.mubr.bf16.gmra.mrb[0].mxu0 %v8478
      %v8952 = vpop.f32.mrb[0].mxu0
      %v8953 = vadd.f32 0.0, %v8952
      %v8954 = vpop.f32.mrb[0].mxu0
      %v8955 = vpop.f32.mrb[0].mxu0
      %v8956 = vadd.f32 0.0, %v8955
      %v8957 = vpop.f32.mrb[0].mxu0
      %8958 = vmatprep.mubr.bf16.mxu0 0
      %8959 = vmatmul.mubr.bf16.gmra.mrb[0].mxu0 %v8479
      %v8960 = vpop.f32.mrb[0].mxu0
      %v8961 = vadd.f32 0.0, %v8960
      %v8962 = vpop.f32.mrb[0].mxu0
      %v8963 = vpop.f32.mrb[0].mxu0
      %v8964 = vadd.f32 0.0, %v8963
      %v8965 = vpop.f32.mrb[0].mxu0
      %8966 = vmatprep.mubr.bf16.mxu0 0
      %8967 = vmatmul.mubr.bf16.gmra.mrb[0].mxu0 %v8480
      %v8968 = vpop.f32.mrb[0].mxu0
      %v8969 = vadd.f32 0.0, %v8968
      %v8970 = vpop.f32.mrb[0].mxu0
      %v8971 = vpop.f32.mrb[0].mxu0
      %v8972 = vadd.f32 0.0, %v8971
      %v8973 = vpop.f32.mrb[0].mxu0
      %8974 = vmatprep.mubr.bf16.mxu0 0
      %8975 = vmatmul.mubr.bf16.gmra.mrb[0].mxu0 %v8481
      %v8976 = vpop.f32.mrb[0].mxu0
      %v8977 = vadd.f32 0.0, %v8976
      %v8978 = vpop.f32.mrb[0].mxu0
      %v8979 = vpop.f32.mrb[0].mxu0
      %v8980 = vadd.f32 0.0, %v8979
      %v8981 = vpop.f32.mrb[0].mxu0
      %8982 = vmatprep.mubr.bf16.mxu0 0
      %8983 = vmatmul.mubr.bf16.gmra.mrb[0].mxu0 %v8482
      %v8984 = vpop.f32.mrb[0].mxu0
      %v8985 = vadd.f32 0.0, %v8984
      %v8986 = vpop.f32.mrb[0].mxu0
      %v8987 = vpop.f32.mrb[0].mxu0
      %v8988 = vadd.f32 0.0, %v8987
      %v8989 = vpop.f32.mrb[0].mxu0
      %8990 = vmatprep.mubr.bf16.mxu0 0
      %8991 = vmatmul.mubr.bf16.gmra.mrb[0].mxu0 %v8483
      %v8992 = vpop.f32.mrb[0].mxu0
      %v8993 = vadd.f32 0.0, %v8992
      %v8994 = vpop.f32.mrb[0].mxu0
      %v8995 = vpop.f32.mrb[0].mxu0
      %v8996 = vadd.f32 0.0, %v8995
      %v8997 = vpop.f32.mrb[0].mxu0
      %8998 = vmatprep.mubr.bf16.mxu0 0
      %8999 = vmatmul.mubr.bf16.gmra.mrb[0].mxu0 %v8484
      %v9000 = vpop.f32.mrb[0].mxu0
      %v9001 = vadd.f32 0.0, %v9000
      %v9002 = vpop.f32.mrb[0].mxu0
      %v9003 = vpop.f32.mrb[0].mxu0
      %v9004 = vadd.f32 0.0, %v9003
      %v9005 = vpop.f32.mrb[0].mxu0
      %9006 = vmatprep.mubr.bf16.mxu0 0
      %9007 = vmatmul.mubr.bf16.gmra.mrb[0].mxu0 %v8485
      %v9008 = vpop.f32.mrb[0].mxu0
      %v9009 = vadd.f32 0.0, %v9008
      %v9010 = vpop.f32.mrb[0].mxu0
      %v9011 = vpop.f32.mrb[0].mxu0
      %v9012 = vadd.f32 0.0, %v9011
      %v9013 = vpop.f32.mrb[0].mxu0
      %9014 = vmatprep.mubr.bf16.mxu0 0
      %9015 = vmatmul.mubr.bf16.gmra.mrb[0].mxu0 %v8486
      %v9016 = vpop.f32.mrb[0].mxu0
      %v9017 = vadd.f32 0.0, %v9016
      %v9018 = vpop.f32.mrb[0].mxu0
      %v9019 = vpop.f32.mrb[0].mxu0
      %v9020 = vadd.f32 0.0, %v9019
      %v9021 = vpop.f32.mrb[0].mxu0
      %9022 = vmatprep.mubr.bf16.mxu0 0
      %9023 = vmatmul.mubr.bf16.gmra.mrb[0].mxu0 %v8487
      %v9024 = vpop.f32.mrb[0].mxu0
      %v9025 = vadd.f32 0.0, %v9024
      %v9026 = vpop.f32.mrb[0].mxu0
      %v9027 = vpop.f32.mrb[0].mxu0
      %v9028 = vadd.f32 0.0, %v9027
      %v9029 = vpop.f32.mrb[0].mxu0
      %9030 = vmatprep.mubr.bf16.mxu0 0
      %9031 = vmatmul.mubr.bf16.gmra.mrb[0].mxu0 %v8488
      %v9032 = vpop.f32.mrb[0].mxu0
      %v9033 = vadd.f32 0.0, %v9032
      %v9034 = vpop.f32.mrb[0].mxu0
      %v9035 = vpop.f32.mrb[0].mxu0
      %v9036 = vadd.f32 0.0, %v9035
      %v9037 = vpop.f32.mrb[0].mxu0
      %9038 = vmatprep.mubr.bf16.mxu0 0
      %9039 = vmatmul.mubr.bf16.gmra.mrb[0].mxu0 %v8489
      %v9040 = vpop.f32.mrb[0].mxu0
      %v9041 = vadd.f32 0.0, %v9040
      %v9042 = vpop.f32.mrb[0].mxu0
      %v9043 = vpop.f32.mrb[0].mxu0
      %v9044 = vadd.f32 0.0, %v9043
      %v9045 = vpop.f32.mrb[0].mxu0
      %9046 = vmatprep.mubr.bf16.mxu0 0
      %9047 = vmatmul.mubr.bf16.gmra.mrb[0].mxu0 %v8490
      %v9048 = vpop.f32.mrb[0].mxu0
      %v9049 = vadd.f32 0.0, %v9048
      %v9050 = vpop.f32.mrb[0].mxu0
      %v9051 = vpop.f32.mrb[0].mxu0
      %v9052 = vadd.f32 0.0, %v9051
      %v9053 = vpop.f32.mrb[0].mxu0
      %9054 = vmatprep.mubr.bf16.mxu0 0
      %9055 = vmatmul.mubr.bf16.gmra.mrb[0].mxu0 %v8491
      %v9056 = vpop.f32.mrb[0].mxu0
      %v9057 = vadd.f32 0.0, %v9056
      %v9058 = vpop.f32.mrb[0].mxu0
      %v9059 = vpop.f32.mrb[0].mxu0
      %v9060 = vadd.f32 0.0, %v9059
      %v9061 = vpop.f32.mrb[0].mxu0
      %9062 = vmatprep.mubr.bf16.mxu0 0
      %9063 = vmatmul.mubr.bf16.gmra.mrb[0].mxu0 %v8492
      %v9064 = vpop.f32.mrb[0].mxu0
      %v9065 = vadd.f32 0.0, %v9064
      %v9066 = vpop.f32.mrb[0].mxu0
      %v9067 = vpop.f32.mrb[0].mxu0
      %v9068 = vadd.f32 0.0, %v9067
      %v9069 = vpop.f32.mrb[0].mxu0
      %9070 = vmatprep.mubr.bf16.mxu0 0
      %9071 = vmatmul.mubr.bf16.gmra.mrb[0].mxu0 %v8493
      %v9072 = vpop.f32.mrb[0].mxu0
      %v9073 = vadd.f32 0.0, %v9072
      %v9074 = vpop.f32.mrb[0].mxu0
      %v9075 = vpop.f32.mrb[0].mxu0
      %v9076 = vadd.f32 0.0, %v9075
      %v9077 = vpop.f32.mrb[0].mxu0
      %9078 = vmatprep.mubr.bf16.mxu0 0
      %9079 = vmatmul.mubr.bf16.gmra.mrb[0].mxu0 %v8494
      %v9080 = vpop.f32.mrb[0].mxu0
      %v9081 = vadd.f32 0.0, %v9080
      %v9082 = vpop.f32.mrb[0].mxu0
      %v9083 = vpop.f32.mrb[0].mxu0
      %v9084 = vadd.f32 0.0, %v9083
      %v9085 = vpop.f32.mrb[0].mxu0
      %9086 = vmatprep.mubr.bf16.mxu0 0
      %9087 = vmatmul.mubr.bf16.gmra.mrb[0].mxu0 %v8495
      %v9088 = vpop.f32.mrb[0].mxu0
      %v9089 = vadd.f32 0.0, %v9088
      %v9090 = vpop.f32.mrb[0].mxu0
      %v9091 = vpop.f32.mrb[0].mxu0
      %v9092 = vadd.f32 0.0, %v9091
      %v9093 = vpop.f32.mrb[0].mxu0
      %9094 = vmatprep.mubr.bf16.mxu0 0
      %9095 = vmatmul.mubr.bf16.gmra.mrb[0].mxu0 %v8496
      %v9096 = vpop.f32.mrb[0].mxu0
      %v9097 = vadd.f32 0.0, %v9096
      %v9098 = vpop.f32.mrb[0].mxu0
      %v9099 = vpop.f32.mrb[0].mxu0
      %v9100 = vadd.f32 0.0, %v9099
      %v9101 = vpop.f32.mrb[0].mxu0
      %9102 = vmatprep.mubr.bf16.mxu0 0
      %9103 = vmatmul.mubr.bf16.gmra.mrb[0].mxu0 %v8497
      %v9104 = vpop.f32.mrb[0].mxu0
      %v9105 = vadd.f32 0.0, %v9104
      %v9106 = vpop.f32.mrb[0].mxu0
      %v9107 = vpop.f32.mrb[0].mxu0
      %v9108 = vadd.f32 0.0, %v9107
      %v9109 = vpop.f32.mrb[0].mxu0
      %9110 = vmatprep.mubr.bf16.mxu0 0
      %9111 = vmatmul.mubr.bf16.gmra.mrb[0].mxu0 %v8498
      %v9112 = vpop.f32.mrb[0].mxu0
      %v9113 = vadd.f32 0.0, %v9112
      %v9114 = vpop.f32.mrb[0].mxu0
      %v9115 = vpop.f32.mrb[0].mxu0
      %v9116 = vadd.f32 0.0, %v9115
      %v9117 = vpop.f32.mrb[0].mxu0
      %9118 = vmatprep.mubr.bf16.mxu0 0
      %9119 = vmatmul.mubr.bf16.gmra.mrb[0].mxu0 %v8499
      %v9120 = vpop.f32.mrb[0].mxu0
      %v9121 = vadd.f32 0.0, %v9120
      %v9122 = vpop.f32.mrb[0].mxu0
      %v9123 = vpop.f32.mrb[0].mxu0
      %v9124 = vadd.f32 0.0, %v9123
      %v9125 = vpop.f32.mrb[0].mxu0
      %9126 = vmatprep.mubr.bf16.mxu0 0
      %9127 = vmatmul.mubr.bf16.gmra.mrb[0].mxu0 %v8500
      %v9128 = vpop.f32.mrb[0].mxu0
      %v9129 = vadd.f32 0.0, %v9128
      %v9130 = vpop.f32.mrb[0].mxu0
      %v9131 = vpop.f32.mrb[0].mxu0
      %v9132 = vadd.f32 0.0, %v9131
      %v9133 = vpop.f32.mrb[0].mxu0
      %9134 = vmatprep.mubr.bf16.mxu0 0
      %9135 = vmatmul.mubr.bf16.gmra.mrb[0].mxu0 %v8501
      %v9136 = vpop.f32.mrb[0].mxu0
      %v9137 = vadd.f32 0.0, %v9136
      %v9138 = vpop.f32.mrb[0].mxu0
      %v9139 = vpop.f32.mrb[0].mxu0
      %v9140 = vadd.f32 0.0, %v9139
      %v9141 = vpop.f32.mrb[0].mxu0
      %9142 = vmatprep.mubr.bf16.mxu0 0
      %9143 = vmatmul.mubr.bf16.gmra.mrb[0].mxu0 %v8502
      %v9144 = vpop.f32.mrb[0].mxu0
      %v9145 = vadd.f32 0.0, %v9144
      %v9146 = vpop.f32.mrb[0].mxu0
      %v9147 = vpop.f32.mrb[0].mxu0
      %v9148 = vadd.f32 0.0, %v9147
      %v9149 = vpop.f32.mrb[0].mxu0
      %9150 = vmatprep.mubr.bf16.mxu0 0
      %9151 = vmatmul.mubr.bf16.gmra.mrb[0].mxu0 %v8503
      %v9152 = vpop.f32.mrb[0].mxu0
      %v9153 = vadd.f32 0.0, %v9152
      %v9154 = vpop.f32.mrb[0].mxu0
      %v9155 = vpop.f32.mrb[0].mxu0
      %v9156 = vadd.f32 0.0, %v9155
      %v9157 = vpop.f32.mrb[0].mxu0
      %9158 = vmatprep.mubr.bf16.mxu0 0
      %9159 = vmatmul.mubr.bf16.gmra.mrb[0].mxu0 %v8504
      %v9160 = vpop.f32.mrb[0].mxu0
      %v9161 = vadd.f32 0.0, %v9160
      %v9162 = vpop.f32.mrb[0].mxu0
      %v9163 = vpop.f32.mrb[0].mxu0
      %v9164 = vadd.f32 0.0, %v9163
      %v9165 = vpop.f32.mrb[0].mxu0
      %9166 = vmatprep.mubr.bf16.mxu0 0
      %9167 = vmatmul.mubr.bf16.gmra.mrb[0].mxu0 %v8505
      %v9168 = vpop.f32.mrb[0].mxu0
      %v9169 = vadd.f32 0.0, %v9168
      %v9170 = vpop.f32.mrb[0].mxu0
      %v9171 = vpop.f32.mrb[0].mxu0
      %v9172 = vadd.f32 0.0, %v9171
      %v9173 = vpop.f32.mrb[0].mxu0
      %9174 = vmatprep.mubr.bf16.mxu0 0
      %9175 = vmatmul.mubr.bf16.gmra.mrb[0].mxu0 %v8506
      %v9176 = vpop.f32.mrb[0].mxu0
      %v9177 = vadd.f32 0.0, %v9176
      %v9178 = vpop.f32.mrb[0].mxu0
      %v9179 = vpop.f32.mrb[0].mxu0
      %v9180 = vadd.f32 0.0, %v9179
      %v9181 = vpop.f32.mrb[0].mxu0
      %9182 = vmatprep.mubr.bf16.mxu0 0
      %9183 = vmatmul.mubr.bf16.gmra.mrb[0].mxu0 %v8507
      %v9184 = vpop.f32.mrb[0].mxu0
      %v9185 = vadd.f32 0.0, %v9184
      %v9186 = vpop.f32.mrb[0].mxu0
      %v9187 = vpop.f32.mrb[0].mxu0
      %v9188 = vadd.f32 0.0, %v9187
      %v9189 = vpop.f32.mrb[0].mxu0
      %9190 = vmatprep.mubr.bf16.mxu0 0
      %9191 = vmatmul.mubr.bf16.gmra.mrb[0].mxu0 %v8508
      %v9192 = vpop.f32.mrb[0].mxu0
      %v9193 = vadd.f32 0.0, %v9192
      %v9194 = vpop.f32.mrb[0].mxu0
      %v9195 = vpop.f32.mrb[0].mxu0
      %v9196 = vadd.f32 0.0, %v9195
      %v9197 = vpop.f32.mrb[0].mxu0
      %9198 = vmatprep.mubr.bf16.mxu0 0
      %9199 = vmatmul.mubr.bf16.gmra.mrb[0].mxu0 %v8509
      %v9200 = vpop.f32.mrb[0].mxu0
      %v9201 = vadd.f32 0.0, %v9200
      %v9202 = vpop.f32.mrb[0].mxu0
      %v9203 = vpop.f32.mrb[0].mxu0
      %v9204 = vadd.f32 0.0, %v9203
      %v9205 = vpop.f32.mrb[0].mxu0
      %9206 = vmatprep.mubr.bf16.mxu0 0
      %9207 = vmatmul.mubr.bf16.gmra.mrb[0].mxu0 %v8510
      %v9208 = vpop.f32.mrb[0].mxu0
      %v9209 = vadd.f32 0.0, %v9208
      %v9210 = vpop.f32.mrb[0].mxu0
      %v9211 = vpop.f32.mrb[0].mxu0
      %v9212 = vadd.f32 0.0, %v9211
      %v9213 = vpop.f32.mrb[0].mxu0
      %9214 = vmatprep.mubr.bf16.mxu0 0
      %9215 = vmatmul.mubr.bf16.gmra.mrb[0].mxu0 %v8511
      %v9216 = vpop.f32.mrb[0].mxu0
      %v9217 = vadd.f32 0.0, %v9216
      %v9218 = vpop.f32.mrb[0].mxu0
      %v9219 = vpop.f32.mrb[0].mxu0
      %v9220 = vadd.f32 0.0, %v9219
      %v9221 = vpop.f32.mrb[0].mxu0
      %9222 = vmatprep.mubr.bf16.mxu0 0
      %9223 = vmatmul.mubr.bf16.gmra.mrb[0].mxu0 %v8512
      %v9224 = vpop.f32.mrb[0].mxu0
      %v9225 = vadd.f32 0.0, %v9224
      %v9226 = vpop.f32.mrb[0].mxu0
      %v9227 = vpop.f32.mrb[0].mxu0
      %v9228 = vadd.f32 0.0, %v9227
      %v9229 = vpop.f32.mrb[0].mxu0
      %9230 = vmatprep.mubr.bf16.mxu0 0
      %9231 = vmatmul.mubr.bf16.gmra.mrb[0].mxu0 %v8513
      %v9232 = vpop.f32.mrb[0].mxu0
      %v9233 = vadd.f32 0.0, %v9232
      %v9234 = vpop.f32.mrb[0].mxu0
      %v9235 = vpop.f32.mrb[0].mxu0
      %v9236 = vadd.f32 0.0, %v9235
      %v9237 = vpop.f32.mrb[0].mxu0
      %9238 = vmatprep.mubr.bf16.mxu0 0
      %9239 = vmatmul.mubr.bf16.gmra.mrb[0].mxu0 %v8514
      %v9240 = vpop.f32.mrb[0].mxu0
      %v9241 = vadd.f32 0.0, %v9240
      %v9242 = vpop.f32.mrb[0].mxu0
      %v9243 = vpop.f32.mrb[0].mxu0
      %v9244 = vadd.f32 0.0, %v9243
      %v9245 = vpop.f32.mrb[0].mxu0
      %9246 = vmatprep.mubr.bf16.mxu0 0
      %9247 = vmatmul.mubr.bf16.gmra.mrb[0].mxu0 %v8515
      %v9248 = vpop.f32.mrb[0].mxu0
      %v9249 = vadd.f32 0.0, %v9248
      %v9250 = vpop.f32.mrb[0].mxu0
      %v9251 = vpop.f32.mrb[0].mxu0
      %v9252 = vadd.f32 0.0, %v9251
      %v9253 = vpop.f32.mrb[0].mxu0
      %9254 = vmatprep.mubr.bf16.mxu0 0
      %9255 = vmatmul.mubr.bf16.gmra.mrb[0].mxu0 %v8516
      %v9256 = vpop.f32.mrb[0].mxu0
      %v9257 = vadd.f32 0.0, %v9256
      %v9258 = vpop.f32.mrb[0].mxu0
      %v9259 = vpop.f32.mrb[0].mxu0
      %v9260 = vadd.f32 0.0, %v9259
      %v9261 = vpop.f32.mrb[0].mxu0
      %9262 = vdwg.mxu0
      %v9263 = vpack.c.bf16 %v8620, %v8617
      %v9264 = vpack.c.bf16 %v8628, %v8625
      %v9265 = vpack.c.bf16 %v8636, %v8633
      %v9266 = vpack.c.bf16 %v8644, %v8641
      %v9267 = vpack.c.bf16 %v8652, %v8649
      %v9268 = vpack.c.bf16 %v8660, %v8657
      %v9269 = vpack.c.bf16 %v8668, %v8665
      %v9270 = vpack.c.bf16 %v8676, %v8673
      %v9271 = vpack.c.bf16 %v8684, %v8681
      %v9272 = vpack.c.bf16 %v8692, %v8689
      %v9273 = vpack.c.bf16 %v8700, %v8697
      %v9274 = vpack.c.bf16 %v8708, %v8705
      %v9275 = vpack.c.bf16 %v8716, %v8713
      %v9276 = vpack.c.bf16 %v8724, %v8721
      %v9277 = vpack.c.bf16 %v8732, %v8729
      %v9278 = vpack.c.bf16 %v8740, %v8737
      %v9279 = vpack.c.bf16 %v8748, %v8745
      %v9280 = vpack.c.bf16 %v8756, %v8753
      %v9281 = vpack.c.bf16 %v8764, %v8761
      %v9282 = vpack.c.bf16 %v8772, %v8769
      %v9283 = vpack.c.bf16 %v8780, %v8777
      %v9284 = vpack.c.bf16 %v8788, %v8785
      %v9285 = vpack.c.bf16 %v8796, %v8793
      %v9286 = vpack.c.bf16 %v8804, %v8801
      %v9287 = vpack.c.bf16 %v8812, %v8809
      %v9288 = vpack.c.bf16 %v8820, %v8817
      %v9289 = vpack.c.bf16 %v8828, %v8825
      %v9290 = vpack.c.bf16 %v8836, %v8833
      %v9291 = vpack.c.bf16 %v8844, %v8841
      %v9292 = vpack.c.bf16 %v8852, %v8849
      %v9293 = vpack.c.bf16 %v8860, %v8857
      %v9294 = vpack.c.bf16 %v8868, %v8865
      %v9295 = vpack.c.bf16 %v8876, %v8873
      %v9296 = vpack.c.bf16 %v8884, %v8881
      %v9297 = vpack.c.bf16 %v8892, %v8889
      %v9298 = vpack.c.bf16 %v8900, %v8897
      %v9299 = vpack.c.bf16 %v8908, %v8905
      %v9300 = vpack.c.bf16 %v8916, %v8913
      %v9301 = vpack.c.bf16 %v8924, %v8921
      %v9302 = vpack.c.bf16 %v8932, %v8929
      %v9303 = vpack.c.bf16 %v8940, %v8937
      %v9304 = vpack.c.bf16 %v8948, %v8945
      %v9305 = vpack.c.bf16 %v8956, %v8953
      %v9306 = vpack.c.bf16 %v8964, %v8961
      %v9307 = vpack.c.bf16 %v8972, %v8969
      %v9308 = vpack.c.bf16 %v8980, %v8977
      %v9309 = vpack.c.bf16 %v8988, %v8985
      %v9310 = vpack.c.bf16 %v8996, %v8993
      %v9311 = vpack.c.bf16 %v9004, %v9001
      %v9312 = vpack.c.bf16 %v9012, %v9009
      %v9313 = vpack.c.bf16 %v9020, %v9017
      %v9314 = vpack.c.bf16 %v9028, %v9025
      %v9315 = vpack.c.bf16 %v9036, %v9033
      %v9316 = vpack.c.bf16 %v9044, %v9041
      %v9317 = vpack.c.bf16 %v9052, %v9049
      %v9318 = vpack.c.bf16 %v9060, %v9057
      %v9319 = vpack.c.bf16 %v9068, %v9065
      %v9320 = vpack.c.bf16 %v9076, %v9073
      %v9321 = vpack.c.bf16 %v9084, %v9081
      %v9322 = vpack.c.bf16 %v9092, %v9089
      %v9323 = vpack.c.bf16 %v9100, %v9097
      %v9324 = vpack.c.bf16 %v9108, %v9105
      %v9325 = vpack.c.bf16 %v9116, %v9113
      %v9326 = vpack.c.bf16 %v9124, %v9121
      %v9327 = vpack.c.bf16 %v9132, %v9129
      %v9328 = vpack.c.bf16 %v9140, %v9137
      %v9329 = vpack.c.bf16 %v9148, %v9145
      %v9330 = vpack.c.bf16 %v9156, %v9153
      %v9331 = vpack.c.bf16 %v9164, %v9161
      %v9332 = vpack.c.bf16 %v9172, %v9169
      %v9333 = vpack.c.bf16 %v9180, %v9177
      %v9334 = vpack.c.bf16 %v9188, %v9185
      %v9335 = vpack.c.bf16 %v9196, %v9193
      %v9336 = vpack.c.bf16 %v9204, %v9201
      %v9337 = vpack.c.bf16 %v9212, %v9209
      %v9338 = vpack.c.bf16 %v9220, %v9217
      %v9339 = vpack.c.bf16 %v9228, %v9225
      %v9340 = vpack.c.bf16 %v9236, %v9233
      %v9341 = vpack.c.bf16 %v9244, %v9241
      %v9342 = vpack.c.bf16 %v9252, %v9249
      %v9343 = vpack.c.bf16 %v9260, %v9257
      %v9345 = vpack.i.b16 %v8533, %v8533
      %v9347 = vlaneseq
      %v9348 = vshrl.u32 %v9347, 7
      %v9349 = vsub.s32 0, %v9348
      %v9350 = vrot.slane %v9345, %v9349
      %v9351 = vadd.bf16 %v9263, %v9350
      %v9352 = vadd.bf16 %v9264, %v9350
      %v9353 = vadd.bf16 %v9265, %v9350
      %v9354 = vadd.bf16 %v9266, %v9350
      %v9355 = vadd.bf16 %v9267, %v9350
      %v9356 = vadd.bf16 %v9268, %v9350
      %v9357 = vadd.bf16 %v9269, %v9350
      %v9358 = vadd.bf16 %v9270, %v9350
      %v9359 = vadd.bf16 %v9271, %v9350
      %v9360 = vadd.bf16 %v9272, %v9350
      %v9361 = vadd.bf16 %v9273, %v9350
      %v9362 = vadd.bf16 %v9274, %v9350
      %v9363 = vadd.bf16 %v9275, %v9350
      %v9364 = vadd.bf16 %v9276, %v9350
      %v9365 = vadd.bf16 %v9277, %v9350
      %v9366 = vadd.bf16 %v9278, %v9350
      %v9367 = vadd.bf16 %v9279, %v9350
      %v9368 = vadd.bf16 %v9280, %v9350
      %v9369 = vadd.bf16 %v9281, %v9350
      %v9370 = vadd.bf16 %v9282, %v9350
      %v9371 = vadd.bf16 %v9283, %v9350
      %v9372 = vadd.bf16 %v9284, %v9350
      %v9373 = vadd.bf16 %v9285, %v9350
      %v9374 = vadd.bf16 %v9286, %v9350
      %v9375 = vadd.bf16 %v9287, %v9350
      %v9376 = vadd.bf16 %v9288, %v9350
      %v9377 = vadd.bf16 %v9289, %v9350
      %v9378 = vadd.bf16 %v9290, %v9350
      %v9379 = vadd.bf16 %v9291, %v9350
      %v9380 = vadd.bf16 %v9292, %v9350
      %v9381 = vadd.bf16 %v9293, %v9350
      %v9382 = vadd.bf16 %v9294, %v9350
      %v9383 = vadd.bf16 %v9295, %v9350
      %v9384 = vadd.bf16 %v9296, %v9350
      %v9385 = vadd.bf16 %v9297, %v9350
      %v9386 = vadd.bf16 %v9298, %v9350
      %v9387 = vadd.bf16 %v9299, %v9350
      %v9388 = vadd.bf16 %v9300, %v9350
      %v9389 = vadd.bf16 %v9301, %v9350
      %v9390 = vadd.bf16 %v9302, %v9350
      %v9391 = vadd.bf16 %v9303, %v9350
      %v9392 = vadd.bf16 %v9304, %v9350
      %v9393 = vadd.bf16 %v9305, %v9350
      %v9394 = vadd.bf16 %v9306, %v9350
      %v9395 = vadd.bf16 %v9307, %v9350
      %v9396 = vadd.bf16 %v9308, %v9350
      %v9397 = vadd.bf16 %v9309, %v9350
      %v9398 = vadd.bf16 %v9310, %v9350
      %v9399 = vadd.bf16 %v9311, %v9350
      %v9400 = vadd.bf16 %v9312, %v9350
      %v9401 = vadd.bf16 %v9313, %v9350
      %v9402 = vadd.bf16 %v9314, %v9350
      %v9403 = vadd.bf16 %v9315, %v9350
      %v9404 = vadd.bf16 %v9316, %v9350
      %v9405 = vadd.bf16 %v9317, %v9350
      %v9406 = vadd.bf16 %v9318, %v9350
      %v9407 = vadd.bf16 %v9319, %v9350
      %v9408 = vadd.bf16 %v9320, %v9350
      %v9409 = vadd.bf16 %v9321, %v9350
      %v9410 = vadd.bf16 %v9322, %v9350
      %v9411 = vadd.bf16 %v9323, %v9350
      %v9412 = vadd.bf16 %v9324, %v9350
      %v9413 = vadd.bf16 %v9325, %v9350
      %v9414 = vadd.bf16 %v9326, %v9350
      %v9415 = vadd.bf16 %v9327, %v9350
      %v9416 = vadd.bf16 %v9328, %v9350
      %v9417 = vadd.bf16 %v9329, %v9350
      %v9418 = vadd.bf16 %v9330, %v9350
      %v9419 = vadd.bf16 %v9331, %v9350
      %v9420 = vadd.bf16 %v9332, %v9350
      %v9421 = vadd.bf16 %v9333, %v9350
      %v9422 = vadd.bf16 %v9334, %v9350
      %v9423 = vadd.bf16 %v9335, %v9350
      %v9424 = vadd.bf16 %v9336, %v9350
      %v9425 = vadd.bf16 %v9337, %v9350
      %v9426 = vadd.bf16 %v9338, %v9350
      %v9427 = vadd.bf16 %v9339, %v9350
      %v9428 = vadd.bf16 %v9340, %v9350
      %v9429 = vadd.bf16 %v9341, %v9350
      %v9430 = vadd.bf16 %v9342, %v9350
      %v9431 = vadd.bf16 %v9343, %v9350
      %v9432 = vmax.bf16 %v9351, 0
      %v9433 = vmax.bf16 %v9352, 0
      %v9434 = vmax.bf16 %v9353, 0
      %v9435 = vmax.bf16 %v9354, 0
      %v9436 = vmax.bf16 %v9355, 0
      %v9437 = vmax.bf16 %v9356, 0
      %v9438 = vmax.bf16 %v9357, 0
      %v9439 = vmax.bf16 %v9358, 0
      %v9440 = vmax.bf16 %v9359, 0
      %v9441 = vmax.bf16 %v9360, 0
      %v9442 = vmax.bf16 %v9361, 0
      %v9443 = vmax.bf16 %v9362, 0
      %v9444 = vmax.bf16 %v9363, 0
      %v9445 = vmax.bf16 %v9364, 0
      %v9446 = vmax.bf16 %v9365, 0
      %v9447 = vmax.bf16 %v9366, 0
      %v9448 = vmax.bf16 %v9367, 0
      %v9449 = vmax.bf16 %v9368, 0
      %v9450 = vmax.bf16 %v9369, 0
      %v9451 = vmax.bf16 %v9370, 0
      %v9452 = vmax.bf16 %v9371, 0
      %v9453 = vmax.bf16 %v9372, 0
      %v9454 = vmax.bf16 %v9373, 0
      %v9455 = vmax.bf16 %v9374, 0
      %v9456 = vmax.bf16 %v9375, 0
      %v9457 = vmax.bf16 %v9376, 0
      %v9458 = vmax.bf16 %v9377, 0
      %v9459 = vmax.bf16 %v9378, 0
      %v9460 = vmax.bf16 %v9379, 0
      %v9461 = vmax.bf16 %v9380, 0
      %v9462 = vmax.bf16 %v9381, 0
      %v9463 = vmax.bf16 %v9382, 0
      %v9464 = vmax.bf16 %v9383, 0
      %v9465 = vmax.bf16 %v9384, 0
      %v9466 = vmax.bf16 %v9385, 0
      %v9467 = vmax.bf16 %v9386, 0
      %v9468 = vmax.bf16 %v9387, 0
      %v9469 = vmax.bf16 %v9388, 0
      %v9470 = vmax.bf16 %v9389, 0
      %v9471 = vmax.bf16 %v9390, 0
      %v9472 = vmax.bf16 %v9391, 0
      %v9473 = vmax.bf16 %v9392, 0
      %v9474 = vmax.bf16 %v9393, 0
      %v9475 = vmax.bf16 %v9394, 0
      %v9476 = vmax.bf16 %v9395, 0
      %v9477 = vmax.bf16 %v9396, 0
      %v9478 = vmax.bf16 %v9397, 0
      %v9479 = vmax.bf16 %v9398, 0
      %v9480 = vmax.bf16 %v9399, 0
      %v9481 = vmax.bf16 %v9400, 0
      %v9482 = vmax.bf16 %v9401, 0
      %v9483 = vmax.bf16 %v9402, 0
      %v9484 = vmax.bf16 %v9403, 0
      %v9485 = vmax.bf16 %v9404, 0
      %v9486 = vmax.bf16 %v9405, 0
      %v9487 = vmax.bf16 %v9406, 0
      %v9488 = vmax.bf16 %v9407, 0
      %v9489 = vmax.bf16 %v9408, 0
      %v9490 = vmax.bf16 %v9409, 0
      %v9491 = vmax.bf16 %v9410, 0
      %v9492 = vmax.bf16 %v9411, 0
      %v9493 = vmax.bf16 %v9412, 0
      %v9494 = vmax.bf16 %v9413, 0
      %v9495 = vmax.bf16 %v9414, 0
      %v9496 = vmax.bf16 %v9415, 0
      %v9497 = vmax.bf16 %v9416, 0
      %v9498 = vmax.bf16 %v9417, 0
      %v9499 = vmax.bf16 %v9418, 0
      %v9500 = vmax.bf16 %v9419, 0
      %v9501 = vmax.bf16 %v9420, 0
      %v9502 = vmax.bf16 %v9421, 0
      %v9503 = vmax.bf16 %v9422, 0
      %v9504 = vmax.bf16 %v9423, 0
      %v9505 = vmax.bf16 %v9424, 0
      %v9506 = vmax.bf16 %v9425, 0
      %v9507 = vmax.bf16 %v9426, 0
      %v9508 = vmax.bf16 %v9427, 0
      %v9509 = vmax.bf16 %v9428, 0
      %v9510 = vmax.bf16 %v9429, 0
      %v9511 = vmax.bf16 %v9430, 0
      %v9512 = vmax.bf16 %v9431, 0
      %v9513 = vld [vmem:[%s5] sm:$0xf]
      %v9514 = vld [vmem:[%s5 + $0x4] sm:$0xf]
      %v9515 = vld [vmem:[%s5 + $0x8] sm:$0xf]
      %v9516 = vld [vmem:[%s5 + $0xc] sm:$0xf]
      %v9517 = vld [vmem:[%s5 + $0x10] sm:$0xf]
      %v9518 = vld [vmem:[%s5 + $0x14] sm:$0xf]
      %v9519 = vld [vmem:[%s5 + $0x18] sm:$0xf]
      %v9520 = vld [vmem:[%s5 + $0x1c] sm:$0xf]
      %v9521 = vld [vmem:[%s5 + $0x20] sm:$0xf]
      %v9522 = vld [vmem:[%s5 + $0x24] sm:$0xf]
      %v9523 = vld [vmem:[%s5 + $0x28] sm:$0xf]
      %v9524 = vld [vmem:[%s5 + $0x2c] sm:$0xf]
      %v9525 = vld [vmem:[%s5 + $0x30] sm:$0xf]
      %v9526 = vld [vmem:[%s5 + $0x34] sm:$0xf]
      %v9527 = vld [vmem:[%s5 + $0x38] sm:$0xf]
      %v9528 = vld [vmem:[%s5 + $0x3c] sm:$0xf]
      %v9529 = vld [vmem:[#allocation2] sm:$0x1]
      %v9531 = vlaneseq
      %v9532 = vshrl.u32 %v9531, 7
      %v9533 = vsub.s32 0, %v9532
      %v9534 = vrot.slane %v9529, %v9533
      %v9552 = vunpack.c.l.b16 %v9513
      %v9553 = vunpack.c.l.b16 %v9514
      %v9554 = vunpack.c.l.b16 %v9515
      %v9555 = vunpack.c.l.b16 %v9516
      %v9556 = vunpack.c.l.b16 %v9517
      %v9557 = vunpack.c.l.b16 %v9518
      %v9558 = vunpack.c.l.b16 %v9519
      %v9559 = vunpack.c.l.b16 %v9520
      %v9560 = vunpack.c.l.b16 %v9521
      %v9561 = vunpack.c.l.b16 %v9522
      %v9562 = vunpack.c.l.b16 %v9523
      %v9563 = vunpack.c.l.b16 %v9524
      %v9564 = vunpack.c.l.b16 %v9525
      %v9565 = vunpack.c.l.b16 %v9526
      %v9566 = vunpack.c.l.b16 %v9527
      %v9567 = vunpack.c.l.b16 %v9528
      %v9568 = vpack.c.b16 %v9553, %v9552
      %v9569 = vpack.c.b16 %v9555, %v9554
      %v9570 = vpack.c.b16 %v9557, %v9556
      %v9571 = vpack.c.b16 %v9559, %v9558
      %v9572 = vpack.c.b16 %v9561, %v9560
      %v9573 = vpack.c.b16 %v9563, %v9562
      %v9574 = vpack.c.b16 %v9565, %v9564
      %v9575 = vpack.c.b16 %v9567, %v9566
      %9584 = vmatprep.subr.bf16.mxu0 0
      %9585 = vmatpush1.bf16.msra.mxu0 %v9568
      %9586 = vmatprep.subr.bf16.mxu0 0
      %9587 = vmatpush1.bf16.msra.mxu0 %v9569
      %9588 = vmatprep.subr.bf16.mxu0 0
      %9589 = vmatpush1.bf16.msra.mxu0 %v9570
      %9590 = vmatprep.subr.bf16.mxu0 0
      %9591 = vmatpush1.bf16.msra.mxu0 %v9571
      %9592 = vmatprep.subr.bf16.mxu0 0
      %9593 = vmatpush1.bf16.msra.mxu0 %v9572
      %9594 = vmatprep.subr.bf16.mxu0 0
      %9595 = vmatpush1.bf16.msra.mxu0 %v9573
      %9596 = vmatprep.subr.bf16.mxu0 0
      %9597 = vmatpush1.bf16.msra.mxu0 %v9574
      %9598 = vmatprep.subr.bf16.mxu0 0
      %9599 = vmatpush1.bf16.msra.mxu0 %v9575
      %9600 = vmatprep.subr.bf16.mxu0 0
      %9601 = vmatpush1.bf16.msra.mxu0 0
      %9602 = vmatprep.subr.bf16.mxu0 0
      %9603 = vmatpush1.bf16.msra.mxu0 0
      %9604 = vmatprep.subr.bf16.mxu0 0
      %9605 = vmatpush1.bf16.msra.mxu0 0
      %9606 = vmatprep.subr.bf16.mxu0 0
      %9607 = vmatpush1.bf16.msra.mxu0 0
      %9608 = vmatprep.subr.bf16.mxu0 0
      %9609 = vmatpush1.bf16.msra.mxu0 0
      %9610 = vmatprep.subr.bf16.mxu0 0
      %9611 = vmatpush1.bf16.msra.mxu0 0
      %9612 = vmatprep.subr.bf16.mxu0 0
      %9613 = vmatpush1.bf16.msra.mxu0 0
      %9614 = vmatprep.subr.bf16.mxu0 0
      %9615 = vmatpush1.bf16.msra.mxu0 0
      %9616 = vmatprep.mubr.bf16.mxu0 0
      %9617 = vmatmul.mubr.bf16.gmra.mrb[0].mxu0 %v9432
      %v9618 = vpop.f32.mrb[0].mxu0
      %v9619 = vadd.f32 %v9534, %v9618
      %v9620 = vpop.f32.mrb[0].mxu0
      %v9621 = vpop.f32.mrb[0].mxu0
      %v9622 = vadd.f32 %v9534, %v9621
      %v9623 = vpop.f32.mrb[0].mxu0
      %9624 = vmatprep.mubr.bf16.mxu0 0
      %9625 = vmatmul.mubr.bf16.gmra.mrb[0].mxu0 %v9433
      %v9626 = vpop.f32.mrb[0].mxu0
      %v9627 = vadd.f32 %v9534, %v9626
      %v9628 = vpop.f32.mrb[0].mxu0
      %v9629 = vpop.f32.mrb[0].mxu0
      %v9630 = vadd.f32 %v9534, %v9629
      %v9631 = vpop.f32.mrb[0].mxu0
      %9632 = vmatprep.mubr.bf16.mxu0 0
      %9633 = vmatmul.mubr.bf16.gmra.mrb[0].mxu0 %v9434
      %v9634 = vpop.f32.mrb[0].mxu0
      %v9635 = vadd.f32 %v9534, %v9634
      %v9636 = vpop.f32.mrb[0].mxu0
      %v9637 = vpop.f32.mrb[0].mxu0
      %v9638 = vadd.f32 %v9534, %v9637
      %v9639 = vpop.f32.mrb[0].mxu0
      %9640 = vmatprep.mubr.bf16.mxu0 0
      %9641 = vmatmul.mubr.bf16.gmra.mrb[0].mxu0 %v9435
      %v9642 = vpop.f32.mrb[0].mxu0
      %v9643 = vadd.f32 %v9534, %v9642
      %v9644 = vpop.f32.mrb[0].mxu0
      %v9645 = vpop.f32.mrb[0].mxu0
      %v9646 = vadd.f32 %v9534, %v9645
      %v9647 = vpop.f32.mrb[0].mxu0
      %9648 = vmatprep.mubr.bf16.mxu0 0
      %9649 = vmatmul.mubr.bf16.gmra.mrb[0].mxu0 %v9436
      %v9650 = vpop.f32.mrb[0].mxu0
      %v9651 = vadd.f32 %v9534, %v9650
      %v9652 = vpop.f32.mrb[0].mxu0
      %v9653 = vpop.f32.mrb[0].mxu0
      %v9654 = vadd.f32 %v9534, %v9653
      %v9655 = vpop.f32.mrb[0].mxu0
      %9656 = vmatprep.mubr.bf16.mxu0 0
      %9657 = vmatmul.mubr.bf16.gmra.mrb[0].mxu0 %v9437
      %v9658 = vpop.f32.mrb[0].mxu0
      %v9659 = vadd.f32 %v9534, %v9658
      %v9660 = vpop.f32.mrb[0].mxu0
      %v9661 = vpop.f32.mrb[0].mxu0
      %v9662 = vadd.f32 %v9534, %v9661
      %v9663 = vpop.f32.mrb[0].mxu0
      %9664 = vmatprep.mubr.bf16.mxu0 0
      %9665 = vmatmul.mubr.bf16.gmra.mrb[0].mxu0 %v9438
      %v9666 = vpop.f32.mrb[0].mxu0
      %v9667 = vadd.f32 %v9534, %v9666
      %v9668 = vpop.f32.mrb[0].mxu0
      %v9669 = vpop.f32.mrb[0].mxu0
      %v9670 = vadd.f32 %v9534, %v9669
      %v9671 = vpop.f32.mrb[0].mxu0
      %9672 = vmatprep.mubr.bf16.mxu0 0
      %9673 = vmatmul.mubr.bf16.gmra.mrb[0].mxu0 %v9439
      %v9674 = vpop.f32.mrb[0].mxu0
      %v9675 = vadd.f32 %v9534, %v9674
      %v9676 = vpop.f32.mrb[0].mxu0
      %v9677 = vpop.f32.mrb[0].mxu0
      %v9678 = vadd.f32 %v9534, %v9677
      %v9679 = vpop.f32.mrb[0].mxu0
      %9680 = vmatprep.mubr.bf16.mxu0 0
      %9681 = vmatmul.mubr.bf16.gmra.mrb[0].mxu0 %v9440
      %v9682 = vpop.f32.mrb[0].mxu0
      %v9683 = vadd.f32 %v9534, %v9682
      %v9684 = vpop.f32.mrb[0].mxu0
      %v9685 = vpop.f32.mrb[0].mxu0
      %v9686 = vadd.f32 %v9534, %v9685
      %v9687 = vpop.f32.mrb[0].mxu0
      %9688 = vmatprep.mubr.bf16.mxu0 0
      %9689 = vmatmul.mubr.bf16.gmra.mrb[0].mxu0 %v9441
      %v9690 = vpop.f32.mrb[0].mxu0
      %v9691 = vadd.f32 %v9534, %v9690
      %v9692 = vpop.f32.mrb[0].mxu0
      %v9693 = vpop.f32.mrb[0].mxu0
      %v9694 = vadd.f32 %v9534, %v9693
      %v9695 = vpop.f32.mrb[0].mxu0
      %9696 = vmatprep.mubr.bf16.mxu0 0
      %9697 = vmatmul.mubr.bf16.gmra.mrb[0].mxu0 %v9442
      %v9698 = vpop.f32.mrb[0].mxu0
      %v9699 = vadd.f32 %v9534, %v9698
      %v9700 = vpop.f32.mrb[0].mxu0
      %v9701 = vpop.f32.mrb[0].mxu0
      %v9702 = vadd.f32 %v9534, %v9701
      %v9703 = vpop.f32.mrb[0].mxu0
      %9704 = vmatprep.mubr.bf16.mxu0 0
      %9705 = vmatmul.mubr.bf16.gmra.mrb[0].mxu0 %v9443
      %v9706 = vpop.f32.mrb[0].mxu0
      %v9707 = vadd.f32 %v9534, %v9706
      %v9708 = vpop.f32.mrb[0].mxu0
      %v9709 = vpop.f32.mrb[0].mxu0
      %v9710 = vadd.f32 %v9534, %v9709
      %v9711 = vpop.f32.mrb[0].mxu0
      %9712 = vmatprep.mubr.bf16.mxu0 0
      %9713 = vmatmul.mubr.bf16.gmra.mrb[0].mxu0 %v9444
      %v9714 = vpop.f32.mrb[0].mxu0
      %v9715 = vadd.f32 %v9534, %v9714
      %v9716 = vpop.f32.mrb[0].mxu0
      %v9717 = vpop.f32.mrb[0].mxu0
      %v9718 = vadd.f32 %v9534, %v9717
      %v9719 = vpop.f32.mrb[0].mxu0
      %9720 = vmatprep.mubr.bf16.mxu0 0
      %9721 = vmatmul.mubr.bf16.gmra.mrb[0].mxu0 %v9445
      %v9722 = vpop.f32.mrb[0].mxu0
      %v9723 = vadd.f32 %v9534, %v9722
      %v9724 = vpop.f32.mrb[0].mxu0
      %v9725 = vpop.f32.mrb[0].mxu0
      %v9726 = vadd.f32 %v9534, %v9725
      %v9727 = vpop.f32.mrb[0].mxu0
      %9728 = vmatprep.mubr.bf16.mxu0 0
      %9729 = vmatmul.mubr.bf16.gmra.mrb[0].mxu0 %v9446
      %v9730 = vpop.f32.mrb[0].mxu0
      %v9731 = vadd.f32 %v9534, %v9730
      %v9732 = vpop.f32.mrb[0].mxu0
      %v9733 = vpop.f32.mrb[0].mxu0
      %v9734 = vadd.f32 %v9534, %v9733
      %v9735 = vpop.f32.mrb[0].mxu0
      %9736 = vmatprep.mubr.bf16.mxu0 0
      %9737 = vmatmul.mubr.bf16.gmra.mrb[0].mxu0 %v9447
      %v9738 = vpop.f32.mrb[0].mxu0
      %v9739 = vadd.f32 %v9534, %v9738
      %v9740 = vpop.f32.mrb[0].mxu0
      %v9741 = vpop.f32.mrb[0].mxu0
      %v9742 = vadd.f32 %v9534, %v9741
      %v9743 = vpop.f32.mrb[0].mxu0
      %9744 = vmatprep.mubr.bf16.mxu0 0
      %9745 = vmatmul.mubr.bf16.gmra.mrb[0].mxu0 %v9448
      %v9746 = vpop.f32.mrb[0].mxu0
      %v9747 = vadd.f32 %v9534, %v9746
      %v9748 = vpop.f32.mrb[0].mxu0
      %v9749 = vpop.f32.mrb[0].mxu0
      %v9750 = vadd.f32 %v9534, %v9749
      %v9751 = vpop.f32.mrb[0].mxu0
      %9752 = vmatprep.mubr.bf16.mxu0 0
      %9753 = vmatmul.mubr.bf16.gmra.mrb[0].mxu0 %v9449
      %v9754 = vpop.f32.mrb[0].mxu0
      %v9755 = vadd.f32 %v9534, %v9754
      %v9756 = vpop.f32.mrb[0].mxu0
      %v9757 = vpop.f32.mrb[0].mxu0
      %v9758 = vadd.f32 %v9534, %v9757
      %v9759 = vpop.f32.mrb[0].mxu0
      %9760 = vmatprep.mubr.bf16.mxu0 0
      %9761 = vmatmul.mubr.bf16.gmra.mrb[0].mxu0 %v9450
      %v9762 = vpop.f32.mrb[0].mxu0
      %v9763 = vadd.f32 %v9534, %v9762
      %v9764 = vpop.f32.mrb[0].mxu0
      %v9765 = vpop.f32.mrb[0].mxu0
      %v9766 = vadd.f32 %v9534, %v9765
      %v9767 = vpop.f32.mrb[0].mxu0
      %9768 = vmatprep.mubr.bf16.mxu0 0
      %9769 = vmatmul.mubr.bf16.gmra.mrb[0].mxu0 %v9451
      %v9770 = vpop.f32.mrb[0].mxu0
      %v9771 = vadd.f32 %v9534, %v9770
      %v9772 = vpop.f32.mrb[0].mxu0
      %v9773 = vpop.f32.mrb[0].mxu0
      %v9774 = vadd.f32 %v9534, %v9773
      %v9775 = vpop.f32.mrb[0].mxu0
      %9776 = vmatprep.mubr.bf16.mxu0 0
      %9777 = vmatmul.mubr.bf16.gmra.mrb[0].mxu0 %v9452
      %v9778 = vpop.f32.mrb[0].mxu0
      %v9779 = vadd.f32 %v9534, %v9778
      %v9780 = vpop.f32.mrb[0].mxu0
      %v9781 = vpop.f32.mrb[0].mxu0
      %v9782 = vadd.f32 %v9534, %v9781
      %v9783 = vpop.f32.mrb[0].mxu0
      %9784 = vmatprep.mubr.bf16.mxu0 0
      %9785 = vmatmul.mubr.bf16.gmra.mrb[0].mxu0 %v9453
      %v9786 = vpop.f32.mrb[0].mxu0
      %v9787 = vadd.f32 %v9534, %v9786
      %v9788 = vpop.f32.mrb[0].mxu0
      %v9789 = vpop.f32.mrb[0].mxu0
      %v9790 = vadd.f32 %v9534, %v9789
      %v9791 = vpop.f32.mrb[0].mxu0
      %9792 = vmatprep.mubr.bf16.mxu0 0
      %9793 = vmatmul.mubr.bf16.gmra.mrb[0].mxu0 %v9454
      %v9794 = vpop.f32.mrb[0].mxu0
      %v9795 = vadd.f32 %v9534, %v9794
      %v9796 = vpop.f32.mrb[0].mxu0
      %v9797 = vpop.f32.mrb[0].mxu0
      %v9798 = vadd.f32 %v9534, %v9797
      %v9799 = vpop.f32.mrb[0].mxu0
      %9800 = vmatprep.mubr.bf16.mxu0 0
      %9801 = vmatmul.mubr.bf16.gmra.mrb[0].mxu0 %v9455
      %v9802 = vpop.f32.mrb[0].mxu0
      %v9803 = vadd.f32 %v9534, %v9802
      %v9804 = vpop.f32.mrb[0].mxu0
      %v9805 = vpop.f32.mrb[0].mxu0
      %v9806 = vadd.f32 %v9534, %v9805
      %v9807 = vpop.f32.mrb[0].mxu0
      %9808 = vmatprep.mubr.bf16.mxu0 0
      %9809 = vmatmul.mubr.bf16.gmra.mrb[0].mxu0 %v9456
      %v9810 = vpop.f32.mrb[0].mxu0
      %v9811 = vadd.f32 %v9534, %v9810
      %v9812 = vpop.f32.mrb[0].mxu0
      %v9813 = vpop.f32.mrb[0].mxu0
      %v9814 = vadd.f32 %v9534, %v9813
      %v9815 = vpop.f32.mrb[0].mxu0
      %9816 = vmatprep.mubr.bf16.mxu0 0
      %9817 = vmatmul.mubr.bf16.gmra.mrb[0].mxu0 %v9457
      %v9818 = vpop.f32.mrb[0].mxu0
      %v9819 = vadd.f32 %v9534, %v9818
      %v9820 = vpop.f32.mrb[0].mxu0
      %v9821 = vpop.f32.mrb[0].mxu0
      %v9822 = vadd.f32 %v9534, %v9821
      %v9823 = vpop.f32.mrb[0].mxu0
      %9824 = vmatprep.mubr.bf16.mxu0 0
      %9825 = vmatmul.mubr.bf16.gmra.mrb[0].mxu0 %v9458
      %v9826 = vpop.f32.mrb[0].mxu0
      %v9827 = vadd.f32 %v9534, %v9826
      %v9828 = vpop.f32.mrb[0].mxu0
      %v9829 = vpop.f32.mrb[0].mxu0
      %v9830 = vadd.f32 %v9534, %v9829
      %v9831 = vpop.f32.mrb[0].mxu0
      %9832 = vmatprep.mubr.bf16.mxu0 0
      %9833 = vmatmul.mubr.bf16.gmra.mrb[0].mxu0 %v9459
      %v9834 = vpop.f32.mrb[0].mxu0
      %v9835 = vadd.f32 %v9534, %v9834
      %v9836 = vpop.f32.mrb[0].mxu0
      %v9837 = vpop.f32.mrb[0].mxu0
      %v9838 = vadd.f32 %v9534, %v9837
      %v9839 = vpop.f32.mrb[0].mxu0
      %9840 = vmatprep.mubr.bf16.mxu0 0
      %9841 = vmatmul.mubr.bf16.gmra.mrb[0].mxu0 %v9460
      %v9842 = vpop.f32.mrb[0].mxu0
      %v9843 = vadd.f32 %v9534, %v9842
      %v9844 = vpop.f32.mrb[0].mxu0
      %v9845 = vpop.f32.mrb[0].mxu0
      %v9846 = vadd.f32 %v9534, %v9845
      %v9847 = vpop.f32.mrb[0].mxu0
      %9848 = vmatprep.mubr.bf16.mxu0 0
      %9849 = vmatmul.mubr.bf16.gmra.mrb[0].mxu0 %v9461
      %v9850 = vpop.f32.mrb[0].mxu0
      %v9851 = vadd.f32 %v9534, %v9850
      %v9852 = vpop.f32.mrb[0].mxu0
      %v9853 = vpop.f32.mrb[0].mxu0
      %v9854 = vadd.f32 %v9534, %v9853
      %v9855 = vpop.f32.mrb[0].mxu0
      %9856 = vmatprep.mubr.bf16.mxu0 0
      %9857 = vmatmul.mubr.bf16.gmra.mrb[0].mxu0 %v9462
      %v9858 = vpop.f32.mrb[0].mxu0
      %v9859 = vadd.f32 %v9534, %v9858
      %v9860 = vpop.f32.mrb[0].mxu0
      %v9861 = vpop.f32.mrb[0].mxu0
      %v9862 = vadd.f32 %v9534, %v9861
      %v9863 = vpop.f32.mrb[0].mxu0
      %9864 = vmatprep.mubr.bf16.mxu0 0
      %9865 = vmatmul.mubr.bf16.gmra.mrb[0].mxu0 %v9463
      %v9866 = vpop.f32.mrb[0].mxu0
      %v9867 = vadd.f32 %v9534, %v9866
      %v9868 = vpop.f32.mrb[0].mxu0
      %v9869 = vpop.f32.mrb[0].mxu0
      %v9870 = vadd.f32 %v9534, %v9869
      %v9871 = vpop.f32.mrb[0].mxu0
      %9872 = vmatprep.mubr.bf16.mxu0 0
      %9873 = vmatmul.mubr.bf16.gmra.mrb[0].mxu0 %v9464
      %v9874 = vpop.f32.mrb[0].mxu0
      %v9875 = vadd.f32 %v9534, %v9874
      %v9876 = vpop.f32.mrb[0].mxu0
      %v9877 = vpop.f32.mrb[0].mxu0
      %v9878 = vadd.f32 %v9534, %v9877
      %v9879 = vpop.f32.mrb[0].mxu0
      %9880 = vmatprep.mubr.bf16.mxu0 0
      %9881 = vmatmul.mubr.bf16.gmra.mrb[0].mxu0 %v9465
      %v9882 = vpop.f32.mrb[0].mxu0
      %v9883 = vadd.f32 %v9534, %v9882
      %v9884 = vpop.f32.mrb[0].mxu0
      %v9885 = vpop.f32.mrb[0].mxu0
      %v9886 = vadd.f32 %v9534, %v9885
      %v9887 = vpop.f32.mrb[0].mxu0
      %9888 = vmatprep.mubr.bf16.mxu0 0
      %9889 = vmatmul.mubr.bf16.gmra.mrb[0].mxu0 %v9466
      %v9890 = vpop.f32.mrb[0].mxu0
      %v9891 = vadd.f32 %v9534, %v9890
      %v9892 = vpop.f32.mrb[0].mxu0
      %v9893 = vpop.f32.mrb[0].mxu0
      %v9894 = vadd.f32 %v9534, %v9893
      %v9895 = vpop.f32.mrb[0].mxu0
      %9896 = vmatprep.mubr.bf16.mxu0 0
      %9897 = vmatmul.mubr.bf16.gmra.mrb[0].mxu0 %v9467
      %v9898 = vpop.f32.mrb[0].mxu0
      %v9899 = vadd.f32 %v9534, %v9898
      %v9900 = vpop.f32.mrb[0].mxu0
      %v9901 = vpop.f32.mrb[0].mxu0
      %v9902 = vadd.f32 %v9534, %v9901
      %v9903 = vpop.f32.mrb[0].mxu0
      %9904 = vmatprep.mubr.bf16.mxu0 0
      %9905 = vmatmul.mubr.bf16.gmra.mrb[0].mxu0 %v9468
      %v9906 = vpop.f32.mrb[0].mxu0
      %v9907 = vadd.f32 %v9534, %v9906
      %v9908 = vpop.f32.mrb[0].mxu0
      %v9909 = vpop.f32.mrb[0].mxu0
      %v9910 = vadd.f32 %v9534, %v9909
      %v9911 = vpop.f32.mrb[0].mxu0
      %9912 = vmatprep.mubr.bf16.mxu0 0
      %9913 = vmatmul.mubr.bf16.gmra.mrb[0].mxu0 %v9469
      %v9914 = vpop.f32.mrb[0].mxu0
      %v9915 = vadd.f32 %v9534, %v9914
      %v9916 = vpop.f32.mrb[0].mxu0
      %v9917 = vpop.f32.mrb[0].mxu0
      %v9918 = vadd.f32 %v9534, %v9917
      %v9919 = vpop.f32.mrb[0].mxu0
      %9920 = vmatprep.mubr.bf16.mxu0 0
      %9921 = vmatmul.mubr.bf16.gmra.mrb[0].mxu0 %v9470
      %v9922 = vpop.f32.mrb[0].mxu0
      %v9923 = vadd.f32 %v9534, %v9922
      %v9924 = vpop.f32.mrb[0].mxu0
      %v9925 = vpop.f32.mrb[0].mxu0
      %v9926 = vadd.f32 %v9534, %v9925
      %v9927 = vpop.f32.mrb[0].mxu0
      %9928 = vmatprep.mubr.bf16.mxu0 0
      %9929 = vmatmul.mubr.bf16.gmra.mrb[0].mxu0 %v9471
      %v9930 = vpop.f32.mrb[0].mxu0
      %v9931 = vadd.f32 %v9534, %v9930
      %v9932 = vpop.f32.mrb[0].mxu0
      %v9933 = vpop.f32.mrb[0].mxu0
      %v9934 = vadd.f32 %v9534, %v9933
      %v9935 = vpop.f32.mrb[0].mxu0
      %9936 = vmatprep.mubr.bf16.mxu0 0
      %9937 = vmatmul.mubr.bf16.gmra.mrb[0].mxu0 %v9472
      %v9938 = vpop.f32.mrb[0].mxu0
      %v9939 = vadd.f32 %v9534, %v9938
      %v9940 = vpop.f32.mrb[0].mxu0
      %v9941 = vpop.f32.mrb[0].mxu0
      %v9942 = vadd.f32 %v9534, %v9941
      %v9943 = vpop.f32.mrb[0].mxu0
      %9944 = vmatprep.mubr.bf16.mxu0 0
      %9945 = vmatmul.mubr.bf16.gmra.mrb[0].mxu0 %v9473
      %v9946 = vpop.f32.mrb[0].mxu0
      %v9947 = vadd.f32 %v9534, %v9946
      %v9948 = vpop.f32.mrb[0].mxu0
      %v9949 = vpop.f32.mrb[0].mxu0
      %v9950 = vadd.f32 %v9534, %v9949
      %v9951 = vpop.f32.mrb[0].mxu0
      %9952 = vmatprep.mubr.bf16.mxu0 0
      %9953 = vmatmul.mubr.bf16.gmra.mrb[0].mxu0 %v9474
      %v9954 = vpop.f32.mrb[0].mxu0
      %v9955 = vadd.f32 %v9534, %v9954
      %v9956 = vpop.f32.mrb[0].mxu0
      %v9957 = vpop.f32.mrb[0].mxu0
      %v9958 = vadd.f32 %v9534, %v9957
      %v9959 = vpop.f32.mrb[0].mxu0
      %9960 = vmatprep.mubr.bf16.mxu0 0
      %9961 = vmatmul.mubr.bf16.gmra.mrb[0].mxu0 %v9475
      %v9962 = vpop.f32.mrb[0].mxu0
      %v9963 = vadd.f32 %v9534, %v9962
      %v9964 = vpop.f32.mrb[0].mxu0
      %v9965 = vpop.f32.mrb[0].mxu0
      %v9966 = vadd.f32 %v9534, %v9965
      %v9967 = vpop.f32.mrb[0].mxu0
      %9968 = vmatprep.mubr.bf16.mxu0 0
      %9969 = vmatmul.mubr.bf16.gmra.mrb[0].mxu0 %v9476
      %v9970 = vpop.f32.mrb[0].mxu0
      %v9971 = vadd.f32 %v9534, %v9970
      %v9972 = vpop.f32.mrb[0].mxu0
      %v9973 = vpop.f32.mrb[0].mxu0
      %v9974 = vadd.f32 %v9534, %v9973
      %v9975 = vpop.f32.mrb[0].mxu0
      %9976 = vmatprep.mubr.bf16.mxu0 0
      %9977 = vmatmul.mubr.bf16.gmra.mrb[0].mxu0 %v9477
      %v9978 = vpop.f32.mrb[0].mxu0
      %v9979 = vadd.f32 %v9534, %v9978
      %v9980 = vpop.f32.mrb[0].mxu0
      %v9981 = vpop.f32.mrb[0].mxu0
      %v9982 = vadd.f32 %v9534, %v9981
      %v9983 = vpop.f32.mrb[0].mxu0
      %9984 = vmatprep.mubr.bf16.mxu0 0
      %9985 = vmatmul.mubr.bf16.gmra.mrb[0].mxu0 %v9478
      %v9986 = vpop.f32.mrb[0].mxu0
      %v9987 = vadd.f32 %v9534, %v9986
      %v9988 = vpop.f32.mrb[0].mxu0
      %v9989 = vpop.f32.mrb[0].mxu0
      %v9990 = vadd.f32 %v9534, %v9989
      %v9991 = vpop.f32.mrb[0].mxu0
      %9992 = vmatprep.mubr.bf16.mxu0 0
      %9993 = vmatmul.mubr.bf16.gmra.mrb[0].mxu0 %v9479
      %v9994 = vpop.f32.mrb[0].mxu0
      %v9995 = vadd.f32 %v9534, %v9994
      %v9996 = vpop.f32.mrb[0].mxu0
      %v9997 = vpop.f32.mrb[0].mxu0
      %v9998 = vadd.f32 %v9534, %v9997
      %v9999 = vpop.f32.mrb[0].mxu0
      %10000 = vmatprep.mubr.bf16.mxu0 0
      %10001 = vmatmul.mubr.bf16.gmra.mrb[0].mxu0 %v9480
      %v10002 = vpop.f32.mrb[0].mxu0
      %v10003 = vadd.f32 %v9534, %v10002
      %v10004 = vpop.f32.mrb[0].mxu0
      %v10005 = vpop.f32.mrb[0].mxu0
      %v10006 = vadd.f32 %v9534, %v10005
      %v10007 = vpop.f32.mrb[0].mxu0
      %10008 = vmatprep.mubr.bf16.mxu0 0
      %10009 = vmatmul.mubr.bf16.gmra.mrb[0].mxu0 %v9481
      %v10010 = vpop.f32.mrb[0].mxu0
      %v10011 = vadd.f32 %v9534, %v10010
      %v10012 = vpop.f32.mrb[0].mxu0
      %v10013 = vpop.f32.mrb[0].mxu0
      %v10014 = vadd.f32 %v9534, %v10013
      %v10015 = vpop.f32.mrb[0].mxu0
      %10016 = vmatprep.mubr.bf16.mxu0 0
      %10017 = vmatmul.mubr.bf16.gmra.mrb[0].mxu0 %v9482
      %v10018 = vpop.f32.mrb[0].mxu0
      %v10019 = vadd.f32 %v9534, %v10018
      %v10020 = vpop.f32.mrb[0].mxu0
      %v10021 = vpop.f32.mrb[0].mxu0
      %v10022 = vadd.f32 %v9534, %v10021
      %v10023 = vpop.f32.mrb[0].mxu0
      %10024 = vmatprep.mubr.bf16.mxu0 0
      %10025 = vmatmul.mubr.bf16.gmra.mrb[0].mxu0 %v9483
      %v10026 = vpop.f32.mrb[0].mxu0
      %v10027 = vadd.f32 %v9534, %v10026
      %v10028 = vpop.f32.mrb[0].mxu0
      %v10029 = vpop.f32.mrb[0].mxu0
      %v10030 = vadd.f32 %v9534, %v10029
      %v10031 = vpop.f32.mrb[0].mxu0
      %10032 = vmatprep.mubr.bf16.mxu0 0
      %10033 = vmatmul.mubr.bf16.gmra.mrb[0].mxu0 %v9484
      %v10034 = vpop.f32.mrb[0].mxu0
      %v10035 = vadd.f32 %v9534, %v10034
      %v10036 = vpop.f32.mrb[0].mxu0
      %v10037 = vpop.f32.mrb[0].mxu0
      %v10038 = vadd.f32 %v9534, %v10037
      %v10039 = vpop.f32.mrb[0].mxu0
      %10040 = vmatprep.mubr.bf16.mxu0 0
      %10041 = vmatmul.mubr.bf16.gmra.mrb[0].mxu0 %v9485
      %v10042 = vpop.f32.mrb[0].mxu0
      %v10043 = vadd.f32 %v9534, %v10042
      %v10044 = vpop.f32.mrb[0].mxu0
      %v10045 = vpop.f32.mrb[0].mxu0
      %v10046 = vadd.f32 %v9534, %v10045
      %v10047 = vpop.f32.mrb[0].mxu0
      %10048 = vmatprep.mubr.bf16.mxu0 0
      %10049 = vmatmul.mubr.bf16.gmra.mrb[0].mxu0 %v9486
      %v10050 = vpop.f32.mrb[0].mxu0
      %v10051 = vadd.f32 %v9534, %v10050
      %v10052 = vpop.f32.mrb[0].mxu0
      %v10053 = vpop.f32.mrb[0].mxu0
      %v10054 = vadd.f32 %v9534, %v10053
      %v10055 = vpop.f32.mrb[0].mxu0
      %10056 = vmatprep.mubr.bf16.mxu0 0
      %10057 = vmatmul.mubr.bf16.gmra.mrb[0].mxu0 %v9487
      %v10058 = vpop.f32.mrb[0].mxu0
      %v10059 = vadd.f32 %v9534, %v10058
      %v10060 = vpop.f32.mrb[0].mxu0
      %v10061 = vpop.f32.mrb[0].mxu0
      %v10062 = vadd.f32 %v9534, %v10061
      %v10063 = vpop.f32.mrb[0].mxu0
      %10064 = vmatprep.mubr.bf16.mxu0 0
      %10065 = vmatmul.mubr.bf16.gmra.mrb[0].mxu0 %v9488
      %v10066 = vpop.f32.mrb[0].mxu0
      %v10067 = vadd.f32 %v9534, %v10066
      %v10068 = vpop.f32.mrb[0].mxu0
      %v10069 = vpop.f32.mrb[0].mxu0
      %v10070 = vadd.f32 %v9534, %v10069
      %v10071 = vpop.f32.mrb[0].mxu0
      %10072 = vmatprep.mubr.bf16.mxu0 0
      %10073 = vmatmul.mubr.bf16.gmra.mrb[0].mxu0 %v9489
      %v10074 = vpop.f32.mrb[0].mxu0
      %v10075 = vadd.f32 %v9534, %v10074
      %v10076 = vpop.f32.mrb[0].mxu0
      %v10077 = vpop.f32.mrb[0].mxu0
      %v10078 = vadd.f32 %v9534, %v10077
      %v10079 = vpop.f32.mrb[0].mxu0
      %10080 = vmatprep.mubr.bf16.mxu0 0
      %10081 = vmatmul.mubr.bf16.gmra.mrb[0].mxu0 %v9490
      %v10082 = vpop.f32.mrb[0].mxu0
      %v10083 = vadd.f32 %v9534, %v10082
      %v10084 = vpop.f32.mrb[0].mxu0
      %v10085 = vpop.f32.mrb[0].mxu0
      %v10086 = vadd.f32 %v9534, %v10085
      %v10087 = vpop.f32.mrb[0].mxu0
      %10088 = vmatprep.mubr.bf16.mxu0 0
      %10089 = vmatmul.mubr.bf16.gmra.mrb[0].mxu0 %v9491
      %v10090 = vpop.f32.mrb[0].mxu0
      %v10091 = vadd.f32 %v9534, %v10090
      %v10092 = vpop.f32.mrb[0].mxu0
      %v10093 = vpop.f32.mrb[0].mxu0
      %v10094 = vadd.f32 %v9534, %v10093
      %v10095 = vpop.f32.mrb[0].mxu0
      %10096 = vmatprep.mubr.bf16.mxu0 0
      %10097 = vmatmul.mubr.bf16.gmra.mrb[0].mxu0 %v9492
      %v10098 = vpop.f32.mrb[0].mxu0
      %v10099 = vadd.f32 %v9534, %v10098
      %v10100 = vpop.f32.mrb[0].mxu0
      %v10101 = vpop.f32.mrb[0].mxu0
      %v10102 = vadd.f32 %v9534, %v10101
      %v10103 = vpop.f32.mrb[0].mxu0
      %10104 = vmatprep.mubr.bf16.mxu0 0
      %10105 = vmatmul.mubr.bf16.gmra.mrb[0].mxu0 %v9493
      %v10106 = vpop.f32.mrb[0].mxu0
      %v10107 = vadd.f32 %v9534, %v10106
      %v10108 = vpop.f32.mrb[0].mxu0
      %v10109 = vpop.f32.mrb[0].mxu0
      %v10110 = vadd.f32 %v9534, %v10109
      %v10111 = vpop.f32.mrb[0].mxu0
      %10112 = vmatprep.mubr.bf16.mxu0 0
      %10113 = vmatmul.mubr.bf16.gmra.mrb[0].mxu0 %v9494
      %v10114 = vpop.f32.mrb[0].mxu0
      %v10115 = vadd.f32 %v9534, %v10114
      %v10116 = vpop.f32.mrb[0].mxu0
      %v10117 = vpop.f32.mrb[0].mxu0
      %v10118 = vadd.f32 %v9534, %v10117
      %v10119 = vpop.f32.mrb[0].mxu0
      %10120 = vmatprep.mubr.bf16.mxu0 0
      %10121 = vmatmul.mubr.bf16.gmra.mrb[0].mxu0 %v9495
      %v10122 = vpop.f32.mrb[0].mxu0
      %v10123 = vadd.f32 %v9534, %v10122
      %v10124 = vpop.f32.mrb[0].mxu0
      %v10125 = vpop.f32.mrb[0].mxu0
      %v10126 = vadd.f32 %v9534, %v10125
      %v10127 = vpop.f32.mrb[0].mxu0
      %10128 = vmatprep.mubr.bf16.mxu0 0
      %10129 = vmatmul.mubr.bf16.gmra.mrb[0].mxu0 %v9496
      %v10130 = vpop.f32.mrb[0].mxu0
      %v10131 = vadd.f32 %v9534, %v10130
      %v10132 = vpop.f32.mrb[0].mxu0
      %v10133 = vpop.f32.mrb[0].mxu0
      %v10134 = vadd.f32 %v9534, %v10133
      %v10135 = vpop.f32.mrb[0].mxu0
      %10136 = vmatprep.mubr.bf16.mxu0 0
      %10137 = vmatmul.mubr.bf16.gmra.mrb[0].mxu0 %v9497
      %v10138 = vpop.f32.mrb[0].mxu0
      %v10139 = vadd.f32 %v9534, %v10138
      %v10140 = vpop.f32.mrb[0].mxu0
      %v10141 = vpop.f32.mrb[0].mxu0
      %v10142 = vadd.f32 %v9534, %v10141
      %v10143 = vpop.f32.mrb[0].mxu0
      %10144 = vmatprep.mubr.bf16.mxu0 0
      %10145 = vmatmul.mubr.bf16.gmra.mrb[0].mxu0 %v9498
      %v10146 = vpop.f32.mrb[0].mxu0
      %v10147 = vadd.f32 %v9534, %v10146
      %v10148 = vpop.f32.mrb[0].mxu0
      %v10149 = vpop.f32.mrb[0].mxu0
      %v10150 = vadd.f32 %v9534, %v10149
      %v10151 = vpop.f32.mrb[0].mxu0
      %10152 = vmatprep.mubr.bf16.mxu0 0
      %10153 = vmatmul.mubr.bf16.gmra.mrb[0].mxu0 %v9499
      %v10154 = vpop.f32.mrb[0].mxu0
      %v10155 = vadd.f32 %v9534, %v10154
      %v10156 = vpop.f32.mrb[0].mxu0
      %v10157 = vpop.f32.mrb[0].mxu0
      %v10158 = vadd.f32 %v9534, %v10157
      %v10159 = vpop.f32.mrb[0].mxu0
      %10160 = vmatprep.mubr.bf16.mxu0 0
      %10161 = vmatmul.mubr.bf16.gmra.mrb[0].mxu0 %v9500
      %v10162 = vpop.f32.mrb[0].mxu0
      %v10163 = vadd.f32 %v9534, %v10162
      %v10164 = vpop.f32.mrb[0].mxu0
      %v10165 = vpop.f32.mrb[0].mxu0
      %v10166 = vadd.f32 %v9534, %v10165
      %v10167 = vpop.f32.mrb[0].mxu0
      %10168 = vmatprep.mubr.bf16.mxu0 0
      %10169 = vmatmul.mubr.bf16.gmra.mrb[0].mxu0 %v9501
      %v10170 = vpop.f32.mrb[0].mxu0
      %v10171 = vadd.f32 %v9534, %v10170
      %v10172 = vpop.f32.mrb[0].mxu0
      %v10173 = vpop.f32.mrb[0].mxu0
      %v10174 = vadd.f32 %v9534, %v10173
      %v10175 = vpop.f32.mrb[0].mxu0
      %10176 = vmatprep.mubr.bf16.mxu0 0
      %10177 = vmatmul.mubr.bf16.gmra.mrb[0].mxu0 %v9502
      %v10178 = vpop.f32.mrb[0].mxu0
      %v10179 = vadd.f32 %v9534, %v10178
      %v10180 = vpop.f32.mrb[0].mxu0
      %v10181 = vpop.f32.mrb[0].mxu0
      %v10182 = vadd.f32 %v9534, %v10181
      %v10183 = vpop.f32.mrb[0].mxu0
      %10184 = vmatprep.mubr.bf16.mxu0 0
      %10185 = vmatmul.mubr.bf16.gmra.mrb[0].mxu0 %v9503
      %v10186 = vpop.f32.mrb[0].mxu0
      %v10187 = vadd.f32 %v9534, %v10186
      %v10188 = vpop.f32.mrb[0].mxu0
      %v10189 = vpop.f32.mrb[0].mxu0
      %v10190 = vadd.f32 %v9534, %v10189
      %v10191 = vpop.f32.mrb[0].mxu0
      %10192 = vmatprep.mubr.bf16.mxu0 0
      %10193 = vmatmul.mubr.bf16.gmra.mrb[0].mxu0 %v9504
      %v10194 = vpop.f32.mrb[0].mxu0
      %v10195 = vadd.f32 %v9534, %v10194
      %v10196 = vpop.f32.mrb[0].mxu0
      %v10197 = vpop.f32.mrb[0].mxu0
      %v10198 = vadd.f32 %v9534, %v10197
      %v10199 = vpop.f32.mrb[0].mxu0
      %10200 = vmatprep.mubr.bf16.mxu0 0
      %10201 = vmatmul.mubr.bf16.gmra.mrb[0].mxu0 %v9505
      %v10202 = vpop.f32.mrb[0].mxu0
      %v10203 = vadd.f32 %v9534, %v10202
      %v10204 = vpop.f32.mrb[0].mxu0
      %v10205 = vpop.f32.mrb[0].mxu0
      %v10206 = vadd.f32 %v9534, %v10205
      %v10207 = vpop.f32.mrb[0].mxu0
      %10208 = vmatprep.mubr.bf16.mxu0 0
      %10209 = vmatmul.mubr.bf16.gmra.mrb[0].mxu0 %v9506
      %v10210 = vpop.f32.mrb[0].mxu0
      %v10211 = vadd.f32 %v9534, %v10210
      %v10212 = vpop.f32.mrb[0].mxu0
      %v10213 = vpop.f32.mrb[0].mxu0
      %v10214 = vadd.f32 %v9534, %v10213
      %v10215 = vpop.f32.mrb[0].mxu0
      %10216 = vmatprep.mubr.bf16.mxu0 0
      %10217 = vmatmul.mubr.bf16.gmra.mrb[0].mxu0 %v9507
      %v10218 = vpop.f32.mrb[0].mxu0
      %v10219 = vadd.f32 %v9534, %v10218
      %v10220 = vpop.f32.mrb[0].mxu0
      %v10221 = vpop.f32.mrb[0].mxu0
      %v10222 = vadd.f32 %v9534, %v10221
      %v10223 = vpop.f32.mrb[0].mxu0
      %10224 = vmatprep.mubr.bf16.mxu0 0
      %10225 = vmatmul.mubr.bf16.gmra.mrb[0].mxu0 %v9508
      %v10226 = vpop.f32.mrb[0].mxu0
      %v10227 = vadd.f32 %v9534, %v10226
      %v10228 = vpop.f32.mrb[0].mxu0
      %v10229 = vpop.f32.mrb[0].mxu0
      %v10230 = vadd.f32 %v9534, %v10229
      %v10231 = vpop.f32.mrb[0].mxu0
      %10232 = vmatprep.mubr.bf16.mxu0 0
      %10233 = vmatmul.mubr.bf16.gmra.mrb[0].mxu0 %v9509
      %v10234 = vpop.f32.mrb[0].mxu0
      %v10235 = vadd.f32 %v9534, %v10234
      %v10236 = vpop.f32.mrb[0].mxu0
      %v10237 = vpop.f32.mrb[0].mxu0
      %v10238 = vadd.f32 %v9534, %v10237
      %v10239 = vpop.f32.mrb[0].mxu0
      %10240 = vmatprep.mubr.bf16.mxu0 0
      %10241 = vmatmul.mubr.bf16.gmra.mrb[0].mxu0 %v9510
      %v10242 = vpop.f32.mrb[0].mxu0
      %v10243 = vadd.f32 %v9534, %v10242
      %v10244 = vpop.f32.mrb[0].mxu0
      %v10245 = vpop.f32.mrb[0].mxu0
      %v10246 = vadd.f32 %v9534, %v10245
      %v10247 = vpop.f32.mrb[0].mxu0
      %10248 = vmatprep.mubr.bf16.mxu0 0
      %10249 = vmatmul.mubr.bf16.gmra.mrb[0].mxu0 %v9511
      %v10250 = vpop.f32.mrb[0].mxu0
      %v10251 = vadd.f32 %v9534, %v10250
      %v10252 = vpop.f32.mrb[0].mxu0
      %v10253 = vpop.f32.mrb[0].mxu0
      %v10254 = vadd.f32 %v9534, %v10253
      %v10255 = vpop.f32.mrb[0].mxu0
      %10256 = vmatprep.mubr.bf16.mxu0 0
      %10257 = vmatmul.mubr.bf16.gmra.mrb[0].mxu0 %v9512
      %v10258 = vpop.f32.mrb[0].mxu0
      %v10259 = vadd.f32 %v9534, %v10258
      %v10260 = vpop.f32.mrb[0].mxu0
      %v10261 = vpop.f32.mrb[0].mxu0
      %v10262 = vadd.f32 %v9534, %v10261
      %v10263 = vpop.f32.mrb[0].mxu0
      %10264 = vdwg.mxu0
      %vm10265 = vcmask 7168
      %10266 = vst.msk [vmem:[%s309] sm:$0xff] %vm10265, %v9619
      %10267 = vst.msk [vmem:[%s309 + $0x8] sm:$0xff] %vm10265, %v9622
      %10268 = vst.msk [vmem:[%s309 + $0x10] sm:$0xff] %vm10265, %v9627
      %10269 = vst.msk [vmem:[%s309 + $0x18] sm:$0xff] %vm10265, %v9630
      %10270 = vst.msk [vmem:[%s309 + $0x20] sm:$0xff] %vm10265, %v9635
      %10271 = vst.msk [vmem:[%s309 + $0x28] sm:$0xff] %vm10265, %v9638
      %10272 = vst.msk [vmem:[%s309 + $0x30] sm:$0xff] %vm10265, %v9643
      %10273 = vst.msk [vmem:[%s309 + $0x38] sm:$0xff] %vm10265, %v9646
      %10274 = vst.msk [vmem:[%s309 + $0x40] sm:$0xff] %vm10265, %v9651
      %10275 = vst.msk [vmem:[%s309 + $0x48] sm:$0xff] %vm10265, %v9654
      %10276 = vst.msk [vmem:[%s309 + $0x50] sm:$0xff] %vm10265, %v9659
      %10277 = vst.msk [vmem:[%s309 + $0x58] sm:$0xff] %vm10265, %v9662
      %10278 = vst.msk [vmem:[%s309 + $0x60] sm:$0xff] %vm10265, %v9667
      %10279 = vst.msk [vmem:[%s309 + $0x68] sm:$0xff] %vm10265, %v9670
      %10280 = vst.msk [vmem:[%s309 + $0x70] sm:$0xff] %vm10265, %v9675
      %10281 = vst.msk [vmem:[%s309 + $0x78] sm:$0xff] %vm10265, %v9678
      %10282 = vst.msk [vmem:[%s309 + $0x80] sm:$0xff] %vm10265, %v9683
      %10283 = vst.msk [vmem:[%s309 + $0x88] sm:$0xff] %vm10265, %v9686
      %10284 = vst.msk [vmem:[%s309 + $0x90] sm:$0xff] %vm10265, %v9691
      %10285 = vst.msk [vmem:[%s309 + $0x98] sm:$0xff] %vm10265, %v9694
      %10286 = vst.msk [vmem:[%s309 + $0xa0] sm:$0xff] %vm10265, %v9699
      %10287 = vst.msk [vmem:[%s309 + $0xa8] sm:$0xff] %vm10265, %v9702
      %10288 = vst.msk [vmem:[%s309 + $0xb0] sm:$0xff] %vm10265, %v9707
      %10289 = vst.msk [vmem:[%s309 + $0xb8] sm:$0xff] %vm10265, %v9710
      %10290 = vst.msk [vmem:[%s309 + $0xc0] sm:$0xff] %vm10265, %v9715
      %10291 = vst.msk [vmem:[%s309 + $0xc8] sm:$0xff] %vm10265, %v9718
      %10292 = vst.msk [vmem:[%s309 + $0xd0] sm:$0xff] %vm10265, %v9723
      %10293 = vst.msk [vmem:[%s309 + $0xd8] sm:$0xff] %vm10265, %v9726
      %10294 = vst.msk [vmem:[%s309 + $0xe0] sm:$0xff] %vm10265, %v9731
      %10295 = vst.msk [vmem:[%s309 + $0xe8] sm:$0xff] %vm10265, %v9734
      %10296 = vst.msk [vmem:[%s309 + $0xf0] sm:$0xff] %vm10265, %v9739
      %10297 = vst.msk [vmem:[%s309 + $0xf8] sm:$0xff] %vm10265, %v9742
      %10298 = vst.msk [vmem:[%s309 + $0x100] sm:$0xff] %vm10265, %v9747
      %10299 = vst.msk [vmem:[%s309 + $0x108] sm:$0xff] %vm10265, %v9750
      %10300 = vst.msk [vmem:[%s309 + $0x110] sm:$0xff] %vm10265, %v9755
      %10301 = vst.msk [vmem:[%s309 + $0x118] sm:$0xff] %vm10265, %v9758
      %10302 = vst.msk [vmem:[%s309 + $0x120] sm:$0xff] %vm10265, %v9763
      %10303 = vst.msk [vmem:[%s309 + $0x128] sm:$0xff] %vm10265, %v9766
      %10304 = vst.msk [vmem:[%s309 + $0x130] sm:$0xff] %vm10265, %v9771
      %10305 = vst.msk [vmem:[%s309 + $0x138] sm:$0xff] %vm10265, %v9774
      %10306 = vst.msk [vmem:[%s309 + $0x140] sm:$0xff] %vm10265, %v9779
      %10307 = vst.msk [vmem:[%s309 + $0x148] sm:$0xff] %vm10265, %v9782
      %10308 = vst.msk [vmem:[%s309 + $0x150] sm:$0xff] %vm10265, %v9787
      %10309 = vst.msk [vmem:[%s309 + $0x158] sm:$0xff] %vm10265, %v9790
      %10310 = vst.msk [vmem:[%s309 + $0x160] sm:$0xff] %vm10265, %v9795
      %10311 = vst.msk [vmem:[%s309 + $0x168] sm:$0xff] %vm10265, %v9798
      %10312 = vst.msk [vmem:[%s309 + $0x170] sm:$0xff] %vm10265, %v9803
      %10313 = vst.msk [vmem:[%s309 + $0x178] sm:$0xff] %vm10265, %v9806
      %10314 = vst.msk [vmem:[%s309 + $0x180] sm:$0xff] %vm10265, %v9811
      %10315 = vst.msk [vmem:[%s309 + $0x188] sm:$0xff] %vm10265, %v9814
      %10316 = vst.msk [vmem:[%s309 + $0x190] sm:$0xff] %vm10265, %v9819
      %10317 = vst.msk [vmem:[%s309 + $0x198] sm:$0xff] %vm10265, %v9822
      %10318 = vst.msk [vmem:[%s309 + $0x1a0] sm:$0xff] %vm10265, %v9827
      %10319 = vst.msk [vmem:[%s309 + $0x1a8] sm:$0xff] %vm10265, %v9830
      %10320 = vst.msk [vmem:[%s309 + $0x1b0] sm:$0xff] %vm10265, %v9835
      %10321 = vst.msk [vmem:[%s309 + $0x1b8] sm:$0xff] %vm10265, %v9838
      %10322 = vst.msk [vmem:[%s309 + $0x1c0] sm:$0xff] %vm10265, %v9843
      %10323 = vst.msk [vmem:[%s309 + $0x1c8] sm:$0xff] %vm10265, %v9846
      %10324 = vst.msk [vmem:[%s309 + $0x1d0] sm:$0xff] %vm10265, %v9851
      %10325 = vst.msk [vmem:[%s309 + $0x1d8] sm:$0xff] %vm10265, %v9854
      %10326 = vst.msk [vmem:[%s309 + $0x1e0] sm:$0xff] %vm10265, %v9859
      %10327 = vst.msk [vmem:[%s309 + $0x1e8] sm:$0xff] %vm10265, %v9862
      %10328 = vst.msk [vmem:[%s309 + $0x1f0] sm:$0xff] %vm10265, %v9867
      %10329 = vst.msk [vmem:[%s309 + $0x1f8] sm:$0xff] %vm10265, %v9870
      %10330 = vst.msk [vmem:[%s309 + $0x200] sm:$0xff] %vm10265, %v9875
      %10331 = vst.msk [vmem:[%s309 + $0x208] sm:$0xff] %vm10265, %v9878
      %10332 = vst.msk [vmem:[%s309 + $0x210] sm:$0xff] %vm10265, %v9883
      %10333 = vst.msk [vmem:[%s309 + $0x218] sm:$0xff] %vm10265, %v9886
      %10334 = vst.msk [vmem:[%s309 + $0x220] sm:$0xff] %vm10265, %v9891
      %10335 = vst.msk [vmem:[%s309 + $0x228] sm:$0xff] %vm10265, %v9894
      %10336 = vst.msk [vmem:[%s309 + $0x230] sm:$0xff] %vm10265, %v9899
      %10337 = vst.msk [vmem:[%s309 + $0x238] sm:$0xff] %vm10265, %v9902
      %10338 = vst.msk [vmem:[%s309 + $0x240] sm:$0xff] %vm10265, %v9907
      %10339 = vst.msk [vmem:[%s309 + $0x248] sm:$0xff] %vm10265, %v9910
      %10340 = vst.msk [vmem:[%s309 + $0x250] sm:$0xff] %vm10265, %v9915
      %10341 = vst.msk [vmem:[%s309 + $0x258] sm:$0xff] %vm10265, %v9918
      %10342 = vst.msk [vmem:[%s309 + $0x260] sm:$0xff] %vm10265, %v9923
      %10343 = vst.msk [vmem:[%s309 + $0x268] sm:$0xff] %vm10265, %v9926
      %10344 = vst.msk [vmem:[%s309 + $0x270] sm:$0xff] %vm10265, %v9931
      %10345 = vst.msk [vmem:[%s309 + $0x278] sm:$0xff] %vm10265, %v9934
      %10346 = vst.msk [vmem:[%s309 + $0x280] sm:$0xff] %vm10265, %v9939
      %10347 = vst.msk [vmem:[%s309 + $0x288] sm:$0xff] %vm10265, %v9942
      %10348 = vst.msk [vmem:[%s309 + $0x290] sm:$0xff] %vm10265, %v9947
      %10349 = vst.msk [vmem:[%s309 + $0x298] sm:$0xff] %vm10265, %v9950
      %10350 = vst.msk [vmem:[%s309 + $0x2a0] sm:$0xff] %vm10265, %v9955
      %10351 = vst.msk [vmem:[%s309 + $0x2a8] sm:$0xff] %vm10265, %v9958
      %10352 = vst.msk [vmem:[%s309 + $0x2b0] sm:$0xff] %vm10265, %v9963
      %10353 = vst.msk [vmem:[%s309 + $0x2b8] sm:$0xff] %vm10265, %v9966
      %10354 = vst.msk [vmem:[%s309 + $0x2c0] sm:$0xff] %vm10265, %v9971
      %10355 = vst.msk [vmem:[%s309 + $0x2c8] sm:$0xff] %vm10265, %v9974
      %10356 = vst.msk [vmem:[%s309 + $0x2d0] sm:$0xff] %vm10265, %v9979
      %10357 = vst.msk [vmem:[%s309 + $0x2d8] sm:$0xff] %vm10265, %v9982
      %10358 = vst.msk [vmem:[%s309 + $0x2e0] sm:$0xff] %vm10265, %v9987
      %10359 = vst.msk [vmem:[%s309 + $0x2e8] sm:$0xff] %vm10265, %v9990
      %10360 = vst.msk [vmem:[%s309 + $0x2f0] sm:$0xff] %vm10265, %v9995
      %10361 = vst.msk [vmem:[%s309 + $0x2f8] sm:$0xff] %vm10265, %v9998
      %10362 = vst.msk [vmem:[%s309 + $0x300] sm:$0xff] %vm10265, %v10003
      %10363 = vst.msk [vmem:[%s309 + $0x308] sm:$0xff] %vm10265, %v10006
      %10364 = vst.msk [vmem:[%s309 + $0x310] sm:$0xff] %vm10265, %v10011
      %10365 = vst.msk [vmem:[%s309 + $0x318] sm:$0xff] %vm10265, %v10014
      %10366 = vst.msk [vmem:[%s309 + $0x320] sm:$0xff] %vm10265, %v10019
      %10367 = vst.msk [vmem:[%s309 + $0x328] sm:$0xff] %vm10265, %v10022
      %10368 = vst.msk [vmem:[%s309 + $0x330] sm:$0xff] %vm10265, %v10027
      %10369 = vst.msk [vmem:[%s309 + $0x338] sm:$0xff] %vm10265, %v10030
      %10370 = vst.msk [vmem:[%s309 + $0x340] sm:$0xff] %vm10265, %v10035
      %10371 = vst.msk [vmem:[%s309 + $0x348] sm:$0xff] %vm10265, %v10038
      %10372 = vst.msk [vmem:[%s309 + $0x350] sm:$0xff] %vm10265, %v10043
      %10373 = vst.msk [vmem:[%s309 + $0x358] sm:$0xff] %vm10265, %v10046
      %10374 = vst.msk [vmem:[%s309 + $0x360] sm:$0xff] %vm10265, %v10051
      %10375 = vst.msk [vmem:[%s309 + $0x368] sm:$0xff] %vm10265, %v10054
      %10376 = vst.msk [vmem:[%s309 + $0x370] sm:$0xff] %vm10265, %v10059
      %10377 = vst.msk [vmem:[%s309 + $0x378] sm:$0xff] %vm10265, %v10062
      %10378 = vst.msk [vmem:[%s309 + $0x380] sm:$0xff] %vm10265, %v10067
      %10379 = vst.msk [vmem:[%s309 + $0x388] sm:$0xff] %vm10265, %v10070
      %10380 = vst.msk [vmem:[%s309 + $0x390] sm:$0xff] %vm10265, %v10075
      %10381 = vst.msk [vmem:[%s309 + $0x398] sm:$0xff] %vm10265, %v10078
      %10382 = vst.msk [vmem:[%s309 + $0x3a0] sm:$0xff] %vm10265, %v10083
      %10383 = vst.msk [vmem:[%s309 + $0x3a8] sm:$0xff] %vm10265, %v10086
      %10384 = vst.msk [vmem:[%s309 + $0x3b0] sm:$0xff] %vm10265, %v10091
      %10385 = vst.msk [vmem:[%s309 + $0x3b8] sm:$0xff] %vm10265, %v10094
      %10386 = vst.msk [vmem:[%s309 + $0x3c0] sm:$0xff] %vm10265, %v10099
      %10387 = vst.msk [vmem:[%s309 + $0x3c8] sm:$0xff] %vm10265, %v10102
      %10388 = vst.msk [vmem:[%s309 + $0x3d0] sm:$0xff] %vm10265, %v10107
      %10389 = vst.msk [vmem:[%s309 + $0x3d8] sm:$0xff] %vm10265, %v10110
      %10390 = vst.msk [vmem:[%s309 + $0x3e0] sm:$0xff] %vm10265, %v10115
      %10391 = vst.msk [vmem:[%s309 + $0x3e8] sm:$0xff] %vm10265, %v10118
      %10392 = vst.msk [vmem:[%s309 + $0x3f0] sm:$0xff] %vm10265, %v10123
      %10393 = vst.msk [vmem:[%s309 + $0x3f8] sm:$0xff] %vm10265, %v10126
      %10394 = vst.msk [vmem:[%s309 + $0x400] sm:$0xff] %vm10265, %v10131
      %10395 = vst.msk [vmem:[%s309 + $0x408] sm:$0xff] %vm10265, %v10134
      %10396 = vst.msk [vmem:[%s309 + $0x410] sm:$0xff] %vm10265, %v10139
      %10397 = vst.msk [vmem:[%s309 + $0x418] sm:$0xff] %vm10265, %v10142
      %10398 = vst.msk [vmem:[%s309 + $0x420] sm:$0xff] %vm10265, %v10147
      %10399 = vst.msk [vmem:[%s309 + $0x428] sm:$0xff] %vm10265, %v10150
      %10400 = vst.msk [vmem:[%s309 + $0x430] sm:$0xff] %vm10265, %v10155
      %10401 = vst.msk [vmem:[%s309 + $0x438] sm:$0xff] %vm10265, %v10158
      %10402 = vst.msk [vmem:[%s309 + $0x440] sm:$0xff] %vm10265, %v10163
      %10403 = vst.msk [vmem:[%s309 + $0x448] sm:$0xff] %vm10265, %v10166
      %10404 = vst.msk [vmem:[%s309 + $0x450] sm:$0xff] %vm10265, %v10171
      %10405 = vst.msk [vmem:[%s309 + $0x458] sm:$0xff] %vm10265, %v10174
      %10406 = vst.msk [vmem:[%s309 + $0x460] sm:$0xff] %vm10265, %v10179
      %10407 = vst.msk [vmem:[%s309 + $0x468] sm:$0xff] %vm10265, %v10182
      %10408 = vst.msk [vmem:[%s309 + $0x470] sm:$0xff] %vm10265, %v10187
      %10409 = vst.msk [vmem:[%s309 + $0x478] sm:$0xff] %vm10265, %v10190
      %10410 = vst.msk [vmem:[%s309 + $0x480] sm:$0xff] %vm10265, %v10195
      %10411 = vst.msk [vmem:[%s309 + $0x488] sm:$0xff] %vm10265, %v10198
      %10412 = vst.msk [vmem:[%s309 + $0x490] sm:$0xff] %vm10265, %v10203
      %10413 = vst.msk [vmem:[%s309 + $0x498] sm:$0xff] %vm10265, %v10206
      %10414 = vst.msk [vmem:[%s309 + $0x4a0] sm:$0xff] %vm10265, %v10211
      %10415 = vst.msk [vmem:[%s309 + $0x4a8] sm:$0xff] %vm10265, %v10214
      %10416 = vst.msk [vmem:[%s309 + $0x4b0] sm:$0xff] %vm10265, %v10219
      %10417 = vst.msk [vmem:[%s309 + $0x4b8] sm:$0xff] %vm10265, %v10222
      %10418 = vst.msk [vmem:[%s309 + $0x4c0] sm:$0xff] %vm10265, %v10227
      %10419 = vst.msk [vmem:[%s309 + $0x4c8] sm:$0xff] %vm10265, %v10230
      %10420 = vst.msk [vmem:[%s309 + $0x4d0] sm:$0xff] %vm10265, %v10235
      %10421 = vst.msk [vmem:[%s309 + $0x4d8] sm:$0xff] %vm10265, %v10238
      %10422 = vst.msk [vmem:[%s309 + $0x4e0] sm:$0xff] %vm10265, %v10243
      %10423 = vst.msk [vmem:[%s309 + $0x4e8] sm:$0xff] %vm10265, %v10246
      %10424 = vst.msk [vmem:[%s309 + $0x4f0] sm:$0xff] %vm10265, %v10251
      %10425 = vst.msk [vmem:[%s309 + $0x4f8] sm:$0xff] %vm10265, %v10254
      %10426 = vst.msk [vmem:[%s309 + $0x500] sm:$0xff] %vm10265, %v10259
      %10427 = vst.msk [vmem:[%s309 + $0x508] sm:$0xff] %vm10265, %v10262
      %s10428 = smul.u32 162, %s21
      %p10429 = scmp.lt.s32.totalorder %s10428, 323
      %s10430 = scalar_select %p10429, %s10428, 323
      %s10431 = smul.addr %s10430, 8
      %s10432 = scalar_lea.vmem %s8, %s10431
      // Predicated region
      $region53: #{sdr_predictor_pallas.1} parent=51 // pred_check
        %p10433 = pneg %p212
      $region54: #{sdr_predictor_pallas.1} parent=51 // pred_check_branch
        %10435 = sbr.rel (%p10433) target = $region56
      $region55: #{sdr_predictor_pallas.1} parent=51 // pred_region
        %s10436 = smul.u32 162, %s21
      $region56: #{sdr_predictor_pallas.1} parent=51 // pred_fallthru
        _
    $region52: #{sdr_predictor_pallas.1} parent=5 // pred_fallthru
      _
    %p10437 = scmp.le.s32.totalorder 2, %s16
    // Predicated region
    $region57: #{sdr_predictor_pallas.1} parent=5 // pred_check
      %p10438 = pneg %p10437
    $region58: #{sdr_predictor_pallas.1} parent=5 // pred_check_branch
      %10440 = sbr.rel (%p10438) target = $region60
    $region59: #{sdr_predictor_pallas.1} parent=5 // pred_region
      %s10441 = ssub.s32 %s16, 2
      // Predicated region
      $region61: #{sdr_predictor_pallas.1} parent=59 // pred_check
        %p10442 = pneg %p218
      $region62: #{sdr_predictor_pallas.1} parent=59 // pred_check_branch
        %10444 = sbr.rel (%p10442) target = $region64
      $region63: #{sdr_predictor_pallas.1} parent=59 // pred_region
        %s10445 = smul.u32 162, %s22
        %p10446 = scmp.lt.s32.totalorder %s10445, 323
        %s10447 = scalar_select %p10446, %s10445, 323
        %s10448 = smul.addr %s10447, 8
        %s10449 = scalar_lea.vmem %s8, %s10448
      $region64: #{sdr_predictor_pallas.1} parent=59 // pred_fallthru
        _
    $region60: #{sdr_predictor_pallas.1} parent=5 // pred_fallthru
      _
  $region6: #{sdr_predictor_pallas.1} parent=0 // loop_footer
    %s20 = sadd.s32 1, %s16
  $region7: #{sdr_predictor_pallas.1} parent=0 // loop_footer_branch
    %15 = sbr.rel target = $region3
  $region8: #{sdr_predictor_pallas.1} parent=0 // loop_exit
    _

</llo_original>
